<compile_context>
chip_gen: v7x
topology: tpu7x:2x2x1
jax: 0.10.0
libtpu: 0.0.40
codegen_flags: <defaults>
</compile_context>

<pallas_src>
import functools

import jax
import jax.numpy as jnp
from jax import lax
from jax.experimental import pallas as pl
from jax.experimental.pallas import tpu as pltpu


def _round_up(n, m):
    return (n + m - 1) // m * m


def _cdiv(a, b):
    return -(-a // b)


def _vmem_capacity_bytes():
    try:
        return int(pltpu.get_tpu_info().vmem_capacity_bytes)
    except Exception:
        return 64 * 1024 * 1024  # conservative (v7x per-TC VMEM)


def audio_bilstm_kernel(
    x_ref,                                        # (Tc, BG, Ep) bf16, time-major chunk
    ln_w_ref, ln_b_ref,                           # (1, Ep), (1, Ep) f32
    w_ih0_ref, w_hh0_ref, b_ih0_ref, b_hh0_ref,   # (Ep,3Hp) (Hp,3Hp) bf16, biases f32
    w_ih1_ref, w_hh1_ref, b_ih1_ref, b_hh1_ref,   # (Hp,3Hp) (Hp,3Hp) bf16, biases f32
    w_fc1_ref, b_fc1_ref,                         # (Hp, Hp), (1, Hp) f32
    w_fc2_ref, b_fc2_ref,                         # (Hp, C), (1, C) f32
    out_ref,                                      # (BG, C) f32
    h0_ref, h1_ref, acc_ref,                      # scratch carries: (BG, Hp) f32
    h0_seq_ref,                                   # scratch: (Tc*BG, Hp) bf16
    gi_ref,                                       # scratch: (Tc*BG, 3*Hp) bf16
    *, hp, ep, e_true, tc, t_true, last_has_pad, eps, unroll,
):
    c = pl.program_id(1)                          # chunk index along time
    bg = x_ref.shape[1]                           # batch group (16-sublane aligned)

    @pl.when(c == 0)
    def _init():
        h0_ref[...] = jnp.zeros_like(h0_ref)
        h1_ref[...] = jnp.zeros_like(h1_ref)
        acc_ref[...] = jnp.zeros_like(acc_ref)

    # ---- hoisted LayerNorm over the whole chunk (off the serial path) ----
    # x is streamed in bf16; statistics are computed in f32 over the TRUE E
    # (padded lanes are zero and get masked out of the variance).
    xt = x_ref[...].astype(jnp.float32)           # (Tc, BG, Ep)
    inv_e = 1.0 / e_true
    mu = jnp.sum(xt, axis=-1, keepdims=True) * inv_e
    diff = xt - mu
    if ep != e_true:
        lane = lax.broadcasted_iota(jnp.int32, (1, 1, ep), 2)
        diff = diff * (lane < e_true).astype(jnp.float32)
    var = jnp.sum(diff * diff, axis=-1, keepdims=True) * inv_e
    xn = diff * lax.rsqrt(var + eps) * ln_w_ref[...] + ln_b_ref[...]

    # ---- layer-0 input projection: one big (Tc*BG, Ep)@(Ep, 3Hp) bf16 matmul ----
    xn2 = xn.reshape(tc * bg, ep).astype(w_ih0_ref.dtype)
    gi_ref[...] = (jnp.dot(xn2, w_ih0_ref[...],
                           preferred_element_type=jnp.float32)
                   + b_ih0_ref[...]).astype(gi_ref.dtype)   # b_ih folded once

    def gate_update(gi, gh, h_prev):
        # PyTorch GRU cell, gate order (r, z, n); slices are lane-aligned.
        r = jax.nn.sigmoid(gi[:, 0:hp] + gh[:, 0:hp])
        z = jax.nn.sigmoid(gi[:, hp:2 * hp] + gh[:, hp:2 * hp])
        n = jnp.tanh(gi[:, 2 * hp:3 * hp] + r * gh[:, 2 * hp:3 * hp])
        return (1.0 - z) * n + z * h_prev

    # ---- layer-0 recurrence: single-pass bf16 hh matmul + gates per step ----
    w_hh0 = w_hh0_ref[...]
    b_hh0 = b_hh0_ref[...]

    def l0_step(t, h):
        row = pl.multiple_of(t * bg, bg)
        gi = gi_ref[pl.ds(row, bg), :].astype(jnp.float32)
        gh = jnp.dot(h.astype(w_hh0.dtype), w_hh0,
                     preferred_element_type=jnp.float32) + b_hh0
        h_new = gate_update(gi, gh, h)
        h0_seq_ref[pl.ds(row, bg), :] = h_new.astype(h0_seq_ref.dtype)
        return h_new

    h0_ref[...] = lax.fori_loop(0, tc, l0_step, h0_ref[...], unroll=unroll)

    # ---- layer-1 input projection: one big (Tc*BG, Hp)@(Hp, 3Hp) bf16 matmul ----
    # TODO(synk): nn.GRU inter-layer dropout is train-only; eval == identity.
    gi_ref[...] = (jnp.dot(h0_seq_ref[...], w_ih1_ref[...],
                           preferred_element_type=jnp.float32)
                   + b_ih1_ref[...]).astype(gi_ref.dtype)

    # ---- layer-1 recurrence + running sum (for the mean over time) ----
    w_hh1 = w_hh1_ref[...]
    b_hh1 = b_hh1_ref[...]
    t0 = c * tc

    def run_l1(masked):
        def l1_step(t, carry):
            h, acc = carry
            row = pl.multiple_of(t * bg, bg)
            gi = gi_ref[pl.ds(row, bg), :].astype(jnp.float32)
            gh = jnp.dot(h.astype(w_hh1.dtype), w_hh1,
                         preferred_element_type=jnp.float32) + b_hh1
            h_new = gate_update(gi, gh, h)
            if masked:
                valid = ((t0 + t) < t_true).astype(jnp.float32)
                acc = acc + h_new * valid          # mask padded timesteps
            else:
                acc = acc + h_new                  # mask-free hot path
            return h_new, acc

        h1, acc = lax.fori_loop(0, tc, l1_step, (h1_ref[...], acc_ref[...]),
                                unroll=unroll)
        h1_ref[...] = h1
        acc_ref[...] = acc

    if last_has_pad:
        last = pl.num_programs(1) - 1

        @pl.when(c != last)
        def _not_last():
            run_l1(masked=False)

        @pl.when(c == last)
        def _last():
            run_l1(masked=True)
    else:
        run_l1(masked=False)

    # ---- classification head, only on the last chunk ----
    @pl.when(c == pl.num_programs(1) - 1)
    def _final():
        # TODO(synk): fc_audio nn.Dropout layers are identity in eval mode.
        m = acc_ref[...] * (1.0 / t_true)                    # mean over time
        hfc = jnp.maximum(
            jnp.dot(m, w_fc1_ref[...], preferred_element_type=jnp.float32)
            + b_fc1_ref[...], 0.0)
        logits = (jnp.dot(hfc, w_fc2_ref[...],
                          preferred_element_type=jnp.float32)
                  + b_fc2_ref[...])
        mx = jnp.max(logits, axis=-1, keepdims=True)
        ex = jnp.exp(logits - mx)
        out_ref[...] = (ex / jnp.sum(ex, axis=-1, keepdims=True)
                        ).astype(out_ref.dtype)


def pack_params(p, *, embed, hidden, num_classes, ep, hp, matmul_dtype):
    """PyTorch-layout params -> kernel layout (lane-aligned, gate-padded)."""
    H, E, C = hidden, embed, num_classes

    def pack_w(w, k, kp):            # (3H, K) -> (Kp, 3*Hp), gates lane-aligned
        w3 = w.reshape(3, H, k).transpose(2, 0, 1)               # (K, 3, H)
        w3 = jnp.pad(w3, ((0, kp - k), (0, 0), (0, hp - H)))
        return w3.reshape(kp, 3 * hp)

    def pack_b(b):                   # (3H,) -> (1, 3*Hp)
        b3 = jnp.pad(b.reshape(3, H), ((0, 0), (0, hp - H)))
        return b3.reshape(1, 3 * hp).astype(jnp.float32)

    return (
        jnp.pad(p["ln_w"], (0, ep - E)).reshape(1, ep).astype(jnp.float32),
        jnp.pad(p["ln_b"], (0, ep - E)).reshape(1, ep).astype(jnp.float32),
        pack_w(p["w_ih0"], E, ep).astype(matmul_dtype),
        pack_w(p["w_hh0"], H, hp).astype(matmul_dtype),   # bf16: single-pass hh MXU
        pack_b(p["b_ih0"]),
        pack_b(p["b_hh0"]),
        pack_w(p["w_ih1"], H, hp).astype(matmul_dtype),
        pack_w(p["w_hh1"], H, hp).astype(matmul_dtype),
        pack_b(p["b_ih1"]),
        pack_b(p["b_hh1"]),
        jnp.pad(p["w_fc1"].T, ((0, hp - H), (0, hp - H))).astype(jnp.float32),
        jnp.pad(p["b_fc1"].reshape(1, H), ((0, 0), (0, hp - H))).astype(jnp.float32),
        jnp.pad(p["w_fc2"].T, ((0, hp - H), (0, 0))).astype(jnp.float32),
        p["b_fc2"].reshape(1, C).astype(jnp.float32),
    )


def audio_bilstm_forward(x, params, *, hidden, num_classes,
                         t_chunk=None, batch_group=None,
                         matmul_dtype=jnp.bfloat16):
    """x: (B, T, E) batch_first, like the PyTorch module (eval mode)."""
    B, T, E = x.shape
    H, C = hidden, num_classes
    Hp = _round_up(H, 128)            # gate slices start on 128-lane boundaries
    Ep = _round_up(E, 128)            # lane-dense embedding dim

    # Batch group: amortize the fixed per-step recurrence latency over as many
    # MXU rows as possible (cap ~256; 16-sublane aligned for bf16 tiles).
    # Split into multiple groups (GB >= 2) only when the batch is large.
    if batch_group is None:
        gb = _cdiv(B, 256)
        BG = _round_up(_cdiv(B, gb), 16)
    else:
        BG = _round_up(max(batch_group, 1), 16)
        gb = _cdiv(B, BG)
    Bp = gb * BG

    packed = pack_params(params, embed=E, hidden=H, num_classes=C,
                         ep=Ep, hp=Hp, matmul_dtype=matmul_dtype)

    # Per-generation VMEM budgeting (v5e/v6e: 128 MiB, v7x: 64 MiB per TC).
    vmem_cap = _vmem_capacity_bytes()
    if t_chunk is None:
        weight_bytes = sum(int(a.nbytes) for a in packed)
        fixed = (2 * weight_bytes                 # weights (double-buffered)
                 + 3 * BG * Hp * 4                # f32 carries
                 + 2 * BG * max(C, 128) * 4       # output block
                 + (1 << 20))                     # margin
        per_t = BG * (8 * Hp + 4 * Ep)            # bf16 gi + h0_seq + 2x bf16 input
        budget = max(int(vmem_cap * 0.6) - fixed, 8 * per_t)
        t_chunk = max(8, min(512, _round_up(T, 8), (budget // per_t) // 8 * 8))
    Tc = _round_up(max(t_chunk, 1), 8)
    Tp = _round_up(T, Tc)
    GT = Tp // Tc

    # One pad+transpose pass to time-major bf16 (Tp, Bp, Ep); padded rows /
    # timesteps / lanes are masked or zero-neutral inside the kernel.
    x_tm = jnp.pad(jnp.transpose(x, (1, 0, 2)).astype(jnp.bfloat16),
                   ((0, Tp - T), (0, Bp - B), (0, Ep - E)))

    GB = Bp // BG

    def const_spec(shape):
        # NOTE: constant index_map -> DMA'd once; pl.Buffered(1) could also drop
        # the second VMEM buffer, omitted here for lowering robustness.
        return pl.BlockSpec(shape, lambda b, c: (0,) * len(shape))

    in_specs = [pl.BlockSpec((Tc, BG, Ep), lambda b, c: (c, b, 0))]
    in_specs += [const_spec(a.shape) for a in packed]
    out_specs = pl.BlockSpec((BG, C), lambda b, c: (b, 0))

    kernel = functools.partial(
        audio_bilstm_kernel,
        hp=Hp, ep=Ep, e_true=E, tc=Tc, t_true=T,
        last_has_pad=(Tp > T), eps=1e-5, unroll=min(Tc, 8))

    out = pl.pallas_call(
        kernel,
        out_shape=jax.ShapeDtypeStruct((Bp, C), jnp.float32),
        grid_spec=pltpu.PrefetchScalarGridSpec(
            num_scalar_prefetch=0,
            grid=(GB, GT),
            in_specs=in_specs,
            out_specs=out_specs,
            scratch_shapes=[
                pltpu.VMEM((BG, Hp), jnp.float32),            # h0 carry
                pltpu.VMEM((BG, Hp), jnp.float32),            # h1 carry
                pltpu.VMEM((BG, Hp), jnp.float32),            # sum-over-time acc
                pltpu.VMEM((Tc * BG, Hp), jnp.bfloat16),      # layer-0 output seq
                pltpu.VMEM((Tc * BG, 3 * Hp), jnp.bfloat16),  # hoisted projections
            ]),
        compiler_params=pltpu.CompilerParams(
            dimension_semantics=("parallel", "arbitrary"),
            vmem_limit_bytes=int(vmem_cap * 0.85)),
    )(x_tm, *packed)
    return out[:B]


def init_params(key, *, embed, hidden, num_classes):
    """Deterministic synthetic parameters in PyTorch layouts."""
    H, E, C = hidden, embed, num_classes
    ks = jax.random.split(key, 16)
    u = lambda k, shape, s=0.1: jax.random.uniform(k, shape, jnp.float32, -s, s)
    return {
        "ln_w": 1.0 + u(ks[0], (E,)),
        "ln_b": u(ks[1], (E,)),
        "w_ih0": u(ks[2], (3 * H, E)),
        "w_hh0": u(ks[3], (3 * H, H)),
        "b_ih0": u(ks[4], (3 * H,)),
        "b_hh0": u(ks[5], (3 * H,)),
        "w_ih1": u(ks[6], (3 * H, H)),
        "w_hh1": u(ks[7], (3 * H, H)),
        "b_ih1": u(ks[8], (3 * H,)),
        "b_hh1": u(ks[9], (3 * H,)),
        "w_fc1": u(ks[10], (H, H)),
        "b_fc1": u(ks[11], (H,)),
        "w_fc2": u(ks[12], (C, H)),
        "b_fc2": u(ks[13], (C,)),
    }


def reference_forward(x, p, *, hidden, eps=1e-5):
    """Pure-JAX eval-mode reference matching the PyTorch module."""
    B, T, E = x.shape
    H = hidden
    mu = jnp.mean(x, -1, keepdims=True)
    var = jnp.mean(jnp.square(x - mu), -1, keepdims=True)
    xn = (x - mu) / jnp.sqrt(var + eps) * p["ln_w"] + p["ln_b"]

    def gru_layer(seq, w_ih, w_hh, b_ih, b_hh):
        def step(h, x_t):
            gi = x_t @ w_ih.T + b_ih
            gh = h @ w_hh.T + b_hh
            r = jax.nn.sigmoid(gi[:, :H] + gh[:, :H])
            z = jax.nn.sigmoid(gi[:, H:2 * H] + gh[:, H:2 * H])
            n = jnp.tanh(gi[:, 2 * H:] + r * gh[:, 2 * H:])
            h_new = (1.0 - z) * n + z * h
            return h_new, h_new
        _, ys = lax.scan(step, jnp.zeros((B, H), jnp.float32),
                         jnp.transpose(seq, (1, 0, 2)))
        return jnp.transpose(ys, (1, 0, 2))

    h = gru_layer(xn, p["w_ih0"], p["w_hh0"], p["b_ih0"], p["b_hh0"])
    h = gru_layer(h, p["w_ih1"], p["w_hh1"], p["b_ih1"], p["b_hh1"])
    m = h.mean(axis=1)
    f = jnp.maximum(m @ p["w_fc1"].T + p["b_fc1"], 0.0)
    logits = f @ p["w_fc2"].T + p["b_fc2"]
    return jax.nn.softmax(logits, axis=1)


if __name__ == "__main__":
    # Small shapes consistent with the module: (batch, seq, embedding_size).
    B, T, E, H, C = 2, 20, 32, 32, 2

    key = jax.random.PRNGKey(0)
    k_x, k_p = jax.random.split(key)
    x = jax.random.normal(k_x, (B, T, E), jnp.float32)
    params = init_params(k_p, embed=E, hidden=H, num_classes=C)
    ref = reference_forward(x, params, hidden=H)

    # 1) Forced small chunk: exercises multi-chunk streaming + tail masking.
    out1 = jax.block_until_ready(
        audio_bilstm_forward(x, params, hidden=H, num_classes=C, t_chunk=8))
    # 2) Auto-budgeted chunk (single chunk here): exercises the default path.
    out2 = jax.block_until_ready(
        audio_bilstm_forward(x, params, hidden=H, num_classes=C))

    for out in (out1, out2):
        assert out.shape == (B, C)
        assert bool(jnp.all(jnp.isfinite(out)))
        assert jnp.allclose(jnp.sum(out, axis=-1), 1.0, atol=1e-5)
        # bf16 is used on the streamed input, hoisted projections, hh matmuls
        # and gi/h0_seq scratch; carries and accumulation stay f32 -> loose tol.
        assert jnp.allclose(out, ref, atol=3e-2), float(jnp.max(jnp.abs(out - ref)))
    print("KERNEL_OK")
</pallas_src>

<mosaic_0001>
module attributes {stable_mosaic.version = 11 : i64} {
  func.func @audio_bilstm_kernel(%arg0: i32, %arg1: i32, %arg2: memref<8x16x128xbf16, #tpu.memory_space<vmem>>, %arg3: memref<1x128xf32, #tpu.memory_space<vmem>>, %arg4: memref<1x128xf32, #tpu.memory_space<vmem>>, %arg5: memref<128x384xbf16, #tpu.memory_space<vmem>>, %arg6: memref<128x384xbf16, #tpu.memory_space<vmem>>, %arg7: memref<1x384xf32, #tpu.memory_space<vmem>>, %arg8: memref<1x384xf32, #tpu.memory_space<vmem>>, %arg9: memref<128x384xbf16, #tpu.memory_space<vmem>>, %arg10: memref<128x384xbf16, #tpu.memory_space<vmem>>, %arg11: memref<1x384xf32, #tpu.memory_space<vmem>>, %arg12: memref<1x384xf32, #tpu.memory_space<vmem>>, %arg13: memref<128x128xf32, #tpu.memory_space<vmem>>, %arg14: memref<1x128xf32, #tpu.memory_space<vmem>>, %arg15: memref<128x2xf32, #tpu.memory_space<vmem>>, %arg16: memref<1x2xf32, #tpu.memory_space<vmem>>, %arg17: memref<16x2xf32, #tpu.memory_space<vmem>>, %arg18: memref<16x128xf32, #tpu.memory_space<vmem>>, %arg19: memref<16x128xf32, #tpu.memory_space<vmem>>, %arg20: memref<16x128xf32, #tpu.memory_space<vmem>>, %arg21: memref<128x128xbf16, #tpu.memory_space<vmem>>, %arg22: memref<128x384xbf16, #tpu.memory_space<vmem>>) attributes {dimension_semantics = [#tpu.dimension_semantics<parallel>, #tpu.dimension_semantics<arbitrary>], iteration_bounds = array<i64: 1, 3>, scalar_prefetch = 0 : i64, scratch_operands = 5 : i64, tpu.core_type = #tpu.core_type<tc>, window_params = [{transform_indices = @transform_0, window_bounds = array<i64: 8, 16, 128>}, {pipeline_mode = #tpu.pipeline_mode<synchronous>, transform_indices = @transform_1, window_bounds = array<i64: 1, 128>}, {pipeline_mode = #tpu.pipeline_mode<synchronous>, transform_indices = @transform_2, window_bounds = array<i64: 1, 128>}, {pipeline_mode = #tpu.pipeline_mode<synchronous>, transform_indices = @transform_3, window_bounds = array<i64: 128, 384>}, {pipeline_mode = #tpu.pipeline_mode<synchronous>, transform_indices = @transform_4, window_bounds = array<i64: 128, 384>}, {pipeline_mode = #tpu.pipeline_mode<synchronous>, transform_indices = @transform_5, window_bounds = array<i64: 1, 384>}, {pipeline_mode = #tpu.pipeline_mode<synchronous>, transform_indices = @transform_6, window_bounds = array<i64: 1, 384>}, {pipeline_mode = #tpu.pipeline_mode<synchronous>, transform_indices = @transform_7, window_bounds = array<i64: 128, 384>}, {pipeline_mode = #tpu.pipeline_mode<synchronous>, transform_indices = @transform_8, window_bounds = array<i64: 128, 384>}, {pipeline_mode = #tpu.pipeline_mode<synchronous>, transform_indices = @transform_9, window_bounds = array<i64: 1, 384>}, {pipeline_mode = #tpu.pipeline_mode<synchronous>, transform_indices = @transform_10, window_bounds = array<i64: 1, 384>}, {pipeline_mode = #tpu.pipeline_mode<synchronous>, transform_indices = @transform_11, window_bounds = array<i64: 128, 128>}, {pipeline_mode = #tpu.pipeline_mode<synchronous>, transform_indices = @transform_12, window_bounds = array<i64: 1, 128>}, {pipeline_mode = #tpu.pipeline_mode<synchronous>, transform_indices = @transform_13, window_bounds = array<i64: 128, 2>}, {pipeline_mode = #tpu.pipeline_mode<synchronous>, transform_indices = @transform_14, window_bounds = array<i64: 1, 2>}, {transform_indices = @transform_15, window_bounds = array<i64: 16, 2>}]} {
    %c0_i32 = arith.constant 0 : i32
    %0 = arith.cmpi eq, %arg1, %c0_i32 : i32
    %1 = arith.extui %0 : i1 to i32
    %c0_i32_0 = arith.constant 0 : i32
    %2 = arith.cmpi ne, %1, %c0_i32_0 : i32
    scf.if %2 {
      %cst_102 = arith.constant 0.000000e+00 : f32
      %373 = vector.broadcast %cst_102 : f32 to vector<16x128xf32>
      %c0_103 = arith.constant 0 : index
      %c0_104 = arith.constant 0 : index
      %374 = vector.load %arg18[%c0_103, %c0_104] : memref<16x128xf32, #tpu.memory_space<vmem>>, vector<16x128xf32>
      tpu.vector_store %arg18[%c0_103, %c0_104], %373 {strides = array<i32>} : memref<16x128xf32, #tpu.memory_space<vmem>>, vector<16x128xf32>,
      %cst_105 = arith.constant 0.000000e+00 : f32
      %375 = vector.broadcast %cst_105 : f32 to vector<16x128xf32>
      %c0_106 = arith.constant 0 : index
      %c0_107 = arith.constant 0 : index
      %376 = vector.load %arg19[%c0_106, %c0_107] : memref<16x128xf32, #tpu.memory_space<vmem>>, vector<16x128xf32>
      tpu.vector_store %arg19[%c0_106, %c0_107], %375 {strides = array<i32>} : memref<16x128xf32, #tpu.memory_space<vmem>>, vector<16x128xf32>,
      %cst_108 = arith.constant 0.000000e+00 : f32
      %377 = vector.broadcast %cst_108 : f32 to vector<16x128xf32>
      %c0_109 = arith.constant 0 : index
      %c0_110 = arith.constant 0 : index
      %378 = vector.load %arg20[%c0_109, %c0_110] : memref<16x128xf32, #tpu.memory_space<vmem>>, vector<16x128xf32>
      tpu.vector_store %arg20[%c0_109, %c0_110], %377 {strides = array<i32>} : memref<16x128xf32, #tpu.memory_space<vmem>>, vector<16x128xf32>,
    } else {
    }
    %c0 = arith.constant 0 : index
    %c0_1 = arith.constant 0 : index
    %c0_2 = arith.constant 0 : index
    %3 = vector.load %arg2[%c0, %c0_1, %c0_2] : memref<8x16x128xbf16, #tpu.memory_space<vmem>>, vector<8x16x128xbf16>
    %4 = arith.extf %3 : vector<8x16x128xbf16> to vector<8x16x128xf32>
    %cst = arith.constant dense<0.000000e+00> : vector<8x16xf32>
    %5 = vector.multi_reduction <add>, %4, %cst [2] : vector<8x16x128xf32> to vector<8x16xf32>
    %6 = vector.shape_cast %5 : vector<8x16xf32> to vector<8x16x1xf32>
    %cst_3 = arith.constant 3.125000e-02 : f32
    %7 = vector.broadcast %cst_3 : f32 to vector<8x16x1xf32>
    %8 = arith.mulf %6, %7 : vector<8x16x1xf32>
    %9 = vector.broadcast %8 : vector<8x16x1xf32> to vector<8x16x128xf32>
    %10 = arith.subf %4, %9 : vector<8x16x128xf32>
    %11 = tpu.iota {dimensions = array<i32: 2>} : vector<1x1x128xi32>
    %c32_i32 = arith.constant 32 : i32
    %12 = vector.broadcast %c32_i32 : i32 to vector<1x1x128xi32>
    %13 = arith.cmpi slt, %11, %12 : vector<1x1x128xi32>
    %14 = arith.extui %13 : vector<1x1x128xi1> to vector<1x1x128xi32>
    %15 = arith.sitofp %14 : vector<1x1x128xi32> to vector<1x1x128xf32>
    %16 = vector.broadcast %15 : vector<1x1x128xf32> to vector<8x16x128xf32>
    %17 = arith.mulf %10, %16 : vector<8x16x128xf32>
    %18 = arith.mulf %17, %17 : vector<8x16x128xf32>
    %cst_4 = arith.constant dense<0.000000e+00> : vector<8x16xf32>
    %19 = vector.multi_reduction <add>, %18, %cst_4 [2] : vector<8x16x128xf32> to vector<8x16xf32>
    %20 = vector.shape_cast %19 : vector<8x16xf32> to vector<8x16x1xf32>
    %cst_5 = arith.constant 3.125000e-02 : f32
    %21 = vector.broadcast %cst_5 : f32 to vector<8x16x1xf32>
    %22 = arith.mulf %20, %21 : vector<8x16x1xf32>
    %cst_6 = arith.constant 9.99999974E-6 : f32
    %23 = vector.broadcast %cst_6 : f32 to vector<8x16x1xf32>
    %24 = arith.addf %22, %23 : vector<8x16x1xf32>
    %25 = math.rsqrt %24 : vector<8x16x1xf32>
    %26 = vector.broadcast %25 : vector<8x16x1xf32> to vector<8x16x128xf32>
    %27 = arith.mulf %17, %26 : vector<8x16x128xf32>
    %c0_7 = arith.constant 0 : index
    %c0_8 = arith.constant 0 : index
    %28 = vector.load %arg3[%c0_7, %c0_8] : memref<1x128xf32, #tpu.memory_space<vmem>>, vector<1x128xf32>
    %29 = vector.shape_cast %28 : vector<1x128xf32> to vector<1x1x128xf32>
    %30 = vector.broadcast %29 : vector<1x1x128xf32> to vector<8x16x128xf32>
    %31 = arith.mulf %27, %30 : vector<8x16x128xf32>
    %c0_9 = arith.constant 0 : index
    %c0_10 = arith.constant 0 : index
    %32 = vector.load %arg4[%c0_9, %c0_10] : memref<1x128xf32, #tpu.memory_space<vmem>>, vector<1x128xf32>
    %33 = vector.shape_cast %32 : vector<1x128xf32> to vector<1x1x128xf32>
    %34 = vector.broadcast %33 : vector<1x1x128xf32> to vector<8x16x128xf32>
    %35 = arith.addf %31, %34 : vector<8x16x128xf32>
    %36 = vector.shape_cast %35 : vector<8x16x128xf32> to vector<128x128xf32>
    %37 = arith.truncf %36 : vector<128x128xf32> to vector<128x128xbf16>
    %c0_11 = arith.constant 0 : index
    %c0_12 = arith.constant 0 : index
    %38 = vector.load %arg5[%c0_11, %c0_12] : memref<128x384xbf16, #tpu.memory_space<vmem>>, vector<128x384xbf16>
    %cst_13 = arith.constant dense<0.000000e+00> : vector<128x384xf32>
    %39 = tpu.matmul %37, %38, %cst_13 {dimension_numbers = #tpu.dot_dimension_numbers<[1], [0], [0], [1], [0, 0, 1, 1], [], []>} : vector<128x128xbf16>, vector<128x384xbf16>, vector<128x384xf32> -> vector<128x384xf32>
    %c0_14 = arith.constant 0 : index
    %c0_15 = arith.constant 0 : index
    %40 = vector.load %arg7[%c0_14, %c0_15] : memref<1x384xf32, #tpu.memory_space<vmem>>, vector<1x384xf32>
    %41 = vector.broadcast %40 : vector<1x384xf32> to vector<128x384xf32>
    %42 = arith.addf %39, %41 : vector<128x384xf32>
    %43 = arith.truncf %42 : vector<128x384xf32> to vector<128x384xbf16>
    %c0_16 = arith.constant 0 : index
    %c0_17 = arith.constant 0 : index
    %44 = vector.load %arg22[%c0_16, %c0_17] : memref<128x384xbf16, #tpu.memory_space<vmem>>, vector<128x384xbf16>
    tpu.vector_store %arg22[%c0_16, %c0_17], %43 {strides = array<i32>} : memref<128x384xbf16, #tpu.memory_space<vmem>>, vector<128x384xbf16>,
    %c0_18 = arith.constant 0 : index
    %c0_19 = arith.constant 0 : index
    %45 = vector.load %arg6[%c0_18, %c0_19] : memref<128x384xbf16, #tpu.memory_space<vmem>>, vector<128x384xbf16>
    %c0_20 = arith.constant 0 : index
    %c0_21 = arith.constant 0 : index
    %46 = vector.load %arg8[%c0_20, %c0_21] : memref<1x384xf32, #tpu.memory_space<vmem>>, vector<1x384xf32>
    %c0_22 = arith.constant 0 : index
    %c0_23 = arith.constant 0 : index
    %47 = vector.load %arg18[%c0_22, %c0_23] : memref<16x128xf32, #tpu.memory_space<vmem>>, vector<16x128xf32>
    %c0_i32_24 = arith.constant 0 : i32
    %c16_i32 = arith.constant 16 : i32
    %48 = arith.muli %c0_i32_24, %c16_i32 : i32
    %49 = tpu.assume_multiple %48, 16 : i32
    %50 = arith.index_cast %49 : i32 to index
    %c0_25 = arith.constant 0 : index
    %51 = vector.load %arg22[%50, %c0_25] : memref<128x384xbf16, #tpu.memory_space<vmem>>, vector<16x384xbf16>
    %52 = arith.extf %51 : vector<16x384xbf16> to vector<16x384xf32>
    %53 = arith.truncf %47 : vector<16x128xf32> to vector<16x128xbf16>
    %cst_26 = arith.constant dense<0.000000e+00> : vector<16x384xf32>
    %54 = tpu.matmul %53, %45, %cst_26 {dimension_numbers = #tpu.dot_dimension_numbers<[1], [0], [0], [1], [0, 0, 1, 1], [], []>} : vector<16x128xbf16>, vector<128x384xbf16>, vector<16x384xf32> -> vector<16x384xf32>
    %55 = vector.broadcast %46 : vector<1x384xf32> to vector<16x384xf32>
    %56 = arith.addf %54, %55 : vector<16x384xf32>
    %57 = vector.extract_strided_slice %52 {offsets = [0, 0], sizes = [16, 128], strides = [1, 1]} : vector<16x384xf32> to vector<16x128xf32>
    %58 = vector.extract_strided_slice %56 {offsets = [0, 0], sizes = [16, 128], strides = [1, 1]} : vector<16x384xf32> to vector<16x128xf32>
    %59 = arith.addf %57, %58 : vector<16x128xf32>
    %60 = arith.negf %59 : vector<16x128xf32>
    %61 = math.exp %60 : vector<16x128xf32>
    %cst_27 = arith.constant 1.000000e+00 : f32
    %62 = vector.broadcast %cst_27 : f32 to vector<16x128xf32>
    %63 = arith.addf %62, %61 : vector<16x128xf32>
    %64 = arith.divf %62, %63 : vector<16x128xf32>
    %65 = vector.extract_strided_slice %52 {offsets = [0, 128], sizes = [16, 128], strides = [1, 1]} : vector<16x384xf32> to vector<16x128xf32>
    %66 = vector.extract_strided_slice %56 {offsets = [0, 128], sizes = [16, 128], strides = [1, 1]} : vector<16x384xf32> to vector<16x128xf32>
    %67 = arith.addf %65, %66 : vector<16x128xf32>
    %68 = arith.negf %67 : vector<16x128xf32>
    %69 = math.exp %68 : vector<16x128xf32>
    %cst_28 = arith.constant 1.000000e+00 : f32
    %70 = vector.broadcast %cst_28 : f32 to vector<16x128xf32>
    %71 = arith.addf %70, %69 : vector<16x128xf32>
    %72 = arith.divf %70, %71 : vector<16x128xf32>
    %73 = vector.extract_strided_slice %52 {offsets = [0, 256], sizes = [16, 128], strides = [1, 1]} : vector<16x384xf32> to vector<16x128xf32>
    %74 = vector.extract_strided_slice %56 {offsets = [0, 256], sizes = [16, 128], strides = [1, 1]} : vector<16x384xf32> to vector<16x128xf32>
    %75 = arith.mulf %64, %74 : vector<16x128xf32>
    %76 = arith.addf %73, %75 : vector<16x128xf32>
    %77 = math.tanh %76 : vector<16x128xf32>
    %cst_29 = arith.constant 1.000000e+00 : f32
    %78 = vector.broadcast %cst_29 : f32 to vector<16x128xf32>
    %79 = arith.subf %78, %72 : vector<16x128xf32>
    %80 = arith.mulf %79, %77 : vector<16x128xf32>
    %81 = arith.mulf %72, %47 : vector<16x128xf32>
    %82 = arith.addf %80, %81 : vector<16x128xf32>
    %83 = arith.truncf %82 : vector<16x128xf32> to vector<16x128xbf16>
    %84 = arith.index_cast %49 : i32 to index
    %c0_30 = arith.constant 0 : index
    %85 = vector.load %arg21[%84, %c0_30] : memref<128x128xbf16, #tpu.memory_space<vmem>>, vector<16x128xbf16>
    tpu.vector_store %arg21[%84, %c0_30], %83 {strides = array<i32>} : memref<128x128xbf16, #tpu.memory_space<vmem>>, vector<16x128xbf16>,
    %c1_i32 = arith.constant 1 : i32
    %c16_i32_31 = arith.constant 16 : i32
    %86 = arith.muli %c1_i32, %c16_i32_31 : i32
    %87 = tpu.assume_multiple %86, 16 : i32
    %88 = arith.index_cast %87 : i32 to index
    %c0_32 = arith.constant 0 : index
    %89 = vector.load %arg22[%88, %c0_32] : memref<128x384xbf16, #tpu.memory_space<vmem>>, vector<16x384xbf16>
    %90 = arith.extf %89 : vector<16x384xbf16> to vector<16x384xf32>
    %91 = arith.truncf %82 : vector<16x128xf32> to vector<16x128xbf16>
    %cst_33 = arith.constant dense<0.000000e+00> : vector<16x384xf32>
    %92 = tpu.matmul %91, %45, %cst_33 {dimension_numbers = #tpu.dot_dimension_numbers<[1], [0], [0], [1], [0, 0, 1, 1], [], []>} : vector<16x128xbf16>, vector<128x384xbf16>, vector<16x384xf32> -> vector<16x384xf32>
    %93 = vector.broadcast %46 : vector<1x384xf32> to vector<16x384xf32>
    %94 = arith.addf %92, %93 : vector<16x384xf32>
    %95 = vector.extract_strided_slice %90 {offsets = [0, 0], sizes = [16, 128], strides = [1, 1]} : vector<16x384xf32> to vector<16x128xf32>
    %96 = vector.extract_strided_slice %94 {offsets = [0, 0], sizes = [16, 128], strides = [1, 1]} : vector<16x384xf32> to vector<16x128xf32>
    %97 = arith.addf %95, %96 : vector<16x128xf32>
    %98 = arith.negf %97 : vector<16x128xf32>
    %99 = math.exp %98 : vector<16x128xf32>
    %cst_34 = arith.constant 1.000000e+00 : f32
    %100 = vector.broadcast %cst_34 : f32 to vector<16x128xf32>
    %101 = arith.addf %100, %99 : vector<16x128xf32>
    %102 = arith.divf %100, %101 : vector<16x128xf32>
    %103 = vector.extract_strided_slice %90 {offsets = [0, 128], sizes = [16, 128], strides = [1, 1]} : vector<16x384xf32> to vector<16x128xf32>
    %104 = vector.extract_strided_slice %94 {offsets = [0, 128], sizes = [16, 128], strides = [1, 1]} : vector<16x384xf32> to vector<16x128xf32>
    %105 = arith.addf %103, %104 : vector<16x128xf32>
    %106 = arith.negf %105 : vector<16x128xf32>
    %107 = math.exp %106 : vector<16x128xf32>
    %cst_35 = arith.constant 1.000000e+00 : f32
    %108 = vector.broadcast %cst_35 : f32 to vector<16x128xf32>
    %109 = arith.addf %108, %107 : vector<16x128xf32>
    %110 = arith.divf %108, %109 : vector<16x128xf32>
    %111 = vector.extract_strided_slice %90 {offsets = [0, 256], sizes = [16, 128], strides = [1, 1]} : vector<16x384xf32> to vector<16x128xf32>
    %112 = vector.extract_strided_slice %94 {offsets = [0, 256], sizes = [16, 128], strides = [1, 1]} : vector<16x384xf32> to vector<16x128xf32>
    %113 = arith.mulf %102, %112 : vector<16x128xf32>
    %114 = arith.addf %111, %113 : vector<16x128xf32>
    %115 = math.tanh %114 : vector<16x128xf32>
    %cst_36 = arith.constant 1.000000e+00 : f32
    %116 = vector.broadcast %cst_36 : f32 to vector<16x128xf32>
    %117 = arith.subf %116, %110 : vector<16x128xf32>
    %118 = arith.mulf %117, %115 : vector<16x128xf32>
    %119 = arith.mulf %110, %82 : vector<16x128xf32>
    %120 = arith.addf %118, %119 : vector<16x128xf32>
    %121 = arith.truncf %120 : vector<16x128xf32> to vector<16x128xbf16>
    %122 = arith.index_cast %87 : i32 to index
    %c0_37 = arith.constant 0 : index
    %123 = vector.load %arg21[%122, %c0_37] : memref<128x128xbf16, #tpu.memory_space<vmem>>, vector<16x128xbf16>
    tpu.vector_store %arg21[%122, %c0_37], %121 {strides = array<i32>} : memref<128x128xbf16, #tpu.memory_space<vmem>>, vector<16x128xbf16>,
    %c2_i32 = arith.constant 2 : i32
    %c16_i32_38 = arith.constant 16 : i32
    %124 = arith.muli %c2_i32, %c16_i32_38 : i32
    %125 = tpu.assume_multiple %124, 16 : i32
    %126 = arith.index_cast %125 : i32 to index
    %c0_39 = arith.constant 0 : index
    %127 = vector.load %arg22[%126, %c0_39] : memref<128x384xbf16, #tpu.memory_space<vmem>>, vector<16x384xbf16>
    %128 = arith.extf %127 : vector<16x384xbf16> to vector<16x384xf32>
    %129 = arith.truncf %120 : vector<16x128xf32> to vector<16x128xbf16>
    %cst_40 = arith.constant dense<0.000000e+00> : vector<16x384xf32>
    %130 = tpu.matmul %129, %45, %cst_40 {dimension_numbers = #tpu.dot_dimension_numbers<[1], [0], [0], [1], [0, 0, 1, 1], [], []>} : vector<16x128xbf16>, vector<128x384xbf16>, vector<16x384xf32> -> vector<16x384xf32>
    %131 = vector.broadcast %46 : vector<1x384xf32> to vector<16x384xf32>
    %132 = arith.addf %130, %131 : vector<16x384xf32>
    %133 = vector.extract_strided_slice %128 {offsets = [0, 0], sizes = [16, 128], strides = [1, 1]} : vector<16x384xf32> to vector<16x128xf32>
    %134 = vector.extract_strided_slice %132 {offsets = [0, 0], sizes = [16, 128], strides = [1, 1]} : vector<16x384xf32> to vector<16x128xf32>
    %135 = arith.addf %133, %134 : vector<16x128xf32>
    %136 = arith.negf %135 : vector<16x128xf32>
    %137 = math.exp %136 : vector<16x128xf32>
    %cst_41 = arith.constant 1.000000e+00 : f32
    %138 = vector.broadcast %cst_41 : f32 to vector<16x128xf32>
    %139 = arith.addf %138, %137 : vector<16x128xf32>
    %140 = arith.divf %138, %139 : vector<16x128xf32>
    %141 = vector.extract_strided_slice %128 {offsets = [0, 128], sizes = [16, 128], strides = [1, 1]} : vector<16x384xf32> to vector<16x128xf32>
    %142 = vector.extract_strided_slice %132 {offsets = [0, 128], sizes = [16, 128], strides = [1, 1]} : vector<16x384xf32> to vector<16x128xf32>
    %143 = arith.addf %141, %142 : vector<16x128xf32>
    %144 = arith.negf %143 : vector<16x128xf32>
    %145 = math.exp %144 : vector<16x128xf32>
    %cst_42 = arith.constant 1.000000e+00 : f32
    %146 = vector.broadcast %cst_42 : f32 to vector<16x128xf32>
    %147 = arith.addf %146, %145 : vector<16x128xf32>
    %148 = arith.divf %146, %147 : vector<16x128xf32>
    %149 = vector.extract_strided_slice %128 {offsets = [0, 256], sizes = [16, 128], strides = [1, 1]} : vector<16x384xf32> to vector<16x128xf32>
    %150 = vector.extract_strided_slice %132 {offsets = [0, 256], sizes = [16, 128], strides = [1, 1]} : vector<16x384xf32> to vector<16x128xf32>
    %151 = arith.mulf %140, %150 : vector<16x128xf32>
    %152 = arith.addf %149, %151 : vector<16x128xf32>
    %153 = math.tanh %152 : vector<16x128xf32>
    %cst_43 = arith.constant 1.000000e+00 : f32
    %154 = vector.broadcast %cst_43 : f32 to vector<16x128xf32>
    %155 = arith.subf %154, %148 : vector<16x128xf32>
    %156 = arith.mulf %155, %153 : vector<16x128xf32>
    %157 = arith.mulf %148, %120 : vector<16x128xf32>
    %158 = arith.addf %156, %157 : vector<16x128xf32>
    %159 = arith.truncf %158 : vector<16x128xf32> to vector<16x128xbf16>
    %160 = arith.index_cast %125 : i32 to index
    %c0_44 = arith.constant 0 : index
    %161 = vector.load %arg21[%160, %c0_44] : memref<128x128xbf16, #tpu.memory_space<vmem>>, vector<16x128xbf16>
    tpu.vector_store %arg21[%160, %c0_44], %159 {strides = array<i32>} : memref<128x128xbf16, #tpu.memory_space<vmem>>, vector<16x128xbf16>,
    %c3_i32 = arith.constant 3 : i32
    %c16_i32_45 = arith.constant 16 : i32
    %162 = arith.muli %c3_i32, %c16_i32_45 : i32
    %163 = tpu.assume_multiple %162, 16 : i32
    %164 = arith.index_cast %163 : i32 to index
    %c0_46 = arith.constant 0 : index
    %165 = vector.load %arg22[%164, %c0_46] : memref<128x384xbf16, #tpu.memory_space<vmem>>, vector<16x384xbf16>
    %166 = arith.extf %165 : vector<16x384xbf16> to vector<16x384xf32>
    %167 = arith.truncf %158 : vector<16x128xf32> to vector<16x128xbf16>
    %cst_47 = arith.constant dense<0.000000e+00> : vector<16x384xf32>
    %168 = tpu.matmul %167, %45, %cst_47 {dimension_numbers = #tpu.dot_dimension_numbers<[1], [0], [0], [1], [0, 0, 1, 1], [], []>} : vector<16x128xbf16>, vector<128x384xbf16>, vector<16x384xf32> -> vector<16x384xf32>
    %169 = vector.broadcast %46 : vector<1x384xf32> to vector<16x384xf32>
    %170 = arith.addf %168, %169 : vector<16x384xf32>
    %171 = vector.extract_strided_slice %166 {offsets = [0, 0], sizes = [16, 128], strides = [1, 1]} : vector<16x384xf32> to vector<16x128xf32>
    %172 = vector.extract_strided_slice %170 {offsets = [0, 0], sizes = [16, 128], strides = [1, 1]} : vector<16x384xf32> to vector<16x128xf32>
    %173 = arith.addf %171, %172 : vector<16x128xf32>
    %174 = arith.negf %173 : vector<16x128xf32>
    %175 = math.exp %174 : vector<16x128xf32>
    %cst_48 = arith.constant 1.000000e+00 : f32
    %176 = vector.broadcast %cst_48 : f32 to vector<16x128xf32>
    %177 = arith.addf %176, %175 : vector<16x128xf32>
    %178 = arith.divf %176, %177 : vector<16x128xf32>
    %179 = vector.extract_strided_slice %166 {offsets = [0, 128], sizes = [16, 128], strides = [1, 1]} : vector<16x384xf32> to vector<16x128xf32>
    %180 = vector.extract_strided_slice %170 {offsets = [0, 128], sizes = [16, 128], strides = [1, 1]} : vector<16x384xf32> to vector<16x128xf32>
    %181 = arith.addf %179, %180 : vector<16x128xf32>
    %182 = arith.negf %181 : vector<16x128xf32>
    %183 = math.exp %182 : vector<16x128xf32>
    %cst_49 = arith.constant 1.000000e+00 : f32
    %184 = vector.broadcast %cst_49 : f32 to vector<16x128xf32>
    %185 = arith.addf %184, %183 : vector<16x128xf32>
    %186 = arith.divf %184, %185 : vector<16x128xf32>
    %187 = vector.extract_strided_slice %166 {offsets = [0, 256], sizes = [16, 128], strides = [1, 1]} : vector<16x384xf32> to vector<16x128xf32>
    %188 = vector.extract_strided_slice %170 {offsets = [0, 256], sizes = [16, 128], strides = [1, 1]} : vector<16x384xf32> to vector<16x128xf32>
    %189 = arith.mulf %178, %188 : vector<16x128xf32>
    %190 = arith.addf %187, %189 : vector<16x128xf32>
    %191 = math.tanh %190 : vector<16x128xf32>
    %cst_50 = arith.constant 1.000000e+00 : f32
    %192 = vector.broadcast %cst_50 : f32 to vector<16x128xf32>
    %193 = arith.subf %192, %186 : vector<16x128xf32>
    %194 = arith.mulf %193, %191 : vector<16x128xf32>
    %195 = arith.mulf %186, %158 : vector<16x128xf32>
    %196 = arith.addf %194, %195 : vector<16x128xf32>
    %197 = arith.truncf %196 : vector<16x128xf32> to vector<16x128xbf16>
    %198 = arith.index_cast %163 : i32 to index
    %c0_51 = arith.constant 0 : index
    %199 = vector.load %arg21[%198, %c0_51] : memref<128x128xbf16, #tpu.memory_space<vmem>>, vector<16x128xbf16>
    tpu.vector_store %arg21[%198, %c0_51], %197 {strides = array<i32>} : memref<128x128xbf16, #tpu.memory_space<vmem>>, vector<16x128xbf16>,
    %c4_i32 = arith.constant 4 : i32
    %c16_i32_52 = arith.constant 16 : i32
    %200 = arith.muli %c4_i32, %c16_i32_52 : i32
    %201 = tpu.assume_multiple %200, 16 : i32
    %202 = arith.index_cast %201 : i32 to index
    %c0_53 = arith.constant 0 : index
    %203 = vector.load %arg22[%202, %c0_53] : memref<128x384xbf16, #tpu.memory_space<vmem>>, vector<16x384xbf16>
    %204 = arith.extf %203 : vector<16x384xbf16> to vector<16x384xf32>
    %205 = arith.truncf %196 : vector<16x128xf32> to vector<16x128xbf16>
    %cst_54 = arith.constant dense<0.000000e+00> : vector<16x384xf32>
    %206 = tpu.matmul %205, %45, %cst_54 {dimension_numbers = #tpu.dot_dimension_numbers<[1], [0], [0], [1], [0, 0, 1, 1], [], []>} : vector<16x128xbf16>, vector<128x384xbf16>, vector<16x384xf32> -> vector<16x384xf32>
    %207 = vector.broadcast %46 : vector<1x384xf32> to vector<16x384xf32>
    %208 = arith.addf %206, %207 : vector<16x384xf32>
    %209 = vector.extract_strided_slice %204 {offsets = [0, 0], sizes = [16, 128], strides = [1, 1]} : vector<16x384xf32> to vector<16x128xf32>
    %210 = vector.extract_strided_slice %208 {offsets = [0, 0], sizes = [16, 128], strides = [1, 1]} : vector<16x384xf32> to vector<16x128xf32>
    %211 = arith.addf %209, %210 : vector<16x128xf32>
    %212 = arith.negf %211 : vector<16x128xf32>
    %213 = math.exp %212 : vector<16x128xf32>
    %cst_55 = arith.constant 1.000000e+00 : f32
    %214 = vector.broadcast %cst_55 : f32 to vector<16x128xf32>
    %215 = arith.addf %214, %213 : vector<16x128xf32>
    %216 = arith.divf %214, %215 : vector<16x128xf32>
    %217 = vector.extract_strided_slice %204 {offsets = [0, 128], sizes = [16, 128], strides = [1, 1]} : vector<16x384xf32> to vector<16x128xf32>
    %218 = vector.extract_strided_slice %208 {offsets = [0, 128], sizes = [16, 128], strides = [1, 1]} : vector<16x384xf32> to vector<16x128xf32>
    %219 = arith.addf %217, %218 : vector<16x128xf32>
    %220 = arith.negf %219 : vector<16x128xf32>
    %221 = math.exp %220 : vector<16x128xf32>
    %cst_56 = arith.constant 1.000000e+00 : f32
    %222 = vector.broadcast %cst_56 : f32 to vector<16x128xf32>
    %223 = arith.addf %222, %221 : vector<16x128xf32>
    %224 = arith.divf %222, %223 : vector<16x128xf32>
    %225 = vector.extract_strided_slice %204 {offsets = [0, 256], sizes = [16, 128], strides = [1, 1]} : vector<16x384xf32> to vector<16x128xf32>
    %226 = vector.extract_strided_slice %208 {offsets = [0, 256], sizes = [16, 128], strides = [1, 1]} : vector<16x384xf32> to vector<16x128xf32>
    %227 = arith.mulf %216, %226 : vector<16x128xf32>
    %228 = arith.addf %225, %227 : vector<16x128xf32>
    %229 = math.tanh %228 : vector<16x128xf32>
    %cst_57 = arith.constant 1.000000e+00 : f32
    %230 = vector.broadcast %cst_57 : f32 to vector<16x128xf32>
    %231 = arith.subf %230, %224 : vector<16x128xf32>
    %232 = arith.mulf %231, %229 : vector<16x128xf32>
    %233 = arith.mulf %224, %196 : vector<16x128xf32>
    %234 = arith.addf %232, %233 : vector<16x128xf32>
    %235 = arith.truncf %234 : vector<16x128xf32> to vector<16x128xbf16>
    %236 = arith.index_cast %201 : i32 to index
    %c0_58 = arith.constant 0 : index
    %237 = vector.load %arg21[%236, %c0_58] : memref<128x128xbf16, #tpu.memory_space<vmem>>, vector<16x128xbf16>
    tpu.vector_store %arg21[%236, %c0_58], %235 {strides = array<i32>} : memref<128x128xbf16, #tpu.memory_space<vmem>>, vector<16x128xbf16>,
    %c5_i32 = arith.constant 5 : i32
    %c16_i32_59 = arith.constant 16 : i32
    %238 = arith.muli %c5_i32, %c16_i32_59 : i32
    %239 = tpu.assume_multiple %238, 16 : i32
    %240 = arith.index_cast %239 : i32 to index
    %c0_60 = arith.constant 0 : index
    %241 = vector.load %arg22[%240, %c0_60] : memref<128x384xbf16, #tpu.memory_space<vmem>>, vector<16x384xbf16>
    %242 = arith.extf %241 : vector<16x384xbf16> to vector<16x384xf32>
    %243 = arith.truncf %234 : vector<16x128xf32> to vector<16x128xbf16>
    %cst_61 = arith.constant dense<0.000000e+00> : vector<16x384xf32>
    %244 = tpu.matmul %243, %45, %cst_61 {dimension_numbers = #tpu.dot_dimension_numbers<[1], [0], [0], [1], [0, 0, 1, 1], [], []>} : vector<16x128xbf16>, vector<128x384xbf16>, vector<16x384xf32> -> vector<16x384xf32>
    %245 = vector.broadcast %46 : vector<1x384xf32> to vector<16x384xf32>
    %246 = arith.addf %244, %245 : vector<16x384xf32>
    %247 = vector.extract_strided_slice %242 {offsets = [0, 0], sizes = [16, 128], strides = [1, 1]} : vector<16x384xf32> to vector<16x128xf32>
    %248 = vector.extract_strided_slice %246 {offsets = [0, 0], sizes = [16, 128], strides = [1, 1]} : vector<16x384xf32> to vector<16x128xf32>
    %249 = arith.addf %247, %248 : vector<16x128xf32>
    %250 = arith.negf %249 : vector<16x128xf32>
    %251 = math.exp %250 : vector<16x128xf32>
    %cst_62 = arith.constant 1.000000e+00 : f32
    %252 = vector.broadcast %cst_62 : f32 to vector<16x128xf32>
    %253 = arith.addf %252, %251 : vector<16x128xf32>
    %254 = arith.divf %252, %253 : vector<16x128xf32>
    %255 = vector.extract_strided_slice %242 {offsets = [0, 128], sizes = [16, 128], strides = [1, 1]} : vector<16x384xf32> to vector<16x128xf32>
    %256 = vector.extract_strided_slice %246 {offsets = [0, 128], sizes = [16, 128], strides = [1, 1]} : vector<16x384xf32> to vector<16x128xf32>
    %257 = arith.addf %255, %256 : vector<16x128xf32>
    %258 = arith.negf %257 : vector<16x128xf32>
    %259 = math.exp %258 : vector<16x128xf32>
    %cst_63 = arith.constant 1.000000e+00 : f32
    %260 = vector.broadcast %cst_63 : f32 to vector<16x128xf32>
    %261 = arith.addf %260, %259 : vector<16x128xf32>
    %262 = arith.divf %260, %261 : vector<16x128xf32>
    %263 = vector.extract_strided_slice %242 {offsets = [0, 256], sizes = [16, 128], strides = [1, 1]} : vector<16x384xf32> to vector<16x128xf32>
    %264 = vector.extract_strided_slice %246 {offsets = [0, 256], sizes = [16, 128], strides = [1, 1]} : vector<16x384xf32> to vector<16x128xf32>
    %265 = arith.mulf %254, %264 : vector<16x128xf32>
    %266 = arith.addf %263, %265 : vector<16x128xf32>
    %267 = math.tanh %266 : vector<16x128xf32>
    %cst_64 = arith.constant 1.000000e+00 : f32
    %268 = vector.broadcast %cst_64 : f32 to vector<16x128xf32>
    %269 = arith.subf %268, %262 : vector<16x128xf32>
    %270 = arith.mulf %269, %267 : vector<16x128xf32>
    %271 = arith.mulf %262, %234 : vector<16x128xf32>
    %272 = arith.addf %270, %271 : vector<16x128xf32>
    %273 = arith.truncf %272 : vector<16x128xf32> to vector<16x128xbf16>
    %274 = arith.index_cast %239 : i32 to index
    %c0_65 = arith.constant 0 : index
    %275 = vector.load %arg21[%274, %c0_65] : memref<128x128xbf16, #tpu.memory_space<vmem>>, vector<16x128xbf16>
    tpu.vector_store %arg21[%274, %c0_65], %273 {strides = array<i32>} : memref<128x128xbf16, #tpu.memory_space<vmem>>, vector<16x128xbf16>,
    %c6_i32 = arith.constant 6 : i32
    %c16_i32_66 = arith.constant 16 : i32
    %276 = arith.muli %c6_i32, %c16_i32_66 : i32
    %277 = tpu.assume_multiple %276, 16 : i32
    %278 = arith.index_cast %277 : i32 to index
    %c0_67 = arith.constant 0 : index
    %279 = vector.load %arg22[%278, %c0_67] : memref<128x384xbf16, #tpu.memory_space<vmem>>, vector<16x384xbf16>
    %280 = arith.extf %279 : vector<16x384xbf16> to vector<16x384xf32>
    %281 = arith.truncf %272 : vector<16x128xf32> to vector<16x128xbf16>
    %cst_68 = arith.constant dense<0.000000e+00> : vector<16x384xf32>
    %282 = tpu.matmul %281, %45, %cst_68 {dimension_numbers = #tpu.dot_dimension_numbers<[1], [0], [0], [1], [0, 0, 1, 1], [], []>} : vector<16x128xbf16>, vector<128x384xbf16>, vector<16x384xf32> -> vector<16x384xf32>
    %283 = vector.broadcast %46 : vector<1x384xf32> to vector<16x384xf32>
    %284 = arith.addf %282, %283 : vector<16x384xf32>
    %285 = vector.extract_strided_slice %280 {offsets = [0, 0], sizes = [16, 128], strides = [1, 1]} : vector<16x384xf32> to vector<16x128xf32>
    %286 = vector.extract_strided_slice %284 {offsets = [0, 0], sizes = [16, 128], strides = [1, 1]} : vector<16x384xf32> to vector<16x128xf32>
    %287 = arith.addf %285, %286 : vector<16x128xf32>
    %288 = arith.negf %287 : vector<16x128xf32>
    %289 = math.exp %288 : vector<16x128xf32>
    %cst_69 = arith.constant 1.000000e+00 : f32
    %290 = vector.broadcast %cst_69 : f32 to vector<16x128xf32>
    %291 = arith.addf %290, %289 : vector<16x128xf32>
    %292 = arith.divf %290, %291 : vector<16x128xf32>
    %293 = vector.extract_strided_slice %280 {offsets = [0, 128], sizes = [16, 128], strides = [1, 1]} : vector<16x384xf32> to vector<16x128xf32>
    %294 = vector.extract_strided_slice %284 {offsets = [0, 128], sizes = [16, 128], strides = [1, 1]} : vector<16x384xf32> to vector<16x128xf32>
    %295 = arith.addf %293, %294 : vector<16x128xf32>
    %296 = arith.negf %295 : vector<16x128xf32>
    %297 = math.exp %296 : vector<16x128xf32>
    %cst_70 = arith.constant 1.000000e+00 : f32
    %298 = vector.broadcast %cst_70 : f32 to vector<16x128xf32>
    %299 = arith.addf %298, %297 : vector<16x128xf32>
    %300 = arith.divf %298, %299 : vector<16x128xf32>
    %301 = vector.extract_strided_slice %280 {offsets = [0, 256], sizes = [16, 128], strides = [1, 1]} : vector<16x384xf32> to vector<16x128xf32>
    %302 = vector.extract_strided_slice %284 {offsets = [0, 256], sizes = [16, 128], strides = [1, 1]} : vector<16x384xf32> to vector<16x128xf32>
    %303 = arith.mulf %292, %302 : vector<16x128xf32>
    %304 = arith.addf %301, %303 : vector<16x128xf32>
    %305 = math.tanh %304 : vector<16x128xf32>
    %cst_71 = arith.constant 1.000000e+00 : f32
    %306 = vector.broadcast %cst_71 : f32 to vector<16x128xf32>
    %307 = arith.subf %306, %300 : vector<16x128xf32>
    %308 = arith.mulf %307, %305 : vector<16x128xf32>
    %309 = arith.mulf %300, %272 : vector<16x128xf32>
    %310 = arith.addf %308, %309 : vector<16x128xf32>
    %311 = arith.truncf %310 : vector<16x128xf32> to vector<16x128xbf16>
    %312 = arith.index_cast %277 : i32 to index
    %c0_72 = arith.constant 0 : index
    %313 = vector.load %arg21[%312, %c0_72] : memref<128x128xbf16, #tpu.memory_space<vmem>>, vector<16x128xbf16>
    tpu.vector_store %arg21[%312, %c0_72], %311 {strides = array<i32>} : memref<128x128xbf16, #tpu.memory_space<vmem>>, vector<16x128xbf16>,
    %c7_i32 = arith.constant 7 : i32
    %c16_i32_73 = arith.constant 16 : i32
    %314 = arith.muli %c7_i32, %c16_i32_73 : i32
    %315 = tpu.assume_multiple %314, 16 : i32
    %316 = arith.index_cast %315 : i32 to index
    %c0_74 = arith.constant 0 : index
    %317 = vector.load %arg22[%316, %c0_74] : memref<128x384xbf16, #tpu.memory_space<vmem>>, vector<16x384xbf16>
    %318 = arith.extf %317 : vector<16x384xbf16> to vector<16x384xf32>
    %319 = arith.truncf %310 : vector<16x128xf32> to vector<16x128xbf16>
    %cst_75 = arith.constant dense<0.000000e+00> : vector<16x384xf32>
    %320 = tpu.matmul %319, %45, %cst_75 {dimension_numbers = #tpu.dot_dimension_numbers<[1], [0], [0], [1], [0, 0, 1, 1], [], []>} : vector<16x128xbf16>, vector<128x384xbf16>, vector<16x384xf32> -> vector<16x384xf32>
    %321 = vector.broadcast %46 : vector<1x384xf32> to vector<16x384xf32>
    %322 = arith.addf %320, %321 : vector<16x384xf32>
    %323 = vector.extract_strided_slice %318 {offsets = [0, 0], sizes = [16, 128], strides = [1, 1]} : vector<16x384xf32> to vector<16x128xf32>
    %324 = vector.extract_strided_slice %322 {offsets = [0, 0], sizes = [16, 128], strides = [1, 1]} : vector<16x384xf32> to vector<16x128xf32>
    %325 = arith.addf %323, %324 : vector<16x128xf32>
    %326 = arith.negf %325 : vector<16x128xf32>
    %327 = math.exp %326 : vector<16x128xf32>
    %cst_76 = arith.constant 1.000000e+00 : f32
    %328 = vector.broadcast %cst_76 : f32 to vector<16x128xf32>
    %329 = arith.addf %328, %327 : vector<16x128xf32>
    %330 = arith.divf %328, %329 : vector<16x128xf32>
    %331 = vector.extract_strided_slice %318 {offsets = [0, 128], sizes = [16, 128], strides = [1, 1]} : vector<16x384xf32> to vector<16x128xf32>
    %332 = vector.extract_strided_slice %322 {offsets = [0, 128], sizes = [16, 128], strides = [1, 1]} : vector<16x384xf32> to vector<16x128xf32>
    %333 = arith.addf %331, %332 : vector<16x128xf32>
    %334 = arith.negf %333 : vector<16x128xf32>
    %335 = math.exp %334 : vector<16x128xf32>
    %cst_77 = arith.constant 1.000000e+00 : f32
    %336 = vector.broadcast %cst_77 : f32 to vector<16x128xf32>
    %337 = arith.addf %336, %335 : vector<16x128xf32>
    %338 = arith.divf %336, %337 : vector<16x128xf32>
    %339 = vector.extract_strided_slice %318 {offsets = [0, 256], sizes = [16, 128], strides = [1, 1]} : vector<16x384xf32> to vector<16x128xf32>
    %340 = vector.extract_strided_slice %322 {offsets = [0, 256], sizes = [16, 128], strides = [1, 1]} : vector<16x384xf32> to vector<16x128xf32>
    %341 = arith.mulf %330, %340 : vector<16x128xf32>
    %342 = arith.addf %339, %341 : vector<16x128xf32>
    %343 = math.tanh %342 : vector<16x128xf32>
    %cst_78 = arith.constant 1.000000e+00 : f32
    %344 = vector.broadcast %cst_78 : f32 to vector<16x128xf32>
    %345 = arith.subf %344, %338 : vector<16x128xf32>
    %346 = arith.mulf %345, %343 : vector<16x128xf32>
    %347 = arith.mulf %338, %310 : vector<16x128xf32>
    %348 = arith.addf %346, %347 : vector<16x128xf32>
    %349 = arith.truncf %348 : vector<16x128xf32> to vector<16x128xbf16>
    %350 = arith.index_cast %315 : i32 to index
    %c0_79 = arith.constant 0 : index
    %351 = vector.load %arg21[%350, %c0_79] : memref<128x128xbf16, #tpu.memory_space<vmem>>, vector<16x128xbf16>
    tpu.vector_store %arg21[%350, %c0_79], %349 {strides = array<i32>} : memref<128x128xbf16, #tpu.memory_space<vmem>>, vector<16x128xbf16>,
    %c8_i32 = arith.constant 8 : i32
    %c0_80 = arith.constant 0 : index
    %c0_81 = arith.constant 0 : index
    %352 = vector.load %arg18[%c0_80, %c0_81] : memref<16x128xf32, #tpu.memory_space<vmem>>, vector<16x128xf32>
    tpu.vector_store %arg18[%c0_80, %c0_81], %348 {strides = array<i32>} : memref<16x128xf32, #tpu.memory_space<vmem>>, vector<16x128xf32>,
    %c0_82 = arith.constant 0 : index
    %c0_83 = arith.constant 0 : index
    %353 = vector.load %arg21[%c0_82, %c0_83] : memref<128x128xbf16, #tpu.memory_space<vmem>>, vector<128x128xbf16>
    %c0_84 = arith.constant 0 : index
    %c0_85 = arith.constant 0 : index
    %354 = vector.load %arg9[%c0_84, %c0_85] : memref<128x384xbf16, #tpu.memory_space<vmem>>, vector<128x384xbf16>
    %cst_86 = arith.constant dense<0.000000e+00> : vector<128x384xf32>
    %355 = tpu.matmul %353, %354, %cst_86 {dimension_numbers = #tpu.dot_dimension_numbers<[1], [0], [0], [1], [0, 0, 1, 1], [], []>} : vector<128x128xbf16>, vector<128x384xbf16>, vector<128x384xf32> -> vector<128x384xf32>
    %c0_87 = arith.constant 0 : index
    %c0_88 = arith.constant 0 : index
    %356 = vector.load %arg11[%c0_87, %c0_88] : memref<1x384xf32, #tpu.memory_space<vmem>>, vector<1x384xf32>
    %357 = vector.broadcast %356 : vector<1x384xf32> to vector<128x384xf32>
    %358 = arith.addf %355, %357 : vector<128x384xf32>
    %359 = arith.truncf %358 : vector<128x384xf32> to vector<128x384xbf16>
    %c0_89 = arith.constant 0 : index
    %c0_90 = arith.constant 0 : index
    %360 = vector.load %arg22[%c0_89, %c0_90] : memref<128x384xbf16, #tpu.memory_space<vmem>>, vector<128x384xbf16>
    tpu.vector_store %arg22[%c0_89, %c0_90], %359 {strides = array<i32>} : memref<128x384xbf16, #tpu.memory_space<vmem>>, vector<128x384xbf16>,
    %c0_91 = arith.constant 0 : index
    %c0_92 = arith.constant 0 : index
    %361 = vector.load %arg10[%c0_91, %c0_92] : memref<128x384xbf16, #tpu.memory_space<vmem>>, vector<128x384xbf16>
    %c0_93 = arith.constant 0 : index
    %c0_94 = arith.constant 0 : index
    %362 = vector.load %arg12[%c0_93, %c0_94] : memref<1x384xf32, #tpu.memory_space<vmem>>, vector<1x384xf32>
    %c8_i32_95 = arith.constant 8 : i32
    %363 = arith.muli %arg1, %c8_i32_95 : i32
    %c2_i32_96 = arith.constant 2 : i32
    %364 = arith.cmpi ne, %arg1, %c2_i32_96 : i32
    %365 = arith.extui %364 : i1 to i32
    %c0_i32_97 = arith.constant 0 : i32
    %366 = arith.cmpi ne, %365, %c0_i32_97 : i32
    scf.if %366 {
      %c0_102 = arith.constant 0 : index
      %c0_103 = arith.constant 0 : index
      %373 = vector.load %arg19[%c0_102, %c0_103] : memref<16x128xf32, #tpu.memory_space<vmem>>, vector<16x128xf32>
      %c0_104 = arith.constant 0 : index
      %c0_105 = arith.constant 0 : index
      %374 = vector.load %arg20[%c0_104, %c0_105] : memref<16x128xf32, #tpu.memory_space<vmem>>, vector<16x128xf32>
      %c0_i32_106 = arith.constant 0 : i32
      %c16_i32_107 = arith.constant 16 : i32
      %375 = arith.muli %c0_i32_106, %c16_i32_107 : i32
      %376 = tpu.assume_multiple %375, 16 : i32
      %377 = arith.index_cast %376 : i32 to index
      %c0_108 = arith.constant 0 : index
      %378 = vector.load %arg22[%377, %c0_108] : memref<128x384xbf16, #tpu.memory_space<vmem>>, vector<16x384xbf16>
      %379 = arith.extf %378 : vector<16x384xbf16> to vector<16x384xf32>
      %380 = arith.truncf %373 : vector<16x128xf32> to vector<16x128xbf16>
      %cst_109 = arith.constant dense<0.000000e+00> : vector<16x384xf32>
      %381 = tpu.matmul %380, %361, %cst_109 {dimension_numbers = #tpu.dot_dimension_numbers<[1], [0], [0], [1], [0, 0, 1, 1], [], []>} : vector<16x128xbf16>, vector<128x384xbf16>, vector<16x384xf32> -> vector<16x384xf32>
      %382 = vector.broadcast %362 : vector<1x384xf32> to vector<16x384xf32>
      %383 = arith.addf %381, %382 : vector<16x384xf32>
      %384 = vector.extract_strided_slice %379 {offsets = [0, 0], sizes = [16, 128], strides = [1, 1]} : vector<16x384xf32> to vector<16x128xf32>
      %385 = vector.extract_strided_slice %383 {offsets = [0, 0], sizes = [16, 128], strides = [1, 1]} : vector<16x384xf32> to vector<16x128xf32>
      %386 = arith.addf %384, %385 : vector<16x128xf32>
      %387 = arith.negf %386 : vector<16x128xf32>
      %388 = math.exp %387 : vector<16x128xf32>
      %cst_110 = arith.constant 1.000000e+00 : f32
      %389 = vector.broadcast %cst_110 : f32 to vector<16x128xf32>
      %390 = arith.addf %389, %388 : vector<16x128xf32>
      %391 = arith.divf %389, %390 : vector<16x128xf32>
      %392 = vector.extract_strided_slice %379 {offsets = [0, 128], sizes = [16, 128], strides = [1, 1]} : vector<16x384xf32> to vector<16x128xf32>
      %393 = vector.extract_strided_slice %383 {offsets = [0, 128], sizes = [16, 128], strides = [1, 1]} : vector<16x384xf32> to vector<16x128xf32>
      %394 = arith.addf %392, %393 : vector<16x128xf32>
      %395 = arith.negf %394 : vector<16x128xf32>
      %396 = math.exp %395 : vector<16x128xf32>
      %cst_111 = arith.constant 1.000000e+00 : f32
      %397 = vector.broadcast %cst_111 : f32 to vector<16x128xf32>
      %398 = arith.addf %397, %396 : vector<16x128xf32>
      %399 = arith.divf %397, %398 : vector<16x128xf32>
      %400 = vector.extract_strided_slice %379 {offsets = [0, 256], sizes = [16, 128], strides = [1, 1]} : vector<16x384xf32> to vector<16x128xf32>
      %401 = vector.extract_strided_slice %383 {offsets = [0, 256], sizes = [16, 128], strides = [1, 1]} : vector<16x384xf32> to vector<16x128xf32>
      %402 = arith.mulf %391, %401 : vector<16x128xf32>
      %403 = arith.addf %400, %402 : vector<16x128xf32>
      %404 = math.tanh %403 : vector<16x128xf32>
      %cst_112 = arith.constant 1.000000e+00 : f32
      %405 = vector.broadcast %cst_112 : f32 to vector<16x128xf32>
      %406 = arith.subf %405, %399 : vector<16x128xf32>
      %407 = arith.mulf %406, %404 : vector<16x128xf32>
      %408 = arith.mulf %399, %373 : vector<16x128xf32>
      %409 = arith.addf %407, %408 : vector<16x128xf32>
      %410 = arith.addf %374, %409 : vector<16x128xf32>
      %c1_i32_113 = arith.constant 1 : i32
      %c16_i32_114 = arith.constant 16 : i32
      %411 = arith.muli %c1_i32_113, %c16_i32_114 : i32
      %412 = tpu.assume_multiple %411, 16 : i32
      %413 = arith.index_cast %412 : i32 to index
      %c0_115 = arith.constant 0 : index
      %414 = vector.load %arg22[%413, %c0_115] : memref<128x384xbf16, #tpu.memory_space<vmem>>, vector<16x384xbf16>
      %415 = arith.extf %414 : vector<16x384xbf16> to vector<16x384xf32>
      %416 = arith.truncf %409 : vector<16x128xf32> to vector<16x128xbf16>
      %cst_116 = arith.constant dense<0.000000e+00> : vector<16x384xf32>
      %417 = tpu.matmul %416, %361, %cst_116 {dimension_numbers = #tpu.dot_dimension_numbers<[1], [0], [0], [1], [0, 0, 1, 1], [], []>} : vector<16x128xbf16>, vector<128x384xbf16>, vector<16x384xf32> -> vector<16x384xf32>
      %418 = vector.broadcast %362 : vector<1x384xf32> to vector<16x384xf32>
      %419 = arith.addf %417, %418 : vector<16x384xf32>
      %420 = vector.extract_strided_slice %415 {offsets = [0, 0], sizes = [16, 128], strides = [1, 1]} : vector<16x384xf32> to vector<16x128xf32>
      %421 = vector.extract_strided_slice %419 {offsets = [0, 0], sizes = [16, 128], strides = [1, 1]} : vector<16x384xf32> to vector<16x128xf32>
      %422 = arith.addf %420, %421 : vector<16x128xf32>
      %423 = arith.negf %422 : vector<16x128xf32>
      %424 = math.exp %423 : vector<16x128xf32>
      %cst_117 = arith.constant 1.000000e+00 : f32
      %425 = vector.broadcast %cst_117 : f32 to vector<16x128xf32>
      %426 = arith.addf %425, %424 : vector<16x128xf32>
      %427 = arith.divf %425, %426 : vector<16x128xf32>
      %428 = vector.extract_strided_slice %415 {offsets = [0, 128], sizes = [16, 128], strides = [1, 1]} : vector<16x384xf32> to vector<16x128xf32>
      %429 = vector.extract_strided_slice %419 {offsets = [0, 128], sizes = [16, 128], strides = [1, 1]} : vector<16x384xf32> to vector<16x128xf32>
      %430 = arith.addf %428, %429 : vector<16x128xf32>
      %431 = arith.negf %430 : vector<16x128xf32>
      %432 = math.exp %431 : vector<16x128xf32>
      %cst_118 = arith.constant 1.000000e+00 : f32
      %433 = vector.broadcast %cst_118 : f32 to vector<16x128xf32>
      %434 = arith.addf %433, %432 : vector<16x128xf32>
      %435 = arith.divf %433, %434 : vector<16x128xf32>
      %436 = vector.extract_strided_slice %415 {offsets = [0, 256], sizes = [16, 128], strides = [1, 1]} : vector<16x384xf32> to vector<16x128xf32>
      %437 = vector.extract_strided_slice %419 {offsets = [0, 256], sizes = [16, 128], strides = [1, 1]} : vector<16x384xf32> to vector<16x128xf32>
      %438 = arith.mulf %427, %437 : vector<16x128xf32>
      %439 = arith.addf %436, %438 : vector<16x128xf32>
      %440 = math.tanh %439 : vector<16x128xf32>
      %cst_119 = arith.constant 1.000000e+00 : f32
      %441 = vector.broadcast %cst_119 : f32 to vector<16x128xf32>
      %442 = arith.subf %441, %435 : vector<16x128xf32>
      %443 = arith.mulf %442, %440 : vector<16x128xf32>
      %444 = arith.mulf %435, %409 : vector<16x128xf32>
      %445 = arith.addf %443, %444 : vector<16x128xf32>
      %446 = arith.addf %410, %445 : vector<16x128xf32>
      %c2_i32_120 = arith.constant 2 : i32
      %c16_i32_121 = arith.constant 16 : i32
      %447 = arith.muli %c2_i32_120, %c16_i32_121 : i32
      %448 = tpu.assume_multiple %447, 16 : i32
      %449 = arith.index_cast %448 : i32 to index
      %c0_122 = arith.constant 0 : index
      %450 = vector.load %arg22[%449, %c0_122] : memref<128x384xbf16, #tpu.memory_space<vmem>>, vector<16x384xbf16>
      %451 = arith.extf %450 : vector<16x384xbf16> to vector<16x384xf32>
      %452 = arith.truncf %445 : vector<16x128xf32> to vector<16x128xbf16>
      %cst_123 = arith.constant dense<0.000000e+00> : vector<16x384xf32>
      %453 = tpu.matmul %452, %361, %cst_123 {dimension_numbers = #tpu.dot_dimension_numbers<[1], [0], [0], [1], [0, 0, 1, 1], [], []>} : vector<16x128xbf16>, vector<128x384xbf16>, vector<16x384xf32> -> vector<16x384xf32>
      %454 = vector.broadcast %362 : vector<1x384xf32> to vector<16x384xf32>
      %455 = arith.addf %453, %454 : vector<16x384xf32>
      %456 = vector.extract_strided_slice %451 {offsets = [0, 0], sizes = [16, 128], strides = [1, 1]} : vector<16x384xf32> to vector<16x128xf32>
      %457 = vector.extract_strided_slice %455 {offsets = [0, 0], sizes = [16, 128], strides = [1, 1]} : vector<16x384xf32> to vector<16x128xf32>
      %458 = arith.addf %456, %457 : vector<16x128xf32>
      %459 = arith.negf %458 : vector<16x128xf32>
      %460 = math.exp %459 : vector<16x128xf32>
      %cst_124 = arith.constant 1.000000e+00 : f32
      %461 = vector.broadcast %cst_124 : f32 to vector<16x128xf32>
      %462 = arith.addf %461, %460 : vector<16x128xf32>
      %463 = arith.divf %461, %462 : vector<16x128xf32>
      %464 = vector.extract_strided_slice %451 {offsets = [0, 128], sizes = [16, 128], strides = [1, 1]} : vector<16x384xf32> to vector<16x128xf32>
      %465 = vector.extract_strided_slice %455 {offsets = [0, 128], sizes = [16, 128], strides = [1, 1]} : vector<16x384xf32> to vector<16x128xf32>
      %466 = arith.addf %464, %465 : vector<16x128xf32>
      %467 = arith.negf %466 : vector<16x128xf32>
      %468 = math.exp %467 : vector<16x128xf32>
      %cst_125 = arith.constant 1.000000e+00 : f32
      %469 = vector.broadcast %cst_125 : f32 to vector<16x128xf32>
      %470 = arith.addf %469, %468 : vector<16x128xf32>
      %471 = arith.divf %469, %470 : vector<16x128xf32>
      %472 = vector.extract_strided_slice %451 {offsets = [0, 256], sizes = [16, 128], strides = [1, 1]} : vector<16x384xf32> to vector<16x128xf32>
      %473 = vector.extract_strided_slice %455 {offsets = [0, 256], sizes = [16, 128], strides = [1, 1]} : vector<16x384xf32> to vector<16x128xf32>
      %474 = arith.mulf %463, %473 : vector<16x128xf32>
      %475 = arith.addf %472, %474 : vector<16x128xf32>
      %476 = math.tanh %475 : vector<16x128xf32>
      %cst_126 = arith.constant 1.000000e+00 : f32
      %477 = vector.broadcast %cst_126 : f32 to vector<16x128xf32>
      %478 = arith.subf %477, %471 : vector<16x128xf32>
      %479 = arith.mulf %478, %476 : vector<16x128xf32>
      %480 = arith.mulf %471, %445 : vector<16x128xf32>
      %481 = arith.addf %479, %480 : vector<16x128xf32>
      %482 = arith.addf %446, %481 : vector<16x128xf32>
      %c3_i32_127 = arith.constant 3 : i32
      %c16_i32_128 = arith.constant 16 : i32
      %483 = arith.muli %c3_i32_127, %c16_i32_128 : i32
      %484 = tpu.assume_multiple %483, 16 : i32
      %485 = arith.index_cast %484 : i32 to index
      %c0_129 = arith.constant 0 : index
      %486 = vector.load %arg22[%485, %c0_129] : memref<128x384xbf16, #tpu.memory_space<vmem>>, vector<16x384xbf16>
      %487 = arith.extf %486 : vector<16x384xbf16> to vector<16x384xf32>
      %488 = arith.truncf %481 : vector<16x128xf32> to vector<16x128xbf16>
      %cst_130 = arith.constant dense<0.000000e+00> : vector<16x384xf32>
      %489 = tpu.matmul %488, %361, %cst_130 {dimension_numbers = #tpu.dot_dimension_numbers<[1], [0], [0], [1], [0, 0, 1, 1], [], []>} : vector<16x128xbf16>, vector<128x384xbf16>, vector<16x384xf32> -> vector<16x384xf32>
      %490 = vector.broadcast %362 : vector<1x384xf32> to vector<16x384xf32>
      %491 = arith.addf %489, %490 : vector<16x384xf32>
      %492 = vector.extract_strided_slice %487 {offsets = [0, 0], sizes = [16, 128], strides = [1, 1]} : vector<16x384xf32> to vector<16x128xf32>
      %493 = vector.extract_strided_slice %491 {offsets = [0, 0], sizes = [16, 128], strides = [1, 1]} : vector<16x384xf32> to vector<16x128xf32>
      %494 = arith.addf %492, %493 : vector<16x128xf32>
      %495 = arith.negf %494 : vector<16x128xf32>
      %496 = math.exp %495 : vector<16x128xf32>
      %cst_131 = arith.constant 1.000000e+00 : f32
      %497 = vector.broadcast %cst_131 : f32 to vector<16x128xf32>
      %498 = arith.addf %497, %496 : vector<16x128xf32>
      %499 = arith.divf %497, %498 : vector<16x128xf32>
      %500 = vector.extract_strided_slice %487 {offsets = [0, 128], sizes = [16, 128], strides = [1, 1]} : vector<16x384xf32> to vector<16x128xf32>
      %501 = vector.extract_strided_slice %491 {offsets = [0, 128], sizes = [16, 128], strides = [1, 1]} : vector<16x384xf32> to vector<16x128xf32>
      %502 = arith.addf %500, %501 : vector<16x128xf32>
      %503 = arith.negf %502 : vector<16x128xf32>
      %504 = math.exp %503 : vector<16x128xf32>
      %cst_132 = arith.constant 1.000000e+00 : f32
      %505 = vector.broadcast %cst_132 : f32 to vector<16x128xf32>
      %506 = arith.addf %505, %504 : vector<16x128xf32>
      %507 = arith.divf %505, %506 : vector<16x128xf32>
      %508 = vector.extract_strided_slice %487 {offsets = [0, 256], sizes = [16, 128], strides = [1, 1]} : vector<16x384xf32> to vector<16x128xf32>
      %509 = vector.extract_strided_slice %491 {offsets = [0, 256], sizes = [16, 128], strides = [1, 1]} : vector<16x384xf32> to vector<16x128xf32>
      %510 = arith.mulf %499, %509 : vector<16x128xf32>
      %511 = arith.addf %508, %510 : vector<16x128xf32>
      %512 = math.tanh %511 : vector<16x128xf32>
      %cst_133 = arith.constant 1.000000e+00 : f32
      %513 = vector.broadcast %cst_133 : f32 to vector<16x128xf32>
      %514 = arith.subf %513, %507 : vector<16x128xf32>
      %515 = arith.mulf %514, %512 : vector<16x128xf32>
      %516 = arith.mulf %507, %481 : vector<16x128xf32>
      %517 = arith.addf %515, %516 : vector<16x128xf32>
      %518 = arith.addf %482, %517 : vector<16x128xf32>
      %c4_i32_134 = arith.constant 4 : i32
      %c16_i32_135 = arith.constant 16 : i32
      %519 = arith.muli %c4_i32_134, %c16_i32_135 : i32
      %520 = tpu.assume_multiple %519, 16 : i32
      %521 = arith.index_cast %520 : i32 to index
      %c0_136 = arith.constant 0 : index
      %522 = vector.load %arg22[%521, %c0_136] : memref<128x384xbf16, #tpu.memory_space<vmem>>, vector<16x384xbf16>
      %523 = arith.extf %522 : vector<16x384xbf16> to vector<16x384xf32>
      %524 = arith.truncf %517 : vector<16x128xf32> to vector<16x128xbf16>
      %cst_137 = arith.constant dense<0.000000e+00> : vector<16x384xf32>
      %525 = tpu.matmul %524, %361, %cst_137 {dimension_numbers = #tpu.dot_dimension_numbers<[1], [0], [0], [1], [0, 0, 1, 1], [], []>} : vector<16x128xbf16>, vector<128x384xbf16>, vector<16x384xf32> -> vector<16x384xf32>
      %526 = vector.broadcast %362 : vector<1x384xf32> to vector<16x384xf32>
      %527 = arith.addf %525, %526 : vector<16x384xf32>
      %528 = vector.extract_strided_slice %523 {offsets = [0, 0], sizes = [16, 128], strides = [1, 1]} : vector<16x384xf32> to vector<16x128xf32>
      %529 = vector.extract_strided_slice %527 {offsets = [0, 0], sizes = [16, 128], strides = [1, 1]} : vector<16x384xf32> to vector<16x128xf32>
      %530 = arith.addf %528, %529 : vector<16x128xf32>
      %531 = arith.negf %530 : vector<16x128xf32>
      %532 = math.exp %531 : vector<16x128xf32>
      %cst_138 = arith.constant 1.000000e+00 : f32
      %533 = vector.broadcast %cst_138 : f32 to vector<16x128xf32>
      %534 = arith.addf %533, %532 : vector<16x128xf32>
      %535 = arith.divf %533, %534 : vector<16x128xf32>
      %536 = vector.extract_strided_slice %523 {offsets = [0, 128], sizes = [16, 128], strides = [1, 1]} : vector<16x384xf32> to vector<16x128xf32>
      %537 = vector.extract_strided_slice %527 {offsets = [0, 128], sizes = [16, 128], strides = [1, 1]} : vector<16x384xf32> to vector<16x128xf32>
      %538 = arith.addf %536, %537 : vector<16x128xf32>
      %539 = arith.negf %538 : vector<16x128xf32>
      %540 = math.exp %539 : vector<16x128xf32>
      %cst_139 = arith.constant 1.000000e+00 : f32
      %541 = vector.broadcast %cst_139 : f32 to vector<16x128xf32>
      %542 = arith.addf %541, %540 : vector<16x128xf32>
      %543 = arith.divf %541, %542 : vector<16x128xf32>
      %544 = vector.extract_strided_slice %523 {offsets = [0, 256], sizes = [16, 128], strides = [1, 1]} : vector<16x384xf32> to vector<16x128xf32>
      %545 = vector.extract_strided_slice %527 {offsets = [0, 256], sizes = [16, 128], strides = [1, 1]} : vector<16x384xf32> to vector<16x128xf32>
      %546 = arith.mulf %535, %545 : vector<16x128xf32>
      %547 = arith.addf %544, %546 : vector<16x128xf32>
      %548 = math.tanh %547 : vector<16x128xf32>
      %cst_140 = arith.constant 1.000000e+00 : f32
      %549 = vector.broadcast %cst_140 : f32 to vector<16x128xf32>
      %550 = arith.subf %549, %543 : vector<16x128xf32>
      %551 = arith.mulf %550, %548 : vector<16x128xf32>
      %552 = arith.mulf %543, %517 : vector<16x128xf32>
      %553 = arith.addf %551, %552 : vector<16x128xf32>
      %554 = arith.addf %518, %553 : vector<16x128xf32>
      %c5_i32_141 = arith.constant 5 : i32
      %c16_i32_142 = arith.constant 16 : i32
      %555 = arith.muli %c5_i32_141, %c16_i32_142 : i32
      %556 = tpu.assume_multiple %555, 16 : i32
      %557 = arith.index_cast %556 : i32 to index
      %c0_143 = arith.constant 0 : index
      %558 = vector.load %arg22[%557, %c0_143] : memref<128x384xbf16, #tpu.memory_space<vmem>>, vector<16x384xbf16>
      %559 = arith.extf %558 : vector<16x384xbf16> to vector<16x384xf32>
      %560 = arith.truncf %553 : vector<16x128xf32> to vector<16x128xbf16>
      %cst_144 = arith.constant dense<0.000000e+00> : vector<16x384xf32>
      %561 = tpu.matmul %560, %361, %cst_144 {dimension_numbers = #tpu.dot_dimension_numbers<[1], [0], [0], [1], [0, 0, 1, 1], [], []>} : vector<16x128xbf16>, vector<128x384xbf16>, vector<16x384xf32> -> vector<16x384xf32>
      %562 = vector.broadcast %362 : vector<1x384xf32> to vector<16x384xf32>
      %563 = arith.addf %561, %562 : vector<16x384xf32>
      %564 = vector.extract_strided_slice %559 {offsets = [0, 0], sizes = [16, 128], strides = [1, 1]} : vector<16x384xf32> to vector<16x128xf32>
      %565 = vector.extract_strided_slice %563 {offsets = [0, 0], sizes = [16, 128], strides = [1, 1]} : vector<16x384xf32> to vector<16x128xf32>
      %566 = arith.addf %564, %565 : vector<16x128xf32>
      %567 = arith.negf %566 : vector<16x128xf32>
      %568 = math.exp %567 : vector<16x128xf32>
      %cst_145 = arith.constant 1.000000e+00 : f32
      %569 = vector.broadcast %cst_145 : f32 to vector<16x128xf32>
      %570 = arith.addf %569, %568 : vector<16x128xf32>
      %571 = arith.divf %569, %570 : vector<16x128xf32>
      %572 = vector.extract_strided_slice %559 {offsets = [0, 128], sizes = [16, 128], strides = [1, 1]} : vector<16x384xf32> to vector<16x128xf32>
      %573 = vector.extract_strided_slice %563 {offsets = [0, 128], sizes = [16, 128], strides = [1, 1]} : vector<16x384xf32> to vector<16x128xf32>
      %574 = arith.addf %572, %573 : vector<16x128xf32>
      %575 = arith.negf %574 : vector<16x128xf32>
      %576 = math.exp %575 : vector<16x128xf32>
      %cst_146 = arith.constant 1.000000e+00 : f32
      %577 = vector.broadcast %cst_146 : f32 to vector<16x128xf32>
      %578 = arith.addf %577, %576 : vector<16x128xf32>
      %579 = arith.divf %577, %578 : vector<16x128xf32>
      %580 = vector.extract_strided_slice %559 {offsets = [0, 256], sizes = [16, 128], strides = [1, 1]} : vector<16x384xf32> to vector<16x128xf32>
      %581 = vector.extract_strided_slice %563 {offsets = [0, 256], sizes = [16, 128], strides = [1, 1]} : vector<16x384xf32> to vector<16x128xf32>
      %582 = arith.mulf %571, %581 : vector<16x128xf32>
      %583 = arith.addf %580, %582 : vector<16x128xf32>
      %584 = math.tanh %583 : vector<16x128xf32>
      %cst_147 = arith.constant 1.000000e+00 : f32
      %585 = vector.broadcast %cst_147 : f32 to vector<16x128xf32>
      %586 = arith.subf %585, %579 : vector<16x128xf32>
      %587 = arith.mulf %586, %584 : vector<16x128xf32>
      %588 = arith.mulf %579, %553 : vector<16x128xf32>
      %589 = arith.addf %587, %588 : vector<16x128xf32>
      %590 = arith.addf %554, %589 : vector<16x128xf32>
      %c6_i32_148 = arith.constant 6 : i32
      %c16_i32_149 = arith.constant 16 : i32
      %591 = arith.muli %c6_i32_148, %c16_i32_149 : i32
      %592 = tpu.assume_multiple %591, 16 : i32
      %593 = arith.index_cast %592 : i32 to index
      %c0_150 = arith.constant 0 : index
      %594 = vector.load %arg22[%593, %c0_150] : memref<128x384xbf16, #tpu.memory_space<vmem>>, vector<16x384xbf16>
      %595 = arith.extf %594 : vector<16x384xbf16> to vector<16x384xf32>
      %596 = arith.truncf %589 : vector<16x128xf32> to vector<16x128xbf16>
      %cst_151 = arith.constant dense<0.000000e+00> : vector<16x384xf32>
      %597 = tpu.matmul %596, %361, %cst_151 {dimension_numbers = #tpu.dot_dimension_numbers<[1], [0], [0], [1], [0, 0, 1, 1], [], []>} : vector<16x128xbf16>, vector<128x384xbf16>, vector<16x384xf32> -> vector<16x384xf32>
      %598 = vector.broadcast %362 : vector<1x384xf32> to vector<16x384xf32>
      %599 = arith.addf %597, %598 : vector<16x384xf32>
      %600 = vector.extract_strided_slice %595 {offsets = [0, 0], sizes = [16, 128], strides = [1, 1]} : vector<16x384xf32> to vector<16x128xf32>
      %601 = vector.extract_strided_slice %599 {offsets = [0, 0], sizes = [16, 128], strides = [1, 1]} : vector<16x384xf32> to vector<16x128xf32>
      %602 = arith.addf %600, %601 : vector<16x128xf32>
      %603 = arith.negf %602 : vector<16x128xf32>
      %604 = math.exp %603 : vector<16x128xf32>
      %cst_152 = arith.constant 1.000000e+00 : f32
      %605 = vector.broadcast %cst_152 : f32 to vector<16x128xf32>
      %606 = arith.addf %605, %604 : vector<16x128xf32>
      %607 = arith.divf %605, %606 : vector<16x128xf32>
      %608 = vector.extract_strided_slice %595 {offsets = [0, 128], sizes = [16, 128], strides = [1, 1]} : vector<16x384xf32> to vector<16x128xf32>
      %609 = vector.extract_strided_slice %599 {offsets = [0, 128], sizes = [16, 128], strides = [1, 1]} : vector<16x384xf32> to vector<16x128xf32>
      %610 = arith.addf %608, %609 : vector<16x128xf32>
      %611 = arith.negf %610 : vector<16x128xf32>
      %612 = math.exp %611 : vector<16x128xf32>
      %cst_153 = arith.constant 1.000000e+00 : f32
      %613 = vector.broadcast %cst_153 : f32 to vector<16x128xf32>
      %614 = arith.addf %613, %612 : vector<16x128xf32>
      %615 = arith.divf %613, %614 : vector<16x128xf32>
      %616 = vector.extract_strided_slice %595 {offsets = [0, 256], sizes = [16, 128], strides = [1, 1]} : vector<16x384xf32> to vector<16x128xf32>
      %617 = vector.extract_strided_slice %599 {offsets = [0, 256], sizes = [16, 128], strides = [1, 1]} : vector<16x384xf32> to vector<16x128xf32>
      %618 = arith.mulf %607, %617 : vector<16x128xf32>
      %619 = arith.addf %616, %618 : vector<16x128xf32>
      %620 = math.tanh %619 : vector<16x128xf32>
      %cst_154 = arith.constant 1.000000e+00 : f32
      %621 = vector.broadcast %cst_154 : f32 to vector<16x128xf32>
      %622 = arith.subf %621, %615 : vector<16x128xf32>
      %623 = arith.mulf %622, %620 : vector<16x128xf32>
      %624 = arith.mulf %615, %589 : vector<16x128xf32>
      %625 = arith.addf %623, %624 : vector<16x128xf32>
      %626 = arith.addf %590, %625 : vector<16x128xf32>
      %c7_i32_155 = arith.constant 7 : i32
      %c16_i32_156 = arith.constant 16 : i32
      %627 = arith.muli %c7_i32_155, %c16_i32_156 : i32
      %628 = tpu.assume_multiple %627, 16 : i32
      %629 = arith.index_cast %628 : i32 to index
      %c0_157 = arith.constant 0 : index
      %630 = vector.load %arg22[%629, %c0_157] : memref<128x384xbf16, #tpu.memory_space<vmem>>, vector<16x384xbf16>
      %631 = arith.extf %630 : vector<16x384xbf16> to vector<16x384xf32>
      %632 = arith.truncf %625 : vector<16x128xf32> to vector<16x128xbf16>
      %cst_158 = arith.constant dense<0.000000e+00> : vector<16x384xf32>
      %633 = tpu.matmul %632, %361, %cst_158 {dimension_numbers = #tpu.dot_dimension_numbers<[1], [0], [0], [1], [0, 0, 1, 1], [], []>} : vector<16x128xbf16>, vector<128x384xbf16>, vector<16x384xf32> -> vector<16x384xf32>
      %634 = vector.broadcast %362 : vector<1x384xf32> to vector<16x384xf32>
      %635 = arith.addf %633, %634 : vector<16x384xf32>
      %636 = vector.extract_strided_slice %631 {offsets = [0, 0], sizes = [16, 128], strides = [1, 1]} : vector<16x384xf32> to vector<16x128xf32>
      %637 = vector.extract_strided_slice %635 {offsets = [0, 0], sizes = [16, 128], strides = [1, 1]} : vector<16x384xf32> to vector<16x128xf32>
      %638 = arith.addf %636, %637 : vector<16x128xf32>
      %639 = arith.negf %638 : vector<16x128xf32>
      %640 = math.exp %639 : vector<16x128xf32>
      %cst_159 = arith.constant 1.000000e+00 : f32
      %641 = vector.broadcast %cst_159 : f32 to vector<16x128xf32>
      %642 = arith.addf %641, %640 : vector<16x128xf32>
      %643 = arith.divf %641, %642 : vector<16x128xf32>
      %644 = vector.extract_strided_slice %631 {offsets = [0, 128], sizes = [16, 128], strides = [1, 1]} : vector<16x384xf32> to vector<16x128xf32>
      %645 = vector.extract_strided_slice %635 {offsets = [0, 128], sizes = [16, 128], strides = [1, 1]} : vector<16x384xf32> to vector<16x128xf32>
      %646 = arith.addf %644, %645 : vector<16x128xf32>
      %647 = arith.negf %646 : vector<16x128xf32>
      %648 = math.exp %647 : vector<16x128xf32>
      %cst_160 = arith.constant 1.000000e+00 : f32
      %649 = vector.broadcast %cst_160 : f32 to vector<16x128xf32>
      %650 = arith.addf %649, %648 : vector<16x128xf32>
      %651 = arith.divf %649, %650 : vector<16x128xf32>
      %652 = vector.extract_strided_slice %631 {offsets = [0, 256], sizes = [16, 128], strides = [1, 1]} : vector<16x384xf32> to vector<16x128xf32>
      %653 = vector.extract_strided_slice %635 {offsets = [0, 256], sizes = [16, 128], strides = [1, 1]} : vector<16x384xf32> to vector<16x128xf32>
      %654 = arith.mulf %643, %653 : vector<16x128xf32>
      %655 = arith.addf %652, %654 : vector<16x128xf32>
      %656 = math.tanh %655 : vector<16x128xf32>
      %cst_161 = arith.constant 1.000000e+00 : f32
      %657 = vector.broadcast %cst_161 : f32 to vector<16x128xf32>
      %658 = arith.subf %657, %651 : vector<16x128xf32>
      %659 = arith.mulf %658, %656 : vector<16x128xf32>
      %660 = arith.mulf %651, %625 : vector<16x128xf32>
      %661 = arith.addf %659, %660 : vector<16x128xf32>
      %662 = arith.addf %626, %661 : vector<16x128xf32>
      %c8_i32_162 = arith.constant 8 : i32
      %c0_163 = arith.constant 0 : index
      %c0_164 = arith.constant 0 : index
      %663 = vector.load %arg19[%c0_163, %c0_164] : memref<16x128xf32, #tpu.memory_space<vmem>>, vector<16x128xf32>
      tpu.vector_store %arg19[%c0_163, %c0_164], %661 {strides = array<i32>} : memref<16x128xf32, #tpu.memory_space<vmem>>, vector<16x128xf32>,
      %c0_165 = arith.constant 0 : index
      %c0_166 = arith.constant 0 : index
      %664 = vector.load %arg20[%c0_165, %c0_166] : memref<16x128xf32, #tpu.memory_space<vmem>>, vector<16x128xf32>
      tpu.vector_store %arg20[%c0_165, %c0_166], %662 {strides = array<i32>} : memref<16x128xf32, #tpu.memory_space<vmem>>, vector<16x128xf32>,
    } else {
    }
    %c2_i32_98 = arith.constant 2 : i32
    %367 = arith.cmpi eq, %arg1, %c2_i32_98 : i32
    %368 = arith.extui %367 : i1 to i32
    %c0_i32_99 = arith.constant 0 : i32
    %369 = arith.cmpi ne, %368, %c0_i32_99 : i32
    scf.if %369 {
      %c0_102 = arith.constant 0 : index
      %c0_103 = arith.constant 0 : index
      %373 = vector.load %arg19[%c0_102, %c0_103] : memref<16x128xf32, #tpu.memory_space<vmem>>, vector<16x128xf32>
      %c0_104 = arith.constant 0 : index
      %c0_105 = arith.constant 0 : index
      %374 = vector.load %arg20[%c0_104, %c0_105] : memref<16x128xf32, #tpu.memory_space<vmem>>, vector<16x128xf32>
      %c0_i32_106 = arith.constant 0 : i32
      %c16_i32_107 = arith.constant 16 : i32
      %375 = arith.muli %c0_i32_106, %c16_i32_107 : i32
      %376 = tpu.assume_multiple %375, 16 : i32
      %377 = arith.index_cast %376 : i32 to index
      %c0_108 = arith.constant 0 : index
      %378 = vector.load %arg22[%377, %c0_108] : memref<128x384xbf16, #tpu.memory_space<vmem>>, vector<16x384xbf16>
      %379 = arith.extf %378 : vector<16x384xbf16> to vector<16x384xf32>
      %380 = arith.truncf %373 : vector<16x128xf32> to vector<16x128xbf16>
      %cst_109 = arith.constant dense<0.000000e+00> : vector<16x384xf32>
      %381 = tpu.matmul %380, %361, %cst_109 {dimension_numbers = #tpu.dot_dimension_numbers<[1], [0], [0], [1], [0, 0, 1, 1], [], []>} : vector<16x128xbf16>, vector<128x384xbf16>, vector<16x384xf32> -> vector<16x384xf32>
      %382 = vector.broadcast %362 : vector<1x384xf32> to vector<16x384xf32>
      %383 = arith.addf %381, %382 : vector<16x384xf32>
      %384 = vector.extract_strided_slice %379 {offsets = [0, 0], sizes = [16, 128], strides = [1, 1]} : vector<16x384xf32> to vector<16x128xf32>
      %385 = vector.extract_strided_slice %383 {offsets = [0, 0], sizes = [16, 128], strides = [1, 1]} : vector<16x384xf32> to vector<16x128xf32>
      %386 = arith.addf %384, %385 : vector<16x128xf32>
      %387 = arith.negf %386 : vector<16x128xf32>
      %388 = math.exp %387 : vector<16x128xf32>
      %cst_110 = arith.constant 1.000000e+00 : f32
      %389 = vector.broadcast %cst_110 : f32 to vector<16x128xf32>
      %390 = arith.addf %389, %388 : vector<16x128xf32>
      %391 = arith.divf %389, %390 : vector<16x128xf32>
      %392 = vector.extract_strided_slice %379 {offsets = [0, 128], sizes = [16, 128], strides = [1, 1]} : vector<16x384xf32> to vector<16x128xf32>
      %393 = vector.extract_strided_slice %383 {offsets = [0, 128], sizes = [16, 128], strides = [1, 1]} : vector<16x384xf32> to vector<16x128xf32>
      %394 = arith.addf %392, %393 : vector<16x128xf32>
      %395 = arith.negf %394 : vector<16x128xf32>
      %396 = math.exp %395 : vector<16x128xf32>
      %cst_111 = arith.constant 1.000000e+00 : f32
      %397 = vector.broadcast %cst_111 : f32 to vector<16x128xf32>
      %398 = arith.addf %397, %396 : vector<16x128xf32>
      %399 = arith.divf %397, %398 : vector<16x128xf32>
      %400 = vector.extract_strided_slice %379 {offsets = [0, 256], sizes = [16, 128], strides = [1, 1]} : vector<16x384xf32> to vector<16x128xf32>
      %401 = vector.extract_strided_slice %383 {offsets = [0, 256], sizes = [16, 128], strides = [1, 1]} : vector<16x384xf32> to vector<16x128xf32>
      %402 = arith.mulf %391, %401 : vector<16x128xf32>
      %403 = arith.addf %400, %402 : vector<16x128xf32>
      %404 = math.tanh %403 : vector<16x128xf32>
      %cst_112 = arith.constant 1.000000e+00 : f32
      %405 = vector.broadcast %cst_112 : f32 to vector<16x128xf32>
      %406 = arith.subf %405, %399 : vector<16x128xf32>
      %407 = arith.mulf %406, %404 : vector<16x128xf32>
      %408 = arith.mulf %399, %373 : vector<16x128xf32>
      %409 = arith.addf %407, %408 : vector<16x128xf32>
      %410 = arith.addi %363, %c0_i32_106 : i32
      %c20_i32 = arith.constant 20 : i32
      %411 = arith.cmpi slt, %410, %c20_i32 : i32
      %412 = arith.extui %411 : i1 to i32
      %413 = arith.sitofp %412 : i32 to f32
      %414 = vector.broadcast %413 : f32 to vector<16x128xf32>
      %415 = arith.mulf %409, %414 : vector<16x128xf32>
      %416 = arith.addf %374, %415 : vector<16x128xf32>
      %c1_i32_113 = arith.constant 1 : i32
      %c16_i32_114 = arith.constant 16 : i32
      %417 = arith.muli %c1_i32_113, %c16_i32_114 : i32
      %418 = tpu.assume_multiple %417, 16 : i32
      %419 = arith.index_cast %418 : i32 to index
      %c0_115 = arith.constant 0 : index
      %420 = vector.load %arg22[%419, %c0_115] : memref<128x384xbf16, #tpu.memory_space<vmem>>, vector<16x384xbf16>
      %421 = arith.extf %420 : vector<16x384xbf16> to vector<16x384xf32>
      %422 = arith.truncf %409 : vector<16x128xf32> to vector<16x128xbf16>
      %cst_116 = arith.constant dense<0.000000e+00> : vector<16x384xf32>
      %423 = tpu.matmul %422, %361, %cst_116 {dimension_numbers = #tpu.dot_dimension_numbers<[1], [0], [0], [1], [0, 0, 1, 1], [], []>} : vector<16x128xbf16>, vector<128x384xbf16>, vector<16x384xf32> -> vector<16x384xf32>
      %424 = vector.broadcast %362 : vector<1x384xf32> to vector<16x384xf32>
      %425 = arith.addf %423, %424 : vector<16x384xf32>
      %426 = vector.extract_strided_slice %421 {offsets = [0, 0], sizes = [16, 128], strides = [1, 1]} : vector<16x384xf32> to vector<16x128xf32>
      %427 = vector.extract_strided_slice %425 {offsets = [0, 0], sizes = [16, 128], strides = [1, 1]} : vector<16x384xf32> to vector<16x128xf32>
      %428 = arith.addf %426, %427 : vector<16x128xf32>
      %429 = arith.negf %428 : vector<16x128xf32>
      %430 = math.exp %429 : vector<16x128xf32>
      %cst_117 = arith.constant 1.000000e+00 : f32
      %431 = vector.broadcast %cst_117 : f32 to vector<16x128xf32>
      %432 = arith.addf %431, %430 : vector<16x128xf32>
      %433 = arith.divf %431, %432 : vector<16x128xf32>
      %434 = vector.extract_strided_slice %421 {offsets = [0, 128], sizes = [16, 128], strides = [1, 1]} : vector<16x384xf32> to vector<16x128xf32>
      %435 = vector.extract_strided_slice %425 {offsets = [0, 128], sizes = [16, 128], strides = [1, 1]} : vector<16x384xf32> to vector<16x128xf32>
      %436 = arith.addf %434, %435 : vector<16x128xf32>
      %437 = arith.negf %436 : vector<16x128xf32>
      %438 = math.exp %437 : vector<16x128xf32>
      %cst_118 = arith.constant 1.000000e+00 : f32
      %439 = vector.broadcast %cst_118 : f32 to vector<16x128xf32>
      %440 = arith.addf %439, %438 : vector<16x128xf32>
      %441 = arith.divf %439, %440 : vector<16x128xf32>
      %442 = vector.extract_strided_slice %421 {offsets = [0, 256], sizes = [16, 128], strides = [1, 1]} : vector<16x384xf32> to vector<16x128xf32>
      %443 = vector.extract_strided_slice %425 {offsets = [0, 256], sizes = [16, 128], strides = [1, 1]} : vector<16x384xf32> to vector<16x128xf32>
      %444 = arith.mulf %433, %443 : vector<16x128xf32>
      %445 = arith.addf %442, %444 : vector<16x128xf32>
      %446 = math.tanh %445 : vector<16x128xf32>
      %cst_119 = arith.constant 1.000000e+00 : f32
      %447 = vector.broadcast %cst_119 : f32 to vector<16x128xf32>
      %448 = arith.subf %447, %441 : vector<16x128xf32>
      %449 = arith.mulf %448, %446 : vector<16x128xf32>
      %450 = arith.mulf %441, %409 : vector<16x128xf32>
      %451 = arith.addf %449, %450 : vector<16x128xf32>
      %452 = arith.addi %363, %c1_i32_113 : i32
      %c20_i32_120 = arith.constant 20 : i32
      %453 = arith.cmpi slt, %452, %c20_i32_120 : i32
      %454 = arith.extui %453 : i1 to i32
      %455 = arith.sitofp %454 : i32 to f32
      %456 = vector.broadcast %455 : f32 to vector<16x128xf32>
      %457 = arith.mulf %451, %456 : vector<16x128xf32>
      %458 = arith.addf %416, %457 : vector<16x128xf32>
      %c2_i32_121 = arith.constant 2 : i32
      %c16_i32_122 = arith.constant 16 : i32
      %459 = arith.muli %c2_i32_121, %c16_i32_122 : i32
      %460 = tpu.assume_multiple %459, 16 : i32
      %461 = arith.index_cast %460 : i32 to index
      %c0_123 = arith.constant 0 : index
      %462 = vector.load %arg22[%461, %c0_123] : memref<128x384xbf16, #tpu.memory_space<vmem>>, vector<16x384xbf16>
      %463 = arith.extf %462 : vector<16x384xbf16> to vector<16x384xf32>
      %464 = arith.truncf %451 : vector<16x128xf32> to vector<16x128xbf16>
      %cst_124 = arith.constant dense<0.000000e+00> : vector<16x384xf32>
      %465 = tpu.matmul %464, %361, %cst_124 {dimension_numbers = #tpu.dot_dimension_numbers<[1], [0], [0], [1], [0, 0, 1, 1], [], []>} : vector<16x128xbf16>, vector<128x384xbf16>, vector<16x384xf32> -> vector<16x384xf32>
      %466 = vector.broadcast %362 : vector<1x384xf32> to vector<16x384xf32>
      %467 = arith.addf %465, %466 : vector<16x384xf32>
      %468 = vector.extract_strided_slice %463 {offsets = [0, 0], sizes = [16, 128], strides = [1, 1]} : vector<16x384xf32> to vector<16x128xf32>
      %469 = vector.extract_strided_slice %467 {offsets = [0, 0], sizes = [16, 128], strides = [1, 1]} : vector<16x384xf32> to vector<16x128xf32>
      %470 = arith.addf %468, %469 : vector<16x128xf32>
      %471 = arith.negf %470 : vector<16x128xf32>
      %472 = math.exp %471 : vector<16x128xf32>
      %cst_125 = arith.constant 1.000000e+00 : f32
      %473 = vector.broadcast %cst_125 : f32 to vector<16x128xf32>
      %474 = arith.addf %473, %472 : vector<16x128xf32>
      %475 = arith.divf %473, %474 : vector<16x128xf32>
      %476 = vector.extract_strided_slice %463 {offsets = [0, 128], sizes = [16, 128], strides = [1, 1]} : vector<16x384xf32> to vector<16x128xf32>
      %477 = vector.extract_strided_slice %467 {offsets = [0, 128], sizes = [16, 128], strides = [1, 1]} : vector<16x384xf32> to vector<16x128xf32>
      %478 = arith.addf %476, %477 : vector<16x128xf32>
      %479 = arith.negf %478 : vector<16x128xf32>
      %480 = math.exp %479 : vector<16x128xf32>
      %cst_126 = arith.constant 1.000000e+00 : f32
      %481 = vector.broadcast %cst_126 : f32 to vector<16x128xf32>
      %482 = arith.addf %481, %480 : vector<16x128xf32>
      %483 = arith.divf %481, %482 : vector<16x128xf32>
      %484 = vector.extract_strided_slice %463 {offsets = [0, 256], sizes = [16, 128], strides = [1, 1]} : vector<16x384xf32> to vector<16x128xf32>
      %485 = vector.extract_strided_slice %467 {offsets = [0, 256], sizes = [16, 128], strides = [1, 1]} : vector<16x384xf32> to vector<16x128xf32>
      %486 = arith.mulf %475, %485 : vector<16x128xf32>
      %487 = arith.addf %484, %486 : vector<16x128xf32>
      %488 = math.tanh %487 : vector<16x128xf32>
      %cst_127 = arith.constant 1.000000e+00 : f32
      %489 = vector.broadcast %cst_127 : f32 to vector<16x128xf32>
      %490 = arith.subf %489, %483 : vector<16x128xf32>
      %491 = arith.mulf %490, %488 : vector<16x128xf32>
      %492 = arith.mulf %483, %451 : vector<16x128xf32>
      %493 = arith.addf %491, %492 : vector<16x128xf32>
      %494 = arith.addi %363, %c2_i32_121 : i32
      %c20_i32_128 = arith.constant 20 : i32
      %495 = arith.cmpi slt, %494, %c20_i32_128 : i32
      %496 = arith.extui %495 : i1 to i32
      %497 = arith.sitofp %496 : i32 to f32
      %498 = vector.broadcast %497 : f32 to vector<16x128xf32>
      %499 = arith.mulf %493, %498 : vector<16x128xf32>
      %500 = arith.addf %458, %499 : vector<16x128xf32>
      %c3_i32_129 = arith.constant 3 : i32
      %c16_i32_130 = arith.constant 16 : i32
      %501 = arith.muli %c3_i32_129, %c16_i32_130 : i32
      %502 = tpu.assume_multiple %501, 16 : i32
      %503 = arith.index_cast %502 : i32 to index
      %c0_131 = arith.constant 0 : index
      %504 = vector.load %arg22[%503, %c0_131] : memref<128x384xbf16, #tpu.memory_space<vmem>>, vector<16x384xbf16>
      %505 = arith.extf %504 : vector<16x384xbf16> to vector<16x384xf32>
      %506 = arith.truncf %493 : vector<16x128xf32> to vector<16x128xbf16>
      %cst_132 = arith.constant dense<0.000000e+00> : vector<16x384xf32>
      %507 = tpu.matmul %506, %361, %cst_132 {dimension_numbers = #tpu.dot_dimension_numbers<[1], [0], [0], [1], [0, 0, 1, 1], [], []>} : vector<16x128xbf16>, vector<128x384xbf16>, vector<16x384xf32> -> vector<16x384xf32>
      %508 = vector.broadcast %362 : vector<1x384xf32> to vector<16x384xf32>
      %509 = arith.addf %507, %508 : vector<16x384xf32>
      %510 = vector.extract_strided_slice %505 {offsets = [0, 0], sizes = [16, 128], strides = [1, 1]} : vector<16x384xf32> to vector<16x128xf32>
      %511 = vector.extract_strided_slice %509 {offsets = [0, 0], sizes = [16, 128], strides = [1, 1]} : vector<16x384xf32> to vector<16x128xf32>
      %512 = arith.addf %510, %511 : vector<16x128xf32>
      %513 = arith.negf %512 : vector<16x128xf32>
      %514 = math.exp %513 : vector<16x128xf32>
      %cst_133 = arith.constant 1.000000e+00 : f32
      %515 = vector.broadcast %cst_133 : f32 to vector<16x128xf32>
      %516 = arith.addf %515, %514 : vector<16x128xf32>
      %517 = arith.divf %515, %516 : vector<16x128xf32>
      %518 = vector.extract_strided_slice %505 {offsets = [0, 128], sizes = [16, 128], strides = [1, 1]} : vector<16x384xf32> to vector<16x128xf32>
      %519 = vector.extract_strided_slice %509 {offsets = [0, 128], sizes = [16, 128], strides = [1, 1]} : vector<16x384xf32> to vector<16x128xf32>
      %520 = arith.addf %518, %519 : vector<16x128xf32>
      %521 = arith.negf %520 : vector<16x128xf32>
      %522 = math.exp %521 : vector<16x128xf32>
      %cst_134 = arith.constant 1.000000e+00 : f32
      %523 = vector.broadcast %cst_134 : f32 to vector<16x128xf32>
      %524 = arith.addf %523, %522 : vector<16x128xf32>
      %525 = arith.divf %523, %524 : vector<16x128xf32>
      %526 = vector.extract_strided_slice %505 {offsets = [0, 256], sizes = [16, 128], strides = [1, 1]} : vector<16x384xf32> to vector<16x128xf32>
      %527 = vector.extract_strided_slice %509 {offsets = [0, 256], sizes = [16, 128], strides = [1, 1]} : vector<16x384xf32> to vector<16x128xf32>
      %528 = arith.mulf %517, %527 : vector<16x128xf32>
      %529 = arith.addf %526, %528 : vector<16x128xf32>
      %530 = math.tanh %529 : vector<16x128xf32>
      %cst_135 = arith.constant 1.000000e+00 : f32
      %531 = vector.broadcast %cst_135 : f32 to vector<16x128xf32>
      %532 = arith.subf %531, %525 : vector<16x128xf32>
      %533 = arith.mulf %532, %530 : vector<16x128xf32>
      %534 = arith.mulf %525, %493 : vector<16x128xf32>
      %535 = arith.addf %533, %534 : vector<16x128xf32>
      %536 = arith.addi %363, %c3_i32_129 : i32
      %c20_i32_136 = arith.constant 20 : i32
      %537 = arith.cmpi slt, %536, %c20_i32_136 : i32
      %538 = arith.extui %537 : i1 to i32
      %539 = arith.sitofp %538 : i32 to f32
      %540 = vector.broadcast %539 : f32 to vector<16x128xf32>
      %541 = arith.mulf %535, %540 : vector<16x128xf32>
      %542 = arith.addf %500, %541 : vector<16x128xf32>
      %c4_i32_137 = arith.constant 4 : i32
      %c16_i32_138 = arith.constant 16 : i32
      %543 = arith.muli %c4_i32_137, %c16_i32_138 : i32
      %544 = tpu.assume_multiple %543, 16 : i32
      %545 = arith.index_cast %544 : i32 to index
      %c0_139 = arith.constant 0 : index
      %546 = vector.load %arg22[%545, %c0_139] : memref<128x384xbf16, #tpu.memory_space<vmem>>, vector<16x384xbf16>
      %547 = arith.extf %546 : vector<16x384xbf16> to vector<16x384xf32>
      %548 = arith.truncf %535 : vector<16x128xf32> to vector<16x128xbf16>
      %cst_140 = arith.constant dense<0.000000e+00> : vector<16x384xf32>
      %549 = tpu.matmul %548, %361, %cst_140 {dimension_numbers = #tpu.dot_dimension_numbers<[1], [0], [0], [1], [0, 0, 1, 1], [], []>} : vector<16x128xbf16>, vector<128x384xbf16>, vector<16x384xf32> -> vector<16x384xf32>
      %550 = vector.broadcast %362 : vector<1x384xf32> to vector<16x384xf32>
      %551 = arith.addf %549, %550 : vector<16x384xf32>
      %552 = vector.extract_strided_slice %547 {offsets = [0, 0], sizes = [16, 128], strides = [1, 1]} : vector<16x384xf32> to vector<16x128xf32>
      %553 = vector.extract_strided_slice %551 {offsets = [0, 0], sizes = [16, 128], strides = [1, 1]} : vector<16x384xf32> to vector<16x128xf32>
      %554 = arith.addf %552, %553 : vector<16x128xf32>
      %555 = arith.negf %554 : vector<16x128xf32>
      %556 = math.exp %555 : vector<16x128xf32>
      %cst_141 = arith.constant 1.000000e+00 : f32
      %557 = vector.broadcast %cst_141 : f32 to vector<16x128xf32>
      %558 = arith.addf %557, %556 : vector<16x128xf32>
      %559 = arith.divf %557, %558 : vector<16x128xf32>
      %560 = vector.extract_strided_slice %547 {offsets = [0, 128], sizes = [16, 128], strides = [1, 1]} : vector<16x384xf32> to vector<16x128xf32>
      %561 = vector.extract_strided_slice %551 {offsets = [0, 128], sizes = [16, 128], strides = [1, 1]} : vector<16x384xf32> to vector<16x128xf32>
      %562 = arith.addf %560, %561 : vector<16x128xf32>
      %563 = arith.negf %562 : vector<16x128xf32>
      %564 = math.exp %563 : vector<16x128xf32>
      %cst_142 = arith.constant 1.000000e+00 : f32
      %565 = vector.broadcast %cst_142 : f32 to vector<16x128xf32>
      %566 = arith.addf %565, %564 : vector<16x128xf32>
      %567 = arith.divf %565, %566 : vector<16x128xf32>
      %568 = vector.extract_strided_slice %547 {offsets = [0, 256], sizes = [16, 128], strides = [1, 1]} : vector<16x384xf32> to vector<16x128xf32>
      %569 = vector.extract_strided_slice %551 {offsets = [0, 256], sizes = [16, 128], strides = [1, 1]} : vector<16x384xf32> to vector<16x128xf32>
      %570 = arith.mulf %559, %569 : vector<16x128xf32>
      %571 = arith.addf %568, %570 : vector<16x128xf32>
      %572 = math.tanh %571 : vector<16x128xf32>
      %cst_143 = arith.constant 1.000000e+00 : f32
      %573 = vector.broadcast %cst_143 : f32 to vector<16x128xf32>
      %574 = arith.subf %573, %567 : vector<16x128xf32>
      %575 = arith.mulf %574, %572 : vector<16x128xf32>
      %576 = arith.mulf %567, %535 : vector<16x128xf32>
      %577 = arith.addf %575, %576 : vector<16x128xf32>
      %578 = arith.addi %363, %c4_i32_137 : i32
      %c20_i32_144 = arith.constant 20 : i32
      %579 = arith.cmpi slt, %578, %c20_i32_144 : i32
      %580 = arith.extui %579 : i1 to i32
      %581 = arith.sitofp %580 : i32 to f32
      %582 = vector.broadcast %581 : f32 to vector<16x128xf32>
      %583 = arith.mulf %577, %582 : vector<16x128xf32>
      %584 = arith.addf %542, %583 : vector<16x128xf32>
      %c5_i32_145 = arith.constant 5 : i32
      %c16_i32_146 = arith.constant 16 : i32
      %585 = arith.muli %c5_i32_145, %c16_i32_146 : i32
      %586 = tpu.assume_multiple %585, 16 : i32
      %587 = arith.index_cast %586 : i32 to index
      %c0_147 = arith.constant 0 : index
      %588 = vector.load %arg22[%587, %c0_147] : memref<128x384xbf16, #tpu.memory_space<vmem>>, vector<16x384xbf16>
      %589 = arith.extf %588 : vector<16x384xbf16> to vector<16x384xf32>
      %590 = arith.truncf %577 : vector<16x128xf32> to vector<16x128xbf16>
      %cst_148 = arith.constant dense<0.000000e+00> : vector<16x384xf32>
      %591 = tpu.matmul %590, %361, %cst_148 {dimension_numbers = #tpu.dot_dimension_numbers<[1], [0], [0], [1], [0, 0, 1, 1], [], []>} : vector<16x128xbf16>, vector<128x384xbf16>, vector<16x384xf32> -> vector<16x384xf32>
      %592 = vector.broadcast %362 : vector<1x384xf32> to vector<16x384xf32>
      %593 = arith.addf %591, %592 : vector<16x384xf32>
      %594 = vector.extract_strided_slice %589 {offsets = [0, 0], sizes = [16, 128], strides = [1, 1]} : vector<16x384xf32> to vector<16x128xf32>
      %595 = vector.extract_strided_slice %593 {offsets = [0, 0], sizes = [16, 128], strides = [1, 1]} : vector<16x384xf32> to vector<16x128xf32>
      %596 = arith.addf %594, %595 : vector<16x128xf32>
      %597 = arith.negf %596 : vector<16x128xf32>
      %598 = math.exp %597 : vector<16x128xf32>
      %cst_149 = arith.constant 1.000000e+00 : f32
      %599 = vector.broadcast %cst_149 : f32 to vector<16x128xf32>
      %600 = arith.addf %599, %598 : vector<16x128xf32>
      %601 = arith.divf %599, %600 : vector<16x128xf32>
      %602 = vector.extract_strided_slice %589 {offsets = [0, 128], sizes = [16, 128], strides = [1, 1]} : vector<16x384xf32> to vector<16x128xf32>
      %603 = vector.extract_strided_slice %593 {offsets = [0, 128], sizes = [16, 128], strides = [1, 1]} : vector<16x384xf32> to vector<16x128xf32>
      %604 = arith.addf %602, %603 : vector<16x128xf32>
      %605 = arith.negf %604 : vector<16x128xf32>
      %606 = math.exp %605 : vector<16x128xf32>
      %cst_150 = arith.constant 1.000000e+00 : f32
      %607 = vector.broadcast %cst_150 : f32 to vector<16x128xf32>
      %608 = arith.addf %607, %606 : vector<16x128xf32>
      %609 = arith.divf %607, %608 : vector<16x128xf32>
      %610 = vector.extract_strided_slice %589 {offsets = [0, 256], sizes = [16, 128], strides = [1, 1]} : vector<16x384xf32> to vector<16x128xf32>
      %611 = vector.extract_strided_slice %593 {offsets = [0, 256], sizes = [16, 128], strides = [1, 1]} : vector<16x384xf32> to vector<16x128xf32>
      %612 = arith.mulf %601, %611 : vector<16x128xf32>
      %613 = arith.addf %610, %612 : vector<16x128xf32>
      %614 = math.tanh %613 : vector<16x128xf32>
      %cst_151 = arith.constant 1.000000e+00 : f32
      %615 = vector.broadcast %cst_151 : f32 to vector<16x128xf32>
      %616 = arith.subf %615, %609 : vector<16x128xf32>
      %617 = arith.mulf %616, %614 : vector<16x128xf32>
      %618 = arith.mulf %609, %577 : vector<16x128xf32>
      %619 = arith.addf %617, %618 : vector<16x128xf32>
      %620 = arith.addi %363, %c5_i32_145 : i32
      %c20_i32_152 = arith.constant 20 : i32
      %621 = arith.cmpi slt, %620, %c20_i32_152 : i32
      %622 = arith.extui %621 : i1 to i32
      %623 = arith.sitofp %622 : i32 to f32
      %624 = vector.broadcast %623 : f32 to vector<16x128xf32>
      %625 = arith.mulf %619, %624 : vector<16x128xf32>
      %626 = arith.addf %584, %625 : vector<16x128xf32>
      %c6_i32_153 = arith.constant 6 : i32
      %c16_i32_154 = arith.constant 16 : i32
      %627 = arith.muli %c6_i32_153, %c16_i32_154 : i32
      %628 = tpu.assume_multiple %627, 16 : i32
      %629 = arith.index_cast %628 : i32 to index
      %c0_155 = arith.constant 0 : index
      %630 = vector.load %arg22[%629, %c0_155] : memref<128x384xbf16, #tpu.memory_space<vmem>>, vector<16x384xbf16>
      %631 = arith.extf %630 : vector<16x384xbf16> to vector<16x384xf32>
      %632 = arith.truncf %619 : vector<16x128xf32> to vector<16x128xbf16>
      %cst_156 = arith.constant dense<0.000000e+00> : vector<16x384xf32>
      %633 = tpu.matmul %632, %361, %cst_156 {dimension_numbers = #tpu.dot_dimension_numbers<[1], [0], [0], [1], [0, 0, 1, 1], [], []>} : vector<16x128xbf16>, vector<128x384xbf16>, vector<16x384xf32> -> vector<16x384xf32>
      %634 = vector.broadcast %362 : vector<1x384xf32> to vector<16x384xf32>
      %635 = arith.addf %633, %634 : vector<16x384xf32>
      %636 = vector.extract_strided_slice %631 {offsets = [0, 0], sizes = [16, 128], strides = [1, 1]} : vector<16x384xf32> to vector<16x128xf32>
      %637 = vector.extract_strided_slice %635 {offsets = [0, 0], sizes = [16, 128], strides = [1, 1]} : vector<16x384xf32> to vector<16x128xf32>
      %638 = arith.addf %636, %637 : vector<16x128xf32>
      %639 = arith.negf %638 : vector<16x128xf32>
      %640 = math.exp %639 : vector<16x128xf32>
      %cst_157 = arith.constant 1.000000e+00 : f32
      %641 = vector.broadcast %cst_157 : f32 to vector<16x128xf32>
      %642 = arith.addf %641, %640 : vector<16x128xf32>
      %643 = arith.divf %641, %642 : vector<16x128xf32>
      %644 = vector.extract_strided_slice %631 {offsets = [0, 128], sizes = [16, 128], strides = [1, 1]} : vector<16x384xf32> to vector<16x128xf32>
      %645 = vector.extract_strided_slice %635 {offsets = [0, 128], sizes = [16, 128], strides = [1, 1]} : vector<16x384xf32> to vector<16x128xf32>
      %646 = arith.addf %644, %645 : vector<16x128xf32>
      %647 = arith.negf %646 : vector<16x128xf32>
      %648 = math.exp %647 : vector<16x128xf32>
      %cst_158 = arith.constant 1.000000e+00 : f32
      %649 = vector.broadcast %cst_158 : f32 to vector<16x128xf32>
      %650 = arith.addf %649, %648 : vector<16x128xf32>
      %651 = arith.divf %649, %650 : vector<16x128xf32>
      %652 = vector.extract_strided_slice %631 {offsets = [0, 256], sizes = [16, 128], strides = [1, 1]} : vector<16x384xf32> to vector<16x128xf32>
      %653 = vector.extract_strided_slice %635 {offsets = [0, 256], sizes = [16, 128], strides = [1, 1]} : vector<16x384xf32> to vector<16x128xf32>
      %654 = arith.mulf %643, %653 : vector<16x128xf32>
      %655 = arith.addf %652, %654 : vector<16x128xf32>
      %656 = math.tanh %655 : vector<16x128xf32>
      %cst_159 = arith.constant 1.000000e+00 : f32
      %657 = vector.broadcast %cst_159 : f32 to vector<16x128xf32>
      %658 = arith.subf %657, %651 : vector<16x128xf32>
      %659 = arith.mulf %658, %656 : vector<16x128xf32>
      %660 = arith.mulf %651, %619 : vector<16x128xf32>
      %661 = arith.addf %659, %660 : vector<16x128xf32>
      %662 = arith.addi %363, %c6_i32_153 : i32
      %c20_i32_160 = arith.constant 20 : i32
      %663 = arith.cmpi slt, %662, %c20_i32_160 : i32
      %664 = arith.extui %663 : i1 to i32
      %665 = arith.sitofp %664 : i32 to f32
      %666 = vector.broadcast %665 : f32 to vector<16x128xf32>
      %667 = arith.mulf %661, %666 : vector<16x128xf32>
      %668 = arith.addf %626, %667 : vector<16x128xf32>
      %c7_i32_161 = arith.constant 7 : i32
      %c16_i32_162 = arith.constant 16 : i32
      %669 = arith.muli %c7_i32_161, %c16_i32_162 : i32
      %670 = tpu.assume_multiple %669, 16 : i32
      %671 = arith.index_cast %670 : i32 to index
      %c0_163 = arith.constant 0 : index
      %672 = vector.load %arg22[%671, %c0_163] : memref<128x384xbf16, #tpu.memory_space<vmem>>, vector<16x384xbf16>
      %673 = arith.extf %672 : vector<16x384xbf16> to vector<16x384xf32>
      %674 = arith.truncf %661 : vector<16x128xf32> to vector<16x128xbf16>
      %cst_164 = arith.constant dense<0.000000e+00> : vector<16x384xf32>
      %675 = tpu.matmul %674, %361, %cst_164 {dimension_numbers = #tpu.dot_dimension_numbers<[1], [0], [0], [1], [0, 0, 1, 1], [], []>} : vector<16x128xbf16>, vector<128x384xbf16>, vector<16x384xf32> -> vector<16x384xf32>
      %676 = vector.broadcast %362 : vector<1x384xf32> to vector<16x384xf32>
      %677 = arith.addf %675, %676 : vector<16x384xf32>
      %678 = vector.extract_strided_slice %673 {offsets = [0, 0], sizes = [16, 128], strides = [1, 1]} : vector<16x384xf32> to vector<16x128xf32>
      %679 = vector.extract_strided_slice %677 {offsets = [0, 0], sizes = [16, 128], strides = [1, 1]} : vector<16x384xf32> to vector<16x128xf32>
      %680 = arith.addf %678, %679 : vector<16x128xf32>
      %681 = arith.negf %680 : vector<16x128xf32>
      %682 = math.exp %681 : vector<16x128xf32>
      %cst_165 = arith.constant 1.000000e+00 : f32
      %683 = vector.broadcast %cst_165 : f32 to vector<16x128xf32>
      %684 = arith.addf %683, %682 : vector<16x128xf32>
      %685 = arith.divf %683, %684 : vector<16x128xf32>
      %686 = vector.extract_strided_slice %673 {offsets = [0, 128], sizes = [16, 128], strides = [1, 1]} : vector<16x384xf32> to vector<16x128xf32>
      %687 = vector.extract_strided_slice %677 {offsets = [0, 128], sizes = [16, 128], strides = [1, 1]} : vector<16x384xf32> to vector<16x128xf32>
      %688 = arith.addf %686, %687 : vector<16x128xf32>
      %689 = arith.negf %688 : vector<16x128xf32>
      %690 = math.exp %689 : vector<16x128xf32>
      %cst_166 = arith.constant 1.000000e+00 : f32
      %691 = vector.broadcast %cst_166 : f32 to vector<16x128xf32>
      %692 = arith.addf %691, %690 : vector<16x128xf32>
      %693 = arith.divf %691, %692 : vector<16x128xf32>
      %694 = vector.extract_strided_slice %673 {offsets = [0, 256], sizes = [16, 128], strides = [1, 1]} : vector<16x384xf32> to vector<16x128xf32>
      %695 = vector.extract_strided_slice %677 {offsets = [0, 256], sizes = [16, 128], strides = [1, 1]} : vector<16x384xf32> to vector<16x128xf32>
      %696 = arith.mulf %685, %695 : vector<16x128xf32>
      %697 = arith.addf %694, %696 : vector<16x128xf32>
      %698 = math.tanh %697 : vector<16x128xf32>
      %cst_167 = arith.constant 1.000000e+00 : f32
      %699 = vector.broadcast %cst_167 : f32 to vector<16x128xf32>
      %700 = arith.subf %699, %693 : vector<16x128xf32>
      %701 = arith.mulf %700, %698 : vector<16x128xf32>
      %702 = arith.mulf %693, %661 : vector<16x128xf32>
      %703 = arith.addf %701, %702 : vector<16x128xf32>
      %704 = arith.addi %363, %c7_i32_161 : i32
      %c20_i32_168 = arith.constant 20 : i32
      %705 = arith.cmpi slt, %704, %c20_i32_168 : i32
      %706 = arith.extui %705 : i1 to i32
      %707 = arith.sitofp %706 : i32 to f32
      %708 = vector.broadcast %707 : f32 to vector<16x128xf32>
      %709 = arith.mulf %703, %708 : vector<16x128xf32>
      %710 = arith.addf %668, %709 : vector<16x128xf32>
      %c8_i32_169 = arith.constant 8 : i32
      %c0_170 = arith.constant 0 : index
      %c0_171 = arith.constant 0 : index
      %711 = vector.load %arg19[%c0_170, %c0_171] : memref<16x128xf32, #tpu.memory_space<vmem>>, vector<16x128xf32>
      tpu.vector_store %arg19[%c0_170, %c0_171], %703 {strides = array<i32>} : memref<16x128xf32, #tpu.memory_space<vmem>>, vector<16x128xf32>,
      %c0_172 = arith.constant 0 : index
      %c0_173 = arith.constant 0 : index
      %712 = vector.load %arg20[%c0_172, %c0_173] : memref<16x128xf32, #tpu.memory_space<vmem>>, vector<16x128xf32>
      tpu.vector_store %arg20[%c0_172, %c0_173], %710 {strides = array<i32>} : memref<16x128xf32, #tpu.memory_space<vmem>>, vector<16x128xf32>,
    } else {
    }
    %c2_i32_100 = arith.constant 2 : i32
    %370 = arith.cmpi eq, %arg1, %c2_i32_100 : i32
    %371 = arith.extui %370 : i1 to i32
    %c0_i32_101 = arith.constant 0 : i32
    %372 = arith.cmpi ne, %371, %c0_i32_101 : i32
    scf.if %372 {
      %c0_102 = arith.constant 0 : index
      %c0_103 = arith.constant 0 : index
      %373 = vector.load %arg20[%c0_102, %c0_103] : memref<16x128xf32, #tpu.memory_space<vmem>>, vector<16x128xf32>
      %cst_104 = arith.constant 5.000000e-02 : f32
      %374 = vector.broadcast %cst_104 : f32 to vector<16x128xf32>
      %375 = arith.mulf %373, %374 : vector<16x128xf32>
      %c0_105 = arith.constant 0 : index
      %c0_106 = arith.constant 0 : index
      %376 = vector.load %arg13[%c0_105, %c0_106] : memref<128x128xf32, #tpu.memory_space<vmem>>, vector<128x128xf32>
      %cst_107 = arith.constant dense<0.000000e+00> : vector<16x128xf32>
      %377 = tpu.matmul %375, %376, %cst_107 {dimension_numbers = #tpu.dot_dimension_numbers<[1], [0], [0], [1], [0, 0, 1, 1], [], []>} : vector<16x128xf32>, vector<128x128xf32>, vector<16x128xf32> -> vector<16x128xf32>
      %c0_108 = arith.constant 0 : index
      %c0_109 = arith.constant 0 : index
      %378 = vector.load %arg14[%c0_108, %c0_109] : memref<1x128xf32, #tpu.memory_space<vmem>>, vector<1x128xf32>
      %379 = vector.broadcast %378 : vector<1x128xf32> to vector<16x128xf32>
      %380 = arith.addf %377, %379 : vector<16x128xf32>
      %cst_110 = arith.constant 0.000000e+00 : f32
      %381 = vector.broadcast %cst_110 : f32 to vector<16x128xf32>
      %382 = arith.maximumf %380, %381 : vector<16x128xf32>
      %c0_111 = arith.constant 0 : index
      %c0_112 = arith.constant 0 : index
      %383 = vector.load %arg15[%c0_111, %c0_112] : memref<128x2xf32, #tpu.memory_space<vmem>>, vector<128x2xf32>
      %cst_113 = arith.constant dense<0.000000e+00> : vector<16x2xf32>
      %384 = tpu.matmul %382, %383, %cst_113 {dimension_numbers = #tpu.dot_dimension_numbers<[1], [0], [0], [1], [0, 0, 1, 1], [], []>} : vector<16x128xf32>, vector<128x2xf32>, vector<16x2xf32> -> vector<16x2xf32>
      %c0_114 = arith.constant 0 : index
      %c0_115 = arith.constant 0 : index
      %385 = vector.load %arg16[%c0_114, %c0_115] : memref<1x2xf32, #tpu.memory_space<vmem>>, vector<1x2xf32>
      %386 = vector.broadcast %385 : vector<1x2xf32> to vector<16x2xf32>
      %387 = arith.addf %384, %386 : vector<16x2xf32>
      %cst_116 = arith.constant dense<0xFF800000> : vector<16xf32>
      %388 = vector.multi_reduction <maximumf>, %387, %cst_116 [1] : vector<16x2xf32> to vector<16xf32>
      %389 = vector.shape_cast %388 : vector<16xf32> to vector<16x1xf32>
      %390 = vector.broadcast %389 : vector<16x1xf32> to vector<16x2xf32>
      %391 = arith.subf %387, %390 : vector<16x2xf32>
      %392 = math.exp %391 : vector<16x2xf32>
      %cst_117 = arith.constant dense<0.000000e+00> : vector<16xf32>
      %393 = vector.multi_reduction <add>, %392, %cst_117 [1] : vector<16x2xf32> to vector<16xf32>
      %394 = vector.shape_cast %393 : vector<16xf32> to vector<16x1xf32>
      %395 = vector.broadcast %394 : vector<16x1xf32> to vector<16x2xf32>
      %396 = arith.divf %392, %395 : vector<16x2xf32>
      %c0_118 = arith.constant 0 : index
      %c0_119 = arith.constant 0 : index
      %397 = vector.load %arg17[%c0_118, %c0_119] : memref<16x2xf32, #tpu.memory_space<vmem>>, vector<16x2xf32>
      tpu.vector_store %arg17[%c0_118, %c0_119], %396 {strides = array<i32>} : memref<16x2xf32, #tpu.memory_space<vmem>>, vector<16x2xf32>,
    } else {
    }
    return
  }
  func.func @transform_0(%arg0: i32, %arg1: i32) -> (i32, i32, i32) {
    %c0_i32 = arith.constant 0 : i32
    %c0_i32_0 = arith.constant 0 : i32
    return %arg1, %arg0, %c0_i32 : i32, i32, i32
  }
  func.func @transform_1(%arg0: i32, %arg1: i32) -> (i32, i32) {
    %c0_i32 = arith.constant 0 : i32
    %c0_i32_0 = arith.constant 0 : i32
    %c0_i32_1 = arith.constant 0 : i32
    return %c0_i32, %c0_i32_0 : i32, i32
  }
  func.func @transform_2(%arg0: i32, %arg1: i32) -> (i32, i32) {
    %c0_i32 = arith.constant 0 : i32
    %c0_i32_0 = arith.constant 0 : i32
    %c0_i32_1 = arith.constant 0 : i32
    return %c0_i32, %c0_i32_0 : i32, i32
  }
  func.func @transform_3(%arg0: i32, %arg1: i32) -> (i32, i32) {
    %c0_i32 = arith.constant 0 : i32
    %c0_i32_0 = arith.constant 0 : i32
    %c0_i32_1 = arith.constant 0 : i32
    return %c0_i32, %c0_i32_0 : i32, i32
  }
  func.func @transform_4(%arg0: i32, %arg1: i32) -> (i32, i32) {
    %c0_i32 = arith.constant 0 : i32
    %c0_i32_0 = arith.constant 0 : i32
    %c0_i32_1 = arith.constant 0 : i32
    return %c0_i32, %c0_i32_0 : i32, i32
  }
  func.func @transform_5(%arg0: i32, %arg1: i32) -> (i32, i32) {
    %c0_i32 = arith.constant 0 : i32
    %c0_i32_0 = arith.constant 0 : i32
    %c0_i32_1 = arith.constant 0 : i32
    return %c0_i32, %c0_i32_0 : i32, i32
  }
  func.func @transform_6(%arg0: i32, %arg1: i32) -> (i32, i32) {
    %c0_i32 = arith.constant 0 : i32
    %c0_i32_0 = arith.constant 0 : i32
    %c0_i32_1 = arith.constant 0 : i32
    return %c0_i32, %c0_i32_0 : i32, i32
  }
  func.func @transform_7(%arg0: i32, %arg1: i32) -> (i32, i32) {
    %c0_i32 = arith.constant 0 : i32
    %c0_i32_0 = arith.constant 0 : i32
    %c0_i32_1 = arith.constant 0 : i32
    return %c0_i32, %c0_i32_0 : i32, i32
  }
  func.func @transform_8(%arg0: i32, %arg1: i32) -> (i32, i32) {
    %c0_i32 = arith.constant 0 : i32
    %c0_i32_0 = arith.constant 0 : i32
    %c0_i32_1 = arith.constant 0 : i32
    return %c0_i32, %c0_i32_0 : i32, i32
  }
  func.func @transform_9(%arg0: i32, %arg1: i32) -> (i32, i32) {
    %c0_i32 = arith.constant 0 : i32
    %c0_i32_0 = arith.constant 0 : i32
    %c0_i32_1 = arith.constant 0 : i32
    return %c0_i32, %c0_i32_0 : i32, i32
  }
  func.func @transform_10(%arg0: i32, %arg1: i32) -> (i32, i32) {
    %c0_i32 = arith.constant 0 : i32
    %c0_i32_0 = arith.constant 0 : i32
    %c0_i32_1 = arith.constant 0 : i32
    return %c0_i32, %c0_i32_0 : i32, i32
  }
  func.func @transform_11(%arg0: i32, %arg1: i32) -> (i32, i32) {
    %c0_i32 = arith.constant 0 : i32
    %c0_i32_0 = arith.constant 0 : i32
    %c0_i32_1 = arith.constant 0 : i32
    return %c0_i32, %c0_i32_0 : i32, i32
  }
  func.func @transform_12(%arg0: i32, %arg1: i32) -> (i32, i32) {
    %c0_i32 = arith.constant 0 : i32
    %c0_i32_0 = arith.constant 0 : i32
    %c0_i32_1 = arith.constant 0 : i32
    return %c0_i32, %c0_i32_0 : i32, i32
  }
  func.func @transform_13(%arg0: i32, %arg1: i32) -> (i32, i32) {
    %c0_i32 = arith.constant 0 : i32
    %c0_i32_0 = arith.constant 0 : i32
    %c0_i32_1 = arith.constant 0 : i32
    return %c0_i32, %c0_i32_0 : i32, i32
  }
  func.func @transform_14(%arg0: i32, %arg1: i32) -> (i32, i32) {
    %c0_i32 = arith.constant 0 : i32
    %c0_i32_0 = arith.constant 0 : i32
    %c0_i32_1 = arith.constant 0 : i32
    return %c0_i32, %c0_i32_0 : i32, i32
  }
  func.func @transform_15(%arg0: i32, %arg1: i32) -> (i32, i32) {
    %c0_i32 = arith.constant 0 : i32
    %c0_i32_0 = arith.constant 0 : i32
    return %arg0, %c0_i32 : i32, i32
  }
}

</mosaic_0001>

<llo_original>
// kernel: tpu_custom_call.1
$region0: #{tpu_custom_call.1}
  #allocation0 [shape = 'u32[]', space=smem, size = 0x4, offset = 0x4, fixed_abs, tag = 'smem constant byte address 0x4 - core index']
  #allocation1 [shape = 'u32[144,128]{1,0:T(1,128)}', space=vmem, size = 0x12000, scoped, tag = 'internal scratch']
  #allocation2 [shape = 'f32[16,128]{1,0:T(8,128)}', space=vmem, size = 0x2000, scoped, tag = 'scratch operand']
  #allocation3 [shape = 'f32[16,128]{1,0:T(8,128)}', space=vmem, size = 0x2000, scoped, tag = 'scratch operand']
  #allocation4 [shape = 'f32[16,128]{1,0:T(8,128)}', space=vmem, size = 0x2000, scoped, tag = 'scratch operand']
  #allocation5 [shape = 'bf16[128,128]{1,0:T(16,128)(2,1)}', space=vmem, size = 0x8000, scoped, tag = 'scratch operand']
  #allocation6 [shape = 'bf16[128,384]{1,0:T(16,128)(2,1)}', space=vmem, size = 0x18000, scoped, tag = 'scratch operand']
  %s0 = inlined_call_operand.hbm [shape: bf16[24,16,128], index: 0, kind: input, shape index: {}]
  %s1 = inlined_call_operand.vmem [shape: f32[1,128], index: 1, kind: input, shape index: {}]
  %s2 = inlined_call_operand.vmem [shape: f32[1,128], index: 2, kind: input, shape index: {}]
  %s3 = inlined_call_operand.hbm [shape: bf16[128,384], index: 3, kind: input, shape index: {}]
  %s4 = inlined_call_operand.hbm [shape: bf16[128,384], index: 4, kind: input, shape index: {}]
  %s5 = inlined_call_operand.vmem [shape: f32[1,384], index: 5, kind: input, shape index: {}]
  %s6 = inlined_call_operand.vmem [shape: f32[1,384], index: 6, kind: input, shape index: {}]
  %s7 = inlined_call_operand.hbm [shape: bf16[128,384], index: 7, kind: input, shape index: {}]
  %s8 = inlined_call_operand.hbm [shape: bf16[128,384], index: 8, kind: input, shape index: {}]
  %s9 = inlined_call_operand.vmem [shape: f32[1,384], index: 9, kind: input, shape index: {}]
  %s10 = inlined_call_operand.vmem [shape: f32[1,384], index: 10, kind: input, shape index: {}]
  %s11 = inlined_call_operand.vmem [shape: f32[128,128], index: 11, kind: input, shape index: {}]
  %s12 = inlined_call_operand.vmem [shape: f32[1,128], index: 12, kind: input, shape index: {}]
  %s13 = inlined_call_operand.vmem [shape: f32[128,2], index: 13, kind: input, shape index: {}]
  %s14 = inlined_call_operand.vmem [shape: f32[1,2], index: 14, kind: input, shape index: {}]
  %s15 = inlined_call_operand.vmem [shape: f32[16,2], index: 15, kind: output, shape index: {}]
  %s16 = sld [smem:[#allocation0]]
  $region125: #{tpu_custom_call.1} parent=0
    _
  %s18 = ssub.s32 1, %s16
  %s19 = scalar_select 0, %s18, %s16
  $region1: #{tpu_custom_call.1} parent=0
    #allocation7 [shape = 'u8[65536]{0}', space=vmem, size = 0x10000, scoped, tag = 'input window, operand 0']
    #allocation8 [shape = 's32[2]{0}', space=sflag, size = 0x8, scoped, tag = 'scoped memory for tpu_custom_call.1']
    #allocation9 [shape = 'u8[98304]{0}', space=vmem, size = 0x18000, scoped, tag = 'input window, operand 3, single buffered']
    #allocation10 [shape = 's32[1]{0}', space=sflag, size = 0x4, scoped, tag = 'scoped memory for tpu_custom_call.1']
    #allocation11 [shape = 'u8[98304]{0}', space=vmem, size = 0x18000, scoped, tag = 'input window, operand 4, single buffered']
    #allocation12 [shape = 'u8[98304]{0}', space=vmem, size = 0x18000, scoped, tag = 'input window, operand 7, single buffered']
    #allocation13 [shape = 's32[1]{0}', space=sflag, size = 0x4, scoped, tag = 'scoped memory for tpu_custom_call.1']
    #allocation14 [shape = 'u8[98304]{0}', space=vmem, size = 0x18000, scoped, tag = 'input window, operand 8, single buffered']
    %20 = vsyncpa [#allocation8], 0
    %s21 = scalar_lea.sflag [#allocation8], 1
    %22 = vsyncpa %s21, 0
    %23 = vsyncpa [#allocation10], 0
    %24 = vsyncpa [#allocation13], 0
    loop: start=0, step=1, limit=5
    $region2: #{tpu_custom_call.1} parent=1 // loop_pre_header
      _
    $region3: #{tpu_custom_call.1} parent=1 // loop_header
      %s26 = sphi 0, %s30
      %p27 = scmp.ge.s32.totalorder %s26, 5
      %s33 = sphi 0, %s45
      %s34 = sphi 0, %s41
      %s35 = sphi 0, %s33
      %s36 = sphi 0, %s34
      %s37 = sphi 0, %s35
      %s38 = sphi 0, %s36
      %s50 = sphi 0, %s52
      %s53 = sphi 0, %s50
      %s54 = sphi 0, %s53
      %s70 = sphi 0, %s54
      %s74 = sphi 0, %s74
      %s76 = sphi 0, %s74
      %s77 = sphi 0, %s76
      %s91 = sphi 0, %s77
      %s95 = sphi 0, %s95
      %s97 = sphi 0, %s95
      %s98 = sphi 0, %s97
      %s112 = sphi 0, %s98
      %s116 = sphi 0, %s116
      %s118 = sphi 0, %s116
      %s119 = sphi 0, %s118
      %s133 = sphi 0, %s119
      %s137 = sphi 0, %s137
      %s139 = sphi 0, %s137
      %s140 = sphi 0, %s139
      %s154 = sphi 0, %s140
      %s158 = sphi 0, %s158
      %s160 = sphi 0, %s158
      %s161 = sphi 0, %s160
      %s175 = sphi 0, %s161
      %s179 = sphi 0, %s179
      %s181 = sphi 0, %s179
      %s182 = sphi 0, %s181
      %s196 = sphi 0, %s182
      %s200 = sphi 0, %s200
      %s202 = sphi 0, %s200
      %s203 = sphi 0, %s202
      %s217 = sphi 0, %s203
      %s221 = sphi 0, %s221
      %s223 = sphi 0, %s221
      %s224 = sphi 0, %s223
      %s238 = sphi 0, %s224
      %s242 = sphi 0, %s242
      %s244 = sphi 0, %s242
      %s245 = sphi 0, %s244
      %s259 = sphi 0, %s245
      %s263 = sphi 0, %s263
      %s265 = sphi 0, %s263
      %s266 = sphi 0, %s265
      %s280 = sphi 0, %s266
      %s284 = sphi 0, %s284
      %s286 = sphi 0, %s284
      %s287 = sphi 0, %s286
      %s301 = sphi 0, %s287
      %s305 = sphi 0, %s305
      %s307 = sphi 0, %s305
      %s308 = sphi 0, %s307
      %s322 = sphi 0, %s308
      %s326 = sphi 0, %s326
      %s328 = sphi 0, %s326
      %s329 = sphi 0, %s328
      %s343 = sphi 0, %s329
      %s347 = sphi 0, %s347
      %s349 = sphi 0, %s347
      %s350 = sphi 0, %s349
      %s364 = sphi 0, %s350
      %s370 = sphi 0, %s372
      %s373 = sphi 0, %s370
      %s374 = sphi 0, %s373
      %s390 = sphi 0, %s374
    $region4: #{tpu_custom_call.1} parent=1 // loop_header_branch
      %29 = sbr.rel (%p27) target = $region8
    $region5: #{tpu_custom_call.1} parent=1 // loop_body
      %s31 = ssub.s32 %s26, 1
      %s32 = ssub.s32 %s26, 2
      %s39 = sadd.s32 1, %s34
      %p40 = scmp.ge.s32.totalorder %s39, 3
      %s41 = scalar_select %p40, 0, %s39
      %s42 = sadd.s32 1, %s33
      %s43 = scalar_select %p40, %s42, %s33
      %p44 = scmp.ge.s32.totalorder %s43, 1
      %s45 = scalar_select %p44, 0, %s43
      %s46 = ssub.s32 %s34, %s41
      %s47 = ssub.s32 %s33, %s45
      %s48 = sor.u32 %s46, %s47
      %p49 = scmp.eq.s32.totalorder %s48, 0
      %s51 = sadd.s32 %s50, 1
      %s52 = scalar_select %p49, %s50, %s51
      %p55 = pneg %p49
      %p56 = scmp.eq.s32.totalorder %s26, 2
      %p57 = por %p55, %p56
      %p58 = scmp.ne.s32.totalorder %s50, %s53
      %p59 = scmp.eq.s32.totalorder %s26, 0
      %p60 = por %p58, %p59
      %p61 = scmp.ne.s32.totalorder %s50, %s53
      %p62 = scmp.eq.s32.totalorder %s31, 2
      %p63 = por %p61, %p62
      %p64 = scmp.ne.s32.totalorder %s53, %s54
      %p65 = scmp.eq.s32.totalorder %s31, 0
      %p66 = por %p64, %p65
      %p67 = scmp.ne.s32.totalorder %s53, %s54
      %p68 = scmp.eq.s32.totalorder %s32, 2
      %p69 = por %p67, %p68
      %p71 = scmp.ne.s32.totalorder %s54, %s70
      %p72 = scmp.eq.s32.totalorder %s32, 0
      %p73 = por %p71, %p72
      %s75 = sadd.s32 %s74, 1
      %p78 = scmp.eq.s32.totalorder %s26, 2
      %p79 = scmp.ne.s32.totalorder %s74, %s76
      %p80 = scmp.eq.s32.totalorder %s26, 0
      %p81 = por %p79, %p80
      %p82 = scmp.ne.s32.totalorder %s74, %s76
      %p83 = scmp.eq.s32.totalorder %s31, 2
      %p84 = por %p82, %p83
      %p85 = scmp.ne.s32.totalorder %s76, %s77
      %p86 = scmp.eq.s32.totalorder %s31, 0
      %p87 = por %p85, %p86
      %p88 = scmp.ne.s32.totalorder %s76, %s77
      %p89 = scmp.eq.s32.totalorder %s32, 2
      %p90 = por %p88, %p89
      %p92 = scmp.ne.s32.totalorder %s77, %s91
      %p93 = scmp.eq.s32.totalorder %s32, 0
      %p94 = por %p92, %p93
      %s96 = sadd.s32 %s95, 1
      %p99 = scmp.eq.s32.totalorder %s26, 2
      %p100 = scmp.ne.s32.totalorder %s95, %s97
      %p101 = scmp.eq.s32.totalorder %s26, 0
      %p102 = por %p100, %p101
      %p103 = scmp.ne.s32.totalorder %s95, %s97
      %p104 = scmp.eq.s32.totalorder %s31, 2
      %p105 = por %p103, %p104
      %p106 = scmp.ne.s32.totalorder %s97, %s98
      %p107 = scmp.eq.s32.totalorder %s31, 0
      %p108 = por %p106, %p107
      %p109 = scmp.ne.s32.totalorder %s97, %s98
      %p110 = scmp.eq.s32.totalorder %s32, 2
      %p111 = por %p109, %p110
      %p113 = scmp.ne.s32.totalorder %s98, %s112
      %p114 = scmp.eq.s32.totalorder %s32, 0
      %p115 = por %p113, %p114
      %s117 = sadd.s32 %s116, 1
      %p120 = scmp.eq.s32.totalorder %s26, 2
      %p121 = scmp.ne.s32.totalorder %s116, %s118
      %p122 = scmp.eq.s32.totalorder %s26, 0
      %p123 = por %p121, %p122
      %p124 = scmp.ne.s32.totalorder %s116, %s118
      %p125 = scmp.eq.s32.totalorder %s31, 2
      %p126 = por %p124, %p125
      %p127 = scmp.ne.s32.totalorder %s118, %s119
      %p128 = scmp.eq.s32.totalorder %s31, 0
      %p129 = por %p127, %p128
      %p130 = scmp.ne.s32.totalorder %s118, %s119
      %p131 = scmp.eq.s32.totalorder %s32, 2
      %p132 = por %p130, %p131
      %p134 = scmp.ne.s32.totalorder %s119, %s133
      %p135 = scmp.eq.s32.totalorder %s32, 0
      %p136 = por %p134, %p135
      %s138 = sadd.s32 %s137, 1
      %p141 = scmp.eq.s32.totalorder %s26, 2
      %p142 = scmp.ne.s32.totalorder %s137, %s139
      %p143 = scmp.eq.s32.totalorder %s26, 0
      %p144 = por %p142, %p143
      %p145 = scmp.ne.s32.totalorder %s137, %s139
      %p146 = scmp.eq.s32.totalorder %s31, 2
      %p147 = por %p145, %p146
      %p148 = scmp.ne.s32.totalorder %s139, %s140
      %p149 = scmp.eq.s32.totalorder %s31, 0
      %p150 = por %p148, %p149
      %p151 = scmp.ne.s32.totalorder %s139, %s140
      %p152 = scmp.eq.s32.totalorder %s32, 2
      %p153 = por %p151, %p152
      %p155 = scmp.ne.s32.totalorder %s140, %s154
      %p156 = scmp.eq.s32.totalorder %s32, 0
      %p157 = por %p155, %p156
      %s159 = sadd.s32 %s158, 1
      %p162 = scmp.eq.s32.totalorder %s26, 2
      %p163 = scmp.ne.s32.totalorder %s158, %s160
      %p164 = scmp.eq.s32.totalorder %s26, 0
      %p165 = por %p163, %p164
      %p166 = scmp.ne.s32.totalorder %s158, %s160
      %p167 = scmp.eq.s32.totalorder %s31, 2
      %p168 = por %p166, %p167
      %p169 = scmp.ne.s32.totalorder %s160, %s161
      %p170 = scmp.eq.s32.totalorder %s31, 0
      %p171 = por %p169, %p170
      %p172 = scmp.ne.s32.totalorder %s160, %s161
      %p173 = scmp.eq.s32.totalorder %s32, 2
      %p174 = por %p172, %p173
      %p176 = scmp.ne.s32.totalorder %s161, %s175
      %p177 = scmp.eq.s32.totalorder %s32, 0
      %p178 = por %p176, %p177
      %s180 = sadd.s32 %s179, 1
      %p183 = scmp.eq.s32.totalorder %s26, 2
      %p184 = scmp.ne.s32.totalorder %s179, %s181
      %p185 = scmp.eq.s32.totalorder %s26, 0
      %p186 = por %p184, %p185
      %p187 = scmp.ne.s32.totalorder %s179, %s181
      %p188 = scmp.eq.s32.totalorder %s31, 2
      %p189 = por %p187, %p188
      %p190 = scmp.ne.s32.totalorder %s181, %s182
      %p191 = scmp.eq.s32.totalorder %s31, 0
      %p192 = por %p190, %p191
      %p193 = scmp.ne.s32.totalorder %s181, %s182
      %p194 = scmp.eq.s32.totalorder %s32, 2
      %p195 = por %p193, %p194
      %p197 = scmp.ne.s32.totalorder %s182, %s196
      %p198 = scmp.eq.s32.totalorder %s32, 0
      %p199 = por %p197, %p198
      %s201 = sadd.s32 %s200, 1
      %p204 = scmp.eq.s32.totalorder %s26, 2
      %p205 = scmp.ne.s32.totalorder %s200, %s202
      %p206 = scmp.eq.s32.totalorder %s26, 0
      %p207 = por %p205, %p206
      %p208 = scmp.ne.s32.totalorder %s200, %s202
      %p209 = scmp.eq.s32.totalorder %s31, 2
      %p210 = por %p208, %p209
      %p211 = scmp.ne.s32.totalorder %s202, %s203
      %p212 = scmp.eq.s32.totalorder %s31, 0
      %p213 = por %p211, %p212
      %p214 = scmp.ne.s32.totalorder %s202, %s203
      %p215 = scmp.eq.s32.totalorder %s32, 2
      %p216 = por %p214, %p215
      %p218 = scmp.ne.s32.totalorder %s203, %s217
      %p219 = scmp.eq.s32.totalorder %s32, 0
      %p220 = por %p218, %p219
      %s222 = sadd.s32 %s221, 1
      %p225 = scmp.eq.s32.totalorder %s26, 2
      %p226 = scmp.ne.s32.totalorder %s221, %s223
      %p227 = scmp.eq.s32.totalorder %s26, 0
      %p228 = por %p226, %p227
      %p229 = scmp.ne.s32.totalorder %s221, %s223
      %p230 = scmp.eq.s32.totalorder %s31, 2
      %p231 = por %p229, %p230
      %p232 = scmp.ne.s32.totalorder %s223, %s224
      %p233 = scmp.eq.s32.totalorder %s31, 0
      %p234 = por %p232, %p233
      %p235 = scmp.ne.s32.totalorder %s223, %s224
      %p236 = scmp.eq.s32.totalorder %s32, 2
      %p237 = por %p235, %p236
      %p239 = scmp.ne.s32.totalorder %s224, %s238
      %p240 = scmp.eq.s32.totalorder %s32, 0
      %p241 = por %p239, %p240
      %s243 = sadd.s32 %s242, 1
      %p246 = scmp.eq.s32.totalorder %s26, 2
      %p247 = scmp.ne.s32.totalorder %s242, %s244
      %p248 = scmp.eq.s32.totalorder %s26, 0
      %p249 = por %p247, %p248
      %p250 = scmp.ne.s32.totalorder %s242, %s244
      %p251 = scmp.eq.s32.totalorder %s31, 2
      %p252 = por %p250, %p251
      %p253 = scmp.ne.s32.totalorder %s244, %s245
      %p254 = scmp.eq.s32.totalorder %s31, 0
      %p255 = por %p253, %p254
      %p256 = scmp.ne.s32.totalorder %s244, %s245
      %p257 = scmp.eq.s32.totalorder %s32, 2
      %p258 = por %p256, %p257
      %p260 = scmp.ne.s32.totalorder %s245, %s259
      %p261 = scmp.eq.s32.totalorder %s32, 0
      %p262 = por %p260, %p261
      %s264 = sadd.s32 %s263, 1
      %p267 = scmp.eq.s32.totalorder %s26, 2
      %p268 = scmp.ne.s32.totalorder %s263, %s265
      %p269 = scmp.eq.s32.totalorder %s26, 0
      %p270 = por %p268, %p269
      %p271 = scmp.ne.s32.totalorder %s263, %s265
      %p272 = scmp.eq.s32.totalorder %s31, 2
      %p273 = por %p271, %p272
      %p274 = scmp.ne.s32.totalorder %s265, %s266
      %p275 = scmp.eq.s32.totalorder %s31, 0
      %p276 = por %p274, %p275
      %p277 = scmp.ne.s32.totalorder %s265, %s266
      %p278 = scmp.eq.s32.totalorder %s32, 2
      %p279 = por %p277, %p278
      %p281 = scmp.ne.s32.totalorder %s266, %s280
      %p282 = scmp.eq.s32.totalorder %s32, 0
      %p283 = por %p281, %p282
      %s285 = sadd.s32 %s284, 1
      %p288 = scmp.eq.s32.totalorder %s26, 2
      %p289 = scmp.ne.s32.totalorder %s284, %s286
      %p290 = scmp.eq.s32.totalorder %s26, 0
      %p291 = por %p289, %p290
      %p292 = scmp.ne.s32.totalorder %s284, %s286
      %p293 = scmp.eq.s32.totalorder %s31, 2
      %p294 = por %p292, %p293
      %p295 = scmp.ne.s32.totalorder %s286, %s287
      %p296 = scmp.eq.s32.totalorder %s31, 0
      %p297 = por %p295, %p296
      %p298 = scmp.ne.s32.totalorder %s286, %s287
      %p299 = scmp.eq.s32.totalorder %s32, 2
      %p300 = por %p298, %p299
      %p302 = scmp.ne.s32.totalorder %s287, %s301
      %p303 = scmp.eq.s32.totalorder %s32, 0
      %p304 = por %p302, %p303
      %s306 = sadd.s32 %s305, 1
      %p309 = scmp.eq.s32.totalorder %s26, 2
      %p310 = scmp.ne.s32.totalorder %s305, %s307
      %p311 = scmp.eq.s32.totalorder %s26, 0
      %p312 = por %p310, %p311
      %p313 = scmp.ne.s32.totalorder %s305, %s307
      %p314 = scmp.eq.s32.totalorder %s31, 2
      %p315 = por %p313, %p314
      %p316 = scmp.ne.s32.totalorder %s307, %s308
      %p317 = scmp.eq.s32.totalorder %s31, 0
      %p318 = por %p316, %p317
      %p319 = scmp.ne.s32.totalorder %s307, %s308
      %p320 = scmp.eq.s32.totalorder %s32, 2
      %p321 = por %p319, %p320
      %p323 = scmp.ne.s32.totalorder %s308, %s322
      %p324 = scmp.eq.s32.totalorder %s32, 0
      %p325 = por %p323, %p324
      %s327 = sadd.s32 %s326, 1
      %p330 = scmp.eq.s32.totalorder %s26, 2
      %p331 = scmp.ne.s32.totalorder %s326, %s328
      %p332 = scmp.eq.s32.totalorder %s26, 0
      %p333 = por %p331, %p332
      %p334 = scmp.ne.s32.totalorder %s326, %s328
      %p335 = scmp.eq.s32.totalorder %s31, 2
      %p336 = por %p334, %p335
      %p337 = scmp.ne.s32.totalorder %s328, %s329
      %p338 = scmp.eq.s32.totalorder %s31, 0
      %p339 = por %p337, %p338
      %p340 = scmp.ne.s32.totalorder %s328, %s329
      %p341 = scmp.eq.s32.totalorder %s32, 2
      %p342 = por %p340, %p341
      %p344 = scmp.ne.s32.totalorder %s329, %s343
      %p345 = scmp.eq.s32.totalorder %s32, 0
      %p346 = por %p344, %p345
      %s348 = sadd.s32 %s347, 1
      %p351 = scmp.eq.s32.totalorder %s26, 2
      %p352 = scmp.ne.s32.totalorder %s347, %s349
      %p353 = scmp.eq.s32.totalorder %s26, 0
      %p354 = por %p352, %p353
      %p355 = scmp.ne.s32.totalorder %s347, %s349
      %p356 = scmp.eq.s32.totalorder %s31, 2
      %p357 = por %p355, %p356
      %p358 = scmp.ne.s32.totalorder %s349, %s350
      %p359 = scmp.eq.s32.totalorder %s31, 0
      %p360 = por %p358, %p359
      %p361 = scmp.ne.s32.totalorder %s349, %s350
      %p362 = scmp.eq.s32.totalorder %s32, 2
      %p363 = por %p361, %p362
      %p365 = scmp.ne.s32.totalorder %s350, %s364
      %p366 = scmp.eq.s32.totalorder %s32, 0
      %p367 = por %p365, %p366
      %s368 = ssub.s32 %s33, %s45
      %p369 = scmp.eq.s32.totalorder %s368, 0
      %s371 = sadd.s32 %s370, 1
      %s372 = scalar_select %p369, %s370, %s371
      %p375 = pneg %p369
      %p376 = scmp.eq.s32.totalorder %s26, 2
      %p377 = por %p375, %p376
      %p378 = scmp.ne.s32.totalorder %s370, %s373
      %p379 = scmp.eq.s32.totalorder %s26, 0
      %p380 = por %p378, %p379
      %p381 = scmp.ne.s32.totalorder %s370, %s373
      %p382 = scmp.eq.s32.totalorder %s31, 2
      %p383 = por %p381, %p382
      %p384 = scmp.ne.s32.totalorder %s373, %s374
      %p385 = scmp.eq.s32.totalorder %s31, 0
      %p386 = por %p384, %p385
      %p387 = scmp.ne.s32.totalorder %s373, %s374
      %p388 = scmp.eq.s32.totalorder %s32, 2
      %p389 = por %p387, %p388
      %p391 = scmp.ne.s32.totalorder %s374, %s390
      %p392 = scmp.eq.s32.totalorder %s32, 0
      %p393 = por %p391, %p392
      %p394 = scmp.le.s32.totalorder 1, %s26
      %p395 = scmp.lt.s32.totalorder %s26, 4
      %p396 = pnand %p394, %p395
      %p397 = pneg %p396
      // Predicated region
      $region9: #{tpu_custom_call.1} parent=5 // pred_check
        _
      $region10: #{tpu_custom_call.1} parent=5 // pred_check_branch
        %399 = sbr.rel (%p396) target = $region12
      $region11: #{tpu_custom_call.1} parent=5 // pred_region
        %s400 = ssub.s32 %s26, 1
        // Predicated region
        $region13: #{tpu_custom_call.1} parent=11 // pred_check
          %p401 = pneg %p87
        $region14: #{tpu_custom_call.1} parent=11 // pred_check_branch
          %403 = sbr.rel (%p401) target = $region16
        $region15: #{tpu_custom_call.1} parent=11 // pred_region
          _
        $region16: #{tpu_custom_call.1} parent=11 // pred_fallthru
          _
        // Predicated region
        $region17: #{tpu_custom_call.1} parent=11 // pred_check
          %p404 = pneg %p108
        $region18: #{tpu_custom_call.1} parent=11 // pred_check_branch
          %406 = sbr.rel (%p404) target = $region20
        $region19: #{tpu_custom_call.1} parent=11 // pred_region
          _
        $region20: #{tpu_custom_call.1} parent=11 // pred_fallthru
          _
        // Predicated region
        $region21: #{tpu_custom_call.1} parent=11 // pred_check
          %p407 = pneg %p129
        $region22: #{tpu_custom_call.1} parent=11 // pred_check_branch
          %409 = sbr.rel (%p407) target = $region24
        $region23: #{tpu_custom_call.1} parent=11 // pred_region
          %s411 = ssub.s32 3072, 3072
          %412 = vsyncadd [#allocation10], %s411
          %s413 = sshll.u32 [#allocation9], 4
          %s414 = int_to_ptr.vmem [resolvable:$true] %s413
          %419 = dma.hbm_to_vmem [thread:$0]  %s3, 3072, %s414, [#allocation10], 192, 192, 12
        $region24: #{tpu_custom_call.1} parent=11 // pred_fallthru
          _
        // Predicated region
        $region25: #{tpu_custom_call.1} parent=11 // pred_check
          %p420 = pneg %p150
        $region26: #{tpu_custom_call.1} parent=11 // pred_check_branch
          %422 = sbr.rel (%p420) target = $region28
        $region27: #{tpu_custom_call.1} parent=11 // pred_region
          %s424 = ssub.s32 3072, 3072
          %425 = vsyncadd [#allocation10], %s424
          %s426 = sshll.u32 [#allocation11], 4
          %s427 = int_to_ptr.vmem [resolvable:$true] %s426
          %432 = dma.hbm_to_vmem [thread:$0]  %s4, 3072, %s427, [#allocation10], 192, 192, 12
        $region28: #{tpu_custom_call.1} parent=11 // pred_fallthru
          _
        // Predicated region
        $region29: #{tpu_custom_call.1} parent=11 // pred_check
          %p433 = pneg %p171
        $region30: #{tpu_custom_call.1} parent=11 // pred_check_branch
          %435 = sbr.rel (%p433) target = $region32
        $region31: #{tpu_custom_call.1} parent=11 // pred_region
          _
        $region32: #{tpu_custom_call.1} parent=11 // pred_fallthru
          _
        // Predicated region
        $region33: #{tpu_custom_call.1} parent=11 // pred_check
          %p436 = pneg %p192
        $region34: #{tpu_custom_call.1} parent=11 // pred_check_branch
          %438 = sbr.rel (%p436) target = $region36
        $region35: #{tpu_custom_call.1} parent=11 // pred_region
          _
        $region36: #{tpu_custom_call.1} parent=11 // pred_fallthru
          _
        // Predicated region
        $region37: #{tpu_custom_call.1} parent=11 // pred_check
          %p439 = pneg %p213
        $region38: #{tpu_custom_call.1} parent=11 // pred_check_branch
          %441 = sbr.rel (%p439) target = $region40
        $region39: #{tpu_custom_call.1} parent=11 // pred_region
          %s443 = ssub.s32 3072, 3072
          %444 = vsyncadd [#allocation13], %s443
          %s445 = sshll.u32 [#allocation12], 4
          %s446 = int_to_ptr.vmem [resolvable:$true] %s445
          %451 = dma.hbm_to_vmem [thread:$0]  %s7, 3072, %s446, [#allocation13], 192, 192, 12
        $region40: #{tpu_custom_call.1} parent=11 // pred_fallthru
          _
        // Predicated region
        $region41: #{tpu_custom_call.1} parent=11 // pred_check
          %p452 = pneg %p234
        $region42: #{tpu_custom_call.1} parent=11 // pred_check_branch
          %454 = sbr.rel (%p452) target = $region44
        $region43: #{tpu_custom_call.1} parent=11 // pred_region
          %s456 = ssub.s32 3072, 3072
          %457 = vsyncadd [#allocation13], %s456
          %s458 = sshll.u32 [#allocation14], 4
          %s459 = int_to_ptr.vmem [resolvable:$true] %s458
          %464 = dma.hbm_to_vmem [thread:$0]  %s8, 3072, %s459, [#allocation13], 192, 192, 12
        $region44: #{tpu_custom_call.1} parent=11 // pred_fallthru
          _
        // Predicated region
        $region45: #{tpu_custom_call.1} parent=11 // pred_check
          %p465 = pneg %p255
        $region46: #{tpu_custom_call.1} parent=11 // pred_check_branch
          %467 = sbr.rel (%p465) target = $region48
        $region47: #{tpu_custom_call.1} parent=11 // pred_region
          _
        $region48: #{tpu_custom_call.1} parent=11 // pred_fallthru
          _
        // Predicated region
        $region49: #{tpu_custom_call.1} parent=11 // pred_check
          %p468 = pneg %p276
        $region50: #{tpu_custom_call.1} parent=11 // pred_check_branch
          %470 = sbr.rel (%p468) target = $region52
        $region51: #{tpu_custom_call.1} parent=11 // pred_region
          _
        $region52: #{tpu_custom_call.1} parent=11 // pred_fallthru
          _
        // Predicated region
        $region53: #{tpu_custom_call.1} parent=11 // pred_check
          %p471 = pneg %p297
        $region54: #{tpu_custom_call.1} parent=11 // pred_check_branch
          %473 = sbr.rel (%p471) target = $region56
        $region55: #{tpu_custom_call.1} parent=11 // pred_region
          _
        $region56: #{tpu_custom_call.1} parent=11 // pred_fallthru
          _
        // Predicated region
        $region57: #{tpu_custom_call.1} parent=11 // pred_check
          %p474 = pneg %p318
        $region58: #{tpu_custom_call.1} parent=11 // pred_check_branch
          %476 = sbr.rel (%p474) target = $region60
        $region59: #{tpu_custom_call.1} parent=11 // pred_region
          _
        $region60: #{tpu_custom_call.1} parent=11 // pred_fallthru
          _
        // Predicated region
        $region61: #{tpu_custom_call.1} parent=11 // pred_check
          %p477 = pneg %p339
        $region62: #{tpu_custom_call.1} parent=11 // pred_check_branch
          %479 = sbr.rel (%p477) target = $region64
        $region63: #{tpu_custom_call.1} parent=11 // pred_region
          _
        $region64: #{tpu_custom_call.1} parent=11 // pred_fallthru
          _
        // Predicated region
        $region65: #{tpu_custom_call.1} parent=11 // pred_check
          %p480 = pneg %p360
        $region66: #{tpu_custom_call.1} parent=11 // pred_check_branch
          %482 = sbr.rel (%p480) target = $region68
        $region67: #{tpu_custom_call.1} parent=11 // pred_region
          _
        $region68: #{tpu_custom_call.1} parent=11 // pred_fallthru
          _
      $region12: #{tpu_custom_call.1} parent=5 // pred_fallthru
        _
      %p483 = scmp.lt.s32.totalorder %s26, 3
      // Predicated region
      $region69: #{tpu_custom_call.1} parent=5 // pred_check
        %p484 = pneg %p483
      $region70: #{tpu_custom_call.1} parent=5 // pred_check_branch
        %486 = sbr.rel (%p484) target = $region72
      $region71: #{tpu_custom_call.1} parent=5 // pred_region
        // Predicated region
        $region73: #{tpu_custom_call.1} parent=71 // pred_check
          %p487 = pneg %p60
        $region74: #{tpu_custom_call.1} parent=71 // pred_check_branch
          %489 = sbr.rel (%p487) target = $region76
        $region75: #{tpu_custom_call.1} parent=71 // pred_region
          %s490 = sand.u32 %s50, 1
          %s491 = scalar_lea.sflag [#allocation8], %s490
          %s492 = sand.u32 %s50, 1
          %s493 = smul.addr %s492, 64
          %s494 = scalar_lea.vmem [#allocation7], %s493
          %s495 = smul.u32 8, %s34
          %s496 = smul.u32 2, %s33
          %s498 = ssub.s32 1024, 1024
          %499 = vsyncadd %s491, %s498
          %s500 = smul.addr %s495, 2
          %s501 = sadd.s32 %s496, %s500
          %s502 = smul.addr %s501, 64
          %s503 = scalar_lea.hbm %s0, %s502
          %s504 = sshll.u32 %s494, 4
          %s505 = int_to_ptr.vmem [resolvable:$true] %s504
          %510 = dma.hbm_to_vmem [thread:$0]  %s503, 1024, %s505, %s491, 64, 64, 4
        $region76: #{tpu_custom_call.1} parent=71 // pred_fallthru
          _
      $region72: #{tpu_custom_call.1} parent=5 // pred_fallthru
        _
      %p511 = scmp.le.s32.totalorder 1, %s26
      %p512 = scmp.lt.s32.totalorder %s26, 4
      %p513 = pnand %p511, %p512
      %p514 = pneg %p513
      // Predicated region
      $region77: #{tpu_custom_call.1} parent=5 // pred_check
        _
      $region78: #{tpu_custom_call.1} parent=5 // pred_check_branch
        %516 = sbr.rel (%p513) target = $region80
      $region79: #{tpu_custom_call.1} parent=5 // pred_region
        %s517 = ssub.s32 %s26, 1
        %s518 = sand.u32 %s53, 1
        %s519 = scalar_lea.sflag [#allocation8], %s518
        %s520 = sand.u32 %s53, 1
        %s521 = smul.addr %s520, 64
        %s522 = scalar_lea.vmem [#allocation7], %s521
        // Predicated region
        $region81: #{tpu_custom_call.1} parent=79 // pred_check
          %p523 = pneg %p66
        $region82: #{tpu_custom_call.1} parent=79 // pred_check_branch
          %525 = sbr.rel (%p523) target = $region84
        $region83: #{tpu_custom_call.1} parent=79 // pred_region
          %526 = dma.done %s519, 1024
        $region84: #{tpu_custom_call.1} parent=79 // pred_fallthru
          _
        // Predicated region
        $region85: #{tpu_custom_call.1} parent=79 // pred_check
          %p527 = pneg %p129
        $region86: #{tpu_custom_call.1} parent=79 // pred_check_branch
          %529 = sbr.rel (%p527) target = $region88
        $region87: #{tpu_custom_call.1} parent=79 // pred_region
          %530 = dma.done [#allocation10], 3072
        $region88: #{tpu_custom_call.1} parent=79 // pred_fallthru
          _
        // Predicated region
        $region89: #{tpu_custom_call.1} parent=79 // pred_check
          %p531 = pneg %p150
        $region90: #{tpu_custom_call.1} parent=79 // pred_check_branch
          %533 = sbr.rel (%p531) target = $region92
        $region91: #{tpu_custom_call.1} parent=79 // pred_region
          %534 = dma.done [#allocation10], 3072
        $region92: #{tpu_custom_call.1} parent=79 // pred_fallthru
          _
        // Predicated region
        $region93: #{tpu_custom_call.1} parent=79 // pred_check
          %p535 = pneg %p213
        $region94: #{tpu_custom_call.1} parent=79 // pred_check_branch
          %537 = sbr.rel (%p535) target = $region96
        $region95: #{tpu_custom_call.1} parent=79 // pred_region
          %538 = dma.done [#allocation13], 3072
        $region96: #{tpu_custom_call.1} parent=79 // pred_fallthru
          _
        // Predicated region
        $region97: #{tpu_custom_call.1} parent=79 // pred_check
          %p539 = pneg %p234
        $region98: #{tpu_custom_call.1} parent=79 // pred_check_branch
          %541 = sbr.rel (%p539) target = $region100
        $region99: #{tpu_custom_call.1} parent=79 // pred_region
          %542 = dma.done [#allocation13], 3072
        $region100: #{tpu_custom_call.1} parent=79 // pred_fallthru
          _
        %s543 = sand.u32 %s53, 1
        %s544 = scalar_lea.sflag [#allocation8], %s543
        %s545 = sand.u32 %s53, 1
        %s546 = smul.addr %s545, 64
        %s547 = scalar_lea.vmem [#allocation7], %s546
        %p548 = pneg %p66
        %p549 = pneg %p63
        %p550 = pneg %p87
        %p551 = pneg %p84
        %p552 = pneg %p108
        %p553 = pneg %p105
        %p554 = pneg %p129
        %p555 = pneg %p126
        %p556 = pneg %p150
        %p557 = pneg %p147
        %p558 = pneg %p171
        %p559 = pneg %p168
        %p560 = pneg %p192
        %p561 = pneg %p189
        %p562 = pneg %p213
        %p563 = pneg %p210
        %p564 = pneg %p234
        %p565 = pneg %p231
        %p566 = pneg %p255
        %p567 = pneg %p252
        %p568 = pneg %p276
        %p569 = pneg %p273
        %p570 = pneg %p297
        %p571 = pneg %p294
        %p572 = pneg %p318
        %p573 = pneg %p315
        %p574 = pneg %p339
        %p575 = pneg %p336
        %p576 = pneg %p360
        %p577 = pneg %p357
        %p578 = pneg %p386
        %p579 = pneg %p383
        %s580 = smul.u32 2, %s35
        %p581 = scmp.lt.s32.totalorder %s580, 1
        %s582 = scalar_select %p581, %s580, 1
        %s583 = smul.addr %s582, 8
        %s584 = scalar_lea.vmem %s15, %s583
        %s585 = smul.u32 8, %s36
        %s586 = smul.u32 2, %s35
        %s587 = smul.u32 2, %s35
        %p588 = scmp.lt.s32.totalorder %s587, 1
        %s589 = scalar_select %p588, %s587, 1
        %s590 = smul.addr %s589, 8
        %s591 = scalar_lea.vmem %s15, %s590
        %s592 = smul.u32 2, %s35
        %p594 = scmp.eq.s32.totalorder %s36, 0
        // Predicated region
        $region101: #{tpu_custom_call.1} parent=79 // pred_check
          %p595 = pneg %p594
        $region102: #{tpu_custom_call.1} parent=79 // pred_check_branch
          %597 = sbr.rel (%p595) target = $region104
        $region103: #{tpu_custom_call.1} parent=79 // pred_region
          %598 = vst [vmem:[#allocation2] sm:$0xff] 0.0
          %599 = vst [vmem:[#allocation2 + $0x8] sm:$0xff] 0.0
          %600 = vst [vmem:[#allocation3] sm:$0xff] 0.0
          %601 = vst [vmem:[#allocation3 + $0x8] sm:$0xff] 0.0
          %602 = vst [vmem:[#allocation4] sm:$0xff] 0.0
          %603 = vst [vmem:[#allocation4 + $0x8] sm:$0xff] 0.0
        $region104: #{tpu_custom_call.1} parent=79 // pred_fallthru
          _
        %v604 = vld [vmem:[%s522] sm:$0xf]
        %v605 = vld [vmem:[%s522 + $0x4] sm:$0xf]
        %v606 = vld [vmem:[%s522 + $0x8] sm:$0xf]
        %v607 = vld [vmem:[%s522 + $0xc] sm:$0xf]
        %v608 = vld [vmem:[%s522 + $0x10] sm:$0xf]
        %v609 = vld [vmem:[%s522 + $0x14] sm:$0xf]
        %v610 = vld [vmem:[%s522 + $0x18] sm:$0xf]
        %v611 = vld [vmem:[%s522 + $0x1c] sm:$0xf]
        %v612 = vld [vmem:[%s522 + $0x20] sm:$0xf]
        %v613 = vld [vmem:[%s522 + $0x24] sm:$0xf]
        %v614 = vld [vmem:[%s522 + $0x28] sm:$0xf]
        %v615 = vld [vmem:[%s522 + $0x2c] sm:$0xf]
        %v616 = vld [vmem:[%s522 + $0x30] sm:$0xf]
        %v617 = vld [vmem:[%s522 + $0x34] sm:$0xf]
        %v618 = vld [vmem:[%s522 + $0x38] sm:$0xf]
        %v619 = vld [vmem:[%s522 + $0x3c] sm:$0xf]
        %v620 = vunpack.c.l.bf16 %v604
        %v621 = vunpack.c.l.bf16 %v605
        %v622 = vunpack.c.l.bf16 %v606
        %v623 = vunpack.c.l.bf16 %v607
        %v624 = vunpack.c.l.bf16 %v608
        %v625 = vunpack.c.l.bf16 %v609
        %v626 = vunpack.c.l.bf16 %v610
        %v627 = vunpack.c.l.bf16 %v611
        %v628 = vunpack.c.l.bf16 %v612
        %v629 = vunpack.c.l.bf16 %v613
        %v630 = vunpack.c.l.bf16 %v614
        %v631 = vunpack.c.l.bf16 %v615
        %v632 = vunpack.c.l.bf16 %v616
        %v633 = vunpack.c.l.bf16 %v617
        %v634 = vunpack.c.l.bf16 %v618
        %v635 = vunpack.c.l.bf16 %v619
        %636 = vadd.xlane.f32.xlu0 %v620
        %v637 = vpop.xlane.xlu0 %636
        %638 = vadd.xlane.f32.xlu0 %v621
        %v639 = vpop.xlane.xlu0 %638
        %640 = vadd.xlane.f32.xlu0 %v622
        %v641 = vpop.xlane.xlu0 %640
        %642 = vadd.xlane.f32.xlu0 %v623
        %v643 = vpop.xlane.xlu0 %642
        %644 = vadd.xlane.f32.xlu0 %v624
        %v645 = vpop.xlane.xlu0 %644
        %646 = vadd.xlane.f32.xlu0 %v625
        %v647 = vpop.xlane.xlu0 %646
        %648 = vadd.xlane.f32.xlu0 %v626
        %v649 = vpop.xlane.xlu0 %648
        %650 = vadd.xlane.f32.xlu0 %v627
        %v651 = vpop.xlane.xlu0 %650
        %652 = vadd.xlane.f32.xlu0 %v628
        %v653 = vpop.xlane.xlu0 %652
        %654 = vadd.xlane.f32.xlu0 %v629
        %v655 = vpop.xlane.xlu0 %654
        %656 = vadd.xlane.f32.xlu0 %v630
        %v657 = vpop.xlane.xlu0 %656
        %658 = vadd.xlane.f32.xlu0 %v631
        %v659 = vpop.xlane.xlu0 %658
        %660 = vadd.xlane.f32.xlu0 %v632
        %v661 = vpop.xlane.xlu0 %660
        %662 = vadd.xlane.f32.xlu0 %v633
        %v663 = vpop.xlane.xlu0 %662
        %664 = vadd.xlane.f32.xlu0 %v634
        %v665 = vpop.xlane.xlu0 %664
        %666 = vadd.xlane.f32.xlu0 %v635
        %v667 = vpop.xlane.xlu0 %666
        %v668 = vmul.f32 %v637, 0.03125
        %v669 = vmul.f32 %v639, 0.03125
        %v670 = vmul.f32 %v641, 0.03125
        %v671 = vmul.f32 %v643, 0.03125
        %v672 = vmul.f32 %v645, 0.03125
        %v673 = vmul.f32 %v647, 0.03125
        %v674 = vmul.f32 %v649, 0.03125
        %v675 = vmul.f32 %v651, 0.03125
        %v676 = vmul.f32 %v653, 0.03125
        %v677 = vmul.f32 %v655, 0.03125
        %v678 = vmul.f32 %v657, 0.03125
        %v679 = vmul.f32 %v659, 0.03125
        %v680 = vmul.f32 %v661, 0.03125
        %v681 = vmul.f32 %v663, 0.03125
        %v682 = vmul.f32 %v665, 0.03125
        %v683 = vmul.f32 %v667, 0.03125
        %v684 = vsub.f32 %v620, %v668
        %v685 = vsub.f32 %v621, %v669
        %v686 = vsub.f32 %v622, %v670
        %v687 = vsub.f32 %v623, %v671
        %v688 = vsub.f32 %v624, %v672
        %v689 = vsub.f32 %v625, %v673
        %v690 = vsub.f32 %v626, %v674
        %v691 = vsub.f32 %v627, %v675
        %v692 = vsub.f32 %v628, %v676
        %v693 = vsub.f32 %v629, %v677
        %v694 = vsub.f32 %v630, %v678
        %v695 = vsub.f32 %v631, %v679
        %v696 = vsub.f32 %v632, %v680
        %v697 = vsub.f32 %v633, %v681
        %v698 = vsub.f32 %v634, %v682
        %v699 = vsub.f32 %v635, %v683
        %v700 = vlaneseq
        %v701 = vand.u32 %v700, 127
        %vm702 = vcmp.lt.s32.totalorder %v701, 32
        %v703 = vsel %vm702, 1, 0
        %v704 = vcvt.s32.f32 %v703
        %v705 = vmul.f32 %v684, %v704
        %v706 = vmul.f32 %v685, %v704
        %v707 = vmul.f32 %v686, %v704
        %v708 = vmul.f32 %v687, %v704
        %v709 = vmul.f32 %v688, %v704
        %v710 = vmul.f32 %v689, %v704
        %v711 = vmul.f32 %v690, %v704
        %v712 = vmul.f32 %v691, %v704
        %v713 = vmul.f32 %v692, %v704
        %v714 = vmul.f32 %v693, %v704
        %v715 = vmul.f32 %v694, %v704
        %v716 = vmul.f32 %v695, %v704
        %v717 = vmul.f32 %v696, %v704
        %v718 = vmul.f32 %v697, %v704
        %v719 = vmul.f32 %v698, %v704
        %v720 = vmul.f32 %v699, %v704
        %v721 = vmul.f32 %v705, %v705
        %v722 = vmul.f32 %v706, %v706
        %v723 = vmul.f32 %v707, %v707
        %v724 = vmul.f32 %v708, %v708
        %v725 = vmul.f32 %v709, %v709
        %v726 = vmul.f32 %v710, %v710
        %v727 = vmul.f32 %v711, %v711
        %v728 = vmul.f32 %v712, %v712
        %v729 = vmul.f32 %v713, %v713
        %v730 = vmul.f32 %v714, %v714
        %v731 = vmul.f32 %v715, %v715
        %v732 = vmul.f32 %v716, %v716
        %v733 = vmul.f32 %v717, %v717
        %v734 = vmul.f32 %v718, %v718
        %v735 = vmul.f32 %v719, %v719
        %v736 = vmul.f32 %v720, %v720
        %737 = vadd.xlane.f32.xlu0 %v721
        %v738 = vpop.xlane.xlu0 %737
        %739 = vadd.xlane.f32.xlu0 %v722
        %v740 = vpop.xlane.xlu0 %739
        %741 = vadd.xlane.f32.xlu0 %v723
        %v742 = vpop.xlane.xlu0 %741
        %743 = vadd.xlane.f32.xlu0 %v724
        %v744 = vpop.xlane.xlu0 %743
        %745 = vadd.xlane.f32.xlu0 %v725
        %v746 = vpop.xlane.xlu0 %745
        %747 = vadd.xlane.f32.xlu0 %v726
        %v748 = vpop.xlane.xlu0 %747
        %749 = vadd.xlane.f32.xlu0 %v727
        %v750 = vpop.xlane.xlu0 %749
        %751 = vadd.xlane.f32.xlu0 %v728
        %v752 = vpop.xlane.xlu0 %751
        %753 = vadd.xlane.f32.xlu0 %v729
        %v754 = vpop.xlane.xlu0 %753
        %755 = vadd.xlane.f32.xlu0 %v730
        %v756 = vpop.xlane.xlu0 %755
        %757 = vadd.xlane.f32.xlu0 %v731
        %v758 = vpop.xlane.xlu0 %757
        %759 = vadd.xlane.f32.xlu0 %v732
        %v760 = vpop.xlane.xlu0 %759
        %761 = vadd.xlane.f32.xlu0 %v733
        %v762 = vpop.xlane.xlu0 %761
        %763 = vadd.xlane.f32.xlu0 %v734
        %v764 = vpop.xlane.xlu0 %763
        %765 = vadd.xlane.f32.xlu0 %v735
        %v766 = vpop.xlane.xlu0 %765
        %767 = vadd.xlane.f32.xlu0 %v736
        %v768 = vpop.xlane.xlu0 %767
        %v769 = vmul.f32 %v738, 0.03125
        %v770 = vmul.f32 %v740, 0.03125
        %v771 = vmul.f32 %v742, 0.03125
        %v772 = vmul.f32 %v744, 0.03125
        %v773 = vmul.f32 %v746, 0.03125
        %v774 = vmul.f32 %v748, 0.03125
        %v775 = vmul.f32 %v750, 0.03125
        %v776 = vmul.f32 %v752, 0.03125
        %v777 = vmul.f32 %v754, 0.03125
        %v778 = vmul.f32 %v756, 0.03125
        %v779 = vmul.f32 %v758, 0.03125
        %v780 = vmul.f32 %v760, 0.03125
        %v781 = vmul.f32 %v762, 0.03125
        %v782 = vmul.f32 %v764, 0.03125
        %v783 = vmul.f32 %v766, 0.03125
        %v784 = vmul.f32 %v768, 0.03125
        %v785 = vadd.f32 %v769, 1e-05
        %v786 = vadd.f32 %v770, 1e-05
        %v787 = vadd.f32 %v771, 1e-05
        %v788 = vadd.f32 %v772, 1e-05
        %v789 = vadd.f32 %v773, 1e-05
        %v790 = vadd.f32 %v774, 1e-05
        %v791 = vadd.f32 %v775, 1e-05
        %v792 = vadd.f32 %v776, 1e-05
        %v793 = vadd.f32 %v777, 1e-05
        %v794 = vadd.f32 %v778, 1e-05
        %v795 = vadd.f32 %v779, 1e-05
        %v796 = vadd.f32 %v780, 1e-05
        %v797 = vadd.f32 %v781, 1e-05
        %v798 = vadd.f32 %v782, 1e-05
        %v799 = vadd.f32 %v783, 1e-05
        %v800 = vadd.f32 %v784, 1e-05
        %v801 = vrsqrt.pop %v785
        %v802 = vrsqrt.pop %v786
        %v803 = vrsqrt.pop %v787
        %v804 = vrsqrt.pop %v788
        %v805 = vrsqrt.pop %v789
        %v806 = vrsqrt.pop %v790
        %v807 = vrsqrt.pop %v791
        %v808 = vrsqrt.pop %v792
        %v809 = vrsqrt.pop %v793
        %v810 = vrsqrt.pop %v794
        %v811 = vrsqrt.pop %v795
        %v812 = vrsqrt.pop %v796
        %v813 = vrsqrt.pop %v797
        %v814 = vrsqrt.pop %v798
        %v815 = vrsqrt.pop %v799
        %v816 = vrsqrt.pop %v800
        %v817 = vmul.f32 %v705, %v801
        %v818 = vmul.f32 %v706, %v802
        %v819 = vmul.f32 %v707, %v803
        %v820 = vmul.f32 %v708, %v804
        %v821 = vmul.f32 %v709, %v805
        %v822 = vmul.f32 %v710, %v806
        %v823 = vmul.f32 %v711, %v807
        %v824 = vmul.f32 %v712, %v808
        %v825 = vmul.f32 %v713, %v809
        %v826 = vmul.f32 %v714, %v810
        %v827 = vmul.f32 %v715, %v811
        %v828 = vmul.f32 %v716, %v812
        %v829 = vmul.f32 %v717, %v813
        %v830 = vmul.f32 %v718, %v814
        %v831 = vmul.f32 %v719, %v815
        %v832 = vmul.f32 %v720, %v816
        %v833 = vld [vmem:[%s1] sm:$0x1]
        %v835 = vlaneseq
        %v836 = vshrl.u32 %v835, 7
        %v837 = vsub.s32 0, %v836
        %v838 = vrot.slane %v833, %v837
        %v840 = vmul.f32 %v817, %v838
        %v841 = vmul.f32 %v818, %v838
        %v842 = vmul.f32 %v819, %v838
        %v843 = vmul.f32 %v820, %v838
        %v844 = vmul.f32 %v821, %v838
        %v845 = vmul.f32 %v822, %v838
        %v846 = vmul.f32 %v823, %v838
        %v847 = vmul.f32 %v824, %v838
        %v848 = vmul.f32 %v825, %v838
        %v849 = vmul.f32 %v826, %v838
        %v850 = vmul.f32 %v827, %v838
        %v851 = vmul.f32 %v828, %v838
        %v852 = vmul.f32 %v829, %v838
        %v853 = vmul.f32 %v830, %v838
        %v854 = vmul.f32 %v831, %v838
        %v855 = vmul.f32 %v832, %v838
        %v856 = vld [vmem:[%s2] sm:$0x1]
        %v858 = vlaneseq
        %v859 = vshrl.u32 %v858, 7
        %v860 = vsub.s32 0, %v859
        %v861 = vrot.slane %v856, %v860
        %v863 = vadd.f32 %v840, %v861
        %v864 = vadd.f32 %v841, %v861
        %v865 = vadd.f32 %v842, %v861
        %v866 = vadd.f32 %v843, %v861
        %v867 = vadd.f32 %v844, %v861
        %v868 = vadd.f32 %v845, %v861
        %v869 = vadd.f32 %v846, %v861
        %v870 = vadd.f32 %v847, %v861
        %v871 = vadd.f32 %v848, %v861
        %v872 = vadd.f32 %v849, %v861
        %v873 = vadd.f32 %v850, %v861
        %v874 = vadd.f32 %v851, %v861
        %v875 = vadd.f32 %v852, %v861
        %v876 = vadd.f32 %v853, %v861
        %v877 = vadd.f32 %v854, %v861
        %v878 = vadd.f32 %v855, %v861
        %v879 = vpack.c.bf16 %v864, %v863
        %v880 = vpack.c.bf16 %v866, %v865
        %v881 = vpack.c.bf16 %v868, %v867
        %v882 = vpack.c.bf16 %v870, %v869
        %v883 = vpack.c.bf16 %v872, %v871
        %v884 = vpack.c.bf16 %v874, %v873
        %v885 = vpack.c.bf16 %v876, %v875
        %v886 = vpack.c.bf16 %v878, %v877
        %v887 = vld [vmem:[#allocation9] sm:$0xff]
        %v888 = vld [vmem:[#allocation9 + $0x8] sm:$0xf]
        %v889 = vld [vmem:[#allocation9 + $0xc] sm:$0xff]
        %v890 = vld [vmem:[#allocation9 + $0x14] sm:$0xf]
        %v891 = vld [vmem:[#allocation9 + $0x18] sm:$0xff]
        %v892 = vld [vmem:[#allocation9 + $0x20] sm:$0xf]
        %v893 = vld [vmem:[#allocation9 + $0x24] sm:$0xff]
        %v894 = vld [vmem:[#allocation9 + $0x2c] sm:$0xf]
        %v895 = vld [vmem:[#allocation9 + $0x30] sm:$0xff]
        %v896 = vld [vmem:[#allocation9 + $0x38] sm:$0xf]
        %v897 = vld [vmem:[#allocation9 + $0x3c] sm:$0xff]
        %v898 = vld [vmem:[#allocation9 + $0x44] sm:$0xf]
        %v899 = vld [vmem:[#allocation9 + $0x48] sm:$0xff]
        %v900 = vld [vmem:[#allocation9 + $0x50] sm:$0xf]
        %v901 = vld [vmem:[#allocation9 + $0x54] sm:$0xff]
        %v902 = vld [vmem:[#allocation9 + $0x5c] sm:$0xf]
        %v903 = vld [vmem:[#allocation9 + $0x60] sm:$0xff]
        %v904 = vld [vmem:[#allocation9 + $0x68] sm:$0xf]
        %v905 = vld [vmem:[#allocation9 + $0x6c] sm:$0xff]
        %v906 = vld [vmem:[#allocation9 + $0x74] sm:$0xf]
        %v907 = vld [vmem:[#allocation9 + $0x78] sm:$0xff]
        %v908 = vld [vmem:[#allocation9 + $0x80] sm:$0xf]
        %v909 = vld [vmem:[#allocation9 + $0x84] sm:$0xff]
        %v910 = vld [vmem:[#allocation9 + $0x8c] sm:$0xf]
        %v911 = vld [vmem:[#allocation9 + $0x90] sm:$0xff]
        %v912 = vld [vmem:[#allocation9 + $0x98] sm:$0xf]
        %v913 = vld [vmem:[#allocation9 + $0x9c] sm:$0xff]
        %v914 = vld [vmem:[#allocation9 + $0xa4] sm:$0xf]
        %v915 = vld [vmem:[#allocation9 + $0xa8] sm:$0xff]
        %v916 = vld [vmem:[#allocation9 + $0xb0] sm:$0xf]
        %v917 = vld [vmem:[#allocation9 + $0xb4] sm:$0xff]
        %v918 = vld [vmem:[#allocation9 + $0xbc] sm:$0xf]
        %v919 = vld [vmem:[%s5] sm:$0x7]
        %v921 = vlaneseq
        %v922 = vshrl.u32 %v921, 7
        %v923 = vsub.s32 0, %v922
        %v924 = vrot.slane %v919, %v923
        %v925 = vlaneseq
        %v926 = vshrl.u32 %v925, 7
        %v927 = vsub.s32 1, %v926
        %v928 = vrot.slane %v919, %v927
        %v929 = vlaneseq
        %v930 = vshrl.u32 %v929, 7
        %v931 = vsub.s32 2, %v930
        %v932 = vrot.slane %v919, %v931
        %v968 = vunpack.c.l.b16 %v887
        %v969 = vunpack.c.h.b16 %v887
        %v970 = vunpack.c.l.b16 %v888
        %v971 = vunpack.c.l.b16 %v889
        %v972 = vunpack.c.h.b16 %v889
        %v973 = vunpack.c.l.b16 %v890
        %v974 = vunpack.c.l.b16 %v891
        %v975 = vunpack.c.h.b16 %v891
        %v976 = vunpack.c.l.b16 %v892
        %v977 = vunpack.c.l.b16 %v893
        %v978 = vunpack.c.h.b16 %v893
        %v979 = vunpack.c.l.b16 %v894
        %v980 = vunpack.c.l.b16 %v895
        %v981 = vunpack.c.h.b16 %v895
        %v982 = vunpack.c.l.b16 %v896
        %v983 = vunpack.c.l.b16 %v897
        %v984 = vunpack.c.h.b16 %v897
        %v985 = vunpack.c.l.b16 %v898
        %v986 = vunpack.c.l.b16 %v899
        %v987 = vunpack.c.h.b16 %v899
        %v988 = vunpack.c.l.b16 %v900
        %v989 = vunpack.c.l.b16 %v901
        %v990 = vunpack.c.h.b16 %v901
        %v991 = vunpack.c.l.b16 %v902
        %v992 = vunpack.c.l.b16 %v903
        %v993 = vunpack.c.h.b16 %v903
        %v994 = vunpack.c.l.b16 %v904
        %v995 = vunpack.c.l.b16 %v905
        %v996 = vunpack.c.h.b16 %v905
        %v997 = vunpack.c.l.b16 %v906
        %v998 = vunpack.c.l.b16 %v907
        %v999 = vunpack.c.h.b16 %v907
        %v1000 = vunpack.c.l.b16 %v908
        %v1001 = vunpack.c.l.b16 %v909
        %v1002 = vunpack.c.h.b16 %v909
        %v1003 = vunpack.c.l.b16 %v910
        %v1004 = vunpack.c.l.b16 %v911
        %v1005 = vunpack.c.h.b16 %v911
        %v1006 = vunpack.c.l.b16 %v912
        %v1007 = vunpack.c.l.b16 %v913
        %v1008 = vunpack.c.h.b16 %v913
        %v1009 = vunpack.c.l.b16 %v914
        %v1010 = vunpack.c.l.b16 %v915
        %v1011 = vunpack.c.h.b16 %v915
        %v1012 = vunpack.c.l.b16 %v916
        %v1013 = vunpack.c.l.b16 %v917
        %v1014 = vunpack.c.h.b16 %v917
        %v1015 = vunpack.c.l.b16 %v918
        %v1016 = vpack.c.b16 %v971, %v968
        %v1017 = vpack.c.b16 %v972, %v969
        %v1018 = vpack.c.b16 %v973, %v970
        %v1019 = vpack.c.b16 %v977, %v974
        %v1020 = vpack.c.b16 %v978, %v975
        %v1021 = vpack.c.b16 %v979, %v976
        %v1022 = vpack.c.b16 %v983, %v980
        %v1023 = vpack.c.b16 %v984, %v981
        %v1024 = vpack.c.b16 %v985, %v982
        %v1025 = vpack.c.b16 %v989, %v986
        %v1026 = vpack.c.b16 %v990, %v987
        %v1027 = vpack.c.b16 %v991, %v988
        %v1028 = vpack.c.b16 %v995, %v992
        %v1029 = vpack.c.b16 %v996, %v993
        %v1030 = vpack.c.b16 %v997, %v994
        %v1031 = vpack.c.b16 %v1001, %v998
        %v1032 = vpack.c.b16 %v1002, %v999
        %v1033 = vpack.c.b16 %v1003, %v1000
        %v1034 = vpack.c.b16 %v1007, %v1004
        %v1035 = vpack.c.b16 %v1008, %v1005
        %v1036 = vpack.c.b16 %v1009, %v1006
        %v1037 = vpack.c.b16 %v1013, %v1010
        %v1038 = vpack.c.b16 %v1014, %v1011
        %v1039 = vpack.c.b16 %v1015, %v1012
        %1064 = vmatprep.subr.bf16.mxu0 %v1017
        %1065 = vmatpush1.bf16.msra.mxu0 %v1016
        %1066 = vmatprep.subr.bf16.mxu0 %v1020
        %1067 = vmatpush1.bf16.msra.mxu0 %v1019
        %1068 = vmatprep.subr.bf16.mxu0 %v1023
        %1069 = vmatpush1.bf16.msra.mxu0 %v1022
        %1070 = vmatprep.subr.bf16.mxu0 %v1026
        %1071 = vmatpush1.bf16.msra.mxu0 %v1025
        %1072 = vmatprep.subr.bf16.mxu0 %v1029
        %1073 = vmatpush1.bf16.msra.mxu0 %v1028
        %1074 = vmatprep.subr.bf16.mxu0 %v1032
        %1075 = vmatpush1.bf16.msra.mxu0 %v1031
        %1076 = vmatprep.subr.bf16.mxu0 %v1035
        %1077 = vmatpush1.bf16.msra.mxu0 %v1034
        %1078 = vmatprep.subr.bf16.mxu0 %v1038
        %1079 = vmatpush1.bf16.msra.mxu0 %v1037
        %1080 = vmatprep.subr.bf16.mxu0 0
        %1081 = vmatpush1.bf16.msra.mxu0 0
        %1082 = vmatprep.subr.bf16.mxu0 0
        %1083 = vmatpush1.bf16.msra.mxu0 0
        %1084 = vmatprep.subr.bf16.mxu0 0
        %1085 = vmatpush1.bf16.msra.mxu0 0
        %1086 = vmatprep.subr.bf16.mxu0 0
        %1087 = vmatpush1.bf16.msra.mxu0 0
        %1088 = vmatprep.subr.bf16.mxu0 0
        %1089 = vmatpush1.bf16.msra.mxu0 0
        %1090 = vmatprep.subr.bf16.mxu0 0
        %1091 = vmatpush1.bf16.msra.mxu0 0
        %1092 = vmatprep.subr.bf16.mxu0 0
        %1093 = vmatpush1.bf16.msra.mxu0 0
        %1094 = vmatprep.subr.bf16.mxu0 0
        %1095 = vmatpush1.bf16.msra.mxu0 0
        %1096 = vmatprep.mubr.bf16.mxu0 0
        %1097 = vmatmul.mubr.bf16.gmra.mrb[0].mxu0 %v879
        %v1098 = vpop.f32.mrb[0].mxu0
        %v1099 = vadd.f32 %v924, %v1098
        %v1100 = vpop.f32.mrb[0].mxu0
        %v1101 = vadd.f32 %v928, %v1100
        %v1102 = vpop.f32.mrb[0].mxu0
        %v1103 = vadd.f32 %v924, %v1102
        %v1104 = vpop.f32.mrb[0].mxu0
        %v1105 = vadd.f32 %v928, %v1104
        %1106 = vmatprep.mubr.bf16.mxu0 0
        %1107 = vmatmul.mubr.bf16.gmra.mrb[0].mxu0 %v880
        %v1108 = vpop.f32.mrb[0].mxu0
        %v1109 = vadd.f32 %v924, %v1108
        %v1110 = vpop.f32.mrb[0].mxu0
        %v1111 = vadd.f32 %v928, %v1110
        %v1112 = vpop.f32.mrb[0].mxu0
        %v1113 = vadd.f32 %v924, %v1112
        %v1114 = vpop.f32.mrb[0].mxu0
        %v1115 = vadd.f32 %v928, %v1114
        %1116 = vmatprep.mubr.bf16.mxu0 0
        %1117 = vmatmul.mubr.bf16.gmra.mrb[0].mxu0 %v881
        %v1118 = vpop.f32.mrb[0].mxu0
        %v1119 = vadd.f32 %v924, %v1118
        %v1120 = vpop.f32.mrb[0].mxu0
        %v1121 = vadd.f32 %v928, %v1120
        %v1122 = vpop.f32.mrb[0].mxu0
        %v1123 = vadd.f32 %v924, %v1122
        %v1124 = vpop.f32.mrb[0].mxu0
        %v1125 = vadd.f32 %v928, %v1124
        %1126 = vmatprep.mubr.bf16.mxu0 0
        %1127 = vmatmul.mubr.bf16.gmra.mrb[0].mxu0 %v882
        %v1128 = vpop.f32.mrb[0].mxu0
        %v1129 = vadd.f32 %v924, %v1128
        %v1130 = vpop.f32.mrb[0].mxu0
        %v1131 = vadd.f32 %v928, %v1130
        %v1132 = vpop.f32.mrb[0].mxu0
        %v1133 = vadd.f32 %v924, %v1132
        %v1134 = vpop.f32.mrb[0].mxu0
        %v1135 = vadd.f32 %v928, %v1134
        %1136 = vmatprep.mubr.bf16.mxu0 0
        %1137 = vmatmul.mubr.bf16.gmra.mrb[0].mxu0 %v883
        %v1138 = vpop.f32.mrb[0].mxu0
        %v1139 = vadd.f32 %v924, %v1138
        %v1140 = vpop.f32.mrb[0].mxu0
        %v1141 = vadd.f32 %v928, %v1140
        %v1142 = vpop.f32.mrb[0].mxu0
        %v1143 = vadd.f32 %v924, %v1142
        %v1144 = vpop.f32.mrb[0].mxu0
        %v1145 = vadd.f32 %v928, %v1144
        %1146 = vmatprep.mubr.bf16.mxu0 0
        %1147 = vmatmul.mubr.bf16.gmra.mrb[0].mxu0 %v884
        %v1148 = vpop.f32.mrb[0].mxu0
        %v1149 = vadd.f32 %v924, %v1148
        %v1150 = vpop.f32.mrb[0].mxu0
        %v1151 = vadd.f32 %v928, %v1150
        %v1152 = vpop.f32.mrb[0].mxu0
        %v1153 = vadd.f32 %v924, %v1152
        %v1154 = vpop.f32.mrb[0].mxu0
        %v1155 = vadd.f32 %v928, %v1154
        %1156 = vmatprep.mubr.bf16.mxu0 0
        %1157 = vmatmul.mubr.bf16.gmra.mrb[0].mxu0 %v885
        %v1158 = vpop.f32.mrb[0].mxu0
        %v1159 = vadd.f32 %v924, %v1158
        %v1160 = vpop.f32.mrb[0].mxu0
        %v1161 = vadd.f32 %v928, %v1160
        %v1162 = vpop.f32.mrb[0].mxu0
        %v1163 = vadd.f32 %v924, %v1162
        %v1164 = vpop.f32.mrb[0].mxu0
        %v1165 = vadd.f32 %v928, %v1164
        %1166 = vmatprep.mubr.bf16.mxu0 0
        %1167 = vmatmul.mubr.bf16.gmra.mrb[0].mxu0 %v886
        %v1168 = vpop.f32.mrb[0].mxu0
        %v1169 = vadd.f32 %v924, %v1168
        %v1170 = vpop.f32.mrb[0].mxu0
        %v1171 = vadd.f32 %v928, %v1170
        %v1172 = vpop.f32.mrb[0].mxu0
        %v1173 = vadd.f32 %v924, %v1172
        %v1174 = vpop.f32.mrb[0].mxu0
        %v1175 = vadd.f32 %v928, %v1174
        %1176 = vdwg.mxu0
        %1177 = vmatprep.subr.bf16.mxu0 0
        %1178 = vmatpush1.bf16.msra.mxu0 %v1018
        %1179 = vmatprep.subr.bf16.mxu0 0
        %1180 = vmatpush1.bf16.msra.mxu0 %v1021
        %1181 = vmatprep.subr.bf16.mxu0 0
        %1182 = vmatpush1.bf16.msra.mxu0 %v1024
        %1183 = vmatprep.subr.bf16.mxu0 0
        %1184 = vmatpush1.bf16.msra.mxu0 %v1027
        %1185 = vmatprep.subr.bf16.mxu0 0
        %1186 = vmatpush1.bf16.msra.mxu0 %v1030
        %1187 = vmatprep.subr.bf16.mxu0 0
        %1188 = vmatpush1.bf16.msra.mxu0 %v1033
        %1189 = vmatprep.subr.bf16.mxu0 0
        %1190 = vmatpush1.bf16.msra.mxu0 %v1036
        %1191 = vmatprep.subr.bf16.mxu0 0
        %1192 = vmatpush1.bf16.msra.mxu0 %v1039
        %1193 = vmatprep.subr.bf16.mxu0 0
        %1194 = vmatpush1.bf16.msra.mxu0 0
        %1195 = vmatprep.subr.bf16.mxu0 0
        %1196 = vmatpush1.bf16.msra.mxu0 0
        %1197 = vmatprep.subr.bf16.mxu0 0
        %1198 = vmatpush1.bf16.msra.mxu0 0
        %1199 = vmatprep.subr.bf16.mxu0 0
        %1200 = vmatpush1.bf16.msra.mxu0 0
        %1201 = vmatprep.subr.bf16.mxu0 0
        %1202 = vmatpush1.bf16.msra.mxu0 0
        %1203 = vmatprep.subr.bf16.mxu0 0
        %1204 = vmatpush1.bf16.msra.mxu0 0
        %1205 = vmatprep.subr.bf16.mxu0 0
        %1206 = vmatpush1.bf16.msra.mxu0 0
        %1207 = vmatprep.subr.bf16.mxu0 0
        %1208 = vmatpush1.bf16.msra.mxu0 0
        %1209 = vmatprep.mubr.bf16.mxu0 0
        %1210 = vmatmul.mubr.bf16.gmra.mrb[0].mxu0 %v879
        %v1211 = vpop.f32.mrb[0].mxu0
        %v1212 = vadd.f32 %v932, %v1211
        %v1213 = vpop.f32.mrb[0].mxu0
        %v1214 = vpop.f32.mrb[0].mxu0
        %v1215 = vadd.f32 %v932, %v1214
        %v1216 = vpop.f32.mrb[0].mxu0
        %1217 = vmatprep.mubr.bf16.mxu0 0
        %1218 = vmatmul.mubr.bf16.gmra.mrb[0].mxu0 %v880
        %v1219 = vpop.f32.mrb[0].mxu0
        %v1220 = vadd.f32 %v932, %v1219
        %v1221 = vpop.f32.mrb[0].mxu0
        %v1222 = vpop.f32.mrb[0].mxu0
        %v1223 = vadd.f32 %v932, %v1222
        %v1224 = vpop.f32.mrb[0].mxu0
        %1225 = vmatprep.mubr.bf16.mxu0 0
        %1226 = vmatmul.mubr.bf16.gmra.mrb[0].mxu0 %v881
        %v1227 = vpop.f32.mrb[0].mxu0
        %v1228 = vadd.f32 %v932, %v1227
        %v1229 = vpop.f32.mrb[0].mxu0
        %v1230 = vpop.f32.mrb[0].mxu0
        %v1231 = vadd.f32 %v932, %v1230
        %v1232 = vpop.f32.mrb[0].mxu0
        %1233 = vmatprep.mubr.bf16.mxu0 0
        %1234 = vmatmul.mubr.bf16.gmra.mrb[0].mxu0 %v882
        %v1235 = vpop.f32.mrb[0].mxu0
        %v1236 = vadd.f32 %v932, %v1235
        %v1237 = vpop.f32.mrb[0].mxu0
        %v1238 = vpop.f32.mrb[0].mxu0
        %v1239 = vadd.f32 %v932, %v1238
        %v1240 = vpop.f32.mrb[0].mxu0
        %1241 = vmatprep.mubr.bf16.mxu0 0
        %1242 = vmatmul.mubr.bf16.gmra.mrb[0].mxu0 %v883
        %v1243 = vpop.f32.mrb[0].mxu0
        %v1244 = vadd.f32 %v932, %v1243
        %v1245 = vpop.f32.mrb[0].mxu0
        %v1246 = vpop.f32.mrb[0].mxu0
        %v1247 = vadd.f32 %v932, %v1246
        %v1248 = vpop.f32.mrb[0].mxu0
        %1249 = vmatprep.mubr.bf16.mxu0 0
        %1250 = vmatmul.mubr.bf16.gmra.mrb[0].mxu0 %v884
        %v1251 = vpop.f32.mrb[0].mxu0
        %v1252 = vadd.f32 %v932, %v1251
        %v1253 = vpop.f32.mrb[0].mxu0
        %v1254 = vpop.f32.mrb[0].mxu0
        %v1255 = vadd.f32 %v932, %v1254
        %v1256 = vpop.f32.mrb[0].mxu0
        %1257 = vmatprep.mubr.bf16.mxu0 0
        %1258 = vmatmul.mubr.bf16.gmra.mrb[0].mxu0 %v885
        %v1259 = vpop.f32.mrb[0].mxu0
        %v1260 = vadd.f32 %v932, %v1259
        %v1261 = vpop.f32.mrb[0].mxu0
        %v1262 = vpop.f32.mrb[0].mxu0
        %v1263 = vadd.f32 %v932, %v1262
        %v1264 = vpop.f32.mrb[0].mxu0
        %1265 = vmatprep.mubr.bf16.mxu0 0
        %1266 = vmatmul.mubr.bf16.gmra.mrb[0].mxu0 %v886
        %v1267 = vpop.f32.mrb[0].mxu0
        %v1268 = vadd.f32 %v932, %v1267
        %v1269 = vpop.f32.mrb[0].mxu0
        %v1270 = vpop.f32.mrb[0].mxu0
        %v1271 = vadd.f32 %v932, %v1270
        %v1272 = vpop.f32.mrb[0].mxu0
        %1273 = vdwg.mxu0
        %v1274 = vpack.c.bf16 %v1103, %v1099
        %v1275 = vpack.c.bf16 %v1105, %v1101
        %v1276 = vpack.c.bf16 %v1215, %v1212
        %v1277 = vpack.c.bf16 %v1113, %v1109
        %v1278 = vpack.c.bf16 %v1115, %v1111
        %v1279 = vpack.c.bf16 %v1223, %v1220
        %v1280 = vpack.c.bf16 %v1123, %v1119
        %v1281 = vpack.c.bf16 %v1125, %v1121
        %v1282 = vpack.c.bf16 %v1231, %v1228
        %v1283 = vpack.c.bf16 %v1133, %v1129
        %v1284 = vpack.c.bf16 %v1135, %v1131
        %v1285 = vpack.c.bf16 %v1239, %v1236
        %v1286 = vpack.c.bf16 %v1143, %v1139
        %v1287 = vpack.c.bf16 %v1145, %v1141
        %v1288 = vpack.c.bf16 %v1247, %v1244
        %v1289 = vpack.c.bf16 %v1153, %v1149
        %v1290 = vpack.c.bf16 %v1155, %v1151
        %v1291 = vpack.c.bf16 %v1255, %v1252
        %v1292 = vpack.c.bf16 %v1163, %v1159
        %v1293 = vpack.c.bf16 %v1165, %v1161
        %v1294 = vpack.c.bf16 %v1263, %v1260
        %v1295 = vpack.c.bf16 %v1173, %v1169
        %v1296 = vpack.c.bf16 %v1175, %v1171
        %v1297 = vpack.c.bf16 %v1271, %v1268
        %1298 = vst [vmem:[#allocation6] sm:$0xff] %v1274
        %1299 = vst [vmem:[#allocation6 + $0x8] sm:$0xff] %v1275
        %1300 = vst [vmem:[#allocation6 + $0x10] sm:$0xff] %v1276
        %1301 = vst [vmem:[#allocation6 + $0x18] sm:$0xff] %v1277
        %1302 = vst [vmem:[#allocation6 + $0x20] sm:$0xff] %v1278
        %1303 = vst [vmem:[#allocation6 + $0x28] sm:$0xff] %v1279
        %1304 = vst [vmem:[#allocation6 + $0x30] sm:$0xff] %v1280
        %1305 = vst [vmem:[#allocation6 + $0x38] sm:$0xff] %v1281
        %1306 = vst [vmem:[#allocation6 + $0x40] sm:$0xff] %v1282
        %1307 = vst [vmem:[#allocation6 + $0x48] sm:$0xff] %v1283
        %1308 = vst [vmem:[#allocation6 + $0x50] sm:$0xff] %v1284
        %1309 = vst [vmem:[#allocation6 + $0x58] sm:$0xff] %v1285
        %1310 = vst [vmem:[#allocation6 + $0x60] sm:$0xff] %v1286
        %1311 = vst [vmem:[#allocation6 + $0x68] sm:$0xff] %v1287
        %1312 = vst [vmem:[#allocation6 + $0x70] sm:$0xff] %v1288
        %1313 = vst [vmem:[#allocation6 + $0x78] sm:$0xff] %v1289
        %1314 = vst [vmem:[#allocation6 + $0x80] sm:$0xff] %v1290
        %1315 = vst [vmem:[#allocation6 + $0x88] sm:$0xff] %v1291
        %1316 = vst [vmem:[#allocation6 + $0x90] sm:$0xff] %v1292
        %1317 = vst [vmem:[#allocation6 + $0x98] sm:$0xff] %v1293
        %1318 = vst [vmem:[#allocation6 + $0xa0] sm:$0xff] %v1294
        %1319 = vst [vmem:[#allocation6 + $0xa8] sm:$0xff] %v1295
        %1320 = vst [vmem:[#allocation6 + $0xb0] sm:$0xff] %v1296
        %1321 = vst [vmem:[#allocation6 + $0xb8] sm:$0xff] %v1297
        %v1322 = vld [vmem:[#allocation11] sm:$0xff]
        %v1323 = vld [vmem:[#allocation11 + $0x8] sm:$0xf]
        %v1324 = vld [vmem:[#allocation11 + $0xc] sm:$0xff]
        %v1325 = vld [vmem:[#allocation11 + $0x14] sm:$0xf]
        %v1326 = vld [vmem:[#allocation11 + $0x18] sm:$0xff]
        %v1327 = vld [vmem:[#allocation11 + $0x20] sm:$0xf]
        %v1328 = vld [vmem:[#allocation11 + $0x24] sm:$0xff]
        %v1329 = vld [vmem:[#allocation11 + $0x2c] sm:$0xf]
        %v1330 = vld [vmem:[#allocation11 + $0x30] sm:$0xff]
        %v1331 = vld [vmem:[#allocation11 + $0x38] sm:$0xf]
        %v1332 = vld [vmem:[#allocation11 + $0x3c] sm:$0xff]
        %v1333 = vld [vmem:[#allocation11 + $0x44] sm:$0xf]
        %v1334 = vld [vmem:[#allocation11 + $0x48] sm:$0xff]
        %v1335 = vld [vmem:[#allocation11 + $0x50] sm:$0xf]
        %v1336 = vld [vmem:[#allocation11 + $0x54] sm:$0xff]
        %v1337 = vld [vmem:[#allocation11 + $0x5c] sm:$0xf]
        %v1338 = vld [vmem:[#allocation11 + $0x60] sm:$0xff]
        %v1339 = vld [vmem:[#allocation11 + $0x68] sm:$0xf]
        %v1340 = vld [vmem:[#allocation11 + $0x6c] sm:$0xff]
        %v1341 = vld [vmem:[#allocation11 + $0x74] sm:$0xf]
        %v1342 = vld [vmem:[#allocation11 + $0x78] sm:$0xff]
        %v1343 = vld [vmem:[#allocation11 + $0x80] sm:$0xf]
        %v1344 = vld [vmem:[#allocation11 + $0x84] sm:$0xff]
        %v1345 = vld [vmem:[#allocation11 + $0x8c] sm:$0xf]
        %v1346 = vld [vmem:[#allocation11 + $0x90] sm:$0xff]
        %v1347 = vld [vmem:[#allocation11 + $0x98] sm:$0xf]
        %v1348 = vld [vmem:[#allocation11 + $0x9c] sm:$0xff]
        %v1349 = vld [vmem:[#allocation11 + $0xa4] sm:$0xf]
        %v1350 = vld [vmem:[#allocation11 + $0xa8] sm:$0xff]
        %v1351 = vld [vmem:[#allocation11 + $0xb0] sm:$0xf]
        %v1352 = vld [vmem:[#allocation11 + $0xb4] sm:$0xff]
        %v1353 = vld [vmem:[#allocation11 + $0xbc] sm:$0xf]
        %v1354 = vld [vmem:[%s6] sm:$0x7]
        %v1355 = vld [vmem:[#allocation2] sm:$0xff]
        %v1356 = vld [vmem:[#allocation2 + $0x8] sm:$0xff]
        %s1357 = smul.u32 0, 3
        %s1358 = smul.addr %s1357, 8
        %s1359 = scalar_lea.vmem [#allocation6], %s1358
        %v1360 = vld [vmem:[%s1359] sm:$0xff]
        %v1361 = vld [vmem:[%s1359 + $0x8] sm:$0xff]
        %v1362 = vld [vmem:[%s1359 + $0x10] sm:$0xff]
        %v1363 = vunpack.c.l.bf16 %v1360
        %v1364 = vunpack.c.l.bf16 %v1361
        %v1365 = vunpack.c.l.bf16 %v1362
        %v1366 = vunpack.c.h.bf16 %v1360
        %v1367 = vunpack.c.h.bf16 %v1361
        %v1368 = vunpack.c.h.bf16 %v1362
        %v1369 = vpack.c.bf16 %v1356, %v1355
        %v1371 = vlaneseq
        %v1372 = vshrl.u32 %v1371, 7
        %v1373 = vsub.s32 0, %v1372
        %v1374 = vrot.slane %v1354, %v1373
        %v1375 = vlaneseq
        %v1376 = vshrl.u32 %v1375, 7
        %v1377 = vsub.s32 1, %v1376
        %v1378 = vrot.slane %v1354, %v1377
        %v1379 = vlaneseq
        %v1380 = vshrl.u32 %v1379, 7
        %v1381 = vsub.s32 2, %v1380
        %v1382 = vrot.slane %v1354, %v1381
        %v1418 = vunpack.c.l.b16 %v1322
        %v1419 = vunpack.c.h.b16 %v1322
        %v1420 = vunpack.c.l.b16 %v1323
        %v1421 = vunpack.c.l.b16 %v1324
        %v1422 = vunpack.c.h.b16 %v1324
        %v1423 = vunpack.c.l.b16 %v1325
        %v1424 = vunpack.c.l.b16 %v1326
        %v1425 = vunpack.c.h.b16 %v1326
        %v1426 = vunpack.c.l.b16 %v1327
        %v1427 = vunpack.c.l.b16 %v1328
        %v1428 = vunpack.c.h.b16 %v1328
        %v1429 = vunpack.c.l.b16 %v1329
        %v1430 = vunpack.c.l.b16 %v1330
        %v1431 = vunpack.c.h.b16 %v1330
        %v1432 = vunpack.c.l.b16 %v1331
        %v1433 = vunpack.c.l.b16 %v1332
        %v1434 = vunpack.c.h.b16 %v1332
        %v1435 = vunpack.c.l.b16 %v1333
        %v1436 = vunpack.c.l.b16 %v1334
        %v1437 = vunpack.c.h.b16 %v1334
        %v1438 = vunpack.c.l.b16 %v1335
        %v1439 = vunpack.c.l.b16 %v1336
        %v1440 = vunpack.c.h.b16 %v1336
        %v1441 = vunpack.c.l.b16 %v1337
        %v1442 = vunpack.c.l.b16 %v1338
        %v1443 = vunpack.c.h.b16 %v1338
        %v1444 = vunpack.c.l.b16 %v1339
        %v1445 = vunpack.c.l.b16 %v1340
        %v1446 = vunpack.c.h.b16 %v1340
        %v1447 = vunpack.c.l.b16 %v1341
        %v1448 = vunpack.c.l.b16 %v1342
        %v1449 = vunpack.c.h.b16 %v1342
        %v1450 = vunpack.c.l.b16 %v1343
        %v1451 = vunpack.c.l.b16 %v1344
        %v1452 = vunpack.c.h.b16 %v1344
        %v1453 = vunpack.c.l.b16 %v1345
        %v1454 = vunpack.c.l.b16 %v1346
        %v1455 = vunpack.c.h.b16 %v1346
        %v1456 = vunpack.c.l.b16 %v1347
        %v1457 = vunpack.c.l.b16 %v1348
        %v1458 = vunpack.c.h.b16 %v1348
        %v1459 = vunpack.c.l.b16 %v1349
        %v1460 = vunpack.c.l.b16 %v1350
        %v1461 = vunpack.c.h.b16 %v1350
        %v1462 = vunpack.c.l.b16 %v1351
        %v1463 = vunpack.c.l.b16 %v1352
        %v1464 = vunpack.c.h.b16 %v1352
        %v1465 = vunpack.c.l.b16 %v1353
        %v1466 = vpack.c.b16 %v1421, %v1418
        %v1467 = vpack.c.b16 %v1422, %v1419
        %v1468 = vpack.c.b16 %v1423, %v1420
        %v1469 = vpack.c.b16 %v1427, %v1424
        %v1470 = vpack.c.b16 %v1428, %v1425
        %v1471 = vpack.c.b16 %v1429, %v1426
        %v1472 = vpack.c.b16 %v1433, %v1430
        %v1473 = vpack.c.b16 %v1434, %v1431
        %v1474 = vpack.c.b16 %v1435, %v1432
        %v1475 = vpack.c.b16 %v1439, %v1436
        %v1476 = vpack.c.b16 %v1440, %v1437
        %v1477 = vpack.c.b16 %v1441, %v1438
        %v1478 = vpack.c.b16 %v1445, %v1442
        %v1479 = vpack.c.b16 %v1446, %v1443
        %v1480 = vpack.c.b16 %v1447, %v1444
        %v1481 = vpack.c.b16 %v1451, %v1448
        %v1482 = vpack.c.b16 %v1452, %v1449
        %v1483 = vpack.c.b16 %v1453, %v1450
        %v1484 = vpack.c.b16 %v1457, %v1454
        %v1485 = vpack.c.b16 %v1458, %v1455
        %v1486 = vpack.c.b16 %v1459, %v1456
        %v1487 = vpack.c.b16 %v1463, %v1460
        %v1488 = vpack.c.b16 %v1464, %v1461
        %v1489 = vpack.c.b16 %v1465, %v1462
        %1514 = vmatprep.subr.bf16.mxu0 %v1467
        %1515 = vmatpush1.bf16.msra.mxu0 %v1466
        %1516 = vmatprep.subr.bf16.mxu0 %v1470
        %1517 = vmatpush1.bf16.msra.mxu0 %v1469
        %1518 = vmatprep.subr.bf16.mxu0 %v1473
        %1519 = vmatpush1.bf16.msra.mxu0 %v1472
        %1520 = vmatprep.subr.bf16.mxu0 %v1476
        %1521 = vmatpush1.bf16.msra.mxu0 %v1475
        %1522 = vmatprep.subr.bf16.mxu0 %v1479
        %1523 = vmatpush1.bf16.msra.mxu0 %v1478
        %1524 = vmatprep.subr.bf16.mxu0 %v1482
        %1525 = vmatpush1.bf16.msra.mxu0 %v1481
        %1526 = vmatprep.subr.bf16.mxu0 %v1485
        %1527 = vmatpush1.bf16.msra.mxu0 %v1484
        %1528 = vmatprep.subr.bf16.mxu0 %v1488
        %1529 = vmatpush1.bf16.msra.mxu0 %v1487
        %1530 = vmatprep.subr.bf16.mxu0 0
        %1531 = vmatpush1.bf16.msra.mxu0 0
        %1532 = vmatprep.subr.bf16.mxu0 0
        %1533 = vmatpush1.bf16.msra.mxu0 0
        %1534 = vmatprep.subr.bf16.mxu0 0
        %1535 = vmatpush1.bf16.msra.mxu0 0
        %1536 = vmatprep.subr.bf16.mxu0 0
        %1537 = vmatpush1.bf16.msra.mxu0 0
        %1538 = vmatprep.subr.bf16.mxu0 0
        %1539 = vmatpush1.bf16.msra.mxu0 0
        %1540 = vmatprep.subr.bf16.mxu0 0
        %1541 = vmatpush1.bf16.msra.mxu0 0
        %1542 = vmatprep.subr.bf16.mxu0 0
        %1543 = vmatpush1.bf16.msra.mxu0 0
        %1544 = vmatprep.subr.bf16.mxu0 0
        %1545 = vmatpush1.bf16.msra.mxu0 0
        %1546 = vmatprep.mubr.bf16.mxu0 0
        %1547 = vmatmul.mubr.bf16.gmra.mrb[0].mxu0 %v1369
        %v1548 = vpop.f32.mrb[0].mxu0
        %v1549 = vadd.f32 %v1374, %v1548
        %v1550 = vpop.f32.mrb[0].mxu0
        %v1551 = vadd.f32 %v1378, %v1550
        %v1552 = vpop.f32.mrb[0].mxu0
        %v1553 = vadd.f32 %v1374, %v1552
        %v1554 = vpop.f32.mrb[0].mxu0
        %v1555 = vadd.f32 %v1378, %v1554
        %1556 = vdwg.mxu0
        %1557 = vmatprep.subr.bf16.mxu0 0
        %1558 = vmatpush1.bf16.msra.mxu0 %v1468
        %1559 = vmatprep.subr.bf16.mxu0 0
        %1560 = vmatpush1.bf16.msra.mxu0 %v1471
        %1561 = vmatprep.subr.bf16.mxu0 0
        %1562 = vmatpush1.bf16.msra.mxu0 %v1474
        %1563 = vmatprep.subr.bf16.mxu0 0
        %1564 = vmatpush1.bf16.msra.mxu0 %v1477
        %1565 = vmatprep.subr.bf16.mxu0 0
        %1566 = vmatpush1.bf16.msra.mxu0 %v1480
        %1567 = vmatprep.subr.bf16.mxu0 0
        %1568 = vmatpush1.bf16.msra.mxu0 %v1483
        %1569 = vmatprep.subr.bf16.mxu0 0
        %1570 = vmatpush1.bf16.msra.mxu0 %v1486
        %1571 = vmatprep.subr.bf16.mxu0 0
        %1572 = vmatpush1.bf16.msra.mxu0 %v1489
        %1573 = vmatprep.subr.bf16.mxu0 0
        %1574 = vmatpush1.bf16.msra.mxu0 0
        %1575 = vmatprep.subr.bf16.mxu0 0
        %1576 = vmatpush1.bf16.msra.mxu0 0
        %1577 = vmatprep.subr.bf16.mxu0 0
        %1578 = vmatpush1.bf16.msra.mxu0 0
        %1579 = vmatprep.subr.bf16.mxu0 0
        %1580 = vmatpush1.bf16.msra.mxu0 0
        %1581 = vmatprep.subr.bf16.mxu0 0
        %1582 = vmatpush1.bf16.msra.mxu0 0
        %1583 = vmatprep.subr.bf16.mxu0 0
        %1584 = vmatpush1.bf16.msra.mxu0 0
        %1585 = vmatprep.subr.bf16.mxu0 0
        %1586 = vmatpush1.bf16.msra.mxu0 0
        %1587 = vmatprep.subr.bf16.mxu0 0
        %1588 = vmatpush1.bf16.msra.mxu0 0
        %1589 = vmatprep.mubr.bf16.mxu0 0
        %1590 = vmatmul.mubr.bf16.gmra.mrb[0].mxu0 %v1369
        %v1591 = vpop.f32.mrb[0].mxu0
        %v1592 = vadd.f32 %v1382, %v1591
        %v1593 = vpop.f32.mrb[0].mxu0
        %v1594 = vpop.f32.mrb[0].mxu0
        %v1595 = vadd.f32 %v1382, %v1594
        %v1596 = vpop.f32.mrb[0].mxu0
        %1597 = vdwg.mxu0
        %v1598 = vadd.f32 %v1363, %v1549
        %v1599 = vadd.f32 %v1366, %v1553
        %v1600 = vxor.u32 %v1598, 2147483648
        %v1601 = vxor.u32 %v1599, 2147483648
        %v1602 = vmul.f32 %v1600, 1.442695
        %v1603 = vpow.pop %v1602
        %v1604 = vmul.f32 %v1601, 1.442695
        %v1605 = vpow.pop %v1604
        %v1606 = vadd.f32 %v1603, 1.0
        %v1607 = vadd.f32 %v1605, 1.0
        %v1608 = vrcp.pop %v1606
        %v1609 = vmul.f32 1.0, %v1608
        %v1610 = vrcp.pop %v1607
        %v1611 = vmul.f32 1.0, %v1610
        %v1612 = vadd.f32 %v1364, %v1551
        %v1613 = vadd.f32 %v1367, %v1555
        %v1614 = vxor.u32 %v1612, 2147483648
        %v1615 = vxor.u32 %v1613, 2147483648
        %v1616 = vmul.f32 %v1614, 1.442695
        %v1617 = vpow.pop %v1616
        %v1618 = vmul.f32 %v1615, 1.442695
        %v1619 = vpow.pop %v1618
        %v1620 = vadd.f32 %v1617, 1.0
        %v1621 = vadd.f32 %v1619, 1.0
        %v1622 = vrcp.pop %v1620
        %v1623 = vmul.f32 1.0, %v1622
        %v1624 = vrcp.pop %v1621
        %v1625 = vmul.f32 1.0, %v1624
        %v1626 = vmul.f32 %v1609, %v1592
        %v1627 = vmul.f32 %v1611, %v1595
        %v1628 = vadd.f32 %v1365, %v1626
        %v1629 = vadd.f32 %v1368, %v1627
        %v1630 = vtanh.pop %v1628
        %v1631 = vtanh.pop %v1629
        %v1632 = vsub.f32 1.0, %v1623
        %v1633 = vsub.f32 1.0, %v1625
        %v1634 = vmul.f32 %v1632, %v1630
        %v1635 = vmul.f32 %v1633, %v1631
        %v1636 = vmul.f32 %v1623, %v1355
        %v1637 = vmul.f32 %v1625, %v1356
        %v1638 = vadd.f32 %v1634, %v1636
        %v1639 = vadd.f32 %v1635, %v1637
        %v1640 = vpack.c.bf16 %v1639, %v1638
        %1641 = vst [vmem:[#allocation5] sm:$0xff] %v1640
        %s1642 = smul.u32 1, 3
        %s1643 = smul.addr %s1642, 8
        %s1644 = scalar_lea.vmem [#allocation6], %s1643
        %v1645 = vld [vmem:[%s1644] sm:$0xff]
        %v1646 = vld [vmem:[%s1644 + $0x8] sm:$0xff]
        %v1647 = vld [vmem:[%s1644 + $0x10] sm:$0xff]
        %v1648 = vunpack.c.l.bf16 %v1645
        %v1649 = vunpack.c.l.bf16 %v1646
        %v1650 = vunpack.c.l.bf16 %v1647
        %v1651 = vunpack.c.h.bf16 %v1645
        %v1652 = vunpack.c.h.bf16 %v1646
        %v1653 = vunpack.c.h.bf16 %v1647
        %1654 = vmatprep.subr.bf16.mxu0 %v1467
        %1655 = vmatpush1.bf16.msra.mxu0 %v1466
        %1656 = vmatprep.subr.bf16.mxu0 %v1470
        %1657 = vmatpush1.bf16.msra.mxu0 %v1469
        %1658 = vmatprep.subr.bf16.mxu0 %v1473
        %1659 = vmatpush1.bf16.msra.mxu0 %v1472
        %1660 = vmatprep.subr.bf16.mxu0 %v1476
        %1661 = vmatpush1.bf16.msra.mxu0 %v1475
        %1662 = vmatprep.subr.bf16.mxu0 %v1479
        %1663 = vmatpush1.bf16.msra.mxu0 %v1478
        %1664 = vmatprep.subr.bf16.mxu0 %v1482
        %1665 = vmatpush1.bf16.msra.mxu0 %v1481
        %1666 = vmatprep.subr.bf16.mxu0 %v1485
        %1667 = vmatpush1.bf16.msra.mxu0 %v1484
        %1668 = vmatprep.subr.bf16.mxu0 %v1488
        %1669 = vmatpush1.bf16.msra.mxu0 %v1487
        %1670 = vmatprep.subr.bf16.mxu0 0
        %1671 = vmatpush1.bf16.msra.mxu0 0
        %1672 = vmatprep.subr.bf16.mxu0 0
        %1673 = vmatpush1.bf16.msra.mxu0 0
        %1674 = vmatprep.subr.bf16.mxu0 0
        %1675 = vmatpush1.bf16.msra.mxu0 0
        %1676 = vmatprep.subr.bf16.mxu0 0
        %1677 = vmatpush1.bf16.msra.mxu0 0
        %1678 = vmatprep.subr.bf16.mxu0 0
        %1679 = vmatpush1.bf16.msra.mxu0 0
        %1680 = vmatprep.subr.bf16.mxu0 0
        %1681 = vmatpush1.bf16.msra.mxu0 0
        %1682 = vmatprep.subr.bf16.mxu0 0
        %1683 = vmatpush1.bf16.msra.mxu0 0
        %1684 = vmatprep.subr.bf16.mxu0 0
        %1685 = vmatpush1.bf16.msra.mxu0 0
        %1686 = vmatprep.mubr.bf16.mxu0 0
        %1687 = vmatmul.mubr.bf16.gmra.mrb[0].mxu0 %v1640
        %v1688 = vpop.f32.mrb[0].mxu0
        %v1689 = vadd.f32 %v1374, %v1688
        %v1690 = vpop.f32.mrb[0].mxu0
        %v1691 = vadd.f32 %v1378, %v1690
        %v1692 = vpop.f32.mrb[0].mxu0
        %v1693 = vadd.f32 %v1374, %v1692
        %v1694 = vpop.f32.mrb[0].mxu0
        %v1695 = vadd.f32 %v1378, %v1694
        %1696 = vdwg.mxu0
        %1697 = vmatprep.subr.bf16.mxu0 0
        %1698 = vmatpush1.bf16.msra.mxu0 %v1468
        %1699 = vmatprep.subr.bf16.mxu0 0
        %1700 = vmatpush1.bf16.msra.mxu0 %v1471
        %1701 = vmatprep.subr.bf16.mxu0 0
        %1702 = vmatpush1.bf16.msra.mxu0 %v1474
        %1703 = vmatprep.subr.bf16.mxu0 0
        %1704 = vmatpush1.bf16.msra.mxu0 %v1477
        %1705 = vmatprep.subr.bf16.mxu0 0
        %1706 = vmatpush1.bf16.msra.mxu0 %v1480
        %1707 = vmatprep.subr.bf16.mxu0 0
        %1708 = vmatpush1.bf16.msra.mxu0 %v1483
        %1709 = vmatprep.subr.bf16.mxu0 0
        %1710 = vmatpush1.bf16.msra.mxu0 %v1486
        %1711 = vmatprep.subr.bf16.mxu0 0
        %1712 = vmatpush1.bf16.msra.mxu0 %v1489
        %1713 = vmatprep.subr.bf16.mxu0 0
        %1714 = vmatpush1.bf16.msra.mxu0 0
        %1715 = vmatprep.subr.bf16.mxu0 0
        %1716 = vmatpush1.bf16.msra.mxu0 0
        %1717 = vmatprep.subr.bf16.mxu0 0
        %1718 = vmatpush1.bf16.msra.mxu0 0
        %1719 = vmatprep.subr.bf16.mxu0 0
        %1720 = vmatpush1.bf16.msra.mxu0 0
        %1721 = vmatprep.subr.bf16.mxu0 0
        %1722 = vmatpush1.bf16.msra.mxu0 0
        %1723 = vmatprep.subr.bf16.mxu0 0
        %1724 = vmatpush1.bf16.msra.mxu0 0
        %1725 = vmatprep.subr.bf16.mxu0 0
        %1726 = vmatpush1.bf16.msra.mxu0 0
        %1727 = vmatprep.subr.bf16.mxu0 0
        %1728 = vmatpush1.bf16.msra.mxu0 0
        %1729 = vmatprep.mubr.bf16.mxu0 0
        %1730 = vmatmul.mubr.bf16.gmra.mrb[0].mxu0 %v1640
        %v1731 = vpop.f32.mrb[0].mxu0
        %v1732 = vadd.f32 %v1382, %v1731
        %v1733 = vpop.f32.mrb[0].mxu0
        %v1734 = vpop.f32.mrb[0].mxu0
        %v1735 = vadd.f32 %v1382, %v1734
        %v1736 = vpop.f32.mrb[0].mxu0
        %1737 = vdwg.mxu0
        %v1738 = vadd.f32 %v1648, %v1689
        %v1739 = vadd.f32 %v1651, %v1693
        %v1740 = vxor.u32 %v1738, 2147483648
        %v1741 = vxor.u32 %v1739, 2147483648
        %v1742 = vmul.f32 %v1740, 1.442695
        %v1743 = vpow.pop %v1742
        %v1744 = vmul.f32 %v1741, 1.442695
        %v1745 = vpow.pop %v1744
        %v1746 = vadd.f32 %v1743, 1.0
        %v1747 = vadd.f32 %v1745, 1.0
        %v1748 = vrcp.pop %v1746
        %v1749 = vmul.f32 1.0, %v1748
        %v1750 = vrcp.pop %v1747
        %v1751 = vmul.f32 1.0, %v1750
        %v1752 = vadd.f32 %v1649, %v1691
        %v1753 = vadd.f32 %v1652, %v1695
        %v1754 = vxor.u32 %v1752, 2147483648
        %v1755 = vxor.u32 %v1753, 2147483648
        %v1756 = vmul.f32 %v1754, 1.442695
        %v1757 = vpow.pop %v1756
        %v1758 = vmul.f32 %v1755, 1.442695
        %v1759 = vpow.pop %v1758
        %v1760 = vadd.f32 %v1757, 1.0
        %v1761 = vadd.f32 %v1759, 1.0
        %v1762 = vrcp.pop %v1760
        %v1763 = vmul.f32 1.0, %v1762
        %v1764 = vrcp.pop %v1761
        %v1765 = vmul.f32 1.0, %v1764
        %v1766 = vmul.f32 %v1749, %v1732
        %v1767 = vmul.f32 %v1751, %v1735
        %v1768 = vadd.f32 %v1650, %v1766
        %v1769 = vadd.f32 %v1653, %v1767
        %v1770 = vtanh.pop %v1768
        %v1771 = vtanh.pop %v1769
        %v1772 = vsub.f32 1.0, %v1763
        %v1773 = vsub.f32 1.0, %v1765
        %v1774 = vmul.f32 %v1772, %v1770
        %v1775 = vmul.f32 %v1773, %v1771
        %v1776 = vmul.f32 %v1763, %v1638
        %v1777 = vmul.f32 %v1765, %v1639
        %v1778 = vadd.f32 %v1774, %v1776
        %v1779 = vadd.f32 %v1775, %v1777
        %v1780 = vpack.c.bf16 %v1779, %v1778
        %s1781 = scalar_lea.vmem [#allocation5], 8
        %1782 = vst [vmem:[%s1781] sm:$0xff] %v1780
        %s1783 = smul.u32 2, 3
        %s1784 = smul.addr %s1783, 8
        %s1785 = scalar_lea.vmem [#allocation6], %s1784
        %v1786 = vld [vmem:[%s1785] sm:$0xff]
        %v1787 = vld [vmem:[%s1785 + $0x8] sm:$0xff]
        %v1788 = vld [vmem:[%s1785 + $0x10] sm:$0xff]
        %v1789 = vunpack.c.l.bf16 %v1786
        %v1790 = vunpack.c.l.bf16 %v1787
        %v1791 = vunpack.c.l.bf16 %v1788
        %v1792 = vunpack.c.h.bf16 %v1786
        %v1793 = vunpack.c.h.bf16 %v1787
        %v1794 = vunpack.c.h.bf16 %v1788
        %1795 = vmatprep.subr.bf16.mxu0 %v1467
        %1796 = vmatpush1.bf16.msra.mxu0 %v1466
        %1797 = vmatprep.subr.bf16.mxu0 %v1470
        %1798 = vmatpush1.bf16.msra.mxu0 %v1469
        %1799 = vmatprep.subr.bf16.mxu0 %v1473
        %1800 = vmatpush1.bf16.msra.mxu0 %v1472
        %1801 = vmatprep.subr.bf16.mxu0 %v1476
        %1802 = vmatpush1.bf16.msra.mxu0 %v1475
        %1803 = vmatprep.subr.bf16.mxu0 %v1479
        %1804 = vmatpush1.bf16.msra.mxu0 %v1478
        %1805 = vmatprep.subr.bf16.mxu0 %v1482
        %1806 = vmatpush1.bf16.msra.mxu0 %v1481
        %1807 = vmatprep.subr.bf16.mxu0 %v1485
        %1808 = vmatpush1.bf16.msra.mxu0 %v1484
        %1809 = vmatprep.subr.bf16.mxu0 %v1488
        %1810 = vmatpush1.bf16.msra.mxu0 %v1487
        %1811 = vmatprep.subr.bf16.mxu0 0
        %1812 = vmatpush1.bf16.msra.mxu0 0
        %1813 = vmatprep.subr.bf16.mxu0 0
        %1814 = vmatpush1.bf16.msra.mxu0 0
        %1815 = vmatprep.subr.bf16.mxu0 0
        %1816 = vmatpush1.bf16.msra.mxu0 0
        %1817 = vmatprep.subr.bf16.mxu0 0
        %1818 = vmatpush1.bf16.msra.mxu0 0
        %1819 = vmatprep.subr.bf16.mxu0 0
        %1820 = vmatpush1.bf16.msra.mxu0 0
        %1821 = vmatprep.subr.bf16.mxu0 0
        %1822 = vmatpush1.bf16.msra.mxu0 0
        %1823 = vmatprep.subr.bf16.mxu0 0
        %1824 = vmatpush1.bf16.msra.mxu0 0
        %1825 = vmatprep.subr.bf16.mxu0 0
        %1826 = vmatpush1.bf16.msra.mxu0 0
        %1827 = vmatprep.mubr.bf16.mxu0 0
        %1828 = vmatmul.mubr.bf16.gmra.mrb[0].mxu0 %v1780
        %v1829 = vpop.f32.mrb[0].mxu0
        %v1830 = vadd.f32 %v1374, %v1829
        %v1831 = vpop.f32.mrb[0].mxu0
        %v1832 = vadd.f32 %v1378, %v1831
        %v1833 = vpop.f32.mrb[0].mxu0
        %v1834 = vadd.f32 %v1374, %v1833
        %v1835 = vpop.f32.mrb[0].mxu0
        %v1836 = vadd.f32 %v1378, %v1835
        %1837 = vdwg.mxu0
        %1838 = vmatprep.subr.bf16.mxu0 0
        %1839 = vmatpush1.bf16.msra.mxu0 %v1468
        %1840 = vmatprep.subr.bf16.mxu0 0
        %1841 = vmatpush1.bf16.msra.mxu0 %v1471
        %1842 = vmatprep.subr.bf16.mxu0 0
        %1843 = vmatpush1.bf16.msra.mxu0 %v1474
        %1844 = vmatprep.subr.bf16.mxu0 0
        %1845 = vmatpush1.bf16.msra.mxu0 %v1477
        %1846 = vmatprep.subr.bf16.mxu0 0
        %1847 = vmatpush1.bf16.msra.mxu0 %v1480
        %1848 = vmatprep.subr.bf16.mxu0 0
        %1849 = vmatpush1.bf16.msra.mxu0 %v1483
        %1850 = vmatprep.subr.bf16.mxu0 0
        %1851 = vmatpush1.bf16.msra.mxu0 %v1486
        %1852 = vmatprep.subr.bf16.mxu0 0
        %1853 = vmatpush1.bf16.msra.mxu0 %v1489
        %1854 = vmatprep.subr.bf16.mxu0 0
        %1855 = vmatpush1.bf16.msra.mxu0 0
        %1856 = vmatprep.subr.bf16.mxu0 0
        %1857 = vmatpush1.bf16.msra.mxu0 0
        %1858 = vmatprep.subr.bf16.mxu0 0
        %1859 = vmatpush1.bf16.msra.mxu0 0
        %1860 = vmatprep.subr.bf16.mxu0 0
        %1861 = vmatpush1.bf16.msra.mxu0 0
        %1862 = vmatprep.subr.bf16.mxu0 0
        %1863 = vmatpush1.bf16.msra.mxu0 0
        %1864 = vmatprep.subr.bf16.mxu0 0
        %1865 = vmatpush1.bf16.msra.mxu0 0
        %1866 = vmatprep.subr.bf16.mxu0 0
        %1867 = vmatpush1.bf16.msra.mxu0 0
        %1868 = vmatprep.subr.bf16.mxu0 0
        %1869 = vmatpush1.bf16.msra.mxu0 0
        %1870 = vmatprep.mubr.bf16.mxu0 0
        %1871 = vmatmul.mubr.bf16.gmra.mrb[0].mxu0 %v1780
        %v1872 = vpop.f32.mrb[0].mxu0
        %v1873 = vadd.f32 %v1382, %v1872
        %v1874 = vpop.f32.mrb[0].mxu0
        %v1875 = vpop.f32.mrb[0].mxu0
        %v1876 = vadd.f32 %v1382, %v1875
        %v1877 = vpop.f32.mrb[0].mxu0
        %1878 = vdwg.mxu0
        %v1879 = vadd.f32 %v1789, %v1830
        %v1880 = vadd.f32 %v1792, %v1834
        %v1881 = vxor.u32 %v1879, 2147483648
        %v1882 = vxor.u32 %v1880, 2147483648
        %v1883 = vmul.f32 %v1881, 1.442695
        %v1884 = vpow.pop %v1883
        %v1885 = vmul.f32 %v1882, 1.442695
        %v1886 = vpow.pop %v1885
        %v1887 = vadd.f32 %v1884, 1.0
        %v1888 = vadd.f32 %v1886, 1.0
        %v1889 = vrcp.pop %v1887
        %v1890 = vmul.f32 1.0, %v1889
        %v1891 = vrcp.pop %v1888
        %v1892 = vmul.f32 1.0, %v1891
        %v1893 = vadd.f32 %v1790, %v1832
        %v1894 = vadd.f32 %v1793, %v1836
        %v1895 = vxor.u32 %v1893, 2147483648
        %v1896 = vxor.u32 %v1894, 2147483648
        %v1897 = vmul.f32 %v1895, 1.442695
        %v1898 = vpow.pop %v1897
        %v1899 = vmul.f32 %v1896, 1.442695
        %v1900 = vpow.pop %v1899
        %v1901 = vadd.f32 %v1898, 1.0
        %v1902 = vadd.f32 %v1900, 1.0
        %v1903 = vrcp.pop %v1901
        %v1904 = vmul.f32 1.0, %v1903
        %v1905 = vrcp.pop %v1902
        %v1906 = vmul.f32 1.0, %v1905
        %v1907 = vmul.f32 %v1890, %v1873
        %v1908 = vmul.f32 %v1892, %v1876
        %v1909 = vadd.f32 %v1791, %v1907
        %v1910 = vadd.f32 %v1794, %v1908
        %v1911 = vtanh.pop %v1909
        %v1912 = vtanh.pop %v1910
        %v1913 = vsub.f32 1.0, %v1904
        %v1914 = vsub.f32 1.0, %v1906
        %v1915 = vmul.f32 %v1913, %v1911
        %v1916 = vmul.f32 %v1914, %v1912
        %v1917 = vmul.f32 %v1904, %v1778
        %v1918 = vmul.f32 %v1906, %v1779
        %v1919 = vadd.f32 %v1915, %v1917
        %v1920 = vadd.f32 %v1916, %v1918
        %v1921 = vpack.c.bf16 %v1920, %v1919
        %s1922 = scalar_lea.vmem [#allocation5], 16
        %1923 = vst [vmem:[%s1922] sm:$0xff] %v1921
        %s1924 = smul.u32 3, 3
        %s1925 = smul.addr %s1924, 8
        %s1926 = scalar_lea.vmem [#allocation6], %s1925
        %v1927 = vld [vmem:[%s1926] sm:$0xff]
        %v1928 = vld [vmem:[%s1926 + $0x8] sm:$0xff]
        %v1929 = vld [vmem:[%s1926 + $0x10] sm:$0xff]
        %v1930 = vunpack.c.l.bf16 %v1927
        %v1931 = vunpack.c.l.bf16 %v1928
        %v1932 = vunpack.c.l.bf16 %v1929
        %v1933 = vunpack.c.h.bf16 %v1927
        %v1934 = vunpack.c.h.bf16 %v1928
        %v1935 = vunpack.c.h.bf16 %v1929
        %1936 = vmatprep.subr.bf16.mxu0 %v1467
        %1937 = vmatpush1.bf16.msra.mxu0 %v1466
        %1938 = vmatprep.subr.bf16.mxu0 %v1470
        %1939 = vmatpush1.bf16.msra.mxu0 %v1469
        %1940 = vmatprep.subr.bf16.mxu0 %v1473
        %1941 = vmatpush1.bf16.msra.mxu0 %v1472
        %1942 = vmatprep.subr.bf16.mxu0 %v1476
        %1943 = vmatpush1.bf16.msra.mxu0 %v1475
        %1944 = vmatprep.subr.bf16.mxu0 %v1479
        %1945 = vmatpush1.bf16.msra.mxu0 %v1478
        %1946 = vmatprep.subr.bf16.mxu0 %v1482
        %1947 = vmatpush1.bf16.msra.mxu0 %v1481
        %1948 = vmatprep.subr.bf16.mxu0 %v1485
        %1949 = vmatpush1.bf16.msra.mxu0 %v1484
        %1950 = vmatprep.subr.bf16.mxu0 %v1488
        %1951 = vmatpush1.bf16.msra.mxu0 %v1487
        %1952 = vmatprep.subr.bf16.mxu0 0
        %1953 = vmatpush1.bf16.msra.mxu0 0
        %1954 = vmatprep.subr.bf16.mxu0 0
        %1955 = vmatpush1.bf16.msra.mxu0 0
        %1956 = vmatprep.subr.bf16.mxu0 0
        %1957 = vmatpush1.bf16.msra.mxu0 0
        %1958 = vmatprep.subr.bf16.mxu0 0
        %1959 = vmatpush1.bf16.msra.mxu0 0
        %1960 = vmatprep.subr.bf16.mxu0 0
        %1961 = vmatpush1.bf16.msra.mxu0 0
        %1962 = vmatprep.subr.bf16.mxu0 0
        %1963 = vmatpush1.bf16.msra.mxu0 0
        %1964 = vmatprep.subr.bf16.mxu0 0
        %1965 = vmatpush1.bf16.msra.mxu0 0
        %1966 = vmatprep.subr.bf16.mxu0 0
        %1967 = vmatpush1.bf16.msra.mxu0 0
        %1968 = vmatprep.mubr.bf16.mxu0 0
        %1969 = vmatmul.mubr.bf16.gmra.mrb[0].mxu0 %v1921
        %v1970 = vpop.f32.mrb[0].mxu0
        %v1971 = vadd.f32 %v1374, %v1970
        %v1972 = vpop.f32.mrb[0].mxu0
        %v1973 = vadd.f32 %v1378, %v1972
        %v1974 = vpop.f32.mrb[0].mxu0
        %v1975 = vadd.f32 %v1374, %v1974
        %v1976 = vpop.f32.mrb[0].mxu0
        %v1977 = vadd.f32 %v1378, %v1976
        %1978 = vdwg.mxu0
        %1979 = vmatprep.subr.bf16.mxu0 0
        %1980 = vmatpush1.bf16.msra.mxu0 %v1468
        %1981 = vmatprep.subr.bf16.mxu0 0
        %1982 = vmatpush1.bf16.msra.mxu0 %v1471
        %1983 = vmatprep.subr.bf16.mxu0 0
        %1984 = vmatpush1.bf16.msra.mxu0 %v1474
        %1985 = vmatprep.subr.bf16.mxu0 0
        %1986 = vmatpush1.bf16.msra.mxu0 %v1477
        %1987 = vmatprep.subr.bf16.mxu0 0
        %1988 = vmatpush1.bf16.msra.mxu0 %v1480
        %1989 = vmatprep.subr.bf16.mxu0 0
        %1990 = vmatpush1.bf16.msra.mxu0 %v1483
        %1991 = vmatprep.subr.bf16.mxu0 0
        %1992 = vmatpush1.bf16.msra.mxu0 %v1486
        %1993 = vmatprep.subr.bf16.mxu0 0
        %1994 = vmatpush1.bf16.msra.mxu0 %v1489
        %1995 = vmatprep.subr.bf16.mxu0 0
        %1996 = vmatpush1.bf16.msra.mxu0 0
        %1997 = vmatprep.subr.bf16.mxu0 0
        %1998 = vmatpush1.bf16.msra.mxu0 0
        %1999 = vmatprep.subr.bf16.mxu0 0
        %2000 = vmatpush1.bf16.msra.mxu0 0
        %2001 = vmatprep.subr.bf16.mxu0 0
        %2002 = vmatpush1.bf16.msra.mxu0 0
        %2003 = vmatprep.subr.bf16.mxu0 0
        %2004 = vmatpush1.bf16.msra.mxu0 0
        %2005 = vmatprep.subr.bf16.mxu0 0
        %2006 = vmatpush1.bf16.msra.mxu0 0
        %2007 = vmatprep.subr.bf16.mxu0 0
        %2008 = vmatpush1.bf16.msra.mxu0 0
        %2009 = vmatprep.subr.bf16.mxu0 0
        %2010 = vmatpush1.bf16.msra.mxu0 0
        %2011 = vmatprep.mubr.bf16.mxu0 0
        %2012 = vmatmul.mubr.bf16.gmra.mrb[0].mxu0 %v1921
        %v2013 = vpop.f32.mrb[0].mxu0
        %v2014 = vadd.f32 %v1382, %v2013
        %v2015 = vpop.f32.mrb[0].mxu0
        %v2016 = vpop.f32.mrb[0].mxu0
        %v2017 = vadd.f32 %v1382, %v2016
        %v2018 = vpop.f32.mrb[0].mxu0
        %2019 = vdwg.mxu0
        %v2020 = vadd.f32 %v1930, %v1971
        %v2021 = vadd.f32 %v1933, %v1975
        %v2022 = vxor.u32 %v2020, 2147483648
        %v2023 = vxor.u32 %v2021, 2147483648
        %v2024 = vmul.f32 %v2022, 1.442695
        %v2025 = vpow.pop %v2024
        %v2026 = vmul.f32 %v2023, 1.442695
        %v2027 = vpow.pop %v2026
        %v2028 = vadd.f32 %v2025, 1.0
        %v2029 = vadd.f32 %v2027, 1.0
        %v2030 = vrcp.pop %v2028
        %v2031 = vmul.f32 1.0, %v2030
        %v2032 = vrcp.pop %v2029
        %v2033 = vmul.f32 1.0, %v2032
        %v2034 = vadd.f32 %v1931, %v1973
        %v2035 = vadd.f32 %v1934, %v1977
        %v2036 = vxor.u32 %v2034, 2147483648
        %v2037 = vxor.u32 %v2035, 2147483648
        %v2038 = vmul.f32 %v2036, 1.442695
        %v2039 = vpow.pop %v2038
        %v2040 = vmul.f32 %v2037, 1.442695
        %v2041 = vpow.pop %v2040
        %v2042 = vadd.f32 %v2039, 1.0
        %v2043 = vadd.f32 %v2041, 1.0
        %v2044 = vrcp.pop %v2042
        %v2045 = vmul.f32 1.0, %v2044
        %v2046 = vrcp.pop %v2043
        %v2047 = vmul.f32 1.0, %v2046
        %v2048 = vmul.f32 %v2031, %v2014
        %v2049 = vmul.f32 %v2033, %v2017
        %v2050 = vadd.f32 %v1932, %v2048
        %v2051 = vadd.f32 %v1935, %v2049
        %v2052 = vtanh.pop %v2050
        %v2053 = vtanh.pop %v2051
        %v2054 = vsub.f32 1.0, %v2045
        %v2055 = vsub.f32 1.0, %v2047
        %v2056 = vmul.f32 %v2054, %v2052
        %v2057 = vmul.f32 %v2055, %v2053
        %v2058 = vmul.f32 %v2045, %v1919
        %v2059 = vmul.f32 %v2047, %v1920
        %v2060 = vadd.f32 %v2056, %v2058
        %v2061 = vadd.f32 %v2057, %v2059
        %v2062 = vpack.c.bf16 %v2061, %v2060
        %s2063 = scalar_lea.vmem [#allocation5], 24
        %2064 = vst [vmem:[%s2063] sm:$0xff] %v2062
        %s2065 = smul.u32 4, 3
        %s2066 = smul.addr %s2065, 8
        %s2067 = scalar_lea.vmem [#allocation6], %s2066
        %v2068 = vld [vmem:[%s2067] sm:$0xff]
        %v2069 = vld [vmem:[%s2067 + $0x8] sm:$0xff]
        %v2070 = vld [vmem:[%s2067 + $0x10] sm:$0xff]
        %v2071 = vunpack.c.l.bf16 %v2068
        %v2072 = vunpack.c.l.bf16 %v2069
        %v2073 = vunpack.c.l.bf16 %v2070
        %v2074 = vunpack.c.h.bf16 %v2068
        %v2075 = vunpack.c.h.bf16 %v2069
        %v2076 = vunpack.c.h.bf16 %v2070
        %2077 = vmatprep.subr.bf16.mxu0 %v1467
        %2078 = vmatpush1.bf16.msra.mxu0 %v1466
        %2079 = vmatprep.subr.bf16.mxu0 %v1470
        %2080 = vmatpush1.bf16.msra.mxu0 %v1469
        %2081 = vmatprep.subr.bf16.mxu0 %v1473
        %2082 = vmatpush1.bf16.msra.mxu0 %v1472
        %2083 = vmatprep.subr.bf16.mxu0 %v1476
        %2084 = vmatpush1.bf16.msra.mxu0 %v1475
        %2085 = vmatprep.subr.bf16.mxu0 %v1479
        %2086 = vmatpush1.bf16.msra.mxu0 %v1478
        %2087 = vmatprep.subr.bf16.mxu0 %v1482
        %2088 = vmatpush1.bf16.msra.mxu0 %v1481
        %2089 = vmatprep.subr.bf16.mxu0 %v1485
        %2090 = vmatpush1.bf16.msra.mxu0 %v1484
        %2091 = vmatprep.subr.bf16.mxu0 %v1488
        %2092 = vmatpush1.bf16.msra.mxu0 %v1487
        %2093 = vmatprep.subr.bf16.mxu0 0
        %2094 = vmatpush1.bf16.msra.mxu0 0
        %2095 = vmatprep.subr.bf16.mxu0 0
        %2096 = vmatpush1.bf16.msra.mxu0 0
        %2097 = vmatprep.subr.bf16.mxu0 0
        %2098 = vmatpush1.bf16.msra.mxu0 0
        %2099 = vmatprep.subr.bf16.mxu0 0
        %2100 = vmatpush1.bf16.msra.mxu0 0
        %2101 = vmatprep.subr.bf16.mxu0 0
        %2102 = vmatpush1.bf16.msra.mxu0 0
        %2103 = vmatprep.subr.bf16.mxu0 0
        %2104 = vmatpush1.bf16.msra.mxu0 0
        %2105 = vmatprep.subr.bf16.mxu0 0
        %2106 = vmatpush1.bf16.msra.mxu0 0
        %2107 = vmatprep.subr.bf16.mxu0 0
        %2108 = vmatpush1.bf16.msra.mxu0 0
        %2109 = vmatprep.mubr.bf16.mxu0 0
        %2110 = vmatmul.mubr.bf16.gmra.mrb[0].mxu0 %v2062
        %v2111 = vpop.f32.mrb[0].mxu0
        %v2112 = vadd.f32 %v1374, %v2111
        %v2113 = vpop.f32.mrb[0].mxu0
        %v2114 = vadd.f32 %v1378, %v2113
        %v2115 = vpop.f32.mrb[0].mxu0
        %v2116 = vadd.f32 %v1374, %v2115
        %v2117 = vpop.f32.mrb[0].mxu0
        %v2118 = vadd.f32 %v1378, %v2117
        %2119 = vdwg.mxu0
        %2120 = vmatprep.subr.bf16.mxu0 0
        %2121 = vmatpush1.bf16.msra.mxu0 %v1468
        %2122 = vmatprep.subr.bf16.mxu0 0
        %2123 = vmatpush1.bf16.msra.mxu0 %v1471
        %2124 = vmatprep.subr.bf16.mxu0 0
        %2125 = vmatpush1.bf16.msra.mxu0 %v1474
        %2126 = vmatprep.subr.bf16.mxu0 0
        %2127 = vmatpush1.bf16.msra.mxu0 %v1477
        %2128 = vmatprep.subr.bf16.mxu0 0
        %2129 = vmatpush1.bf16.msra.mxu0 %v1480
        %2130 = vmatprep.subr.bf16.mxu0 0
        %2131 = vmatpush1.bf16.msra.mxu0 %v1483
        %2132 = vmatprep.subr.bf16.mxu0 0
        %2133 = vmatpush1.bf16.msra.mxu0 %v1486
        %2134 = vmatprep.subr.bf16.mxu0 0
        %2135 = vmatpush1.bf16.msra.mxu0 %v1489
        %2136 = vmatprep.subr.bf16.mxu0 0
        %2137 = vmatpush1.bf16.msra.mxu0 0
        %2138 = vmatprep.subr.bf16.mxu0 0
        %2139 = vmatpush1.bf16.msra.mxu0 0
        %2140 = vmatprep.subr.bf16.mxu0 0
        %2141 = vmatpush1.bf16.msra.mxu0 0
        %2142 = vmatprep.subr.bf16.mxu0 0
        %2143 = vmatpush1.bf16.msra.mxu0 0
        %2144 = vmatprep.subr.bf16.mxu0 0
        %2145 = vmatpush1.bf16.msra.mxu0 0
        %2146 = vmatprep.subr.bf16.mxu0 0
        %2147 = vmatpush1.bf16.msra.mxu0 0
        %2148 = vmatprep.subr.bf16.mxu0 0
        %2149 = vmatpush1.bf16.msra.mxu0 0
        %2150 = vmatprep.subr.bf16.mxu0 0
        %2151 = vmatpush1.bf16.msra.mxu0 0
        %2152 = vmatprep.mubr.bf16.mxu0 0
        %2153 = vmatmul.mubr.bf16.gmra.mrb[0].mxu0 %v2062
        %v2154 = vpop.f32.mrb[0].mxu0
        %v2155 = vadd.f32 %v1382, %v2154
        %v2156 = vpop.f32.mrb[0].mxu0
        %v2157 = vpop.f32.mrb[0].mxu0
        %v2158 = vadd.f32 %v1382, %v2157
        %v2159 = vpop.f32.mrb[0].mxu0
        %2160 = vdwg.mxu0
        %v2161 = vadd.f32 %v2071, %v2112
        %v2162 = vadd.f32 %v2074, %v2116
        %v2163 = vxor.u32 %v2161, 2147483648
        %v2164 = vxor.u32 %v2162, 2147483648
        %v2165 = vmul.f32 %v2163, 1.442695
        %v2166 = vpow.pop %v2165
        %v2167 = vmul.f32 %v2164, 1.442695
        %v2168 = vpow.pop %v2167
        %v2169 = vadd.f32 %v2166, 1.0
        %v2170 = vadd.f32 %v2168, 1.0
        %v2171 = vrcp.pop %v2169
        %v2172 = vmul.f32 1.0, %v2171
        %v2173 = vrcp.pop %v2170
        %v2174 = vmul.f32 1.0, %v2173
        %v2175 = vadd.f32 %v2072, %v2114
        %v2176 = vadd.f32 %v2075, %v2118
        %v2177 = vxor.u32 %v2175, 2147483648
        %v2178 = vxor.u32 %v2176, 2147483648
        %v2179 = vmul.f32 %v2177, 1.442695
        %v2180 = vpow.pop %v2179
        %v2181 = vmul.f32 %v2178, 1.442695
        %v2182 = vpow.pop %v2181
        %v2183 = vadd.f32 %v2180, 1.0
        %v2184 = vadd.f32 %v2182, 1.0
        %v2185 = vrcp.pop %v2183
        %v2186 = vmul.f32 1.0, %v2185
        %v2187 = vrcp.pop %v2184
        %v2188 = vmul.f32 1.0, %v2187
        %v2189 = vmul.f32 %v2172, %v2155
        %v2190 = vmul.f32 %v2174, %v2158
        %v2191 = vadd.f32 %v2073, %v2189
        %v2192 = vadd.f32 %v2076, %v2190
        %v2193 = vtanh.pop %v2191
        %v2194 = vtanh.pop %v2192
        %v2195 = vsub.f32 1.0, %v2186
        %v2196 = vsub.f32 1.0, %v2188
        %v2197 = vmul.f32 %v2195, %v2193
        %v2198 = vmul.f32 %v2196, %v2194
        %v2199 = vmul.f32 %v2186, %v2060
        %v2200 = vmul.f32 %v2188, %v2061
        %v2201 = vadd.f32 %v2197, %v2199
        %v2202 = vadd.f32 %v2198, %v2200
        %v2203 = vpack.c.bf16 %v2202, %v2201
        %s2204 = scalar_lea.vmem [#allocation5], 32
        %2205 = vst [vmem:[%s2204] sm:$0xff] %v2203
        %s2206 = smul.u32 5, 3
        %s2207 = smul.addr %s2206, 8
        %s2208 = scalar_lea.vmem [#allocation6], %s2207
        %v2209 = vld [vmem:[%s2208] sm:$0xff]
        %v2210 = vld [vmem:[%s2208 + $0x8] sm:$0xff]
        %v2211 = vld [vmem:[%s2208 + $0x10] sm:$0xff]
        %v2212 = vunpack.c.l.bf16 %v2209
        %v2213 = vunpack.c.l.bf16 %v2210
        %v2214 = vunpack.c.l.bf16 %v2211
        %v2215 = vunpack.c.h.bf16 %v2209
        %v2216 = vunpack.c.h.bf16 %v2210
        %v2217 = vunpack.c.h.bf16 %v2211
        %2218 = vmatprep.subr.bf16.mxu0 %v1467
        %2219 = vmatpush1.bf16.msra.mxu0 %v1466
        %2220 = vmatprep.subr.bf16.mxu0 %v1470
        %2221 = vmatpush1.bf16.msra.mxu0 %v1469
        %2222 = vmatprep.subr.bf16.mxu0 %v1473
        %2223 = vmatpush1.bf16.msra.mxu0 %v1472
        %2224 = vmatprep.subr.bf16.mxu0 %v1476
        %2225 = vmatpush1.bf16.msra.mxu0 %v1475
        %2226 = vmatprep.subr.bf16.mxu0 %v1479
        %2227 = vmatpush1.bf16.msra.mxu0 %v1478
        %2228 = vmatprep.subr.bf16.mxu0 %v1482
        %2229 = vmatpush1.bf16.msra.mxu0 %v1481
        %2230 = vmatprep.subr.bf16.mxu0 %v1485
        %2231 = vmatpush1.bf16.msra.mxu0 %v1484
        %2232 = vmatprep.subr.bf16.mxu0 %v1488
        %2233 = vmatpush1.bf16.msra.mxu0 %v1487
        %2234 = vmatprep.subr.bf16.mxu0 0
        %2235 = vmatpush1.bf16.msra.mxu0 0
        %2236 = vmatprep.subr.bf16.mxu0 0
        %2237 = vmatpush1.bf16.msra.mxu0 0
        %2238 = vmatprep.subr.bf16.mxu0 0
        %2239 = vmatpush1.bf16.msra.mxu0 0
        %2240 = vmatprep.subr.bf16.mxu0 0
        %2241 = vmatpush1.bf16.msra.mxu0 0
        %2242 = vmatprep.subr.bf16.mxu0 0
        %2243 = vmatpush1.bf16.msra.mxu0 0
        %2244 = vmatprep.subr.bf16.mxu0 0
        %2245 = vmatpush1.bf16.msra.mxu0 0
        %2246 = vmatprep.subr.bf16.mxu0 0
        %2247 = vmatpush1.bf16.msra.mxu0 0
        %2248 = vmatprep.subr.bf16.mxu0 0
        %2249 = vmatpush1.bf16.msra.mxu0 0
        %2250 = vmatprep.mubr.bf16.mxu0 0
        %2251 = vmatmul.mubr.bf16.gmra.mrb[0].mxu0 %v2203
        %v2252 = vpop.f32.mrb[0].mxu0
        %v2253 = vadd.f32 %v1374, %v2252
        %v2254 = vpop.f32.mrb[0].mxu0
        %v2255 = vadd.f32 %v1378, %v2254
        %v2256 = vpop.f32.mrb[0].mxu0
        %v2257 = vadd.f32 %v1374, %v2256
        %v2258 = vpop.f32.mrb[0].mxu0
        %v2259 = vadd.f32 %v1378, %v2258
        %2260 = vdwg.mxu0
        %2261 = vmatprep.subr.bf16.mxu0 0
        %2262 = vmatpush1.bf16.msra.mxu0 %v1468
        %2263 = vmatprep.subr.bf16.mxu0 0
        %2264 = vmatpush1.bf16.msra.mxu0 %v1471
        %2265 = vmatprep.subr.bf16.mxu0 0
        %2266 = vmatpush1.bf16.msra.mxu0 %v1474
        %2267 = vmatprep.subr.bf16.mxu0 0
        %2268 = vmatpush1.bf16.msra.mxu0 %v1477
        %2269 = vmatprep.subr.bf16.mxu0 0
        %2270 = vmatpush1.bf16.msra.mxu0 %v1480
        %2271 = vmatprep.subr.bf16.mxu0 0
        %2272 = vmatpush1.bf16.msra.mxu0 %v1483
        %2273 = vmatprep.subr.bf16.mxu0 0
        %2274 = vmatpush1.bf16.msra.mxu0 %v1486
        %2275 = vmatprep.subr.bf16.mxu0 0
        %2276 = vmatpush1.bf16.msra.mxu0 %v1489
        %2277 = vmatprep.subr.bf16.mxu0 0
        %2278 = vmatpush1.bf16.msra.mxu0 0
        %2279 = vmatprep.subr.bf16.mxu0 0
        %2280 = vmatpush1.bf16.msra.mxu0 0
        %2281 = vmatprep.subr.bf16.mxu0 0
        %2282 = vmatpush1.bf16.msra.mxu0 0
        %2283 = vmatprep.subr.bf16.mxu0 0
        %2284 = vmatpush1.bf16.msra.mxu0 0
        %2285 = vmatprep.subr.bf16.mxu0 0
        %2286 = vmatpush1.bf16.msra.mxu0 0
        %2287 = vmatprep.subr.bf16.mxu0 0
        %2288 = vmatpush1.bf16.msra.mxu0 0
        %2289 = vmatprep.subr.bf16.mxu0 0
        %2290 = vmatpush1.bf16.msra.mxu0 0
        %2291 = vmatprep.subr.bf16.mxu0 0
        %2292 = vmatpush1.bf16.msra.mxu0 0
        %2293 = vmatprep.mubr.bf16.mxu0 0
        %2294 = vmatmul.mubr.bf16.gmra.mrb[0].mxu0 %v2203
        %v2295 = vpop.f32.mrb[0].mxu0
        %v2296 = vadd.f32 %v1382, %v2295
        %v2297 = vpop.f32.mrb[0].mxu0
        %v2298 = vpop.f32.mrb[0].mxu0
        %v2299 = vadd.f32 %v1382, %v2298
        %v2300 = vpop.f32.mrb[0].mxu0
        %2301 = vdwg.mxu0
        %v2302 = vadd.f32 %v2212, %v2253
        %v2303 = vadd.f32 %v2215, %v2257
        %v2304 = vxor.u32 %v2302, 2147483648
        %v2305 = vxor.u32 %v2303, 2147483648
        %v2306 = vmul.f32 %v2304, 1.442695
        %v2307 = vpow.pop %v2306
        %v2308 = vmul.f32 %v2305, 1.442695
        %v2309 = vpow.pop %v2308
        %v2310 = vadd.f32 %v2307, 1.0
        %v2311 = vadd.f32 %v2309, 1.0
        %v2312 = vrcp.pop %v2310
        %v2313 = vmul.f32 1.0, %v2312
        %v2314 = vrcp.pop %v2311
        %v2315 = vmul.f32 1.0, %v2314
        %v2316 = vadd.f32 %v2213, %v2255
        %v2317 = vadd.f32 %v2216, %v2259
        %v2318 = vxor.u32 %v2316, 2147483648
        %v2319 = vxor.u32 %v2317, 2147483648
        %v2320 = vmul.f32 %v2318, 1.442695
        %v2321 = vpow.pop %v2320
        %v2322 = vmul.f32 %v2319, 1.442695
        %v2323 = vpow.pop %v2322
        %v2324 = vadd.f32 %v2321, 1.0
        %v2325 = vadd.f32 %v2323, 1.0
        %v2326 = vrcp.pop %v2324
        %v2327 = vmul.f32 1.0, %v2326
        %v2328 = vrcp.pop %v2325
        %v2329 = vmul.f32 1.0, %v2328
        %v2330 = vmul.f32 %v2313, %v2296
        %v2331 = vmul.f32 %v2315, %v2299
        %v2332 = vadd.f32 %v2214, %v2330
        %v2333 = vadd.f32 %v2217, %v2331
        %v2334 = vtanh.pop %v2332
        %v2335 = vtanh.pop %v2333
        %v2336 = vsub.f32 1.0, %v2327
        %v2337 = vsub.f32 1.0, %v2329
        %v2338 = vmul.f32 %v2336, %v2334
        %v2339 = vmul.f32 %v2337, %v2335
        %v2340 = vmul.f32 %v2327, %v2201
        %v2341 = vmul.f32 %v2329, %v2202
        %v2342 = vadd.f32 %v2338, %v2340
        %v2343 = vadd.f32 %v2339, %v2341
        %v2344 = vpack.c.bf16 %v2343, %v2342
        %s2345 = scalar_lea.vmem [#allocation5], 40
        %2346 = vst [vmem:[%s2345] sm:$0xff] %v2344
        %s2347 = smul.u32 6, 3
        %s2348 = smul.addr %s2347, 8
        %s2349 = scalar_lea.vmem [#allocation6], %s2348
        %v2350 = vld [vmem:[%s2349] sm:$0xff]
        %v2351 = vld [vmem:[%s2349 + $0x8] sm:$0xff]
        %v2352 = vld [vmem:[%s2349 + $0x10] sm:$0xff]
        %v2353 = vunpack.c.l.bf16 %v2350
        %v2354 = vunpack.c.l.bf16 %v2351
        %v2355 = vunpack.c.l.bf16 %v2352
        %v2356 = vunpack.c.h.bf16 %v2350
        %v2357 = vunpack.c.h.bf16 %v2351
        %v2358 = vunpack.c.h.bf16 %v2352
        %2359 = vmatprep.subr.bf16.mxu0 %v1467
        %2360 = vmatpush1.bf16.msra.mxu0 %v1466
        %2361 = vmatprep.subr.bf16.mxu0 %v1470
        %2362 = vmatpush1.bf16.msra.mxu0 %v1469
        %2363 = vmatprep.subr.bf16.mxu0 %v1473
        %2364 = vmatpush1.bf16.msra.mxu0 %v1472
        %2365 = vmatprep.subr.bf16.mxu0 %v1476
        %2366 = vmatpush1.bf16.msra.mxu0 %v1475
        %2367 = vmatprep.subr.bf16.mxu0 %v1479
        %2368 = vmatpush1.bf16.msra.mxu0 %v1478
        %2369 = vmatprep.subr.bf16.mxu0 %v1482
        %2370 = vmatpush1.bf16.msra.mxu0 %v1481
        %2371 = vmatprep.subr.bf16.mxu0 %v1485
        %2372 = vmatpush1.bf16.msra.mxu0 %v1484
        %2373 = vmatprep.subr.bf16.mxu0 %v1488
        %2374 = vmatpush1.bf16.msra.mxu0 %v1487
        %2375 = vmatprep.subr.bf16.mxu0 0
        %2376 = vmatpush1.bf16.msra.mxu0 0
        %2377 = vmatprep.subr.bf16.mxu0 0
        %2378 = vmatpush1.bf16.msra.mxu0 0
        %2379 = vmatprep.subr.bf16.mxu0 0
        %2380 = vmatpush1.bf16.msra.mxu0 0
        %2381 = vmatprep.subr.bf16.mxu0 0
        %2382 = vmatpush1.bf16.msra.mxu0 0
        %2383 = vmatprep.subr.bf16.mxu0 0
        %2384 = vmatpush1.bf16.msra.mxu0 0
        %2385 = vmatprep.subr.bf16.mxu0 0
        %2386 = vmatpush1.bf16.msra.mxu0 0
        %2387 = vmatprep.subr.bf16.mxu0 0
        %2388 = vmatpush1.bf16.msra.mxu0 0
        %2389 = vmatprep.subr.bf16.mxu0 0
        %2390 = vmatpush1.bf16.msra.mxu0 0
        %2391 = vmatprep.mubr.bf16.mxu0 0
        %2392 = vmatmul.mubr.bf16.gmra.mrb[0].mxu0 %v2344
        %v2393 = vpop.f32.mrb[0].mxu0
        %v2394 = vadd.f32 %v1374, %v2393
        %v2395 = vpop.f32.mrb[0].mxu0
        %v2396 = vadd.f32 %v1378, %v2395
        %v2397 = vpop.f32.mrb[0].mxu0
        %v2398 = vadd.f32 %v1374, %v2397
        %v2399 = vpop.f32.mrb[0].mxu0
        %v2400 = vadd.f32 %v1378, %v2399
        %2401 = vdwg.mxu0
        %2402 = vmatprep.subr.bf16.mxu0 0
        %2403 = vmatpush1.bf16.msra.mxu0 %v1468
        %2404 = vmatprep.subr.bf16.mxu0 0
        %2405 = vmatpush1.bf16.msra.mxu0 %v1471
        %2406 = vmatprep.subr.bf16.mxu0 0
        %2407 = vmatpush1.bf16.msra.mxu0 %v1474
        %2408 = vmatprep.subr.bf16.mxu0 0
        %2409 = vmatpush1.bf16.msra.mxu0 %v1477
        %2410 = vmatprep.subr.bf16.mxu0 0
        %2411 = vmatpush1.bf16.msra.mxu0 %v1480
        %2412 = vmatprep.subr.bf16.mxu0 0
        %2413 = vmatpush1.bf16.msra.mxu0 %v1483
        %2414 = vmatprep.subr.bf16.mxu0 0
        %2415 = vmatpush1.bf16.msra.mxu0 %v1486
        %2416 = vmatprep.subr.bf16.mxu0 0
        %2417 = vmatpush1.bf16.msra.mxu0 %v1489
        %2418 = vmatprep.subr.bf16.mxu0 0
        %2419 = vmatpush1.bf16.msra.mxu0 0
        %2420 = vmatprep.subr.bf16.mxu0 0
        %2421 = vmatpush1.bf16.msra.mxu0 0
        %2422 = vmatprep.subr.bf16.mxu0 0
        %2423 = vmatpush1.bf16.msra.mxu0 0
        %2424 = vmatprep.subr.bf16.mxu0 0
        %2425 = vmatpush1.bf16.msra.mxu0 0
        %2426 = vmatprep.subr.bf16.mxu0 0
        %2427 = vmatpush1.bf16.msra.mxu0 0
        %2428 = vmatprep.subr.bf16.mxu0 0
        %2429 = vmatpush1.bf16.msra.mxu0 0
        %2430 = vmatprep.subr.bf16.mxu0 0
        %2431 = vmatpush1.bf16.msra.mxu0 0
        %2432 = vmatprep.subr.bf16.mxu0 0
        %2433 = vmatpush1.bf16.msra.mxu0 0
        %2434 = vmatprep.mubr.bf16.mxu0 0
        %2435 = vmatmul.mubr.bf16.gmra.mrb[0].mxu0 %v2344
        %v2436 = vpop.f32.mrb[0].mxu0
        %v2437 = vadd.f32 %v1382, %v2436
        %v2438 = vpop.f32.mrb[0].mxu0
        %v2439 = vpop.f32.mrb[0].mxu0
        %v2440 = vadd.f32 %v1382, %v2439
        %v2441 = vpop.f32.mrb[0].mxu0
        %2442 = vdwg.mxu0
        %v2443 = vadd.f32 %v2353, %v2394
        %v2444 = vadd.f32 %v2356, %v2398
        %v2445 = vxor.u32 %v2443, 2147483648
        %v2446 = vxor.u32 %v2444, 2147483648
        %v2447 = vmul.f32 %v2445, 1.442695
        %v2448 = vpow.pop %v2447
        %v2449 = vmul.f32 %v2446, 1.442695
        %v2450 = vpow.pop %v2449
        %v2451 = vadd.f32 %v2448, 1.0
        %v2452 = vadd.f32 %v2450, 1.0
        %v2453 = vrcp.pop %v2451
        %v2454 = vmul.f32 1.0, %v2453
        %v2455 = vrcp.pop %v2452
        %v2456 = vmul.f32 1.0, %v2455
        %v2457 = vadd.f32 %v2354, %v2396
        %v2458 = vadd.f32 %v2357, %v2400
        %v2459 = vxor.u32 %v2457, 2147483648
        %v2460 = vxor.u32 %v2458, 2147483648
        %v2461 = vmul.f32 %v2459, 1.442695
        %v2462 = vpow.pop %v2461
        %v2463 = vmul.f32 %v2460, 1.442695
        %v2464 = vpow.pop %v2463
        %v2465 = vadd.f32 %v2462, 1.0
        %v2466 = vadd.f32 %v2464, 1.0
        %v2467 = vrcp.pop %v2465
        %v2468 = vmul.f32 1.0, %v2467
        %v2469 = vrcp.pop %v2466
        %v2470 = vmul.f32 1.0, %v2469
        %v2471 = vmul.f32 %v2454, %v2437
        %v2472 = vmul.f32 %v2456, %v2440
        %v2473 = vadd.f32 %v2355, %v2471
        %v2474 = vadd.f32 %v2358, %v2472
        %v2475 = vtanh.pop %v2473
        %v2476 = vtanh.pop %v2474
        %v2477 = vsub.f32 1.0, %v2468
        %v2478 = vsub.f32 1.0, %v2470
        %v2479 = vmul.f32 %v2477, %v2475
        %v2480 = vmul.f32 %v2478, %v2476
        %v2481 = vmul.f32 %v2468, %v2342
        %v2482 = vmul.f32 %v2470, %v2343
        %v2483 = vadd.f32 %v2479, %v2481
        %v2484 = vadd.f32 %v2480, %v2482
        %v2485 = vpack.c.bf16 %v2484, %v2483
        %s2486 = scalar_lea.vmem [#allocation5], 48
        %2487 = vst [vmem:[%s2486] sm:$0xff] %v2485
        %s2488 = smul.u32 7, 3
        %s2489 = smul.addr %s2488, 8
        %s2490 = scalar_lea.vmem [#allocation6], %s2489
        %v2491 = vld [vmem:[%s2490] sm:$0xff]
        %v2492 = vld [vmem:[%s2490 + $0x8] sm:$0xff]
        %v2493 = vld [vmem:[%s2490 + $0x10] sm:$0xff]
        %v2494 = vunpack.c.l.bf16 %v2491
        %v2495 = vunpack.c.l.bf16 %v2492
        %v2496 = vunpack.c.l.bf16 %v2493
        %v2497 = vunpack.c.h.bf16 %v2491
        %v2498 = vunpack.c.h.bf16 %v2492
        %v2499 = vunpack.c.h.bf16 %v2493
        %2500 = vmatprep.subr.bf16.mxu0 %v1467
        %2501 = vmatpush1.bf16.msra.mxu0 %v1466
        %2502 = vmatprep.subr.bf16.mxu0 %v1470
        %2503 = vmatpush1.bf16.msra.mxu0 %v1469
        %2504 = vmatprep.subr.bf16.mxu0 %v1473
        %2505 = vmatpush1.bf16.msra.mxu0 %v1472
        %2506 = vmatprep.subr.bf16.mxu0 %v1476
        %2507 = vmatpush1.bf16.msra.mxu0 %v1475
        %2508 = vmatprep.subr.bf16.mxu0 %v1479
        %2509 = vmatpush1.bf16.msra.mxu0 %v1478
        %2510 = vmatprep.subr.bf16.mxu0 %v1482
        %2511 = vmatpush1.bf16.msra.mxu0 %v1481
        %2512 = vmatprep.subr.bf16.mxu0 %v1485
        %2513 = vmatpush1.bf16.msra.mxu0 %v1484
        %2514 = vmatprep.subr.bf16.mxu0 %v1488
        %2515 = vmatpush1.bf16.msra.mxu0 %v1487
        %2516 = vmatprep.subr.bf16.mxu0 0
        %2517 = vmatpush1.bf16.msra.mxu0 0
        %2518 = vmatprep.subr.bf16.mxu0 0
        %2519 = vmatpush1.bf16.msra.mxu0 0
        %2520 = vmatprep.subr.bf16.mxu0 0
        %2521 = vmatpush1.bf16.msra.mxu0 0
        %2522 = vmatprep.subr.bf16.mxu0 0
        %2523 = vmatpush1.bf16.msra.mxu0 0
        %2524 = vmatprep.subr.bf16.mxu0 0
        %2525 = vmatpush1.bf16.msra.mxu0 0
        %2526 = vmatprep.subr.bf16.mxu0 0
        %2527 = vmatpush1.bf16.msra.mxu0 0
        %2528 = vmatprep.subr.bf16.mxu0 0
        %2529 = vmatpush1.bf16.msra.mxu0 0
        %2530 = vmatprep.subr.bf16.mxu0 0
        %2531 = vmatpush1.bf16.msra.mxu0 0
        %2532 = vmatprep.mubr.bf16.mxu0 0
        %2533 = vmatmul.mubr.bf16.gmra.mrb[0].mxu0 %v2485
        %v2534 = vpop.f32.mrb[0].mxu0
        %v2535 = vadd.f32 %v1374, %v2534
        %v2536 = vpop.f32.mrb[0].mxu0
        %v2537 = vadd.f32 %v1378, %v2536
        %v2538 = vpop.f32.mrb[0].mxu0
        %v2539 = vadd.f32 %v1374, %v2538
        %v2540 = vpop.f32.mrb[0].mxu0
        %v2541 = vadd.f32 %v1378, %v2540
        %2542 = vdwg.mxu0
        %2543 = vmatprep.subr.bf16.mxu0 0
        %2544 = vmatpush1.bf16.msra.mxu0 %v1468
        %2545 = vmatprep.subr.bf16.mxu0 0
        %2546 = vmatpush1.bf16.msra.mxu0 %v1471
        %2547 = vmatprep.subr.bf16.mxu0 0
        %2548 = vmatpush1.bf16.msra.mxu0 %v1474
        %2549 = vmatprep.subr.bf16.mxu0 0
        %2550 = vmatpush1.bf16.msra.mxu0 %v1477
        %2551 = vmatprep.subr.bf16.mxu0 0
        %2552 = vmatpush1.bf16.msra.mxu0 %v1480
        %2553 = vmatprep.subr.bf16.mxu0 0
        %2554 = vmatpush1.bf16.msra.mxu0 %v1483
        %2555 = vmatprep.subr.bf16.mxu0 0
        %2556 = vmatpush1.bf16.msra.mxu0 %v1486
        %2557 = vmatprep.subr.bf16.mxu0 0
        %2558 = vmatpush1.bf16.msra.mxu0 %v1489
        %2559 = vmatprep.subr.bf16.mxu0 0
        %2560 = vmatpush1.bf16.msra.mxu0 0
        %2561 = vmatprep.subr.bf16.mxu0 0
        %2562 = vmatpush1.bf16.msra.mxu0 0
        %2563 = vmatprep.subr.bf16.mxu0 0
        %2564 = vmatpush1.bf16.msra.mxu0 0
        %2565 = vmatprep.subr.bf16.mxu0 0
        %2566 = vmatpush1.bf16.msra.mxu0 0
        %2567 = vmatprep.subr.bf16.mxu0 0
        %2568 = vmatpush1.bf16.msra.mxu0 0
        %2569 = vmatprep.subr.bf16.mxu0 0
        %2570 = vmatpush1.bf16.msra.mxu0 0
        %2571 = vmatprep.subr.bf16.mxu0 0
        %2572 = vmatpush1.bf16.msra.mxu0 0
        %2573 = vmatprep.subr.bf16.mxu0 0
        %2574 = vmatpush1.bf16.msra.mxu0 0
        %2575 = vmatprep.mubr.bf16.mxu0 0
        %2576 = vmatmul.mubr.bf16.gmra.mrb[0].mxu0 %v2485
        %v2577 = vpop.f32.mrb[0].mxu0
        %v2578 = vadd.f32 %v1382, %v2577
        %v2579 = vpop.f32.mrb[0].mxu0
        %v2580 = vpop.f32.mrb[0].mxu0
        %v2581 = vadd.f32 %v1382, %v2580
        %v2582 = vpop.f32.mrb[0].mxu0
        %2583 = vdwg.mxu0
        %v2584 = vadd.f32 %v2494, %v2535
        %v2585 = vadd.f32 %v2497, %v2539
        %v2586 = vxor.u32 %v2584, 2147483648
        %v2587 = vxor.u32 %v2585, 2147483648
        %v2588 = vmul.f32 %v2586, 1.442695
        %v2589 = vpow.pop %v2588
        %v2590 = vmul.f32 %v2587, 1.442695
        %v2591 = vpow.pop %v2590
        %v2592 = vadd.f32 %v2589, 1.0
        %v2593 = vadd.f32 %v2591, 1.0
        %v2594 = vrcp.pop %v2592
        %v2595 = vmul.f32 1.0, %v2594
        %v2596 = vrcp.pop %v2593
        %v2597 = vmul.f32 1.0, %v2596
        %v2598 = vadd.f32 %v2495, %v2537
        %v2599 = vadd.f32 %v2498, %v2541
        %v2600 = vxor.u32 %v2598, 2147483648
        %v2601 = vxor.u32 %v2599, 2147483648
        %v2602 = vmul.f32 %v2600, 1.442695
        %v2603 = vpow.pop %v2602
        %v2604 = vmul.f32 %v2601, 1.442695
        %v2605 = vpow.pop %v2604
        %v2606 = vadd.f32 %v2603, 1.0
        %v2607 = vadd.f32 %v2605, 1.0
        %v2608 = vrcp.pop %v2606
        %v2609 = vmul.f32 1.0, %v2608
        %v2610 = vrcp.pop %v2607
        %v2611 = vmul.f32 1.0, %v2610
        %v2612 = vmul.f32 %v2595, %v2578
        %v2613 = vmul.f32 %v2597, %v2581
        %v2614 = vadd.f32 %v2496, %v2612
        %v2615 = vadd.f32 %v2499, %v2613
        %v2616 = vtanh.pop %v2614
        %v2617 = vtanh.pop %v2615
        %v2618 = vsub.f32 1.0, %v2609
        %v2619 = vsub.f32 1.0, %v2611
        %v2620 = vmul.f32 %v2618, %v2616
        %v2621 = vmul.f32 %v2619, %v2617
        %v2622 = vmul.f32 %v2609, %v2483
        %v2623 = vmul.f32 %v2611, %v2484
        %v2624 = vadd.f32 %v2620, %v2622
        %v2625 = vadd.f32 %v2621, %v2623
        %v2626 = vpack.c.bf16 %v2625, %v2624
        %s2627 = scalar_lea.vmem [#allocation5], 56
        %2628 = vst [vmem:[%s2627] sm:$0xff] %v2626
        %2629 = vst [vmem:[#allocation2] sm:$0xff] %v2624
        %2630 = vst [vmem:[#allocation2 + $0x8] sm:$0xff] %v2625
        %v2631 = vld [vmem:[#allocation5] sm:$0xff]
        %v2632 = vld [vmem:[#allocation5 + $0x8] sm:$0xff]
        %v2633 = vld [vmem:[#allocation5 + $0x10] sm:$0xff]
        %v2634 = vld [vmem:[#allocation5 + $0x18] sm:$0xff]
        %v2635 = vld [vmem:[#allocation5 + $0x20] sm:$0xff]
        %v2636 = vld [vmem:[#allocation5 + $0x28] sm:$0xff]
        %v2637 = vld [vmem:[#allocation5 + $0x30] sm:$0xff]
        %v2638 = vld [vmem:[#allocation5 + $0x38] sm:$0xff]
        %v2639 = vld [vmem:[#allocation12] sm:$0xff]
        %v2640 = vld [vmem:[#allocation12 + $0x8] sm:$0xf]
        %v2641 = vld [vmem:[#allocation12 + $0xc] sm:$0xff]
        %v2642 = vld [vmem:[#allocation12 + $0x14] sm:$0xf]
        %v2643 = vld [vmem:[#allocation12 + $0x18] sm:$0xff]
        %v2644 = vld [vmem:[#allocation12 + $0x20] sm:$0xf]
        %v2645 = vld [vmem:[#allocation12 + $0x24] sm:$0xff]
        %v2646 = vld [vmem:[#allocation12 + $0x2c] sm:$0xf]
        %v2647 = vld [vmem:[#allocation12 + $0x30] sm:$0xff]
        %v2648 = vld [vmem:[#allocation12 + $0x38] sm:$0xf]
        %v2649 = vld [vmem:[#allocation12 + $0x3c] sm:$0xff]
        %v2650 = vld [vmem:[#allocation12 + $0x44] sm:$0xf]
        %v2651 = vld [vmem:[#allocation12 + $0x48] sm:$0xff]
        %v2652 = vld [vmem:[#allocation12 + $0x50] sm:$0xf]
        %v2653 = vld [vmem:[#allocation12 + $0x54] sm:$0xff]
        %v2654 = vld [vmem:[#allocation12 + $0x5c] sm:$0xf]
        %v2655 = vld [vmem:[#allocation12 + $0x60] sm:$0xff]
        %v2656 = vld [vmem:[#allocation12 + $0x68] sm:$0xf]
        %v2657 = vld [vmem:[#allocation12 + $0x6c] sm:$0xff]
        %v2658 = vld [vmem:[#allocation12 + $0x74] sm:$0xf]
        %v2659 = vld [vmem:[#allocation12 + $0x78] sm:$0xff]
        %v2660 = vld [vmem:[#allocation12 + $0x80] sm:$0xf]
        %v2661 = vld [vmem:[#allocation12 + $0x84] sm:$0xff]
        %v2662 = vld [vmem:[#allocation12 + $0x8c] sm:$0xf]
        %v2663 = vld [vmem:[#allocation12 + $0x90] sm:$0xff]
        %v2664 = vld [vmem:[#allocation12 + $0x98] sm:$0xf]
        %v2665 = vld [vmem:[#allocation12 + $0x9c] sm:$0xff]
        %v2666 = vld [vmem:[#allocation12 + $0xa4] sm:$0xf]
        %v2667 = vld [vmem:[#allocation12 + $0xa8] sm:$0xff]
        %v2668 = vld [vmem:[#allocation12 + $0xb0] sm:$0xf]
        %v2669 = vld [vmem:[#allocation12 + $0xb4] sm:$0xff]
        %v2670 = vld [vmem:[#allocation12 + $0xbc] sm:$0xf]
        %v2671 = vld [vmem:[%s9] sm:$0x7]
        %v2673 = vlaneseq
        %v2674 = vshrl.u32 %v2673, 7
        %v2675 = vsub.s32 0, %v2674
        %v2676 = vrot.slane %v2671, %v2675
        %v2677 = vlaneseq
        %v2678 = vshrl.u32 %v2677, 7
        %v2679 = vsub.s32 1, %v2678
        %v2680 = vrot.slane %v2671, %v2679
        %v2681 = vlaneseq
        %v2682 = vshrl.u32 %v2681, 7
        %v2683 = vsub.s32 2, %v2682
        %v2684 = vrot.slane %v2671, %v2683
        %v2720 = vunpack.c.l.b16 %v2639
        %v2721 = vunpack.c.h.b16 %v2639
        %v2722 = vunpack.c.l.b16 %v2640
        %v2723 = vunpack.c.l.b16 %v2641
        %v2724 = vunpack.c.h.b16 %v2641
        %v2725 = vunpack.c.l.b16 %v2642
        %v2726 = vunpack.c.l.b16 %v2643
        %v2727 = vunpack.c.h.b16 %v2643
        %v2728 = vunpack.c.l.b16 %v2644
        %v2729 = vunpack.c.l.b16 %v2645
        %v2730 = vunpack.c.h.b16 %v2645
        %v2731 = vunpack.c.l.b16 %v2646
        %v2732 = vunpack.c.l.b16 %v2647
        %v2733 = vunpack.c.h.b16 %v2647
        %v2734 = vunpack.c.l.b16 %v2648
        %v2735 = vunpack.c.l.b16 %v2649
        %v2736 = vunpack.c.h.b16 %v2649
        %v2737 = vunpack.c.l.b16 %v2650
        %v2738 = vunpack.c.l.b16 %v2651
        %v2739 = vunpack.c.h.b16 %v2651
        %v2740 = vunpack.c.l.b16 %v2652
        %v2741 = vunpack.c.l.b16 %v2653
        %v2742 = vunpack.c.h.b16 %v2653
        %v2743 = vunpack.c.l.b16 %v2654
        %v2744 = vunpack.c.l.b16 %v2655
        %v2745 = vunpack.c.h.b16 %v2655
        %v2746 = vunpack.c.l.b16 %v2656
        %v2747 = vunpack.c.l.b16 %v2657
        %v2748 = vunpack.c.h.b16 %v2657
        %v2749 = vunpack.c.l.b16 %v2658
        %v2750 = vunpack.c.l.b16 %v2659
        %v2751 = vunpack.c.h.b16 %v2659
        %v2752 = vunpack.c.l.b16 %v2660
        %v2753 = vunpack.c.l.b16 %v2661
        %v2754 = vunpack.c.h.b16 %v2661
        %v2755 = vunpack.c.l.b16 %v2662
        %v2756 = vunpack.c.l.b16 %v2663
        %v2757 = vunpack.c.h.b16 %v2663
        %v2758 = vunpack.c.l.b16 %v2664
        %v2759 = vunpack.c.l.b16 %v2665
        %v2760 = vunpack.c.h.b16 %v2665
        %v2761 = vunpack.c.l.b16 %v2666
        %v2762 = vunpack.c.l.b16 %v2667
        %v2763 = vunpack.c.h.b16 %v2667
        %v2764 = vunpack.c.l.b16 %v2668
        %v2765 = vunpack.c.l.b16 %v2669
        %v2766 = vunpack.c.h.b16 %v2669
        %v2767 = vunpack.c.l.b16 %v2670
        %v2768 = vpack.c.b16 %v2723, %v2720
        %v2769 = vpack.c.b16 %v2724, %v2721
        %v2770 = vpack.c.b16 %v2725, %v2722
        %v2771 = vpack.c.b16 %v2729, %v2726
        %v2772 = vpack.c.b16 %v2730, %v2727
        %v2773 = vpack.c.b16 %v2731, %v2728
        %v2774 = vpack.c.b16 %v2735, %v2732
        %v2775 = vpack.c.b16 %v2736, %v2733
        %v2776 = vpack.c.b16 %v2737, %v2734
        %v2777 = vpack.c.b16 %v2741, %v2738
        %v2778 = vpack.c.b16 %v2742, %v2739
        %v2779 = vpack.c.b16 %v2743, %v2740
        %v2780 = vpack.c.b16 %v2747, %v2744
        %v2781 = vpack.c.b16 %v2748, %v2745
        %v2782 = vpack.c.b16 %v2749, %v2746
        %v2783 = vpack.c.b16 %v2753, %v2750
        %v2784 = vpack.c.b16 %v2754, %v2751
        %v2785 = vpack.c.b16 %v2755, %v2752
        %v2786 = vpack.c.b16 %v2759, %v2756
        %v2787 = vpack.c.b16 %v2760, %v2757
        %v2788 = vpack.c.b16 %v2761, %v2758
        %v2789 = vpack.c.b16 %v2765, %v2762
        %v2790 = vpack.c.b16 %v2766, %v2763
        %v2791 = vpack.c.b16 %v2767, %v2764
        %2816 = vmatprep.subr.bf16.mxu0 %v2769
        %2817 = vmatpush1.bf16.msra.mxu0 %v2768
        %2818 = vmatprep.subr.bf16.mxu0 %v2772
        %2819 = vmatpush1.bf16.msra.mxu0 %v2771
        %2820 = vmatprep.subr.bf16.mxu0 %v2775
        %2821 = vmatpush1.bf16.msra.mxu0 %v2774
        %2822 = vmatprep.subr.bf16.mxu0 %v2778
        %2823 = vmatpush1.bf16.msra.mxu0 %v2777
        %2824 = vmatprep.subr.bf16.mxu0 %v2781
        %2825 = vmatpush1.bf16.msra.mxu0 %v2780
        %2826 = vmatprep.subr.bf16.mxu0 %v2784
        %2827 = vmatpush1.bf16.msra.mxu0 %v2783
        %2828 = vmatprep.subr.bf16.mxu0 %v2787
        %2829 = vmatpush1.bf16.msra.mxu0 %v2786
        %2830 = vmatprep.subr.bf16.mxu0 %v2790
        %2831 = vmatpush1.bf16.msra.mxu0 %v2789
        %2832 = vmatprep.subr.bf16.mxu0 0
        %2833 = vmatpush1.bf16.msra.mxu0 0
        %2834 = vmatprep.subr.bf16.mxu0 0
        %2835 = vmatpush1.bf16.msra.mxu0 0
        %2836 = vmatprep.subr.bf16.mxu0 0
        %2837 = vmatpush1.bf16.msra.mxu0 0
        %2838 = vmatprep.subr.bf16.mxu0 0
        %2839 = vmatpush1.bf16.msra.mxu0 0
        %2840 = vmatprep.subr.bf16.mxu0 0
        %2841 = vmatpush1.bf16.msra.mxu0 0
        %2842 = vmatprep.subr.bf16.mxu0 0
        %2843 = vmatpush1.bf16.msra.mxu0 0
        %2844 = vmatprep.subr.bf16.mxu0 0
        %2845 = vmatpush1.bf16.msra.mxu0 0
        %2846 = vmatprep.subr.bf16.mxu0 0
        %2847 = vmatpush1.bf16.msra.mxu0 0
        %2848 = vmatprep.mubr.bf16.mxu0 0
        %2849 = vmatmul.mubr.bf16.gmra.mrb[0].mxu0 %v2631
        %v2850 = vpop.f32.mrb[0].mxu0
        %v2851 = vadd.f32 %v2676, %v2850
        %v2852 = vpop.f32.mrb[0].mxu0
        %v2853 = vadd.f32 %v2680, %v2852
        %v2854 = vpop.f32.mrb[0].mxu0
        %v2855 = vadd.f32 %v2676, %v2854
        %v2856 = vpop.f32.mrb[0].mxu0
        %v2857 = vadd.f32 %v2680, %v2856
        %2858 = vmatprep.mubr.bf16.mxu0 0
        %2859 = vmatmul.mubr.bf16.gmra.mrb[0].mxu0 %v2632
        %v2860 = vpop.f32.mrb[0].mxu0
        %v2861 = vadd.f32 %v2676, %v2860
        %v2862 = vpop.f32.mrb[0].mxu0
        %v2863 = vadd.f32 %v2680, %v2862
        %v2864 = vpop.f32.mrb[0].mxu0
        %v2865 = vadd.f32 %v2676, %v2864
        %v2866 = vpop.f32.mrb[0].mxu0
        %v2867 = vadd.f32 %v2680, %v2866
        %2868 = vmatprep.mubr.bf16.mxu0 0
        %2869 = vmatmul.mubr.bf16.gmra.mrb[0].mxu0 %v2633
        %v2870 = vpop.f32.mrb[0].mxu0
        %v2871 = vadd.f32 %v2676, %v2870
        %v2872 = vpop.f32.mrb[0].mxu0
        %v2873 = vadd.f32 %v2680, %v2872
        %v2874 = vpop.f32.mrb[0].mxu0
        %v2875 = vadd.f32 %v2676, %v2874
        %v2876 = vpop.f32.mrb[0].mxu0
        %v2877 = vadd.f32 %v2680, %v2876
        %2878 = vmatprep.mubr.bf16.mxu0 0
        %2879 = vmatmul.mubr.bf16.gmra.mrb[0].mxu0 %v2634
        %v2880 = vpop.f32.mrb[0].mxu0
        %v2881 = vadd.f32 %v2676, %v2880
        %v2882 = vpop.f32.mrb[0].mxu0
        %v2883 = vadd.f32 %v2680, %v2882
        %v2884 = vpop.f32.mrb[0].mxu0
        %v2885 = vadd.f32 %v2676, %v2884
        %v2886 = vpop.f32.mrb[0].mxu0
        %v2887 = vadd.f32 %v2680, %v2886
        %2888 = vmatprep.mubr.bf16.mxu0 0
        %2889 = vmatmul.mubr.bf16.gmra.mrb[0].mxu0 %v2635
        %v2890 = vpop.f32.mrb[0].mxu0
        %v2891 = vadd.f32 %v2676, %v2890
        %v2892 = vpop.f32.mrb[0].mxu0
        %v2893 = vadd.f32 %v2680, %v2892
        %v2894 = vpop.f32.mrb[0].mxu0
        %v2895 = vadd.f32 %v2676, %v2894
        %v2896 = vpop.f32.mrb[0].mxu0
        %v2897 = vadd.f32 %v2680, %v2896
        %2898 = vmatprep.mubr.bf16.mxu0 0
        %2899 = vmatmul.mubr.bf16.gmra.mrb[0].mxu0 %v2636
        %v2900 = vpop.f32.mrb[0].mxu0
        %v2901 = vadd.f32 %v2676, %v2900
        %v2902 = vpop.f32.mrb[0].mxu0
        %v2903 = vadd.f32 %v2680, %v2902
        %v2904 = vpop.f32.mrb[0].mxu0
        %v2905 = vadd.f32 %v2676, %v2904
        %v2906 = vpop.f32.mrb[0].mxu0
        %v2907 = vadd.f32 %v2680, %v2906
        %2908 = vmatprep.mubr.bf16.mxu0 0
        %2909 = vmatmul.mubr.bf16.gmra.mrb[0].mxu0 %v2637
        %v2910 = vpop.f32.mrb[0].mxu0
        %v2911 = vadd.f32 %v2676, %v2910
        %v2912 = vpop.f32.mrb[0].mxu0
        %v2913 = vadd.f32 %v2680, %v2912
        %v2914 = vpop.f32.mrb[0].mxu0
        %v2915 = vadd.f32 %v2676, %v2914
        %v2916 = vpop.f32.mrb[0].mxu0
        %v2917 = vadd.f32 %v2680, %v2916
        %2918 = vmatprep.mubr.bf16.mxu0 0
        %2919 = vmatmul.mubr.bf16.gmra.mrb[0].mxu0 %v2638
        %v2920 = vpop.f32.mrb[0].mxu0
        %v2921 = vadd.f32 %v2676, %v2920
        %v2922 = vpop.f32.mrb[0].mxu0
        %v2923 = vadd.f32 %v2680, %v2922
        %v2924 = vpop.f32.mrb[0].mxu0
        %v2925 = vadd.f32 %v2676, %v2924
        %v2926 = vpop.f32.mrb[0].mxu0
        %v2927 = vadd.f32 %v2680, %v2926
        %2928 = vdwg.mxu0
        %2929 = vmatprep.subr.bf16.mxu0 0
        %2930 = vmatpush1.bf16.msra.mxu0 %v2770
        %2931 = vmatprep.subr.bf16.mxu0 0
        %2932 = vmatpush1.bf16.msra.mxu0 %v2773
        %2933 = vmatprep.subr.bf16.mxu0 0
        %2934 = vmatpush1.bf16.msra.mxu0 %v2776
        %2935 = vmatprep.subr.bf16.mxu0 0
        %2936 = vmatpush1.bf16.msra.mxu0 %v2779
        %2937 = vmatprep.subr.bf16.mxu0 0
        %2938 = vmatpush1.bf16.msra.mxu0 %v2782
        %2939 = vmatprep.subr.bf16.mxu0 0
        %2940 = vmatpush1.bf16.msra.mxu0 %v2785
        %2941 = vmatprep.subr.bf16.mxu0 0
        %2942 = vmatpush1.bf16.msra.mxu0 %v2788
        %2943 = vmatprep.subr.bf16.mxu0 0
        %2944 = vmatpush1.bf16.msra.mxu0 %v2791
        %2945 = vmatprep.subr.bf16.mxu0 0
        %2946 = vmatpush1.bf16.msra.mxu0 0
        %2947 = vmatprep.subr.bf16.mxu0 0
        %2948 = vmatpush1.bf16.msra.mxu0 0
        %2949 = vmatprep.subr.bf16.mxu0 0
        %2950 = vmatpush1.bf16.msra.mxu0 0
        %2951 = vmatprep.subr.bf16.mxu0 0
        %2952 = vmatpush1.bf16.msra.mxu0 0
        %2953 = vmatprep.subr.bf16.mxu0 0
        %2954 = vmatpush1.bf16.msra.mxu0 0
        %2955 = vmatprep.subr.bf16.mxu0 0
        %2956 = vmatpush1.bf16.msra.mxu0 0
        %2957 = vmatprep.subr.bf16.mxu0 0
        %2958 = vmatpush1.bf16.msra.mxu0 0
        %2959 = vmatprep.subr.bf16.mxu0 0
        %2960 = vmatpush1.bf16.msra.mxu0 0
        %2961 = vmatprep.mubr.bf16.mxu0 0
        %2962 = vmatmul.mubr.bf16.gmra.mrb[0].mxu0 %v2631
        %v2963 = vpop.f32.mrb[0].mxu0
        %v2964 = vadd.f32 %v2684, %v2963
        %v2965 = vpop.f32.mrb[0].mxu0
        %v2966 = vpop.f32.mrb[0].mxu0
        %v2967 = vadd.f32 %v2684, %v2966
        %v2968 = vpop.f32.mrb[0].mxu0
        %2969 = vmatprep.mubr.bf16.mxu0 0
        %2970 = vmatmul.mubr.bf16.gmra.mrb[0].mxu0 %v2632
        %v2971 = vpop.f32.mrb[0].mxu0
        %v2972 = vadd.f32 %v2684, %v2971
        %v2973 = vpop.f32.mrb[0].mxu0
        %v2974 = vpop.f32.mrb[0].mxu0
        %v2975 = vadd.f32 %v2684, %v2974
        %v2976 = vpop.f32.mrb[0].mxu0
        %2977 = vmatprep.mubr.bf16.mxu0 0
        %2978 = vmatmul.mubr.bf16.gmra.mrb[0].mxu0 %v2633
        %v2979 = vpop.f32.mrb[0].mxu0
        %v2980 = vadd.f32 %v2684, %v2979
        %v2981 = vpop.f32.mrb[0].mxu0
        %v2982 = vpop.f32.mrb[0].mxu0
        %v2983 = vadd.f32 %v2684, %v2982
        %v2984 = vpop.f32.mrb[0].mxu0
        %2985 = vmatprep.mubr.bf16.mxu0 0
        %2986 = vmatmul.mubr.bf16.gmra.mrb[0].mxu0 %v2634
        %v2987 = vpop.f32.mrb[0].mxu0
        %v2988 = vadd.f32 %v2684, %v2987
        %v2989 = vpop.f32.mrb[0].mxu0
        %v2990 = vpop.f32.mrb[0].mxu0
        %v2991 = vadd.f32 %v2684, %v2990
        %v2992 = vpop.f32.mrb[0].mxu0
        %2993 = vmatprep.mubr.bf16.mxu0 0
        %2994 = vmatmul.mubr.bf16.gmra.mrb[0].mxu0 %v2635
        %v2995 = vpop.f32.mrb[0].mxu0
        %v2996 = vadd.f32 %v2684, %v2995
        %v2997 = vpop.f32.mrb[0].mxu0
        %v2998 = vpop.f32.mrb[0].mxu0
        %v2999 = vadd.f32 %v2684, %v2998
        %v3000 = vpop.f32.mrb[0].mxu0
        %3001 = vmatprep.mubr.bf16.mxu0 0
        %3002 = vmatmul.mubr.bf16.gmra.mrb[0].mxu0 %v2636
        %v3003 = vpop.f32.mrb[0].mxu0
        %v3004 = vadd.f32 %v2684, %v3003
        %v3005 = vpop.f32.mrb[0].mxu0
        %v3006 = vpop.f32.mrb[0].mxu0
        %v3007 = vadd.f32 %v2684, %v3006
        %v3008 = vpop.f32.mrb[0].mxu0
        %3009 = vmatprep.mubr.bf16.mxu0 0
        %3010 = vmatmul.mubr.bf16.gmra.mrb[0].mxu0 %v2637
        %v3011 = vpop.f32.mrb[0].mxu0
        %v3012 = vadd.f32 %v2684, %v3011
        %v3013 = vpop.f32.mrb[0].mxu0
        %v3014 = vpop.f32.mrb[0].mxu0
        %v3015 = vadd.f32 %v2684, %v3014
        %v3016 = vpop.f32.mrb[0].mxu0
        %3017 = vmatprep.mubr.bf16.mxu0 0
        %3018 = vmatmul.mubr.bf16.gmra.mrb[0].mxu0 %v2638
        %v3019 = vpop.f32.mrb[0].mxu0
        %v3020 = vadd.f32 %v2684, %v3019
        %v3021 = vpop.f32.mrb[0].mxu0
        %v3022 = vpop.f32.mrb[0].mxu0
        %v3023 = vadd.f32 %v2684, %v3022
        %v3024 = vpop.f32.mrb[0].mxu0
        %3025 = vdwg.mxu0
        %v3026 = vpack.c.bf16 %v2855, %v2851
        %v3027 = vpack.c.bf16 %v2857, %v2853
        %v3028 = vpack.c.bf16 %v2967, %v2964
        %v3029 = vpack.c.bf16 %v2865, %v2861
        %v3030 = vpack.c.bf16 %v2867, %v2863
        %v3031 = vpack.c.bf16 %v2975, %v2972
        %v3032 = vpack.c.bf16 %v2875, %v2871
        %v3033 = vpack.c.bf16 %v2877, %v2873
        %v3034 = vpack.c.bf16 %v2983, %v2980
        %v3035 = vpack.c.bf16 %v2885, %v2881
        %v3036 = vpack.c.bf16 %v2887, %v2883
        %v3037 = vpack.c.bf16 %v2991, %v2988
        %v3038 = vpack.c.bf16 %v2895, %v2891
        %v3039 = vpack.c.bf16 %v2897, %v2893
        %v3040 = vpack.c.bf16 %v2999, %v2996
        %v3041 = vpack.c.bf16 %v2905, %v2901
        %v3042 = vpack.c.bf16 %v2907, %v2903
        %v3043 = vpack.c.bf16 %v3007, %v3004
        %v3044 = vpack.c.bf16 %v2915, %v2911
        %v3045 = vpack.c.bf16 %v2917, %v2913
        %v3046 = vpack.c.bf16 %v3015, %v3012
        %v3047 = vpack.c.bf16 %v2925, %v2921
        %v3048 = vpack.c.bf16 %v2927, %v2923
        %v3049 = vpack.c.bf16 %v3023, %v3020
        %3050 = vst [vmem:[#allocation6] sm:$0xff] %v3026
        %3051 = vst [vmem:[#allocation6 + $0x8] sm:$0xff] %v3027
        %3052 = vst [vmem:[#allocation6 + $0x10] sm:$0xff] %v3028
        %3053 = vst [vmem:[#allocation6 + $0x18] sm:$0xff] %v3029
        %3054 = vst [vmem:[#allocation6 + $0x20] sm:$0xff] %v3030
        %3055 = vst [vmem:[#allocation6 + $0x28] sm:$0xff] %v3031
        %3056 = vst [vmem:[#allocation6 + $0x30] sm:$0xff] %v3032
        %3057 = vst [vmem:[#allocation6 + $0x38] sm:$0xff] %v3033
        %3058 = vst [vmem:[#allocation6 + $0x40] sm:$0xff] %v3034
        %3059 = vst [vmem:[#allocation6 + $0x48] sm:$0xff] %v3035
        %3060 = vst [vmem:[#allocation6 + $0x50] sm:$0xff] %v3036
        %3061 = vst [vmem:[#allocation6 + $0x58] sm:$0xff] %v3037
        %3062 = vst [vmem:[#allocation6 + $0x60] sm:$0xff] %v3038
        %3063 = vst [vmem:[#allocation6 + $0x68] sm:$0xff] %v3039
        %3064 = vst [vmem:[#allocation6 + $0x70] sm:$0xff] %v3040
        %3065 = vst [vmem:[#allocation6 + $0x78] sm:$0xff] %v3041
        %3066 = vst [vmem:[#allocation6 + $0x80] sm:$0xff] %v3042
        %3067 = vst [vmem:[#allocation6 + $0x88] sm:$0xff] %v3043
        %3068 = vst [vmem:[#allocation6 + $0x90] sm:$0xff] %v3044
        %3069 = vst [vmem:[#allocation6 + $0x98] sm:$0xff] %v3045
        %3070 = vst [vmem:[#allocation6 + $0xa0] sm:$0xff] %v3046
        %3071 = vst [vmem:[#allocation6 + $0xa8] sm:$0xff] %v3047
        %3072 = vst [vmem:[#allocation6 + $0xb0] sm:$0xff] %v3048
        %3073 = vst [vmem:[#allocation6 + $0xb8] sm:$0xff] %v3049
        %v3074 = vld [vmem:[#allocation14] sm:$0xff]
        %v3075 = vld [vmem:[#allocation14 + $0x8] sm:$0xf]
        %v3076 = vld [vmem:[#allocation14 + $0xc] sm:$0xff]
        %v3077 = vld [vmem:[#allocation14 + $0x14] sm:$0xf]
        %v3078 = vld [vmem:[#allocation14 + $0x18] sm:$0xff]
        %v3079 = vld [vmem:[#allocation14 + $0x20] sm:$0xf]
        %v3080 = vld [vmem:[#allocation14 + $0x24] sm:$0xff]
        %v3081 = vld [vmem:[#allocation14 + $0x2c] sm:$0xf]
        %v3082 = vld [vmem:[#allocation14 + $0x30] sm:$0xff]
        %v3083 = vld [vmem:[#allocation14 + $0x38] sm:$0xf]
        %v3084 = vld [vmem:[#allocation14 + $0x3c] sm:$0xff]
        %v3085 = vld [vmem:[#allocation14 + $0x44] sm:$0xf]
        %v3086 = vld [vmem:[#allocation14 + $0x48] sm:$0xff]
        %v3087 = vld [vmem:[#allocation14 + $0x50] sm:$0xf]
        %v3088 = vld [vmem:[#allocation14 + $0x54] sm:$0xff]
        %v3089 = vld [vmem:[#allocation14 + $0x5c] sm:$0xf]
        %v3090 = vld [vmem:[#allocation14 + $0x60] sm:$0xff]
        %v3091 = vld [vmem:[#allocation14 + $0x68] sm:$0xf]
        %v3092 = vld [vmem:[#allocation14 + $0x6c] sm:$0xff]
        %v3093 = vld [vmem:[#allocation14 + $0x74] sm:$0xf]
        %v3094 = vld [vmem:[#allocation14 + $0x78] sm:$0xff]
        %v3095 = vld [vmem:[#allocation14 + $0x80] sm:$0xf]
        %v3096 = vld [vmem:[#allocation14 + $0x84] sm:$0xff]
        %v3097 = vld [vmem:[#allocation14 + $0x8c] sm:$0xf]
        %v3098 = vld [vmem:[#allocation14 + $0x90] sm:$0xff]
        %v3099 = vld [vmem:[#allocation14 + $0x98] sm:$0xf]
        %v3100 = vld [vmem:[#allocation14 + $0x9c] sm:$0xff]
        %v3101 = vld [vmem:[#allocation14 + $0xa4] sm:$0xf]
        %v3102 = vld [vmem:[#allocation14 + $0xa8] sm:$0xff]
        %v3103 = vld [vmem:[#allocation14 + $0xb0] sm:$0xf]
        %v3104 = vld [vmem:[#allocation14 + $0xb4] sm:$0xff]
        %v3105 = vld [vmem:[#allocation14 + $0xbc] sm:$0xf]
        %v3106 = vld [vmem:[%s10] sm:$0x7]
        %s3107 = smul.u32 %s36, 8
        %p3108 = scmp.ne.s32.totalorder %s36, 2
        // Predicated region
        $region105: #{tpu_custom_call.1} parent=79 // pred_check
          %p3109 = pneg %p3108
        $region106: #{tpu_custom_call.1} parent=79 // pred_check_branch
          %3111 = sbr.rel (%p3109) target = $region108
        $region107: #{tpu_custom_call.1} parent=79 // pred_region
          %v3112 = vld [vmem:[#allocation3] sm:$0xff]
          %v3113 = vld [vmem:[#allocation3 + $0x8] sm:$0xff]
          %v3114 = vld [vmem:[#allocation4] sm:$0xff]
          %v3115 = vld [vmem:[#allocation4 + $0x8] sm:$0xff]
          %v3116 = vld [vmem:[%s1359] sm:$0xff]
          %v3117 = vld [vmem:[%s1359 + $0x8] sm:$0xff]
          %v3118 = vld [vmem:[%s1359 + $0x10] sm:$0xff]
          %v3119 = vunpack.c.l.bf16 %v3116
          %v3120 = vunpack.c.l.bf16 %v3117
          %v3121 = vunpack.c.l.bf16 %v3118
          %v3122 = vunpack.c.h.bf16 %v3116
          %v3123 = vunpack.c.h.bf16 %v3117
          %v3124 = vunpack.c.h.bf16 %v3118
          %v3125 = vpack.c.bf16 %v3113, %v3112
          %v3127 = vlaneseq
          %v3128 = vshrl.u32 %v3127, 7
          %v3129 = vsub.s32 0, %v3128
          %v3130 = vrot.slane %v3106, %v3129
          %v3131 = vlaneseq
          %v3132 = vshrl.u32 %v3131, 7
          %v3133 = vsub.s32 1, %v3132
          %v3134 = vrot.slane %v3106, %v3133
          %v3135 = vlaneseq
          %v3136 = vshrl.u32 %v3135, 7
          %v3137 = vsub.s32 2, %v3136
          %v3138 = vrot.slane %v3106, %v3137
          %v3174 = vunpack.c.l.b16 %v3074
          %v3175 = vunpack.c.h.b16 %v3074
          %v3176 = vunpack.c.l.b16 %v3075
          %v3177 = vunpack.c.l.b16 %v3076
          %v3178 = vunpack.c.h.b16 %v3076
          %v3179 = vunpack.c.l.b16 %v3077
          %v3180 = vunpack.c.l.b16 %v3078
          %v3181 = vunpack.c.h.b16 %v3078
          %v3182 = vunpack.c.l.b16 %v3079
          %v3183 = vunpack.c.l.b16 %v3080
          %v3184 = vunpack.c.h.b16 %v3080
          %v3185 = vunpack.c.l.b16 %v3081
          %v3186 = vunpack.c.l.b16 %v3082
          %v3187 = vunpack.c.h.b16 %v3082
          %v3188 = vunpack.c.l.b16 %v3083
          %v3189 = vunpack.c.l.b16 %v3084
          %v3190 = vunpack.c.h.b16 %v3084
          %v3191 = vunpack.c.l.b16 %v3085
          %v3192 = vunpack.c.l.b16 %v3086
          %v3193 = vunpack.c.h.b16 %v3086
          %v3194 = vunpack.c.l.b16 %v3087
          %v3195 = vunpack.c.l.b16 %v3088
          %v3196 = vunpack.c.h.b16 %v3088
          %v3197 = vunpack.c.l.b16 %v3089
          %v3198 = vunpack.c.l.b16 %v3090
          %v3199 = vunpack.c.h.b16 %v3090
          %v3200 = vunpack.c.l.b16 %v3091
          %v3201 = vunpack.c.l.b16 %v3092
          %v3202 = vunpack.c.h.b16 %v3092
          %v3203 = vunpack.c.l.b16 %v3093
          %v3204 = vunpack.c.l.b16 %v3094
          %v3205 = vunpack.c.h.b16 %v3094
          %v3206 = vunpack.c.l.b16 %v3095
          %v3207 = vunpack.c.l.b16 %v3096
          %v3208 = vunpack.c.h.b16 %v3096
          %v3209 = vunpack.c.l.b16 %v3097
          %v3210 = vunpack.c.l.b16 %v3098
          %v3211 = vunpack.c.h.b16 %v3098
          %v3212 = vunpack.c.l.b16 %v3099
          %v3213 = vunpack.c.l.b16 %v3100
          %v3214 = vunpack.c.h.b16 %v3100
          %v3215 = vunpack.c.l.b16 %v3101
          %v3216 = vunpack.c.l.b16 %v3102
          %v3217 = vunpack.c.h.b16 %v3102
          %v3218 = vunpack.c.l.b16 %v3103
          %v3219 = vunpack.c.l.b16 %v3104
          %v3220 = vunpack.c.h.b16 %v3104
          %v3221 = vunpack.c.l.b16 %v3105
          %v3222 = vpack.c.b16 %v3177, %v3174
          %v3223 = vpack.c.b16 %v3178, %v3175
          %v3224 = vpack.c.b16 %v3179, %v3176
          %v3225 = vpack.c.b16 %v3183, %v3180
          %v3226 = vpack.c.b16 %v3184, %v3181
          %v3227 = vpack.c.b16 %v3185, %v3182
          %v3228 = vpack.c.b16 %v3189, %v3186
          %v3229 = vpack.c.b16 %v3190, %v3187
          %v3230 = vpack.c.b16 %v3191, %v3188
          %v3231 = vpack.c.b16 %v3195, %v3192
          %v3232 = vpack.c.b16 %v3196, %v3193
          %v3233 = vpack.c.b16 %v3197, %v3194
          %v3234 = vpack.c.b16 %v3201, %v3198
          %v3235 = vpack.c.b16 %v3202, %v3199
          %v3236 = vpack.c.b16 %v3203, %v3200
          %v3237 = vpack.c.b16 %v3207, %v3204
          %v3238 = vpack.c.b16 %v3208, %v3205
          %v3239 = vpack.c.b16 %v3209, %v3206
          %v3240 = vpack.c.b16 %v3213, %v3210
          %v3241 = vpack.c.b16 %v3214, %v3211
          %v3242 = vpack.c.b16 %v3215, %v3212
          %v3243 = vpack.c.b16 %v3219, %v3216
          %v3244 = vpack.c.b16 %v3220, %v3217
          %v3245 = vpack.c.b16 %v3221, %v3218
          %3270 = vmatprep.subr.bf16.mxu0 %v3223
          %3271 = vmatpush1.bf16.msra.mxu0 %v3222
          %3272 = vmatprep.subr.bf16.mxu0 %v3226
          %3273 = vmatpush1.bf16.msra.mxu0 %v3225
          %3274 = vmatprep.subr.bf16.mxu0 %v3229
          %3275 = vmatpush1.bf16.msra.mxu0 %v3228
          %3276 = vmatprep.subr.bf16.mxu0 %v3232
          %3277 = vmatpush1.bf16.msra.mxu0 %v3231
          %3278 = vmatprep.subr.bf16.mxu0 %v3235
          %3279 = vmatpush1.bf16.msra.mxu0 %v3234
          %3280 = vmatprep.subr.bf16.mxu0 %v3238
          %3281 = vmatpush1.bf16.msra.mxu0 %v3237
          %3282 = vmatprep.subr.bf16.mxu0 %v3241
          %3283 = vmatpush1.bf16.msra.mxu0 %v3240
          %3284 = vmatprep.subr.bf16.mxu0 %v3244
          %3285 = vmatpush1.bf16.msra.mxu0 %v3243
          %3286 = vmatprep.subr.bf16.mxu0 0
          %3287 = vmatpush1.bf16.msra.mxu0 0
          %3288 = vmatprep.subr.bf16.mxu0 0
          %3289 = vmatpush1.bf16.msra.mxu0 0
          %3290 = vmatprep.subr.bf16.mxu0 0
          %3291 = vmatpush1.bf16.msra.mxu0 0
          %3292 = vmatprep.subr.bf16.mxu0 0
          %3293 = vmatpush1.bf16.msra.mxu0 0
          %3294 = vmatprep.subr.bf16.mxu0 0
          %3295 = vmatpush1.bf16.msra.mxu0 0
          %3296 = vmatprep.subr.bf16.mxu0 0
          %3297 = vmatpush1.bf16.msra.mxu0 0
          %3298 = vmatprep.subr.bf16.mxu0 0
          %3299 = vmatpush1.bf16.msra.mxu0 0
          %3300 = vmatprep.subr.bf16.mxu0 0
          %3301 = vmatpush1.bf16.msra.mxu0 0
          %3302 = vmatprep.mubr.bf16.mxu0 0
          %3303 = vmatmul.mubr.bf16.gmra.mrb[0].mxu0 %v3125
          %v3304 = vpop.f32.mrb[0].mxu0
          %v3305 = vadd.f32 %v3130, %v3304
          %v3306 = vpop.f32.mrb[0].mxu0
          %v3307 = vadd.f32 %v3134, %v3306
          %v3308 = vpop.f32.mrb[0].mxu0
          %v3309 = vadd.f32 %v3130, %v3308
          %v3310 = vpop.f32.mrb[0].mxu0
          %v3311 = vadd.f32 %v3134, %v3310
          %3312 = vdwg.mxu0
          %3313 = vmatprep.subr.bf16.mxu0 0
          %3314 = vmatpush1.bf16.msra.mxu0 %v3224
          %3315 = vmatprep.subr.bf16.mxu0 0
          %3316 = vmatpush1.bf16.msra.mxu0 %v3227
          %3317 = vmatprep.subr.bf16.mxu0 0
          %3318 = vmatpush1.bf16.msra.mxu0 %v3230
          %3319 = vmatprep.subr.bf16.mxu0 0
          %3320 = vmatpush1.bf16.msra.mxu0 %v3233
          %3321 = vmatprep.subr.bf16.mxu0 0
          %3322 = vmatpush1.bf16.msra.mxu0 %v3236
          %3323 = vmatprep.subr.bf16.mxu0 0
          %3324 = vmatpush1.bf16.msra.mxu0 %v3239
          %3325 = vmatprep.subr.bf16.mxu0 0
          %3326 = vmatpush1.bf16.msra.mxu0 %v3242
          %3327 = vmatprep.subr.bf16.mxu0 0
          %3328 = vmatpush1.bf16.msra.mxu0 %v3245
          %3329 = vmatprep.subr.bf16.mxu0 0
          %3330 = vmatpush1.bf16.msra.mxu0 0
          %3331 = vmatprep.subr.bf16.mxu0 0
          %3332 = vmatpush1.bf16.msra.mxu0 0
          %3333 = vmatprep.subr.bf16.mxu0 0
          %3334 = vmatpush1.bf16.msra.mxu0 0
          %3335 = vmatprep.subr.bf16.mxu0 0
          %3336 = vmatpush1.bf16.msra.mxu0 0
          %3337 = vmatprep.subr.bf16.mxu0 0
          %3338 = vmatpush1.bf16.msra.mxu0 0
          %3339 = vmatprep.subr.bf16.mxu0 0
          %3340 = vmatpush1.bf16.msra.mxu0 0
          %3341 = vmatprep.subr.bf16.mxu0 0
          %3342 = vmatpush1.bf16.msra.mxu0 0
          %3343 = vmatprep.subr.bf16.mxu0 0
          %3344 = vmatpush1.bf16.msra.mxu0 0
          %3345 = vmatprep.mubr.bf16.mxu0 0
          %3346 = vmatmul.mubr.bf16.gmra.mrb[0].mxu0 %v3125
          %v3347 = vpop.f32.mrb[0].mxu0
          %v3348 = vadd.f32 %v3138, %v3347
          %v3349 = vpop.f32.mrb[0].mxu0
          %v3350 = vpop.f32.mrb[0].mxu0
          %v3351 = vadd.f32 %v3138, %v3350
          %v3352 = vpop.f32.mrb[0].mxu0
          %3353 = vdwg.mxu0
          %v3354 = vadd.f32 %v3119, %v3305
          %v3355 = vadd.f32 %v3122, %v3309
          %v3356 = vxor.u32 %v3354, 2147483648
          %v3357 = vxor.u32 %v3355, 2147483648
          %v3358 = vmul.f32 %v3356, 1.442695
          %v3359 = vpow.pop %v3358
          %v3360 = vmul.f32 %v3357, 1.442695
          %v3361 = vpow.pop %v3360
          %v3362 = vadd.f32 %v3359, 1.0
          %v3363 = vadd.f32 %v3361, 1.0
          %v3364 = vrcp.pop %v3362
          %v3365 = vmul.f32 1.0, %v3364
          %v3366 = vrcp.pop %v3363
          %v3367 = vmul.f32 1.0, %v3366
          %v3368 = vadd.f32 %v3120, %v3307
          %v3369 = vadd.f32 %v3123, %v3311
          %v3370 = vxor.u32 %v3368, 2147483648
          %v3371 = vxor.u32 %v3369, 2147483648
          %v3372 = vmul.f32 %v3370, 1.442695
          %v3373 = vpow.pop %v3372
          %v3374 = vmul.f32 %v3371, 1.442695
          %v3375 = vpow.pop %v3374
          %v3376 = vadd.f32 %v3373, 1.0
          %v3377 = vadd.f32 %v3375, 1.0
          %v3378 = vrcp.pop %v3376
          %v3379 = vmul.f32 1.0, %v3378
          %v3380 = vrcp.pop %v3377
          %v3381 = vmul.f32 1.0, %v3380
          %v3382 = vmul.f32 %v3365, %v3348
          %v3383 = vmul.f32 %v3367, %v3351
          %v3384 = vadd.f32 %v3121, %v3382
          %v3385 = vadd.f32 %v3124, %v3383
          %v3386 = vtanh.pop %v3384
          %v3387 = vtanh.pop %v3385
          %v3388 = vsub.f32 1.0, %v3379
          %v3389 = vsub.f32 1.0, %v3381
          %v3390 = vmul.f32 %v3388, %v3386
          %v3391 = vmul.f32 %v3389, %v3387
          %v3392 = vmul.f32 %v3379, %v3112
          %v3393 = vmul.f32 %v3381, %v3113
          %v3394 = vadd.f32 %v3390, %v3392
          %v3395 = vadd.f32 %v3391, %v3393
          %v3396 = vadd.f32 %v3114, %v3394
          %v3397 = vadd.f32 %v3115, %v3395
          %v3398 = vld [vmem:[%s1644] sm:$0xff]
          %v3399 = vld [vmem:[%s1644 + $0x8] sm:$0xff]
          %v3400 = vld [vmem:[%s1644 + $0x10] sm:$0xff]
          %v3401 = vunpack.c.l.bf16 %v3398
          %v3402 = vunpack.c.l.bf16 %v3399
          %v3403 = vunpack.c.l.bf16 %v3400
          %v3404 = vunpack.c.h.bf16 %v3398
          %v3405 = vunpack.c.h.bf16 %v3399
          %v3406 = vunpack.c.h.bf16 %v3400
          %v3407 = vpack.c.bf16 %v3395, %v3394
          %3408 = vmatprep.subr.bf16.mxu0 %v3223
          %3409 = vmatpush1.bf16.msra.mxu0 %v3222
          %3410 = vmatprep.subr.bf16.mxu0 %v3226
          %3411 = vmatpush1.bf16.msra.mxu0 %v3225
          %3412 = vmatprep.subr.bf16.mxu0 %v3229
          %3413 = vmatpush1.bf16.msra.mxu0 %v3228
          %3414 = vmatprep.subr.bf16.mxu0 %v3232
          %3415 = vmatpush1.bf16.msra.mxu0 %v3231
          %3416 = vmatprep.subr.bf16.mxu0 %v3235
          %3417 = vmatpush1.bf16.msra.mxu0 %v3234
          %3418 = vmatprep.subr.bf16.mxu0 %v3238
          %3419 = vmatpush1.bf16.msra.mxu0 %v3237
          %3420 = vmatprep.subr.bf16.mxu0 %v3241
          %3421 = vmatpush1.bf16.msra.mxu0 %v3240
          %3422 = vmatprep.subr.bf16.mxu0 %v3244
          %3423 = vmatpush1.bf16.msra.mxu0 %v3243
          %3424 = vmatprep.subr.bf16.mxu0 0
          %3425 = vmatpush1.bf16.msra.mxu0 0
          %3426 = vmatprep.subr.bf16.mxu0 0
          %3427 = vmatpush1.bf16.msra.mxu0 0
          %3428 = vmatprep.subr.bf16.mxu0 0
          %3429 = vmatpush1.bf16.msra.mxu0 0
          %3430 = vmatprep.subr.bf16.mxu0 0
          %3431 = vmatpush1.bf16.msra.mxu0 0
          %3432 = vmatprep.subr.bf16.mxu0 0
          %3433 = vmatpush1.bf16.msra.mxu0 0
          %3434 = vmatprep.subr.bf16.mxu0 0
          %3435 = vmatpush1.bf16.msra.mxu0 0
          %3436 = vmatprep.subr.bf16.mxu0 0
          %3437 = vmatpush1.bf16.msra.mxu0 0
          %3438 = vmatprep.subr.bf16.mxu0 0
          %3439 = vmatpush1.bf16.msra.mxu0 0
          %3440 = vmatprep.mubr.bf16.mxu0 0
          %3441 = vmatmul.mubr.bf16.gmra.mrb[0].mxu0 %v3407
          %v3442 = vpop.f32.mrb[0].mxu0
          %v3443 = vadd.f32 %v3130, %v3442
          %v3444 = vpop.f32.mrb[0].mxu0
          %v3445 = vadd.f32 %v3134, %v3444
          %v3446 = vpop.f32.mrb[0].mxu0
          %v3447 = vadd.f32 %v3130, %v3446
          %v3448 = vpop.f32.mrb[0].mxu0
          %v3449 = vadd.f32 %v3134, %v3448
          %3450 = vdwg.mxu0
          %3451 = vmatprep.subr.bf16.mxu0 0
          %3452 = vmatpush1.bf16.msra.mxu0 %v3224
          %3453 = vmatprep.subr.bf16.mxu0 0
          %3454 = vmatpush1.bf16.msra.mxu0 %v3227
          %3455 = vmatprep.subr.bf16.mxu0 0
          %3456 = vmatpush1.bf16.msra.mxu0 %v3230
          %3457 = vmatprep.subr.bf16.mxu0 0
          %3458 = vmatpush1.bf16.msra.mxu0 %v3233
          %3459 = vmatprep.subr.bf16.mxu0 0
          %3460 = vmatpush1.bf16.msra.mxu0 %v3236
          %3461 = vmatprep.subr.bf16.mxu0 0
          %3462 = vmatpush1.bf16.msra.mxu0 %v3239
          %3463 = vmatprep.subr.bf16.mxu0 0
          %3464 = vmatpush1.bf16.msra.mxu0 %v3242
          %3465 = vmatprep.subr.bf16.mxu0 0
          %3466 = vmatpush1.bf16.msra.mxu0 %v3245
          %3467 = vmatprep.subr.bf16.mxu0 0
          %3468 = vmatpush1.bf16.msra.mxu0 0
          %3469 = vmatprep.subr.bf16.mxu0 0
          %3470 = vmatpush1.bf16.msra.mxu0 0
          %3471 = vmatprep.subr.bf16.mxu0 0
          %3472 = vmatpush1.bf16.msra.mxu0 0
          %3473 = vmatprep.subr.bf16.mxu0 0
          %3474 = vmatpush1.bf16.msra.mxu0 0
          %3475 = vmatprep.subr.bf16.mxu0 0
          %3476 = vmatpush1.bf16.msra.mxu0 0
          %3477 = vmatprep.subr.bf16.mxu0 0
          %3478 = vmatpush1.bf16.msra.mxu0 0
          %3479 = vmatprep.subr.bf16.mxu0 0
          %3480 = vmatpush1.bf16.msra.mxu0 0
          %3481 = vmatprep.subr.bf16.mxu0 0
          %3482 = vmatpush1.bf16.msra.mxu0 0
          %3483 = vmatprep.mubr.bf16.mxu0 0
          %3484 = vmatmul.mubr.bf16.gmra.mrb[0].mxu0 %v3407
          %v3485 = vpop.f32.mrb[0].mxu0
          %v3486 = vadd.f32 %v3138, %v3485
          %v3487 = vpop.f32.mrb[0].mxu0
          %v3488 = vpop.f32.mrb[0].mxu0
          %v3489 = vadd.f32 %v3138, %v3488
          %v3490 = vpop.f32.mrb[0].mxu0
          %3491 = vdwg.mxu0
          %v3492 = vadd.f32 %v3401, %v3443
          %v3493 = vadd.f32 %v3404, %v3447
          %v3494 = vxor.u32 %v3492, 2147483648
          %v3495 = vxor.u32 %v3493, 2147483648
          %v3496 = vmul.f32 %v3494, 1.442695
          %v3497 = vpow.pop %v3496
          %v3498 = vmul.f32 %v3495, 1.442695
          %v3499 = vpow.pop %v3498
          %v3500 = vadd.f32 %v3497, 1.0
          %v3501 = vadd.f32 %v3499, 1.0
          %v3502 = vrcp.pop %v3500
          %v3503 = vmul.f32 1.0, %v3502
          %v3504 = vrcp.pop %v3501
          %v3505 = vmul.f32 1.0, %v3504
          %v3506 = vadd.f32 %v3402, %v3445
          %v3507 = vadd.f32 %v3405, %v3449
          %v3508 = vxor.u32 %v3506, 2147483648
          %v3509 = vxor.u32 %v3507, 2147483648
          %v3510 = vmul.f32 %v3508, 1.442695
          %v3511 = vpow.pop %v3510
          %v3512 = vmul.f32 %v3509, 1.442695
          %v3513 = vpow.pop %v3512
          %v3514 = vadd.f32 %v3511, 1.0
          %v3515 = vadd.f32 %v3513, 1.0
          %v3516 = vrcp.pop %v3514
          %v3517 = vmul.f32 1.0, %v3516
          %v3518 = vrcp.pop %v3515
          %v3519 = vmul.f32 1.0, %v3518
          %v3520 = vmul.f32 %v3503, %v3486
          %v3521 = vmul.f32 %v3505, %v3489
          %v3522 = vadd.f32 %v3403, %v3520
          %v3523 = vadd.f32 %v3406, %v3521
          %v3524 = vtanh.pop %v3522
          %v3525 = vtanh.pop %v3523
          %v3526 = vsub.f32 1.0, %v3517
          %v3527 = vsub.f32 1.0, %v3519
          %v3528 = vmul.f32 %v3526, %v3524
          %v3529 = vmul.f32 %v3527, %v3525
          %v3530 = vmul.f32 %v3517, %v3394
          %v3531 = vmul.f32 %v3519, %v3395
          %v3532 = vadd.f32 %v3528, %v3530
          %v3533 = vadd.f32 %v3529, %v3531
          %v3534 = vadd.f32 %v3396, %v3532
          %v3535 = vadd.f32 %v3397, %v3533
          %v3536 = vld [vmem:[%s1785] sm:$0xff]
          %v3537 = vld [vmem:[%s1785 + $0x8] sm:$0xff]
          %v3538 = vld [vmem:[%s1785 + $0x10] sm:$0xff]
          %v3539 = vunpack.c.l.bf16 %v3536
          %v3540 = vunpack.c.l.bf16 %v3537
          %v3541 = vunpack.c.l.bf16 %v3538
          %v3542 = vunpack.c.h.bf16 %v3536
          %v3543 = vunpack.c.h.bf16 %v3537
          %v3544 = vunpack.c.h.bf16 %v3538
          %v3545 = vpack.c.bf16 %v3533, %v3532
          %3546 = vmatprep.subr.bf16.mxu0 %v3223
          %3547 = vmatpush1.bf16.msra.mxu0 %v3222
          %3548 = vmatprep.subr.bf16.mxu0 %v3226
          %3549 = vmatpush1.bf16.msra.mxu0 %v3225
          %3550 = vmatprep.subr.bf16.mxu0 %v3229
          %3551 = vmatpush1.bf16.msra.mxu0 %v3228
          %3552 = vmatprep.subr.bf16.mxu0 %v3232
          %3553 = vmatpush1.bf16.msra.mxu0 %v3231
          %3554 = vmatprep.subr.bf16.mxu0 %v3235
          %3555 = vmatpush1.bf16.msra.mxu0 %v3234
          %3556 = vmatprep.subr.bf16.mxu0 %v3238
          %3557 = vmatpush1.bf16.msra.mxu0 %v3237
          %3558 = vmatprep.subr.bf16.mxu0 %v3241
          %3559 = vmatpush1.bf16.msra.mxu0 %v3240
          %3560 = vmatprep.subr.bf16.mxu0 %v3244
          %3561 = vmatpush1.bf16.msra.mxu0 %v3243
          %3562 = vmatprep.subr.bf16.mxu0 0
          %3563 = vmatpush1.bf16.msra.mxu0 0
          %3564 = vmatprep.subr.bf16.mxu0 0
          %3565 = vmatpush1.bf16.msra.mxu0 0
          %3566 = vmatprep.subr.bf16.mxu0 0
          %3567 = vmatpush1.bf16.msra.mxu0 0
          %3568 = vmatprep.subr.bf16.mxu0 0
          %3569 = vmatpush1.bf16.msra.mxu0 0
          %3570 = vmatprep.subr.bf16.mxu0 0
          %3571 = vmatpush1.bf16.msra.mxu0 0
          %3572 = vmatprep.subr.bf16.mxu0 0
          %3573 = vmatpush1.bf16.msra.mxu0 0
          %3574 = vmatprep.subr.bf16.mxu0 0
          %3575 = vmatpush1.bf16.msra.mxu0 0
          %3576 = vmatprep.subr.bf16.mxu0 0
          %3577 = vmatpush1.bf16.msra.mxu0 0
          %3578 = vmatprep.mubr.bf16.mxu0 0
          %3579 = vmatmul.mubr.bf16.gmra.mrb[0].mxu0 %v3545
          %v3580 = vpop.f32.mrb[0].mxu0
          %v3581 = vadd.f32 %v3130, %v3580
          %v3582 = vpop.f32.mrb[0].mxu0
          %v3583 = vadd.f32 %v3134, %v3582
          %v3584 = vpop.f32.mrb[0].mxu0
          %v3585 = vadd.f32 %v3130, %v3584
          %v3586 = vpop.f32.mrb[0].mxu0
          %v3587 = vadd.f32 %v3134, %v3586
          %3588 = vdwg.mxu0
          %3589 = vmatprep.subr.bf16.mxu0 0
          %3590 = vmatpush1.bf16.msra.mxu0 %v3224
          %3591 = vmatprep.subr.bf16.mxu0 0
          %3592 = vmatpush1.bf16.msra.mxu0 %v3227
          %3593 = vmatprep.subr.bf16.mxu0 0
          %3594 = vmatpush1.bf16.msra.mxu0 %v3230
          %3595 = vmatprep.subr.bf16.mxu0 0
          %3596 = vmatpush1.bf16.msra.mxu0 %v3233
          %3597 = vmatprep.subr.bf16.mxu0 0
          %3598 = vmatpush1.bf16.msra.mxu0 %v3236
          %3599 = vmatprep.subr.bf16.mxu0 0
          %3600 = vmatpush1.bf16.msra.mxu0 %v3239
          %3601 = vmatprep.subr.bf16.mxu0 0
          %3602 = vmatpush1.bf16.msra.mxu0 %v3242
          %3603 = vmatprep.subr.bf16.mxu0 0
          %3604 = vmatpush1.bf16.msra.mxu0 %v3245
          %3605 = vmatprep.subr.bf16.mxu0 0
          %3606 = vmatpush1.bf16.msra.mxu0 0
          %3607 = vmatprep.subr.bf16.mxu0 0
          %3608 = vmatpush1.bf16.msra.mxu0 0
          %3609 = vmatprep.subr.bf16.mxu0 0
          %3610 = vmatpush1.bf16.msra.mxu0 0
          %3611 = vmatprep.subr.bf16.mxu0 0
          %3612 = vmatpush1.bf16.msra.mxu0 0
          %3613 = vmatprep.subr.bf16.mxu0 0
          %3614 = vmatpush1.bf16.msra.mxu0 0
          %3615 = vmatprep.subr.bf16.mxu0 0
          %3616 = vmatpush1.bf16.msra.mxu0 0
          %3617 = vmatprep.subr.bf16.mxu0 0
          %3618 = vmatpush1.bf16.msra.mxu0 0
          %3619 = vmatprep.subr.bf16.mxu0 0
          %3620 = vmatpush1.bf16.msra.mxu0 0
          %3621 = vmatprep.mubr.bf16.mxu0 0
          %3622 = vmatmul.mubr.bf16.gmra.mrb[0].mxu0 %v3545
          %v3623 = vpop.f32.mrb[0].mxu0
          %v3624 = vadd.f32 %v3138, %v3623
          %v3625 = vpop.f32.mrb[0].mxu0
          %v3626 = vpop.f32.mrb[0].mxu0
          %v3627 = vadd.f32 %v3138, %v3626
          %v3628 = vpop.f32.mrb[0].mxu0
          %3629 = vdwg.mxu0
          %v3630 = vadd.f32 %v3539, %v3581
          %v3631 = vadd.f32 %v3542, %v3585
          %v3632 = vxor.u32 %v3630, 2147483648
          %v3633 = vxor.u32 %v3631, 2147483648
          %v3634 = vmul.f32 %v3632, 1.442695
          %v3635 = vpow.pop %v3634
          %v3636 = vmul.f32 %v3633, 1.442695
          %v3637 = vpow.pop %v3636
          %v3638 = vadd.f32 %v3635, 1.0
          %v3639 = vadd.f32 %v3637, 1.0
          %v3640 = vrcp.pop %v3638
          %v3641 = vmul.f32 1.0, %v3640
          %v3642 = vrcp.pop %v3639
          %v3643 = vmul.f32 1.0, %v3642
          %v3644 = vadd.f32 %v3540, %v3583
          %v3645 = vadd.f32 %v3543, %v3587
          %v3646 = vxor.u32 %v3644, 2147483648
          %v3647 = vxor.u32 %v3645, 2147483648
          %v3648 = vmul.f32 %v3646, 1.442695
          %v3649 = vpow.pop %v3648
          %v3650 = vmul.f32 %v3647, 1.442695
          %v3651 = vpow.pop %v3650
          %v3652 = vadd.f32 %v3649, 1.0
          %v3653 = vadd.f32 %v3651, 1.0
          %v3654 = vrcp.pop %v3652
          %v3655 = vmul.f32 1.0, %v3654
          %v3656 = vrcp.pop %v3653
          %v3657 = vmul.f32 1.0, %v3656
          %v3658 = vmul.f32 %v3641, %v3624
          %v3659 = vmul.f32 %v3643, %v3627
          %v3660 = vadd.f32 %v3541, %v3658
          %v3661 = vadd.f32 %v3544, %v3659
          %v3662 = vtanh.pop %v3660
          %v3663 = vtanh.pop %v3661
          %v3664 = vsub.f32 1.0, %v3655
          %v3665 = vsub.f32 1.0, %v3657
          %v3666 = vmul.f32 %v3664, %v3662
          %v3667 = vmul.f32 %v3665, %v3663
          %v3668 = vmul.f32 %v3655, %v3532
          %v3669 = vmul.f32 %v3657, %v3533
          %v3670 = vadd.f32 %v3666, %v3668
          %v3671 = vadd.f32 %v3667, %v3669
          %v3672 = vadd.f32 %v3534, %v3670
          %v3673 = vadd.f32 %v3535, %v3671
          %v3674 = vld [vmem:[%s1926] sm:$0xff]
          %v3675 = vld [vmem:[%s1926 + $0x8] sm:$0xff]
          %v3676 = vld [vmem:[%s1926 + $0x10] sm:$0xff]
          %v3677 = vunpack.c.l.bf16 %v3674
          %v3678 = vunpack.c.l.bf16 %v3675
          %v3679 = vunpack.c.l.bf16 %v3676
          %v3680 = vunpack.c.h.bf16 %v3674
          %v3681 = vunpack.c.h.bf16 %v3675
          %v3682 = vunpack.c.h.bf16 %v3676
          %v3683 = vpack.c.bf16 %v3671, %v3670
          %3684 = vmatprep.subr.bf16.mxu0 %v3223
          %3685 = vmatpush1.bf16.msra.mxu0 %v3222
          %3686 = vmatprep.subr.bf16.mxu0 %v3226
          %3687 = vmatpush1.bf16.msra.mxu0 %v3225
          %3688 = vmatprep.subr.bf16.mxu0 %v3229
          %3689 = vmatpush1.bf16.msra.mxu0 %v3228
          %3690 = vmatprep.subr.bf16.mxu0 %v3232
          %3691 = vmatpush1.bf16.msra.mxu0 %v3231
          %3692 = vmatprep.subr.bf16.mxu0 %v3235
          %3693 = vmatpush1.bf16.msra.mxu0 %v3234
          %3694 = vmatprep.subr.bf16.mxu0 %v3238
          %3695 = vmatpush1.bf16.msra.mxu0 %v3237
          %3696 = vmatprep.subr.bf16.mxu0 %v3241
          %3697 = vmatpush1.bf16.msra.mxu0 %v3240
          %3698 = vmatprep.subr.bf16.mxu0 %v3244
          %3699 = vmatpush1.bf16.msra.mxu0 %v3243
          %3700 = vmatprep.subr.bf16.mxu0 0
          %3701 = vmatpush1.bf16.msra.mxu0 0
          %3702 = vmatprep.subr.bf16.mxu0 0
          %3703 = vmatpush1.bf16.msra.mxu0 0
          %3704 = vmatprep.subr.bf16.mxu0 0
          %3705 = vmatpush1.bf16.msra.mxu0 0
          %3706 = vmatprep.subr.bf16.mxu0 0
          %3707 = vmatpush1.bf16.msra.mxu0 0
          %3708 = vmatprep.subr.bf16.mxu0 0
          %3709 = vmatpush1.bf16.msra.mxu0 0
          %3710 = vmatprep.subr.bf16.mxu0 0
          %3711 = vmatpush1.bf16.msra.mxu0 0
          %3712 = vmatprep.subr.bf16.mxu0 0
          %3713 = vmatpush1.bf16.msra.mxu0 0
          %3714 = vmatprep.subr.bf16.mxu0 0
          %3715 = vmatpush1.bf16.msra.mxu0 0
          %3716 = vmatprep.mubr.bf16.mxu0 0
          %3717 = vmatmul.mubr.bf16.gmra.mrb[0].mxu0 %v3683
          %v3718 = vpop.f32.mrb[0].mxu0
          %v3719 = vadd.f32 %v3130, %v3718
          %v3720 = vpop.f32.mrb[0].mxu0
          %v3721 = vadd.f32 %v3134, %v3720
          %v3722 = vpop.f32.mrb[0].mxu0
          %v3723 = vadd.f32 %v3130, %v3722
          %v3724 = vpop.f32.mrb[0].mxu0
          %v3725 = vadd.f32 %v3134, %v3724
          %3726 = vdwg.mxu0
          %3727 = vmatprep.subr.bf16.mxu0 0
          %3728 = vmatpush1.bf16.msra.mxu0 %v3224
          %3729 = vmatprep.subr.bf16.mxu0 0
          %3730 = vmatpush1.bf16.msra.mxu0 %v3227
          %3731 = vmatprep.subr.bf16.mxu0 0
          %3732 = vmatpush1.bf16.msra.mxu0 %v3230
          %3733 = vmatprep.subr.bf16.mxu0 0
          %3734 = vmatpush1.bf16.msra.mxu0 %v3233
          %3735 = vmatprep.subr.bf16.mxu0 0
          %3736 = vmatpush1.bf16.msra.mxu0 %v3236
          %3737 = vmatprep.subr.bf16.mxu0 0
          %3738 = vmatpush1.bf16.msra.mxu0 %v3239
          %3739 = vmatprep.subr.bf16.mxu0 0
          %3740 = vmatpush1.bf16.msra.mxu0 %v3242
          %3741 = vmatprep.subr.bf16.mxu0 0
          %3742 = vmatpush1.bf16.msra.mxu0 %v3245
          %3743 = vmatprep.subr.bf16.mxu0 0
          %3744 = vmatpush1.bf16.msra.mxu0 0
          %3745 = vmatprep.subr.bf16.mxu0 0
          %3746 = vmatpush1.bf16.msra.mxu0 0
          %3747 = vmatprep.subr.bf16.mxu0 0
          %3748 = vmatpush1.bf16.msra.mxu0 0
          %3749 = vmatprep.subr.bf16.mxu0 0
          %3750 = vmatpush1.bf16.msra.mxu0 0
          %3751 = vmatprep.subr.bf16.mxu0 0
          %3752 = vmatpush1.bf16.msra.mxu0 0
          %3753 = vmatprep.subr.bf16.mxu0 0
          %3754 = vmatpush1.bf16.msra.mxu0 0
          %3755 = vmatprep.subr.bf16.mxu0 0
          %3756 = vmatpush1.bf16.msra.mxu0 0
          %3757 = vmatprep.subr.bf16.mxu0 0
          %3758 = vmatpush1.bf16.msra.mxu0 0
          %3759 = vmatprep.mubr.bf16.mxu0 0
          %3760 = vmatmul.mubr.bf16.gmra.mrb[0].mxu0 %v3683
          %v3761 = vpop.f32.mrb[0].mxu0
          %v3762 = vadd.f32 %v3138, %v3761
          %v3763 = vpop.f32.mrb[0].mxu0
          %v3764 = vpop.f32.mrb[0].mxu0
          %v3765 = vadd.f32 %v3138, %v3764
          %v3766 = vpop.f32.mrb[0].mxu0
          %3767 = vdwg.mxu0
          %v3768 = vadd.f32 %v3677, %v3719
          %v3769 = vadd.f32 %v3680, %v3723
          %v3770 = vxor.u32 %v3768, 2147483648
          %v3771 = vxor.u32 %v3769, 2147483648
          %v3772 = vmul.f32 %v3770, 1.442695
          %v3773 = vpow.pop %v3772
          %v3774 = vmul.f32 %v3771, 1.442695
          %v3775 = vpow.pop %v3774
          %v3776 = vadd.f32 %v3773, 1.0
          %v3777 = vadd.f32 %v3775, 1.0
          %v3778 = vrcp.pop %v3776
          %v3779 = vmul.f32 1.0, %v3778
          %v3780 = vrcp.pop %v3777
          %v3781 = vmul.f32 1.0, %v3780
          %v3782 = vadd.f32 %v3678, %v3721
          %v3783 = vadd.f32 %v3681, %v3725
          %v3784 = vxor.u32 %v3782, 2147483648
          %v3785 = vxor.u32 %v3783, 2147483648
          %v3786 = vmul.f32 %v3784, 1.442695
          %v3787 = vpow.pop %v3786
          %v3788 = vmul.f32 %v3785, 1.442695
          %v3789 = vpow.pop %v3788
          %v3790 = vadd.f32 %v3787, 1.0
          %v3791 = vadd.f32 %v3789, 1.0
          %v3792 = vrcp.pop %v3790
          %v3793 = vmul.f32 1.0, %v3792
          %v3794 = vrcp.pop %v3791
          %v3795 = vmul.f32 1.0, %v3794
          %v3796 = vmul.f32 %v3779, %v3762
          %v3797 = vmul.f32 %v3781, %v3765
          %v3798 = vadd.f32 %v3679, %v3796
          %v3799 = vadd.f32 %v3682, %v3797
          %v3800 = vtanh.pop %v3798
          %v3801 = vtanh.pop %v3799
          %v3802 = vsub.f32 1.0, %v3793
          %v3803 = vsub.f32 1.0, %v3795
          %v3804 = vmul.f32 %v3802, %v3800
          %v3805 = vmul.f32 %v3803, %v3801
          %v3806 = vmul.f32 %v3793, %v3670
          %v3807 = vmul.f32 %v3795, %v3671
          %v3808 = vadd.f32 %v3804, %v3806
          %v3809 = vadd.f32 %v3805, %v3807
          %v3810 = vadd.f32 %v3672, %v3808
          %v3811 = vadd.f32 %v3673, %v3809
          %v3812 = vld [vmem:[%s2067] sm:$0xff]
          %v3813 = vld [vmem:[%s2067 + $0x8] sm:$0xff]
          %v3814 = vld [vmem:[%s2067 + $0x10] sm:$0xff]
          %v3815 = vunpack.c.l.bf16 %v3812
          %v3816 = vunpack.c.l.bf16 %v3813
          %v3817 = vunpack.c.l.bf16 %v3814
          %v3818 = vunpack.c.h.bf16 %v3812
          %v3819 = vunpack.c.h.bf16 %v3813
          %v3820 = vunpack.c.h.bf16 %v3814
          %v3821 = vpack.c.bf16 %v3809, %v3808
          %3822 = vmatprep.subr.bf16.mxu0 %v3223
          %3823 = vmatpush1.bf16.msra.mxu0 %v3222
          %3824 = vmatprep.subr.bf16.mxu0 %v3226
          %3825 = vmatpush1.bf16.msra.mxu0 %v3225
          %3826 = vmatprep.subr.bf16.mxu0 %v3229
          %3827 = vmatpush1.bf16.msra.mxu0 %v3228
          %3828 = vmatprep.subr.bf16.mxu0 %v3232
          %3829 = vmatpush1.bf16.msra.mxu0 %v3231
          %3830 = vmatprep.subr.bf16.mxu0 %v3235
          %3831 = vmatpush1.bf16.msra.mxu0 %v3234
          %3832 = vmatprep.subr.bf16.mxu0 %v3238
          %3833 = vmatpush1.bf16.msra.mxu0 %v3237
          %3834 = vmatprep.subr.bf16.mxu0 %v3241
          %3835 = vmatpush1.bf16.msra.mxu0 %v3240
          %3836 = vmatprep.subr.bf16.mxu0 %v3244
          %3837 = vmatpush1.bf16.msra.mxu0 %v3243
          %3838 = vmatprep.subr.bf16.mxu0 0
          %3839 = vmatpush1.bf16.msra.mxu0 0
          %3840 = vmatprep.subr.bf16.mxu0 0
          %3841 = vmatpush1.bf16.msra.mxu0 0
          %3842 = vmatprep.subr.bf16.mxu0 0
          %3843 = vmatpush1.bf16.msra.mxu0 0
          %3844 = vmatprep.subr.bf16.mxu0 0
          %3845 = vmatpush1.bf16.msra.mxu0 0
          %3846 = vmatprep.subr.bf16.mxu0 0
          %3847 = vmatpush1.bf16.msra.mxu0 0
          %3848 = vmatprep.subr.bf16.mxu0 0
          %3849 = vmatpush1.bf16.msra.mxu0 0
          %3850 = vmatprep.subr.bf16.mxu0 0
          %3851 = vmatpush1.bf16.msra.mxu0 0
          %3852 = vmatprep.subr.bf16.mxu0 0
          %3853 = vmatpush1.bf16.msra.mxu0 0
          %3854 = vmatprep.mubr.bf16.mxu0 0
          %3855 = vmatmul.mubr.bf16.gmra.mrb[0].mxu0 %v3821
          %v3856 = vpop.f32.mrb[0].mxu0
          %v3857 = vadd.f32 %v3130, %v3856
          %v3858 = vpop.f32.mrb[0].mxu0
          %v3859 = vadd.f32 %v3134, %v3858
          %v3860 = vpop.f32.mrb[0].mxu0
          %v3861 = vadd.f32 %v3130, %v3860
          %v3862 = vpop.f32.mrb[0].mxu0
          %v3863 = vadd.f32 %v3134, %v3862
          %3864 = vdwg.mxu0
          %3865 = vmatprep.subr.bf16.mxu0 0
          %3866 = vmatpush1.bf16.msra.mxu0 %v3224
          %3867 = vmatprep.subr.bf16.mxu0 0
          %3868 = vmatpush1.bf16.msra.mxu0 %v3227
          %3869 = vmatprep.subr.bf16.mxu0 0
          %3870 = vmatpush1.bf16.msra.mxu0 %v3230
          %3871 = vmatprep.subr.bf16.mxu0 0
          %3872 = vmatpush1.bf16.msra.mxu0 %v3233
          %3873 = vmatprep.subr.bf16.mxu0 0
          %3874 = vmatpush1.bf16.msra.mxu0 %v3236
          %3875 = vmatprep.subr.bf16.mxu0 0
          %3876 = vmatpush1.bf16.msra.mxu0 %v3239
          %3877 = vmatprep.subr.bf16.mxu0 0
          %3878 = vmatpush1.bf16.msra.mxu0 %v3242
          %3879 = vmatprep.subr.bf16.mxu0 0
          %3880 = vmatpush1.bf16.msra.mxu0 %v3245
          %3881 = vmatprep.subr.bf16.mxu0 0
          %3882 = vmatpush1.bf16.msra.mxu0 0
          %3883 = vmatprep.subr.bf16.mxu0 0
          %3884 = vmatpush1.bf16.msra.mxu0 0
          %3885 = vmatprep.subr.bf16.mxu0 0
          %3886 = vmatpush1.bf16.msra.mxu0 0
          %3887 = vmatprep.subr.bf16.mxu0 0
          %3888 = vmatpush1.bf16.msra.mxu0 0
          %3889 = vmatprep.subr.bf16.mxu0 0
          %3890 = vmatpush1.bf16.msra.mxu0 0
          %3891 = vmatprep.subr.bf16.mxu0 0
          %3892 = vmatpush1.bf16.msra.mxu0 0
          %3893 = vmatprep.subr.bf16.mxu0 0
          %3894 = vmatpush1.bf16.msra.mxu0 0
          %3895 = vmatprep.subr.bf16.mxu0 0
          %3896 = vmatpush1.bf16.msra.mxu0 0
          %3897 = vmatprep.mubr.bf16.mxu0 0
          %3898 = vmatmul.mubr.bf16.gmra.mrb[0].mxu0 %v3821
          %v3899 = vpop.f32.mrb[0].mxu0
          %v3900 = vadd.f32 %v3138, %v3899
          %v3901 = vpop.f32.mrb[0].mxu0
          %v3902 = vpop.f32.mrb[0].mxu0
          %v3903 = vadd.f32 %v3138, %v3902
          %v3904 = vpop.f32.mrb[0].mxu0
          %3905 = vdwg.mxu0
          %v3906 = vadd.f32 %v3815, %v3857
          %v3907 = vadd.f32 %v3818, %v3861
          %v3908 = vxor.u32 %v3906, 2147483648
          %v3909 = vxor.u32 %v3907, 2147483648
          %v3910 = vmul.f32 %v3908, 1.442695
          %v3911 = vpow.pop %v3910
          %v3912 = vmul.f32 %v3909, 1.442695
          %v3913 = vpow.pop %v3912
          %v3914 = vadd.f32 %v3911, 1.0
          %v3915 = vadd.f32 %v3913, 1.0
          %v3916 = vrcp.pop %v3914
          %v3917 = vmul.f32 1.0, %v3916
          %v3918 = vrcp.pop %v3915
          %v3919 = vmul.f32 1.0, %v3918
          %v3920 = vadd.f32 %v3816, %v3859
          %v3921 = vadd.f32 %v3819, %v3863
          %v3922 = vxor.u32 %v3920, 2147483648
          %v3923 = vxor.u32 %v3921, 2147483648
          %v3924 = vmul.f32 %v3922, 1.442695
          %v3925 = vpow.pop %v3924
          %v3926 = vmul.f32 %v3923, 1.442695
          %v3927 = vpow.pop %v3926
          %v3928 = vadd.f32 %v3925, 1.0
          %v3929 = vadd.f32 %v3927, 1.0
          %v3930 = vrcp.pop %v3928
          %v3931 = vmul.f32 1.0, %v3930
          %v3932 = vrcp.pop %v3929
          %v3933 = vmul.f32 1.0, %v3932
          %v3934 = vmul.f32 %v3917, %v3900
          %v3935 = vmul.f32 %v3919, %v3903
          %v3936 = vadd.f32 %v3817, %v3934
          %v3937 = vadd.f32 %v3820, %v3935
          %v3938 = vtanh.pop %v3936
          %v3939 = vtanh.pop %v3937
          %v3940 = vsub.f32 1.0, %v3931
          %v3941 = vsub.f32 1.0, %v3933
          %v3942 = vmul.f32 %v3940, %v3938
          %v3943 = vmul.f32 %v3941, %v3939
          %v3944 = vmul.f32 %v3931, %v3808
          %v3945 = vmul.f32 %v3933, %v3809
          %v3946 = vadd.f32 %v3942, %v3944
          %v3947 = vadd.f32 %v3943, %v3945
          %v3948 = vadd.f32 %v3810, %v3946
          %v3949 = vadd.f32 %v3811, %v3947
          %v3950 = vld [vmem:[%s2208] sm:$0xff]
          %v3951 = vld [vmem:[%s2208 + $0x8] sm:$0xff]
          %v3952 = vld [vmem:[%s2208 + $0x10] sm:$0xff]
          %v3953 = vunpack.c.l.bf16 %v3950
          %v3954 = vunpack.c.l.bf16 %v3951
          %v3955 = vunpack.c.l.bf16 %v3952
          %v3956 = vunpack.c.h.bf16 %v3950
          %v3957 = vunpack.c.h.bf16 %v3951
          %v3958 = vunpack.c.h.bf16 %v3952
          %v3959 = vpack.c.bf16 %v3947, %v3946
          %3960 = vmatprep.subr.bf16.mxu0 %v3223
          %3961 = vmatpush1.bf16.msra.mxu0 %v3222
          %3962 = vmatprep.subr.bf16.mxu0 %v3226
          %3963 = vmatpush1.bf16.msra.mxu0 %v3225
          %3964 = vmatprep.subr.bf16.mxu0 %v3229
          %3965 = vmatpush1.bf16.msra.mxu0 %v3228
          %3966 = vmatprep.subr.bf16.mxu0 %v3232
          %3967 = vmatpush1.bf16.msra.mxu0 %v3231
          %3968 = vmatprep.subr.bf16.mxu0 %v3235
          %3969 = vmatpush1.bf16.msra.mxu0 %v3234
          %3970 = vmatprep.subr.bf16.mxu0 %v3238
          %3971 = vmatpush1.bf16.msra.mxu0 %v3237
          %3972 = vmatprep.subr.bf16.mxu0 %v3241
          %3973 = vmatpush1.bf16.msra.mxu0 %v3240
          %3974 = vmatprep.subr.bf16.mxu0 %v3244
          %3975 = vmatpush1.bf16.msra.mxu0 %v3243
          %3976 = vmatprep.subr.bf16.mxu0 0
          %3977 = vmatpush1.bf16.msra.mxu0 0
          %3978 = vmatprep.subr.bf16.mxu0 0
          %3979 = vmatpush1.bf16.msra.mxu0 0
          %3980 = vmatprep.subr.bf16.mxu0 0
          %3981 = vmatpush1.bf16.msra.mxu0 0
          %3982 = vmatprep.subr.bf16.mxu0 0
          %3983 = vmatpush1.bf16.msra.mxu0 0
          %3984 = vmatprep.subr.bf16.mxu0 0
          %3985 = vmatpush1.bf16.msra.mxu0 0
          %3986 = vmatprep.subr.bf16.mxu0 0
          %3987 = vmatpush1.bf16.msra.mxu0 0
          %3988 = vmatprep.subr.bf16.mxu0 0
          %3989 = vmatpush1.bf16.msra.mxu0 0
          %3990 = vmatprep.subr.bf16.mxu0 0
          %3991 = vmatpush1.bf16.msra.mxu0 0
          %3992 = vmatprep.mubr.bf16.mxu0 0
          %3993 = vmatmul.mubr.bf16.gmra.mrb[0].mxu0 %v3959
          %v3994 = vpop.f32.mrb[0].mxu0
          %v3995 = vadd.f32 %v3130, %v3994
          %v3996 = vpop.f32.mrb[0].mxu0
          %v3997 = vadd.f32 %v3134, %v3996
          %v3998 = vpop.f32.mrb[0].mxu0
          %v3999 = vadd.f32 %v3130, %v3998
          %v4000 = vpop.f32.mrb[0].mxu0
          %v4001 = vadd.f32 %v3134, %v4000
          %4002 = vdwg.mxu0
          %4003 = vmatprep.subr.bf16.mxu0 0
          %4004 = vmatpush1.bf16.msra.mxu0 %v3224
          %4005 = vmatprep.subr.bf16.mxu0 0
          %4006 = vmatpush1.bf16.msra.mxu0 %v3227
          %4007 = vmatprep.subr.bf16.mxu0 0
          %4008 = vmatpush1.bf16.msra.mxu0 %v3230
          %4009 = vmatprep.subr.bf16.mxu0 0
          %4010 = vmatpush1.bf16.msra.mxu0 %v3233
          %4011 = vmatprep.subr.bf16.mxu0 0
          %4012 = vmatpush1.bf16.msra.mxu0 %v3236
          %4013 = vmatprep.subr.bf16.mxu0 0
          %4014 = vmatpush1.bf16.msra.mxu0 %v3239
          %4015 = vmatprep.subr.bf16.mxu0 0
          %4016 = vmatpush1.bf16.msra.mxu0 %v3242
          %4017 = vmatprep.subr.bf16.mxu0 0
          %4018 = vmatpush1.bf16.msra.mxu0 %v3245
          %4019 = vmatprep.subr.bf16.mxu0 0
          %4020 = vmatpush1.bf16.msra.mxu0 0
          %4021 = vmatprep.subr.bf16.mxu0 0
          %4022 = vmatpush1.bf16.msra.mxu0 0
          %4023 = vmatprep.subr.bf16.mxu0 0
          %4024 = vmatpush1.bf16.msra.mxu0 0
          %4025 = vmatprep.subr.bf16.mxu0 0
          %4026 = vmatpush1.bf16.msra.mxu0 0
          %4027 = vmatprep.subr.bf16.mxu0 0
          %4028 = vmatpush1.bf16.msra.mxu0 0
          %4029 = vmatprep.subr.bf16.mxu0 0
          %4030 = vmatpush1.bf16.msra.mxu0 0
          %4031 = vmatprep.subr.bf16.mxu0 0
          %4032 = vmatpush1.bf16.msra.mxu0 0
          %4033 = vmatprep.subr.bf16.mxu0 0
          %4034 = vmatpush1.bf16.msra.mxu0 0
          %4035 = vmatprep.mubr.bf16.mxu0 0
          %4036 = vmatmul.mubr.bf16.gmra.mrb[0].mxu0 %v3959
          %v4037 = vpop.f32.mrb[0].mxu0
          %v4038 = vadd.f32 %v3138, %v4037
          %v4039 = vpop.f32.mrb[0].mxu0
          %v4040 = vpop.f32.mrb[0].mxu0
          %v4041 = vadd.f32 %v3138, %v4040
          %v4042 = vpop.f32.mrb[0].mxu0
          %4043 = vdwg.mxu0
          %v4044 = vadd.f32 %v3953, %v3995
          %v4045 = vadd.f32 %v3956, %v3999
          %v4046 = vxor.u32 %v4044, 2147483648
          %v4047 = vxor.u32 %v4045, 2147483648
          %v4048 = vmul.f32 %v4046, 1.442695
          %v4049 = vpow.pop %v4048
          %v4050 = vmul.f32 %v4047, 1.442695
          %v4051 = vpow.pop %v4050
          %v4052 = vadd.f32 %v4049, 1.0
          %v4053 = vadd.f32 %v4051, 1.0
          %v4054 = vrcp.pop %v4052
          %v4055 = vmul.f32 1.0, %v4054
          %v4056 = vrcp.pop %v4053
          %v4057 = vmul.f32 1.0, %v4056
          %v4058 = vadd.f32 %v3954, %v3997
          %v4059 = vadd.f32 %v3957, %v4001
          %v4060 = vxor.u32 %v4058, 2147483648
          %v4061 = vxor.u32 %v4059, 2147483648
          %v4062 = vmul.f32 %v4060, 1.442695
          %v4063 = vpow.pop %v4062
          %v4064 = vmul.f32 %v4061, 1.442695
          %v4065 = vpow.pop %v4064
          %v4066 = vadd.f32 %v4063, 1.0
          %v4067 = vadd.f32 %v4065, 1.0
          %v4068 = vrcp.pop %v4066
          %v4069 = vmul.f32 1.0, %v4068
          %v4070 = vrcp.pop %v4067
          %v4071 = vmul.f32 1.0, %v4070
          %v4072 = vmul.f32 %v4055, %v4038
          %v4073 = vmul.f32 %v4057, %v4041
          %v4074 = vadd.f32 %v3955, %v4072
          %v4075 = vadd.f32 %v3958, %v4073
          %v4076 = vtanh.pop %v4074
          %v4077 = vtanh.pop %v4075
          %v4078 = vsub.f32 1.0, %v4069
          %v4079 = vsub.f32 1.0, %v4071
          %v4080 = vmul.f32 %v4078, %v4076
          %v4081 = vmul.f32 %v4079, %v4077
          %v4082 = vmul.f32 %v4069, %v3946
          %v4083 = vmul.f32 %v4071, %v3947
          %v4084 = vadd.f32 %v4080, %v4082
          %v4085 = vadd.f32 %v4081, %v4083
          %v4086 = vadd.f32 %v3948, %v4084
          %v4087 = vadd.f32 %v3949, %v4085
          %v4088 = vld [vmem:[%s2349] sm:$0xff]
          %v4089 = vld [vmem:[%s2349 + $0x8] sm:$0xff]
          %v4090 = vld [vmem:[%s2349 + $0x10] sm:$0xff]
          %v4091 = vunpack.c.l.bf16 %v4088
          %v4092 = vunpack.c.l.bf16 %v4089
          %v4093 = vunpack.c.l.bf16 %v4090
          %v4094 = vunpack.c.h.bf16 %v4088
          %v4095 = vunpack.c.h.bf16 %v4089
          %v4096 = vunpack.c.h.bf16 %v4090
          %v4097 = vpack.c.bf16 %v4085, %v4084
          %4098 = vmatprep.subr.bf16.mxu0 %v3223
          %4099 = vmatpush1.bf16.msra.mxu0 %v3222
          %4100 = vmatprep.subr.bf16.mxu0 %v3226
          %4101 = vmatpush1.bf16.msra.mxu0 %v3225
          %4102 = vmatprep.subr.bf16.mxu0 %v3229
          %4103 = vmatpush1.bf16.msra.mxu0 %v3228
          %4104 = vmatprep.subr.bf16.mxu0 %v3232
          %4105 = vmatpush1.bf16.msra.mxu0 %v3231
          %4106 = vmatprep.subr.bf16.mxu0 %v3235
          %4107 = vmatpush1.bf16.msra.mxu0 %v3234
          %4108 = vmatprep.subr.bf16.mxu0 %v3238
          %4109 = vmatpush1.bf16.msra.mxu0 %v3237
          %4110 = vmatprep.subr.bf16.mxu0 %v3241
          %4111 = vmatpush1.bf16.msra.mxu0 %v3240
          %4112 = vmatprep.subr.bf16.mxu0 %v3244
          %4113 = vmatpush1.bf16.msra.mxu0 %v3243
          %4114 = vmatprep.subr.bf16.mxu0 0
          %4115 = vmatpush1.bf16.msra.mxu0 0
          %4116 = vmatprep.subr.bf16.mxu0 0
          %4117 = vmatpush1.bf16.msra.mxu0 0
          %4118 = vmatprep.subr.bf16.mxu0 0
          %4119 = vmatpush1.bf16.msra.mxu0 0
          %4120 = vmatprep.subr.bf16.mxu0 0
          %4121 = vmatpush1.bf16.msra.mxu0 0
          %4122 = vmatprep.subr.bf16.mxu0 0
          %4123 = vmatpush1.bf16.msra.mxu0 0
          %4124 = vmatprep.subr.bf16.mxu0 0
          %4125 = vmatpush1.bf16.msra.mxu0 0
          %4126 = vmatprep.subr.bf16.mxu0 0
          %4127 = vmatpush1.bf16.msra.mxu0 0
          %4128 = vmatprep.subr.bf16.mxu0 0
          %4129 = vmatpush1.bf16.msra.mxu0 0
          %4130 = vmatprep.mubr.bf16.mxu0 0
          %4131 = vmatmul.mubr.bf16.gmra.mrb[0].mxu0 %v4097
          %v4132 = vpop.f32.mrb[0].mxu0
          %v4133 = vadd.f32 %v3130, %v4132
          %v4134 = vpop.f32.mrb[0].mxu0
          %v4135 = vadd.f32 %v3134, %v4134
          %v4136 = vpop.f32.mrb[0].mxu0
          %v4137 = vadd.f32 %v3130, %v4136
          %v4138 = vpop.f32.mrb[0].mxu0
          %v4139 = vadd.f32 %v3134, %v4138
          %4140 = vdwg.mxu0
          %4141 = vmatprep.subr.bf16.mxu0 0
          %4142 = vmatpush1.bf16.msra.mxu0 %v3224
          %4143 = vmatprep.subr.bf16.mxu0 0
          %4144 = vmatpush1.bf16.msra.mxu0 %v3227
          %4145 = vmatprep.subr.bf16.mxu0 0
          %4146 = vmatpush1.bf16.msra.mxu0 %v3230
          %4147 = vmatprep.subr.bf16.mxu0 0
          %4148 = vmatpush1.bf16.msra.mxu0 %v3233
          %4149 = vmatprep.subr.bf16.mxu0 0
          %4150 = vmatpush1.bf16.msra.mxu0 %v3236
          %4151 = vmatprep.subr.bf16.mxu0 0
          %4152 = vmatpush1.bf16.msra.mxu0 %v3239
          %4153 = vmatprep.subr.bf16.mxu0 0
          %4154 = vmatpush1.bf16.msra.mxu0 %v3242
          %4155 = vmatprep.subr.bf16.mxu0 0
          %4156 = vmatpush1.bf16.msra.mxu0 %v3245
          %4157 = vmatprep.subr.bf16.mxu0 0
          %4158 = vmatpush1.bf16.msra.mxu0 0
          %4159 = vmatprep.subr.bf16.mxu0 0
          %4160 = vmatpush1.bf16.msra.mxu0 0
          %4161 = vmatprep.subr.bf16.mxu0 0
          %4162 = vmatpush1.bf16.msra.mxu0 0
          %4163 = vmatprep.subr.bf16.mxu0 0
          %4164 = vmatpush1.bf16.msra.mxu0 0
          %4165 = vmatprep.subr.bf16.mxu0 0
          %4166 = vmatpush1.bf16.msra.mxu0 0
          %4167 = vmatprep.subr.bf16.mxu0 0
          %4168 = vmatpush1.bf16.msra.mxu0 0
          %4169 = vmatprep.subr.bf16.mxu0 0
          %4170 = vmatpush1.bf16.msra.mxu0 0
          %4171 = vmatprep.subr.bf16.mxu0 0
          %4172 = vmatpush1.bf16.msra.mxu0 0
          %4173 = vmatprep.mubr.bf16.mxu0 0
          %4174 = vmatmul.mubr.bf16.gmra.mrb[0].mxu0 %v4097
          %v4175 = vpop.f32.mrb[0].mxu0
          %v4176 = vadd.f32 %v3138, %v4175
          %v4177 = vpop.f32.mrb[0].mxu0
          %v4178 = vpop.f32.mrb[0].mxu0
          %v4179 = vadd.f32 %v3138, %v4178
          %v4180 = vpop.f32.mrb[0].mxu0
          %4181 = vdwg.mxu0
          %v4182 = vadd.f32 %v4091, %v4133
          %v4183 = vadd.f32 %v4094, %v4137
          %v4184 = vxor.u32 %v4182, 2147483648
          %v4185 = vxor.u32 %v4183, 2147483648
          %v4186 = vmul.f32 %v4184, 1.442695
          %v4187 = vpow.pop %v4186
          %v4188 = vmul.f32 %v4185, 1.442695
          %v4189 = vpow.pop %v4188
          %v4190 = vadd.f32 %v4187, 1.0
          %v4191 = vadd.f32 %v4189, 1.0
          %v4192 = vrcp.pop %v4190
          %v4193 = vmul.f32 1.0, %v4192
          %v4194 = vrcp.pop %v4191
          %v4195 = vmul.f32 1.0, %v4194
          %v4196 = vadd.f32 %v4092, %v4135
          %v4197 = vadd.f32 %v4095, %v4139
          %v4198 = vxor.u32 %v4196, 2147483648
          %v4199 = vxor.u32 %v4197, 2147483648
          %v4200 = vmul.f32 %v4198, 1.442695
          %v4201 = vpow.pop %v4200
          %v4202 = vmul.f32 %v4199, 1.442695
          %v4203 = vpow.pop %v4202
          %v4204 = vadd.f32 %v4201, 1.0
          %v4205 = vadd.f32 %v4203, 1.0
          %v4206 = vrcp.pop %v4204
          %v4207 = vmul.f32 1.0, %v4206
          %v4208 = vrcp.pop %v4205
          %v4209 = vmul.f32 1.0, %v4208
          %v4210 = vmul.f32 %v4193, %v4176
          %v4211 = vmul.f32 %v4195, %v4179
          %v4212 = vadd.f32 %v4093, %v4210
          %v4213 = vadd.f32 %v4096, %v4211
          %v4214 = vtanh.pop %v4212
          %v4215 = vtanh.pop %v4213
          %v4216 = vsub.f32 1.0, %v4207
          %v4217 = vsub.f32 1.0, %v4209
          %v4218 = vmul.f32 %v4216, %v4214
          %v4219 = vmul.f32 %v4217, %v4215
          %v4220 = vmul.f32 %v4207, %v4084
          %v4221 = vmul.f32 %v4209, %v4085
          %v4222 = vadd.f32 %v4218, %v4220
          %v4223 = vadd.f32 %v4219, %v4221
          %v4224 = vadd.f32 %v4086, %v4222
          %v4225 = vadd.f32 %v4087, %v4223
          %v4226 = vld [vmem:[%s2490] sm:$0xff]
          %v4227 = vld [vmem:[%s2490 + $0x8] sm:$0xff]
          %v4228 = vld [vmem:[%s2490 + $0x10] sm:$0xff]
          %v4229 = vunpack.c.l.bf16 %v4226
          %v4230 = vunpack.c.l.bf16 %v4227
          %v4231 = vunpack.c.l.bf16 %v4228
          %v4232 = vunpack.c.h.bf16 %v4226
          %v4233 = vunpack.c.h.bf16 %v4227
          %v4234 = vunpack.c.h.bf16 %v4228
          %v4235 = vpack.c.bf16 %v4223, %v4222
          %4236 = vmatprep.subr.bf16.mxu0 %v3223
          %4237 = vmatpush1.bf16.msra.mxu0 %v3222
          %4238 = vmatprep.subr.bf16.mxu0 %v3226
          %4239 = vmatpush1.bf16.msra.mxu0 %v3225
          %4240 = vmatprep.subr.bf16.mxu0 %v3229
          %4241 = vmatpush1.bf16.msra.mxu0 %v3228
          %4242 = vmatprep.subr.bf16.mxu0 %v3232
          %4243 = vmatpush1.bf16.msra.mxu0 %v3231
          %4244 = vmatprep.subr.bf16.mxu0 %v3235
          %4245 = vmatpush1.bf16.msra.mxu0 %v3234
          %4246 = vmatprep.subr.bf16.mxu0 %v3238
          %4247 = vmatpush1.bf16.msra.mxu0 %v3237
          %4248 = vmatprep.subr.bf16.mxu0 %v3241
          %4249 = vmatpush1.bf16.msra.mxu0 %v3240
          %4250 = vmatprep.subr.bf16.mxu0 %v3244
          %4251 = vmatpush1.bf16.msra.mxu0 %v3243
          %4252 = vmatprep.subr.bf16.mxu0 0
          %4253 = vmatpush1.bf16.msra.mxu0 0
          %4254 = vmatprep.subr.bf16.mxu0 0
          %4255 = vmatpush1.bf16.msra.mxu0 0
          %4256 = vmatprep.subr.bf16.mxu0 0
          %4257 = vmatpush1.bf16.msra.mxu0 0
          %4258 = vmatprep.subr.bf16.mxu0 0
          %4259 = vmatpush1.bf16.msra.mxu0 0
          %4260 = vmatprep.subr.bf16.mxu0 0
          %4261 = vmatpush1.bf16.msra.mxu0 0
          %4262 = vmatprep.subr.bf16.mxu0 0
          %4263 = vmatpush1.bf16.msra.mxu0 0
          %4264 = vmatprep.subr.bf16.mxu0 0
          %4265 = vmatpush1.bf16.msra.mxu0 0
          %4266 = vmatprep.subr.bf16.mxu0 0
          %4267 = vmatpush1.bf16.msra.mxu0 0
          %4268 = vmatprep.mubr.bf16.mxu0 0
          %4269 = vmatmul.mubr.bf16.gmra.mrb[0].mxu0 %v4235
          %v4270 = vpop.f32.mrb[0].mxu0
          %v4271 = vadd.f32 %v3130, %v4270
          %v4272 = vpop.f32.mrb[0].mxu0
          %v4273 = vadd.f32 %v3134, %v4272
          %v4274 = vpop.f32.mrb[0].mxu0
          %v4275 = vadd.f32 %v3130, %v4274
          %v4276 = vpop.f32.mrb[0].mxu0
          %v4277 = vadd.f32 %v3134, %v4276
          %4278 = vdwg.mxu0
          %4279 = vmatprep.subr.bf16.mxu0 0
          %4280 = vmatpush1.bf16.msra.mxu0 %v3224
          %4281 = vmatprep.subr.bf16.mxu0 0
          %4282 = vmatpush1.bf16.msra.mxu0 %v3227
          %4283 = vmatprep.subr.bf16.mxu0 0
          %4284 = vmatpush1.bf16.msra.mxu0 %v3230
          %4285 = vmatprep.subr.bf16.mxu0 0
          %4286 = vmatpush1.bf16.msra.mxu0 %v3233
          %4287 = vmatprep.subr.bf16.mxu0 0
          %4288 = vmatpush1.bf16.msra.mxu0 %v3236
          %4289 = vmatprep.subr.bf16.mxu0 0
          %4290 = vmatpush1.bf16.msra.mxu0 %v3239
          %4291 = vmatprep.subr.bf16.mxu0 0
          %4292 = vmatpush1.bf16.msra.mxu0 %v3242
          %4293 = vmatprep.subr.bf16.mxu0 0
          %4294 = vmatpush1.bf16.msra.mxu0 %v3245
          %4295 = vmatprep.subr.bf16.mxu0 0
          %4296 = vmatpush1.bf16.msra.mxu0 0
          %4297 = vmatprep.subr.bf16.mxu0 0
          %4298 = vmatpush1.bf16.msra.mxu0 0
          %4299 = vmatprep.subr.bf16.mxu0 0
          %4300 = vmatpush1.bf16.msra.mxu0 0
          %4301 = vmatprep.subr.bf16.mxu0 0
          %4302 = vmatpush1.bf16.msra.mxu0 0
          %4303 = vmatprep.subr.bf16.mxu0 0
          %4304 = vmatpush1.bf16.msra.mxu0 0
          %4305 = vmatprep.subr.bf16.mxu0 0
          %4306 = vmatpush1.bf16.msra.mxu0 0
          %4307 = vmatprep.subr.bf16.mxu0 0
          %4308 = vmatpush1.bf16.msra.mxu0 0
          %4309 = vmatprep.subr.bf16.mxu0 0
          %4310 = vmatpush1.bf16.msra.mxu0 0
          %4311 = vmatprep.mubr.bf16.mxu0 0
          %4312 = vmatmul.mubr.bf16.gmra.mrb[0].mxu0 %v4235
          %v4313 = vpop.f32.mrb[0].mxu0
          %v4314 = vadd.f32 %v3138, %v4313
          %v4315 = vpop.f32.mrb[0].mxu0
          %v4316 = vpop.f32.mrb[0].mxu0
          %v4317 = vadd.f32 %v3138, %v4316
          %v4318 = vpop.f32.mrb[0].mxu0
          %4319 = vdwg.mxu0
          %v4320 = vadd.f32 %v4229, %v4271
          %v4321 = vadd.f32 %v4232, %v4275
          %v4322 = vxor.u32 %v4320, 2147483648
          %v4323 = vxor.u32 %v4321, 2147483648
          %v4324 = vmul.f32 %v4322, 1.442695
          %v4325 = vpow.pop %v4324
          %v4326 = vmul.f32 %v4323, 1.442695
          %v4327 = vpow.pop %v4326
          %v4328 = vadd.f32 %v4325, 1.0
          %v4329 = vadd.f32 %v4327, 1.0
          %v4330 = vrcp.pop %v4328
          %v4331 = vmul.f32 1.0, %v4330
          %v4332 = vrcp.pop %v4329
          %v4333 = vmul.f32 1.0, %v4332
          %v4334 = vadd.f32 %v4230, %v4273
          %v4335 = vadd.f32 %v4233, %v4277
          %v4336 = vxor.u32 %v4334, 2147483648
          %v4337 = vxor.u32 %v4335, 2147483648
          %v4338 = vmul.f32 %v4336, 1.442695
          %v4339 = vpow.pop %v4338
          %v4340 = vmul.f32 %v4337, 1.442695
          %v4341 = vpow.pop %v4340
          %v4342 = vadd.f32 %v4339, 1.0
          %v4343 = vadd.f32 %v4341, 1.0
          %v4344 = vrcp.pop %v4342
          %v4345 = vmul.f32 1.0, %v4344
          %v4346 = vrcp.pop %v4343
          %v4347 = vmul.f32 1.0, %v4346
          %v4348 = vmul.f32 %v4331, %v4314
          %v4349 = vmul.f32 %v4333, %v4317
          %v4350 = vadd.f32 %v4231, %v4348
          %v4351 = vadd.f32 %v4234, %v4349
          %v4352 = vtanh.pop %v4350
          %v4353 = vtanh.pop %v4351
          %v4354 = vsub.f32 1.0, %v4345
          %v4355 = vsub.f32 1.0, %v4347
          %v4356 = vmul.f32 %v4354, %v4352
          %v4357 = vmul.f32 %v4355, %v4353
          %v4358 = vmul.f32 %v4345, %v4222
          %v4359 = vmul.f32 %v4347, %v4223
          %v4360 = vadd.f32 %v4356, %v4358
          %v4361 = vadd.f32 %v4357, %v4359
          %v4362 = vadd.f32 %v4224, %v4360
          %v4363 = vadd.f32 %v4225, %v4361
          %4364 = vst [vmem:[#allocation3] sm:$0xff] %v4360
          %4365 = vst [vmem:[#allocation3 + $0x8] sm:$0xff] %v4361
          %4366 = vst [vmem:[#allocation4] sm:$0xff] %v4362
          %4367 = vst [vmem:[#allocation4 + $0x8] sm:$0xff] %v4363
        $region108: #{tpu_custom_call.1} parent=79 // pred_fallthru
          _
        %p4368 = scmp.eq.s32.totalorder %s36, 2
        // Predicated region
        $region109: #{tpu_custom_call.1} parent=79 // pred_check
          %p4369 = pneg %p4368
        $region110: #{tpu_custom_call.1} parent=79 // pred_check_branch
          %4371 = sbr.rel (%p4369) target = $region112
        $region111: #{tpu_custom_call.1} parent=79 // pred_region
          %v4372 = vld [vmem:[#allocation3] sm:$0xff]
          %v4373 = vld [vmem:[#allocation3 + $0x8] sm:$0xff]
          %v4374 = vld [vmem:[#allocation4] sm:$0xff]
          %v4375 = vld [vmem:[#allocation4 + $0x8] sm:$0xff]
          %v4376 = vld [vmem:[%s1359] sm:$0xff]
          %v4377 = vld [vmem:[%s1359 + $0x8] sm:$0xff]
          %v4378 = vld [vmem:[%s1359 + $0x10] sm:$0xff]
          %v4379 = vunpack.c.l.bf16 %v4376
          %v4380 = vunpack.c.l.bf16 %v4377
          %v4381 = vunpack.c.l.bf16 %v4378
          %v4382 = vunpack.c.h.bf16 %v4376
          %v4383 = vunpack.c.h.bf16 %v4377
          %v4384 = vunpack.c.h.bf16 %v4378
          %v4385 = vpack.c.bf16 %v4373, %v4372
          %v4387 = vlaneseq
          %v4388 = vshrl.u32 %v4387, 7
          %v4389 = vsub.s32 0, %v4388
          %v4390 = vrot.slane %v3106, %v4389
          %v4391 = vlaneseq
          %v4392 = vshrl.u32 %v4391, 7
          %v4393 = vsub.s32 1, %v4392
          %v4394 = vrot.slane %v3106, %v4393
          %v4395 = vlaneseq
          %v4396 = vshrl.u32 %v4395, 7
          %v4397 = vsub.s32 2, %v4396
          %v4398 = vrot.slane %v3106, %v4397
          %v4434 = vunpack.c.l.b16 %v3074
          %v4435 = vunpack.c.h.b16 %v3074
          %v4436 = vunpack.c.l.b16 %v3075
          %v4437 = vunpack.c.l.b16 %v3076
          %v4438 = vunpack.c.h.b16 %v3076
          %v4439 = vunpack.c.l.b16 %v3077
          %v4440 = vunpack.c.l.b16 %v3078
          %v4441 = vunpack.c.h.b16 %v3078
          %v4442 = vunpack.c.l.b16 %v3079
          %v4443 = vunpack.c.l.b16 %v3080
          %v4444 = vunpack.c.h.b16 %v3080
          %v4445 = vunpack.c.l.b16 %v3081
          %v4446 = vunpack.c.l.b16 %v3082
          %v4447 = vunpack.c.h.b16 %v3082
          %v4448 = vunpack.c.l.b16 %v3083
          %v4449 = vunpack.c.l.b16 %v3084
          %v4450 = vunpack.c.h.b16 %v3084
          %v4451 = vunpack.c.l.b16 %v3085
          %v4452 = vunpack.c.l.b16 %v3086
          %v4453 = vunpack.c.h.b16 %v3086
          %v4454 = vunpack.c.l.b16 %v3087
          %v4455 = vunpack.c.l.b16 %v3088
          %v4456 = vunpack.c.h.b16 %v3088
          %v4457 = vunpack.c.l.b16 %v3089
          %v4458 = vunpack.c.l.b16 %v3090
          %v4459 = vunpack.c.h.b16 %v3090
          %v4460 = vunpack.c.l.b16 %v3091
          %v4461 = vunpack.c.l.b16 %v3092
          %v4462 = vunpack.c.h.b16 %v3092
          %v4463 = vunpack.c.l.b16 %v3093
          %v4464 = vunpack.c.l.b16 %v3094
          %v4465 = vunpack.c.h.b16 %v3094
          %v4466 = vunpack.c.l.b16 %v3095
          %v4467 = vunpack.c.l.b16 %v3096
          %v4468 = vunpack.c.h.b16 %v3096
          %v4469 = vunpack.c.l.b16 %v3097
          %v4470 = vunpack.c.l.b16 %v3098
          %v4471 = vunpack.c.h.b16 %v3098
          %v4472 = vunpack.c.l.b16 %v3099
          %v4473 = vunpack.c.l.b16 %v3100
          %v4474 = vunpack.c.h.b16 %v3100
          %v4475 = vunpack.c.l.b16 %v3101
          %v4476 = vunpack.c.l.b16 %v3102
          %v4477 = vunpack.c.h.b16 %v3102
          %v4478 = vunpack.c.l.b16 %v3103
          %v4479 = vunpack.c.l.b16 %v3104
          %v4480 = vunpack.c.h.b16 %v3104
          %v4481 = vunpack.c.l.b16 %v3105
          %v4482 = vpack.c.b16 %v4437, %v4434
          %v4483 = vpack.c.b16 %v4438, %v4435
          %v4484 = vpack.c.b16 %v4439, %v4436
          %v4485 = vpack.c.b16 %v4443, %v4440
          %v4486 = vpack.c.b16 %v4444, %v4441
          %v4487 = vpack.c.b16 %v4445, %v4442
          %v4488 = vpack.c.b16 %v4449, %v4446
          %v4489 = vpack.c.b16 %v4450, %v4447
          %v4490 = vpack.c.b16 %v4451, %v4448
          %v4491 = vpack.c.b16 %v4455, %v4452
          %v4492 = vpack.c.b16 %v4456, %v4453
          %v4493 = vpack.c.b16 %v4457, %v4454
          %v4494 = vpack.c.b16 %v4461, %v4458
          %v4495 = vpack.c.b16 %v4462, %v4459
          %v4496 = vpack.c.b16 %v4463, %v4460
          %v4497 = vpack.c.b16 %v4467, %v4464
          %v4498 = vpack.c.b16 %v4468, %v4465
          %v4499 = vpack.c.b16 %v4469, %v4466
          %v4500 = vpack.c.b16 %v4473, %v4470
          %v4501 = vpack.c.b16 %v4474, %v4471
          %v4502 = vpack.c.b16 %v4475, %v4472
          %v4503 = vpack.c.b16 %v4479, %v4476
          %v4504 = vpack.c.b16 %v4480, %v4477
          %v4505 = vpack.c.b16 %v4481, %v4478
          %4530 = vmatprep.subr.bf16.mxu0 %v4483
          %4531 = vmatpush1.bf16.msra.mxu0 %v4482
          %4532 = vmatprep.subr.bf16.mxu0 %v4486
          %4533 = vmatpush1.bf16.msra.mxu0 %v4485
          %4534 = vmatprep.subr.bf16.mxu0 %v4489
          %4535 = vmatpush1.bf16.msra.mxu0 %v4488
          %4536 = vmatprep.subr.bf16.mxu0 %v4492
          %4537 = vmatpush1.bf16.msra.mxu0 %v4491
          %4538 = vmatprep.subr.bf16.mxu0 %v4495
          %4539 = vmatpush1.bf16.msra.mxu0 %v4494
          %4540 = vmatprep.subr.bf16.mxu0 %v4498
          %4541 = vmatpush1.bf16.msra.mxu0 %v4497
          %4542 = vmatprep.subr.bf16.mxu0 %v4501
          %4543 = vmatpush1.bf16.msra.mxu0 %v4500
          %4544 = vmatprep.subr.bf16.mxu0 %v4504
          %4545 = vmatpush1.bf16.msra.mxu0 %v4503
          %4546 = vmatprep.subr.bf16.mxu0 0
          %4547 = vmatpush1.bf16.msra.mxu0 0
          %4548 = vmatprep.subr.bf16.mxu0 0
          %4549 = vmatpush1.bf16.msra.mxu0 0
          %4550 = vmatprep.subr.bf16.mxu0 0
          %4551 = vmatpush1.bf16.msra.mxu0 0
          %4552 = vmatprep.subr.bf16.mxu0 0
          %4553 = vmatpush1.bf16.msra.mxu0 0
          %4554 = vmatprep.subr.bf16.mxu0 0
          %4555 = vmatpush1.bf16.msra.mxu0 0
          %4556 = vmatprep.subr.bf16.mxu0 0
          %4557 = vmatpush1.bf16.msra.mxu0 0
          %4558 = vmatprep.subr.bf16.mxu0 0
          %4559 = vmatpush1.bf16.msra.mxu0 0
          %4560 = vmatprep.subr.bf16.mxu0 0
          %4561 = vmatpush1.bf16.msra.mxu0 0
          %4562 = vmatprep.mubr.bf16.mxu0 0
          %4563 = vmatmul.mubr.bf16.gmra.mrb[0].mxu0 %v4385
          %v4564 = vpop.f32.mrb[0].mxu0
          %v4565 = vadd.f32 %v4390, %v4564
          %v4566 = vpop.f32.mrb[0].mxu0
          %v4567 = vadd.f32 %v4394, %v4566
          %v4568 = vpop.f32.mrb[0].mxu0
          %v4569 = vadd.f32 %v4390, %v4568
          %v4570 = vpop.f32.mrb[0].mxu0
          %v4571 = vadd.f32 %v4394, %v4570
          %4572 = vdwg.mxu0
          %4573 = vmatprep.subr.bf16.mxu0 0
          %4574 = vmatpush1.bf16.msra.mxu0 %v4484
          %4575 = vmatprep.subr.bf16.mxu0 0
          %4576 = vmatpush1.bf16.msra.mxu0 %v4487
          %4577 = vmatprep.subr.bf16.mxu0 0
          %4578 = vmatpush1.bf16.msra.mxu0 %v4490
          %4579 = vmatprep.subr.bf16.mxu0 0
          %4580 = vmatpush1.bf16.msra.mxu0 %v4493
          %4581 = vmatprep.subr.bf16.mxu0 0
          %4582 = vmatpush1.bf16.msra.mxu0 %v4496
          %4583 = vmatprep.subr.bf16.mxu0 0
          %4584 = vmatpush1.bf16.msra.mxu0 %v4499
          %4585 = vmatprep.subr.bf16.mxu0 0
          %4586 = vmatpush1.bf16.msra.mxu0 %v4502
          %4587 = vmatprep.subr.bf16.mxu0 0
          %4588 = vmatpush1.bf16.msra.mxu0 %v4505
          %4589 = vmatprep.subr.bf16.mxu0 0
          %4590 = vmatpush1.bf16.msra.mxu0 0
          %4591 = vmatprep.subr.bf16.mxu0 0
          %4592 = vmatpush1.bf16.msra.mxu0 0
          %4593 = vmatprep.subr.bf16.mxu0 0
          %4594 = vmatpush1.bf16.msra.mxu0 0
          %4595 = vmatprep.subr.bf16.mxu0 0
          %4596 = vmatpush1.bf16.msra.mxu0 0
          %4597 = vmatprep.subr.bf16.mxu0 0
          %4598 = vmatpush1.bf16.msra.mxu0 0
          %4599 = vmatprep.subr.bf16.mxu0 0
          %4600 = vmatpush1.bf16.msra.mxu0 0
          %4601 = vmatprep.subr.bf16.mxu0 0
          %4602 = vmatpush1.bf16.msra.mxu0 0
          %4603 = vmatprep.subr.bf16.mxu0 0
          %4604 = vmatpush1.bf16.msra.mxu0 0
          %4605 = vmatprep.mubr.bf16.mxu0 0
          %4606 = vmatmul.mubr.bf16.gmra.mrb[0].mxu0 %v4385
          %v4607 = vpop.f32.mrb[0].mxu0
          %v4608 = vadd.f32 %v4398, %v4607
          %v4609 = vpop.f32.mrb[0].mxu0
          %v4610 = vpop.f32.mrb[0].mxu0
          %v4611 = vadd.f32 %v4398, %v4610
          %v4612 = vpop.f32.mrb[0].mxu0
          %4613 = vdwg.mxu0
          %v4614 = vadd.f32 %v4379, %v4565
          %v4615 = vadd.f32 %v4382, %v4569
          %v4616 = vxor.u32 %v4614, 2147483648
          %v4617 = vxor.u32 %v4615, 2147483648
          %v4618 = vmul.f32 %v4616, 1.442695
          %v4619 = vpow.pop %v4618
          %v4620 = vmul.f32 %v4617, 1.442695
          %v4621 = vpow.pop %v4620
          %v4622 = vadd.f32 %v4619, 1.0
          %v4623 = vadd.f32 %v4621, 1.0
          %v4624 = vrcp.pop %v4622
          %v4625 = vmul.f32 1.0, %v4624
          %v4626 = vrcp.pop %v4623
          %v4627 = vmul.f32 1.0, %v4626
          %v4628 = vadd.f32 %v4380, %v4567
          %v4629 = vadd.f32 %v4383, %v4571
          %v4630 = vxor.u32 %v4628, 2147483648
          %v4631 = vxor.u32 %v4629, 2147483648
          %v4632 = vmul.f32 %v4630, 1.442695
          %v4633 = vpow.pop %v4632
          %v4634 = vmul.f32 %v4631, 1.442695
          %v4635 = vpow.pop %v4634
          %v4636 = vadd.f32 %v4633, 1.0
          %v4637 = vadd.f32 %v4635, 1.0
          %v4638 = vrcp.pop %v4636
          %v4639 = vmul.f32 1.0, %v4638
          %v4640 = vrcp.pop %v4637
          %v4641 = vmul.f32 1.0, %v4640
          %v4642 = vmul.f32 %v4625, %v4608
          %v4643 = vmul.f32 %v4627, %v4611
          %v4644 = vadd.f32 %v4381, %v4642
          %v4645 = vadd.f32 %v4384, %v4643
          %v4646 = vtanh.pop %v4644
          %v4647 = vtanh.pop %v4645
          %v4648 = vsub.f32 1.0, %v4639
          %v4649 = vsub.f32 1.0, %v4641
          %v4650 = vmul.f32 %v4648, %v4646
          %v4651 = vmul.f32 %v4649, %v4647
          %v4652 = vmul.f32 %v4639, %v4372
          %v4653 = vmul.f32 %v4641, %v4373
          %v4654 = vadd.f32 %v4650, %v4652
          %v4655 = vadd.f32 %v4651, %v4653
          %p4656 = scmp.lt.s32.totalorder %s3107, 20
          %s4657 = scalar_select %p4656, 1, 0
          %s4658 = scvt.s32.f32 %s4657
          %v4659 = vstv %s4658
          %v4660 = vmul.f32 %v4654, %v4659
          %v4661 = vmul.f32 %v4655, %v4659
          %v4662 = vadd.f32 %v4374, %v4660
          %v4663 = vadd.f32 %v4375, %v4661
          %v4664 = vld [vmem:[%s1644] sm:$0xff]
          %v4665 = vld [vmem:[%s1644 + $0x8] sm:$0xff]
          %v4666 = vld [vmem:[%s1644 + $0x10] sm:$0xff]
          %v4667 = vunpack.c.l.bf16 %v4664
          %v4668 = vunpack.c.l.bf16 %v4665
          %v4669 = vunpack.c.l.bf16 %v4666
          %v4670 = vunpack.c.h.bf16 %v4664
          %v4671 = vunpack.c.h.bf16 %v4665
          %v4672 = vunpack.c.h.bf16 %v4666
          %v4673 = vpack.c.bf16 %v4655, %v4654
          %4674 = vmatprep.subr.bf16.mxu0 %v4483
          %4675 = vmatpush1.bf16.msra.mxu0 %v4482
          %4676 = vmatprep.subr.bf16.mxu0 %v4486
          %4677 = vmatpush1.bf16.msra.mxu0 %v4485
          %4678 = vmatprep.subr.bf16.mxu0 %v4489
          %4679 = vmatpush1.bf16.msra.mxu0 %v4488
          %4680 = vmatprep.subr.bf16.mxu0 %v4492
          %4681 = vmatpush1.bf16.msra.mxu0 %v4491
          %4682 = vmatprep.subr.bf16.mxu0 %v4495
          %4683 = vmatpush1.bf16.msra.mxu0 %v4494
          %4684 = vmatprep.subr.bf16.mxu0 %v4498
          %4685 = vmatpush1.bf16.msra.mxu0 %v4497
          %4686 = vmatprep.subr.bf16.mxu0 %v4501
          %4687 = vmatpush1.bf16.msra.mxu0 %v4500
          %4688 = vmatprep.subr.bf16.mxu0 %v4504
          %4689 = vmatpush1.bf16.msra.mxu0 %v4503
          %4690 = vmatprep.subr.bf16.mxu0 0
          %4691 = vmatpush1.bf16.msra.mxu0 0
          %4692 = vmatprep.subr.bf16.mxu0 0
          %4693 = vmatpush1.bf16.msra.mxu0 0
          %4694 = vmatprep.subr.bf16.mxu0 0
          %4695 = vmatpush1.bf16.msra.mxu0 0
          %4696 = vmatprep.subr.bf16.mxu0 0
          %4697 = vmatpush1.bf16.msra.mxu0 0
          %4698 = vmatprep.subr.bf16.mxu0 0
          %4699 = vmatpush1.bf16.msra.mxu0 0
          %4700 = vmatprep.subr.bf16.mxu0 0
          %4701 = vmatpush1.bf16.msra.mxu0 0
          %4702 = vmatprep.subr.bf16.mxu0 0
          %4703 = vmatpush1.bf16.msra.mxu0 0
          %4704 = vmatprep.subr.bf16.mxu0 0
          %4705 = vmatpush1.bf16.msra.mxu0 0
          %4706 = vmatprep.mubr.bf16.mxu0 0
          %4707 = vmatmul.mubr.bf16.gmra.mrb[0].mxu0 %v4673
          %v4708 = vpop.f32.mrb[0].mxu0
          %v4709 = vadd.f32 %v4390, %v4708
          %v4710 = vpop.f32.mrb[0].mxu0
          %v4711 = vadd.f32 %v4394, %v4710
          %v4712 = vpop.f32.mrb[0].mxu0
          %v4713 = vadd.f32 %v4390, %v4712
          %v4714 = vpop.f32.mrb[0].mxu0
          %v4715 = vadd.f32 %v4394, %v4714
          %4716 = vdwg.mxu0
          %4717 = vmatprep.subr.bf16.mxu0 0
          %4718 = vmatpush1.bf16.msra.mxu0 %v4484
          %4719 = vmatprep.subr.bf16.mxu0 0
          %4720 = vmatpush1.bf16.msra.mxu0 %v4487
          %4721 = vmatprep.subr.bf16.mxu0 0
          %4722 = vmatpush1.bf16.msra.mxu0 %v4490
          %4723 = vmatprep.subr.bf16.mxu0 0
          %4724 = vmatpush1.bf16.msra.mxu0 %v4493
          %4725 = vmatprep.subr.bf16.mxu0 0
          %4726 = vmatpush1.bf16.msra.mxu0 %v4496
          %4727 = vmatprep.subr.bf16.mxu0 0
          %4728 = vmatpush1.bf16.msra.mxu0 %v4499
          %4729 = vmatprep.subr.bf16.mxu0 0
          %4730 = vmatpush1.bf16.msra.mxu0 %v4502
          %4731 = vmatprep.subr.bf16.mxu0 0
          %4732 = vmatpush1.bf16.msra.mxu0 %v4505
          %4733 = vmatprep.subr.bf16.mxu0 0
          %4734 = vmatpush1.bf16.msra.mxu0 0
          %4735 = vmatprep.subr.bf16.mxu0 0
          %4736 = vmatpush1.bf16.msra.mxu0 0
          %4737 = vmatprep.subr.bf16.mxu0 0
          %4738 = vmatpush1.bf16.msra.mxu0 0
          %4739 = vmatprep.subr.bf16.mxu0 0
          %4740 = vmatpush1.bf16.msra.mxu0 0
          %4741 = vmatprep.subr.bf16.mxu0 0
          %4742 = vmatpush1.bf16.msra.mxu0 0
          %4743 = vmatprep.subr.bf16.mxu0 0
          %4744 = vmatpush1.bf16.msra.mxu0 0
          %4745 = vmatprep.subr.bf16.mxu0 0
          %4746 = vmatpush1.bf16.msra.mxu0 0
          %4747 = vmatprep.subr.bf16.mxu0 0
          %4748 = vmatpush1.bf16.msra.mxu0 0
          %4749 = vmatprep.mubr.bf16.mxu0 0
          %4750 = vmatmul.mubr.bf16.gmra.mrb[0].mxu0 %v4673
          %v4751 = vpop.f32.mrb[0].mxu0
          %v4752 = vadd.f32 %v4398, %v4751
          %v4753 = vpop.f32.mrb[0].mxu0
          %v4754 = vpop.f32.mrb[0].mxu0
          %v4755 = vadd.f32 %v4398, %v4754
          %v4756 = vpop.f32.mrb[0].mxu0
          %4757 = vdwg.mxu0
          %v4758 = vadd.f32 %v4667, %v4709
          %v4759 = vadd.f32 %v4670, %v4713
          %v4760 = vxor.u32 %v4758, 2147483648
          %v4761 = vxor.u32 %v4759, 2147483648
          %v4762 = vmul.f32 %v4760, 1.442695
          %v4763 = vpow.pop %v4762
          %v4764 = vmul.f32 %v4761, 1.442695
          %v4765 = vpow.pop %v4764
          %v4766 = vadd.f32 %v4763, 1.0
          %v4767 = vadd.f32 %v4765, 1.0
          %v4768 = vrcp.pop %v4766
          %v4769 = vmul.f32 1.0, %v4768
          %v4770 = vrcp.pop %v4767
          %v4771 = vmul.f32 1.0, %v4770
          %v4772 = vadd.f32 %v4668, %v4711
          %v4773 = vadd.f32 %v4671, %v4715
          %v4774 = vxor.u32 %v4772, 2147483648
          %v4775 = vxor.u32 %v4773, 2147483648
          %v4776 = vmul.f32 %v4774, 1.442695
          %v4777 = vpow.pop %v4776
          %v4778 = vmul.f32 %v4775, 1.442695
          %v4779 = vpow.pop %v4778
          %v4780 = vadd.f32 %v4777, 1.0
          %v4781 = vadd.f32 %v4779, 1.0
          %v4782 = vrcp.pop %v4780
          %v4783 = vmul.f32 1.0, %v4782
          %v4784 = vrcp.pop %v4781
          %v4785 = vmul.f32 1.0, %v4784
          %v4786 = vmul.f32 %v4769, %v4752
          %v4787 = vmul.f32 %v4771, %v4755
          %v4788 = vadd.f32 %v4669, %v4786
          %v4789 = vadd.f32 %v4672, %v4787
          %v4790 = vtanh.pop %v4788
          %v4791 = vtanh.pop %v4789
          %v4792 = vsub.f32 1.0, %v4783
          %v4793 = vsub.f32 1.0, %v4785
          %v4794 = vmul.f32 %v4792, %v4790
          %v4795 = vmul.f32 %v4793, %v4791
          %v4796 = vmul.f32 %v4783, %v4654
          %v4797 = vmul.f32 %v4785, %v4655
          %v4798 = vadd.f32 %v4794, %v4796
          %v4799 = vadd.f32 %v4795, %v4797
          %s4800 = sadd.s32 %s3107, 1
          %p4801 = scmp.lt.s32.totalorder %s4800, 20
          %s4802 = scalar_select %p4801, 1, 0
          %s4803 = scvt.s32.f32 %s4802
          %v4804 = vstv %s4803
          %v4805 = vmul.f32 %v4798, %v4804
          %v4806 = vmul.f32 %v4799, %v4804
          %v4807 = vadd.f32 %v4662, %v4805
          %v4808 = vadd.f32 %v4663, %v4806
          %v4809 = vld [vmem:[%s1785] sm:$0xff]
          %v4810 = vld [vmem:[%s1785 + $0x8] sm:$0xff]
          %v4811 = vld [vmem:[%s1785 + $0x10] sm:$0xff]
          %v4812 = vunpack.c.l.bf16 %v4809
          %v4813 = vunpack.c.l.bf16 %v4810
          %v4814 = vunpack.c.l.bf16 %v4811
          %v4815 = vunpack.c.h.bf16 %v4809
          %v4816 = vunpack.c.h.bf16 %v4810
          %v4817 = vunpack.c.h.bf16 %v4811
          %v4818 = vpack.c.bf16 %v4799, %v4798
          %4819 = vmatprep.subr.bf16.mxu0 %v4483
          %4820 = vmatpush1.bf16.msra.mxu0 %v4482
          %4821 = vmatprep.subr.bf16.mxu0 %v4486
          %4822 = vmatpush1.bf16.msra.mxu0 %v4485
          %4823 = vmatprep.subr.bf16.mxu0 %v4489
          %4824 = vmatpush1.bf16.msra.mxu0 %v4488
          %4825 = vmatprep.subr.bf16.mxu0 %v4492
          %4826 = vmatpush1.bf16.msra.mxu0 %v4491
          %4827 = vmatprep.subr.bf16.mxu0 %v4495
          %4828 = vmatpush1.bf16.msra.mxu0 %v4494
          %4829 = vmatprep.subr.bf16.mxu0 %v4498
          %4830 = vmatpush1.bf16.msra.mxu0 %v4497
          %4831 = vmatprep.subr.bf16.mxu0 %v4501
          %4832 = vmatpush1.bf16.msra.mxu0 %v4500
          %4833 = vmatprep.subr.bf16.mxu0 %v4504
          %4834 = vmatpush1.bf16.msra.mxu0 %v4503
          %4835 = vmatprep.subr.bf16.mxu0 0
          %4836 = vmatpush1.bf16.msra.mxu0 0
          %4837 = vmatprep.subr.bf16.mxu0 0
          %4838 = vmatpush1.bf16.msra.mxu0 0
          %4839 = vmatprep.subr.bf16.mxu0 0
          %4840 = vmatpush1.bf16.msra.mxu0 0
          %4841 = vmatprep.subr.bf16.mxu0 0
          %4842 = vmatpush1.bf16.msra.mxu0 0
          %4843 = vmatprep.subr.bf16.mxu0 0
          %4844 = vmatpush1.bf16.msra.mxu0 0
          %4845 = vmatprep.subr.bf16.mxu0 0
          %4846 = vmatpush1.bf16.msra.mxu0 0
          %4847 = vmatprep.subr.bf16.mxu0 0
          %4848 = vmatpush1.bf16.msra.mxu0 0
          %4849 = vmatprep.subr.bf16.mxu0 0
          %4850 = vmatpush1.bf16.msra.mxu0 0
          %4851 = vmatprep.mubr.bf16.mxu0 0
          %4852 = vmatmul.mubr.bf16.gmra.mrb[0].mxu0 %v4818
          %v4853 = vpop.f32.mrb[0].mxu0
          %v4854 = vadd.f32 %v4390, %v4853
          %v4855 = vpop.f32.mrb[0].mxu0
          %v4856 = vadd.f32 %v4394, %v4855
          %v4857 = vpop.f32.mrb[0].mxu0
          %v4858 = vadd.f32 %v4390, %v4857
          %v4859 = vpop.f32.mrb[0].mxu0
          %v4860 = vadd.f32 %v4394, %v4859
          %4861 = vdwg.mxu0
          %4862 = vmatprep.subr.bf16.mxu0 0
          %4863 = vmatpush1.bf16.msra.mxu0 %v4484
          %4864 = vmatprep.subr.bf16.mxu0 0
          %4865 = vmatpush1.bf16.msra.mxu0 %v4487
          %4866 = vmatprep.subr.bf16.mxu0 0
          %4867 = vmatpush1.bf16.msra.mxu0 %v4490
          %4868 = vmatprep.subr.bf16.mxu0 0
          %4869 = vmatpush1.bf16.msra.mxu0 %v4493
          %4870 = vmatprep.subr.bf16.mxu0 0
          %4871 = vmatpush1.bf16.msra.mxu0 %v4496
          %4872 = vmatprep.subr.bf16.mxu0 0
          %4873 = vmatpush1.bf16.msra.mxu0 %v4499
          %4874 = vmatprep.subr.bf16.mxu0 0
          %4875 = vmatpush1.bf16.msra.mxu0 %v4502
          %4876 = vmatprep.subr.bf16.mxu0 0
          %4877 = vmatpush1.bf16.msra.mxu0 %v4505
          %4878 = vmatprep.subr.bf16.mxu0 0
          %4879 = vmatpush1.bf16.msra.mxu0 0
          %4880 = vmatprep.subr.bf16.mxu0 0
          %4881 = vmatpush1.bf16.msra.mxu0 0
          %4882 = vmatprep.subr.bf16.mxu0 0
          %4883 = vmatpush1.bf16.msra.mxu0 0
          %4884 = vmatprep.subr.bf16.mxu0 0
          %4885 = vmatpush1.bf16.msra.mxu0 0
          %4886 = vmatprep.subr.bf16.mxu0 0
          %4887 = vmatpush1.bf16.msra.mxu0 0
          %4888 = vmatprep.subr.bf16.mxu0 0
          %4889 = vmatpush1.bf16.msra.mxu0 0
          %4890 = vmatprep.subr.bf16.mxu0 0
          %4891 = vmatpush1.bf16.msra.mxu0 0
          %4892 = vmatprep.subr.bf16.mxu0 0
          %4893 = vmatpush1.bf16.msra.mxu0 0
          %4894 = vmatprep.mubr.bf16.mxu0 0
          %4895 = vmatmul.mubr.bf16.gmra.mrb[0].mxu0 %v4818
          %v4896 = vpop.f32.mrb[0].mxu0
          %v4897 = vadd.f32 %v4398, %v4896
          %v4898 = vpop.f32.mrb[0].mxu0
          %v4899 = vpop.f32.mrb[0].mxu0
          %v4900 = vadd.f32 %v4398, %v4899
          %v4901 = vpop.f32.mrb[0].mxu0
          %4902 = vdwg.mxu0
          %v4903 = vadd.f32 %v4812, %v4854
          %v4904 = vadd.f32 %v4815, %v4858
          %v4905 = vxor.u32 %v4903, 2147483648
          %v4906 = vxor.u32 %v4904, 2147483648
          %v4907 = vmul.f32 %v4905, 1.442695
          %v4908 = vpow.pop %v4907
          %v4909 = vmul.f32 %v4906, 1.442695
          %v4910 = vpow.pop %v4909
          %v4911 = vadd.f32 %v4908, 1.0
          %v4912 = vadd.f32 %v4910, 1.0
          %v4913 = vrcp.pop %v4911
          %v4914 = vmul.f32 1.0, %v4913
          %v4915 = vrcp.pop %v4912
          %v4916 = vmul.f32 1.0, %v4915
          %v4917 = vadd.f32 %v4813, %v4856
          %v4918 = vadd.f32 %v4816, %v4860
          %v4919 = vxor.u32 %v4917, 2147483648
          %v4920 = vxor.u32 %v4918, 2147483648
          %v4921 = vmul.f32 %v4919, 1.442695
          %v4922 = vpow.pop %v4921
          %v4923 = vmul.f32 %v4920, 1.442695
          %v4924 = vpow.pop %v4923
          %v4925 = vadd.f32 %v4922, 1.0
          %v4926 = vadd.f32 %v4924, 1.0
          %v4927 = vrcp.pop %v4925
          %v4928 = vmul.f32 1.0, %v4927
          %v4929 = vrcp.pop %v4926
          %v4930 = vmul.f32 1.0, %v4929
          %v4931 = vmul.f32 %v4914, %v4897
          %v4932 = vmul.f32 %v4916, %v4900
          %v4933 = vadd.f32 %v4814, %v4931
          %v4934 = vadd.f32 %v4817, %v4932
          %v4935 = vtanh.pop %v4933
          %v4936 = vtanh.pop %v4934
          %v4937 = vsub.f32 1.0, %v4928
          %v4938 = vsub.f32 1.0, %v4930
          %v4939 = vmul.f32 %v4937, %v4935
          %v4940 = vmul.f32 %v4938, %v4936
          %v4941 = vmul.f32 %v4928, %v4798
          %v4942 = vmul.f32 %v4930, %v4799
          %v4943 = vadd.f32 %v4939, %v4941
          %v4944 = vadd.f32 %v4940, %v4942
          %s4945 = sadd.s32 %s3107, 2
          %p4946 = scmp.lt.s32.totalorder %s4945, 20
          %s4947 = scalar_select %p4946, 1, 0
          %s4948 = scvt.s32.f32 %s4947
          %v4949 = vstv %s4948
          %v4950 = vmul.f32 %v4943, %v4949
          %v4951 = vmul.f32 %v4944, %v4949
          %v4952 = vadd.f32 %v4807, %v4950
          %v4953 = vadd.f32 %v4808, %v4951
          %v4954 = vld [vmem:[%s1926] sm:$0xff]
          %v4955 = vld [vmem:[%s1926 + $0x8] sm:$0xff]
          %v4956 = vld [vmem:[%s1926 + $0x10] sm:$0xff]
          %v4957 = vunpack.c.l.bf16 %v4954
          %v4958 = vunpack.c.l.bf16 %v4955
          %v4959 = vunpack.c.l.bf16 %v4956
          %v4960 = vunpack.c.h.bf16 %v4954
          %v4961 = vunpack.c.h.bf16 %v4955
          %v4962 = vunpack.c.h.bf16 %v4956
          %v4963 = vpack.c.bf16 %v4944, %v4943
          %4964 = vmatprep.subr.bf16.mxu0 %v4483
          %4965 = vmatpush1.bf16.msra.mxu0 %v4482
          %4966 = vmatprep.subr.bf16.mxu0 %v4486
          %4967 = vmatpush1.bf16.msra.mxu0 %v4485
          %4968 = vmatprep.subr.bf16.mxu0 %v4489
          %4969 = vmatpush1.bf16.msra.mxu0 %v4488
          %4970 = vmatprep.subr.bf16.mxu0 %v4492
          %4971 = vmatpush1.bf16.msra.mxu0 %v4491
          %4972 = vmatprep.subr.bf16.mxu0 %v4495
          %4973 = vmatpush1.bf16.msra.mxu0 %v4494
          %4974 = vmatprep.subr.bf16.mxu0 %v4498
          %4975 = vmatpush1.bf16.msra.mxu0 %v4497
          %4976 = vmatprep.subr.bf16.mxu0 %v4501
          %4977 = vmatpush1.bf16.msra.mxu0 %v4500
          %4978 = vmatprep.subr.bf16.mxu0 %v4504
          %4979 = vmatpush1.bf16.msra.mxu0 %v4503
          %4980 = vmatprep.subr.bf16.mxu0 0
          %4981 = vmatpush1.bf16.msra.mxu0 0
          %4982 = vmatprep.subr.bf16.mxu0 0
          %4983 = vmatpush1.bf16.msra.mxu0 0
          %4984 = vmatprep.subr.bf16.mxu0 0
          %4985 = vmatpush1.bf16.msra.mxu0 0
          %4986 = vmatprep.subr.bf16.mxu0 0
          %4987 = vmatpush1.bf16.msra.mxu0 0
          %4988 = vmatprep.subr.bf16.mxu0 0
          %4989 = vmatpush1.bf16.msra.mxu0 0
          %4990 = vmatprep.subr.bf16.mxu0 0
          %4991 = vmatpush1.bf16.msra.mxu0 0
          %4992 = vmatprep.subr.bf16.mxu0 0
          %4993 = vmatpush1.bf16.msra.mxu0 0
          %4994 = vmatprep.subr.bf16.mxu0 0
          %4995 = vmatpush1.bf16.msra.mxu0 0
          %4996 = vmatprep.mubr.bf16.mxu0 0
          %4997 = vmatmul.mubr.bf16.gmra.mrb[0].mxu0 %v4963
          %v4998 = vpop.f32.mrb[0].mxu0
          %v4999 = vadd.f32 %v4390, %v4998
          %v5000 = vpop.f32.mrb[0].mxu0
          %v5001 = vadd.f32 %v4394, %v5000
          %v5002 = vpop.f32.mrb[0].mxu0
          %v5003 = vadd.f32 %v4390, %v5002
          %v5004 = vpop.f32.mrb[0].mxu0
          %v5005 = vadd.f32 %v4394, %v5004
          %5006 = vdwg.mxu0
          %5007 = vmatprep.subr.bf16.mxu0 0
          %5008 = vmatpush1.bf16.msra.mxu0 %v4484
          %5009 = vmatprep.subr.bf16.mxu0 0
          %5010 = vmatpush1.bf16.msra.mxu0 %v4487
          %5011 = vmatprep.subr.bf16.mxu0 0
          %5012 = vmatpush1.bf16.msra.mxu0 %v4490
          %5013 = vmatprep.subr.bf16.mxu0 0
          %5014 = vmatpush1.bf16.msra.mxu0 %v4493
          %5015 = vmatprep.subr.bf16.mxu0 0
          %5016 = vmatpush1.bf16.msra.mxu0 %v4496
          %5017 = vmatprep.subr.bf16.mxu0 0
          %5018 = vmatpush1.bf16.msra.mxu0 %v4499
          %5019 = vmatprep.subr.bf16.mxu0 0
          %5020 = vmatpush1.bf16.msra.mxu0 %v4502
          %5021 = vmatprep.subr.bf16.mxu0 0
          %5022 = vmatpush1.bf16.msra.mxu0 %v4505
          %5023 = vmatprep.subr.bf16.mxu0 0
          %5024 = vmatpush1.bf16.msra.mxu0 0
          %5025 = vmatprep.subr.bf16.mxu0 0
          %5026 = vmatpush1.bf16.msra.mxu0 0
          %5027 = vmatprep.subr.bf16.mxu0 0
          %5028 = vmatpush1.bf16.msra.mxu0 0
          %5029 = vmatprep.subr.bf16.mxu0 0
          %5030 = vmatpush1.bf16.msra.mxu0 0
          %5031 = vmatprep.subr.bf16.mxu0 0
          %5032 = vmatpush1.bf16.msra.mxu0 0
          %5033 = vmatprep.subr.bf16.mxu0 0
          %5034 = vmatpush1.bf16.msra.mxu0 0
          %5035 = vmatprep.subr.bf16.mxu0 0
          %5036 = vmatpush1.bf16.msra.mxu0 0
          %5037 = vmatprep.subr.bf16.mxu0 0
          %5038 = vmatpush1.bf16.msra.mxu0 0
          %5039 = vmatprep.mubr.bf16.mxu0 0
          %5040 = vmatmul.mubr.bf16.gmra.mrb[0].mxu0 %v4963
          %v5041 = vpop.f32.mrb[0].mxu0
          %v5042 = vadd.f32 %v4398, %v5041
          %v5043 = vpop.f32.mrb[0].mxu0
          %v5044 = vpop.f32.mrb[0].mxu0
          %v5045 = vadd.f32 %v4398, %v5044
          %v5046 = vpop.f32.mrb[0].mxu0
          %5047 = vdwg.mxu0
          %v5048 = vadd.f32 %v4957, %v4999
          %v5049 = vadd.f32 %v4960, %v5003
          %v5050 = vxor.u32 %v5048, 2147483648
          %v5051 = vxor.u32 %v5049, 2147483648
          %v5052 = vmul.f32 %v5050, 1.442695
          %v5053 = vpow.pop %v5052
          %v5054 = vmul.f32 %v5051, 1.442695
          %v5055 = vpow.pop %v5054
          %v5056 = vadd.f32 %v5053, 1.0
          %v5057 = vadd.f32 %v5055, 1.0
          %v5058 = vrcp.pop %v5056
          %v5059 = vmul.f32 1.0, %v5058
          %v5060 = vrcp.pop %v5057
          %v5061 = vmul.f32 1.0, %v5060
          %v5062 = vadd.f32 %v4958, %v5001
          %v5063 = vadd.f32 %v4961, %v5005
          %v5064 = vxor.u32 %v5062, 2147483648
          %v5065 = vxor.u32 %v5063, 2147483648
          %v5066 = vmul.f32 %v5064, 1.442695
          %v5067 = vpow.pop %v5066
          %v5068 = vmul.f32 %v5065, 1.442695
          %v5069 = vpow.pop %v5068
          %v5070 = vadd.f32 %v5067, 1.0
          %v5071 = vadd.f32 %v5069, 1.0
          %v5072 = vrcp.pop %v5070
          %v5073 = vmul.f32 1.0, %v5072
          %v5074 = vrcp.pop %v5071
          %v5075 = vmul.f32 1.0, %v5074
          %v5076 = vmul.f32 %v5059, %v5042
          %v5077 = vmul.f32 %v5061, %v5045
          %v5078 = vadd.f32 %v4959, %v5076
          %v5079 = vadd.f32 %v4962, %v5077
          %v5080 = vtanh.pop %v5078
          %v5081 = vtanh.pop %v5079
          %v5082 = vsub.f32 1.0, %v5073
          %v5083 = vsub.f32 1.0, %v5075
          %v5084 = vmul.f32 %v5082, %v5080
          %v5085 = vmul.f32 %v5083, %v5081
          %v5086 = vmul.f32 %v5073, %v4943
          %v5087 = vmul.f32 %v5075, %v4944
          %v5088 = vadd.f32 %v5084, %v5086
          %v5089 = vadd.f32 %v5085, %v5087
          %s5090 = sadd.s32 %s3107, 3
          %p5091 = scmp.lt.s32.totalorder %s5090, 20
          %s5092 = scalar_select %p5091, 1, 0
          %s5093 = scvt.s32.f32 %s5092
          %v5094 = vstv %s5093
          %v5095 = vmul.f32 %v5088, %v5094
          %v5096 = vmul.f32 %v5089, %v5094
          %v5097 = vadd.f32 %v4952, %v5095
          %v5098 = vadd.f32 %v4953, %v5096
          %v5099 = vld [vmem:[%s2067] sm:$0xff]
          %v5100 = vld [vmem:[%s2067 + $0x8] sm:$0xff]
          %v5101 = vld [vmem:[%s2067 + $0x10] sm:$0xff]
          %v5102 = vunpack.c.l.bf16 %v5099
          %v5103 = vunpack.c.l.bf16 %v5100
          %v5104 = vunpack.c.l.bf16 %v5101
          %v5105 = vunpack.c.h.bf16 %v5099
          %v5106 = vunpack.c.h.bf16 %v5100
          %v5107 = vunpack.c.h.bf16 %v5101
          %v5108 = vpack.c.bf16 %v5089, %v5088
          %5109 = vmatprep.subr.bf16.mxu0 %v4483
          %5110 = vmatpush1.bf16.msra.mxu0 %v4482
          %5111 = vmatprep.subr.bf16.mxu0 %v4486
          %5112 = vmatpush1.bf16.msra.mxu0 %v4485
          %5113 = vmatprep.subr.bf16.mxu0 %v4489
          %5114 = vmatpush1.bf16.msra.mxu0 %v4488
          %5115 = vmatprep.subr.bf16.mxu0 %v4492
          %5116 = vmatpush1.bf16.msra.mxu0 %v4491
          %5117 = vmatprep.subr.bf16.mxu0 %v4495
          %5118 = vmatpush1.bf16.msra.mxu0 %v4494
          %5119 = vmatprep.subr.bf16.mxu0 %v4498
          %5120 = vmatpush1.bf16.msra.mxu0 %v4497
          %5121 = vmatprep.subr.bf16.mxu0 %v4501
          %5122 = vmatpush1.bf16.msra.mxu0 %v4500
          %5123 = vmatprep.subr.bf16.mxu0 %v4504
          %5124 = vmatpush1.bf16.msra.mxu0 %v4503
          %5125 = vmatprep.subr.bf16.mxu0 0
          %5126 = vmatpush1.bf16.msra.mxu0 0
          %5127 = vmatprep.subr.bf16.mxu0 0
          %5128 = vmatpush1.bf16.msra.mxu0 0
          %5129 = vmatprep.subr.bf16.mxu0 0
          %5130 = vmatpush1.bf16.msra.mxu0 0
          %5131 = vmatprep.subr.bf16.mxu0 0
          %5132 = vmatpush1.bf16.msra.mxu0 0
          %5133 = vmatprep.subr.bf16.mxu0 0
          %5134 = vmatpush1.bf16.msra.mxu0 0
          %5135 = vmatprep.subr.bf16.mxu0 0
          %5136 = vmatpush1.bf16.msra.mxu0 0
          %5137 = vmatprep.subr.bf16.mxu0 0
          %5138 = vmatpush1.bf16.msra.mxu0 0
          %5139 = vmatprep.subr.bf16.mxu0 0
          %5140 = vmatpush1.bf16.msra.mxu0 0
          %5141 = vmatprep.mubr.bf16.mxu0 0
          %5142 = vmatmul.mubr.bf16.gmra.mrb[0].mxu0 %v5108
          %v5143 = vpop.f32.mrb[0].mxu0
          %v5144 = vadd.f32 %v4390, %v5143
          %v5145 = vpop.f32.mrb[0].mxu0
          %v5146 = vadd.f32 %v4394, %v5145
          %v5147 = vpop.f32.mrb[0].mxu0
          %v5148 = vadd.f32 %v4390, %v5147
          %v5149 = vpop.f32.mrb[0].mxu0
          %v5150 = vadd.f32 %v4394, %v5149
          %5151 = vdwg.mxu0
          %5152 = vmatprep.subr.bf16.mxu0 0
          %5153 = vmatpush1.bf16.msra.mxu0 %v4484
          %5154 = vmatprep.subr.bf16.mxu0 0
          %5155 = vmatpush1.bf16.msra.mxu0 %v4487
          %5156 = vmatprep.subr.bf16.mxu0 0
          %5157 = vmatpush1.bf16.msra.mxu0 %v4490
          %5158 = vmatprep.subr.bf16.mxu0 0
          %5159 = vmatpush1.bf16.msra.mxu0 %v4493
          %5160 = vmatprep.subr.bf16.mxu0 0
          %5161 = vmatpush1.bf16.msra.mxu0 %v4496
          %5162 = vmatprep.subr.bf16.mxu0 0
          %5163 = vmatpush1.bf16.msra.mxu0 %v4499
          %5164 = vmatprep.subr.bf16.mxu0 0
          %5165 = vmatpush1.bf16.msra.mxu0 %v4502
          %5166 = vmatprep.subr.bf16.mxu0 0
          %5167 = vmatpush1.bf16.msra.mxu0 %v4505
          %5168 = vmatprep.subr.bf16.mxu0 0
          %5169 = vmatpush1.bf16.msra.mxu0 0
          %5170 = vmatprep.subr.bf16.mxu0 0
          %5171 = vmatpush1.bf16.msra.mxu0 0
          %5172 = vmatprep.subr.bf16.mxu0 0
          %5173 = vmatpush1.bf16.msra.mxu0 0
          %5174 = vmatprep.subr.bf16.mxu0 0
          %5175 = vmatpush1.bf16.msra.mxu0 0
          %5176 = vmatprep.subr.bf16.mxu0 0
          %5177 = vmatpush1.bf16.msra.mxu0 0
          %5178 = vmatprep.subr.bf16.mxu0 0
          %5179 = vmatpush1.bf16.msra.mxu0 0
          %5180 = vmatprep.subr.bf16.mxu0 0
          %5181 = vmatpush1.bf16.msra.mxu0 0
          %5182 = vmatprep.subr.bf16.mxu0 0
          %5183 = vmatpush1.bf16.msra.mxu0 0
          %5184 = vmatprep.mubr.bf16.mxu0 0
          %5185 = vmatmul.mubr.bf16.gmra.mrb[0].mxu0 %v5108
          %v5186 = vpop.f32.mrb[0].mxu0
          %v5187 = vadd.f32 %v4398, %v5186
          %v5188 = vpop.f32.mrb[0].mxu0
          %v5189 = vpop.f32.mrb[0].mxu0
          %v5190 = vadd.f32 %v4398, %v5189
          %v5191 = vpop.f32.mrb[0].mxu0
          %5192 = vdwg.mxu0
          %v5193 = vadd.f32 %v5102, %v5144
          %v5194 = vadd.f32 %v5105, %v5148
          %v5195 = vxor.u32 %v5193, 2147483648
          %v5196 = vxor.u32 %v5194, 2147483648
          %v5197 = vmul.f32 %v5195, 1.442695
          %v5198 = vpow.pop %v5197
          %v5199 = vmul.f32 %v5196, 1.442695
          %v5200 = vpow.pop %v5199
          %v5201 = vadd.f32 %v5198, 1.0
          %v5202 = vadd.f32 %v5200, 1.0
          %v5203 = vrcp.pop %v5201
          %v5204 = vmul.f32 1.0, %v5203
          %v5205 = vrcp.pop %v5202
          %v5206 = vmul.f32 1.0, %v5205
          %v5207 = vadd.f32 %v5103, %v5146
          %v5208 = vadd.f32 %v5106, %v5150
          %v5209 = vxor.u32 %v5207, 2147483648
          %v5210 = vxor.u32 %v5208, 2147483648
          %v5211 = vmul.f32 %v5209, 1.442695
          %v5212 = vpow.pop %v5211
          %v5213 = vmul.f32 %v5210, 1.442695
          %v5214 = vpow.pop %v5213
          %v5215 = vadd.f32 %v5212, 1.0
          %v5216 = vadd.f32 %v5214, 1.0
          %v5217 = vrcp.pop %v5215
          %v5218 = vmul.f32 1.0, %v5217
          %v5219 = vrcp.pop %v5216
          %v5220 = vmul.f32 1.0, %v5219
          %v5221 = vmul.f32 %v5204, %v5187
          %v5222 = vmul.f32 %v5206, %v5190
          %v5223 = vadd.f32 %v5104, %v5221
          %v5224 = vadd.f32 %v5107, %v5222
          %v5225 = vtanh.pop %v5223
          %v5226 = vtanh.pop %v5224
          %v5227 = vsub.f32 1.0, %v5218
          %v5228 = vsub.f32 1.0, %v5220
          %v5229 = vmul.f32 %v5227, %v5225
          %v5230 = vmul.f32 %v5228, %v5226
          %v5231 = vmul.f32 %v5218, %v5088
          %v5232 = vmul.f32 %v5220, %v5089
          %v5233 = vadd.f32 %v5229, %v5231
          %v5234 = vadd.f32 %v5230, %v5232
          %s5235 = sadd.s32 %s3107, 4
          %p5236 = scmp.lt.s32.totalorder %s5235, 20
          %s5237 = scalar_select %p5236, 1, 0
          %s5238 = scvt.s32.f32 %s5237
          %v5239 = vstv %s5238
          %v5240 = vmul.f32 %v5233, %v5239
          %v5241 = vmul.f32 %v5234, %v5239
          %v5242 = vadd.f32 %v5097, %v5240
          %v5243 = vadd.f32 %v5098, %v5241
          %v5244 = vld [vmem:[%s2208] sm:$0xff]
          %v5245 = vld [vmem:[%s2208 + $0x8] sm:$0xff]
          %v5246 = vld [vmem:[%s2208 + $0x10] sm:$0xff]
          %v5247 = vunpack.c.l.bf16 %v5244
          %v5248 = vunpack.c.l.bf16 %v5245
          %v5249 = vunpack.c.l.bf16 %v5246
          %v5250 = vunpack.c.h.bf16 %v5244
          %v5251 = vunpack.c.h.bf16 %v5245
          %v5252 = vunpack.c.h.bf16 %v5246
          %v5253 = vpack.c.bf16 %v5234, %v5233
          %5254 = vmatprep.subr.bf16.mxu0 %v4483
          %5255 = vmatpush1.bf16.msra.mxu0 %v4482
          %5256 = vmatprep.subr.bf16.mxu0 %v4486
          %5257 = vmatpush1.bf16.msra.mxu0 %v4485
          %5258 = vmatprep.subr.bf16.mxu0 %v4489
          %5259 = vmatpush1.bf16.msra.mxu0 %v4488
          %5260 = vmatprep.subr.bf16.mxu0 %v4492
          %5261 = vmatpush1.bf16.msra.mxu0 %v4491
          %5262 = vmatprep.subr.bf16.mxu0 %v4495
          %5263 = vmatpush1.bf16.msra.mxu0 %v4494
          %5264 = vmatprep.subr.bf16.mxu0 %v4498
          %5265 = vmatpush1.bf16.msra.mxu0 %v4497
          %5266 = vmatprep.subr.bf16.mxu0 %v4501
          %5267 = vmatpush1.bf16.msra.mxu0 %v4500
          %5268 = vmatprep.subr.bf16.mxu0 %v4504
          %5269 = vmatpush1.bf16.msra.mxu0 %v4503
          %5270 = vmatprep.subr.bf16.mxu0 0
          %5271 = vmatpush1.bf16.msra.mxu0 0
          %5272 = vmatprep.subr.bf16.mxu0 0
          %5273 = vmatpush1.bf16.msra.mxu0 0
          %5274 = vmatprep.subr.bf16.mxu0 0
          %5275 = vmatpush1.bf16.msra.mxu0 0
          %5276 = vmatprep.subr.bf16.mxu0 0
          %5277 = vmatpush1.bf16.msra.mxu0 0
          %5278 = vmatprep.subr.bf16.mxu0 0
          %5279 = vmatpush1.bf16.msra.mxu0 0
          %5280 = vmatprep.subr.bf16.mxu0 0
          %5281 = vmatpush1.bf16.msra.mxu0 0
          %5282 = vmatprep.subr.bf16.mxu0 0
          %5283 = vmatpush1.bf16.msra.mxu0 0
          %5284 = vmatprep.subr.bf16.mxu0 0
          %5285 = vmatpush1.bf16.msra.mxu0 0
          %5286 = vmatprep.mubr.bf16.mxu0 0
          %5287 = vmatmul.mubr.bf16.gmra.mrb[0].mxu0 %v5253
          %v5288 = vpop.f32.mrb[0].mxu0
          %v5289 = vadd.f32 %v4390, %v5288
          %v5290 = vpop.f32.mrb[0].mxu0
          %v5291 = vadd.f32 %v4394, %v5290
          %v5292 = vpop.f32.mrb[0].mxu0
          %v5293 = vadd.f32 %v4390, %v5292
          %v5294 = vpop.f32.mrb[0].mxu0
          %v5295 = vadd.f32 %v4394, %v5294
          %5296 = vdwg.mxu0
          %5297 = vmatprep.subr.bf16.mxu0 0
          %5298 = vmatpush1.bf16.msra.mxu0 %v4484
          %5299 = vmatprep.subr.bf16.mxu0 0
          %5300 = vmatpush1.bf16.msra.mxu0 %v4487
          %5301 = vmatprep.subr.bf16.mxu0 0
          %5302 = vmatpush1.bf16.msra.mxu0 %v4490
          %5303 = vmatprep.subr.bf16.mxu0 0
          %5304 = vmatpush1.bf16.msra.mxu0 %v4493
          %5305 = vmatprep.subr.bf16.mxu0 0
          %5306 = vmatpush1.bf16.msra.mxu0 %v4496
          %5307 = vmatprep.subr.bf16.mxu0 0
          %5308 = vmatpush1.bf16.msra.mxu0 %v4499
          %5309 = vmatprep.subr.bf16.mxu0 0
          %5310 = vmatpush1.bf16.msra.mxu0 %v4502
          %5311 = vmatprep.subr.bf16.mxu0 0
          %5312 = vmatpush1.bf16.msra.mxu0 %v4505
          %5313 = vmatprep.subr.bf16.mxu0 0
          %5314 = vmatpush1.bf16.msra.mxu0 0
          %5315 = vmatprep.subr.bf16.mxu0 0
          %5316 = vmatpush1.bf16.msra.mxu0 0
          %5317 = vmatprep.subr.bf16.mxu0 0
          %5318 = vmatpush1.bf16.msra.mxu0 0
          %5319 = vmatprep.subr.bf16.mxu0 0
          %5320 = vmatpush1.bf16.msra.mxu0 0
          %5321 = vmatprep.subr.bf16.mxu0 0
          %5322 = vmatpush1.bf16.msra.mxu0 0
          %5323 = vmatprep.subr.bf16.mxu0 0
          %5324 = vmatpush1.bf16.msra.mxu0 0
          %5325 = vmatprep.subr.bf16.mxu0 0
          %5326 = vmatpush1.bf16.msra.mxu0 0
          %5327 = vmatprep.subr.bf16.mxu0 0
          %5328 = vmatpush1.bf16.msra.mxu0 0
          %5329 = vmatprep.mubr.bf16.mxu0 0
          %5330 = vmatmul.mubr.bf16.gmra.mrb[0].mxu0 %v5253
          %v5331 = vpop.f32.mrb[0].mxu0
          %v5332 = vadd.f32 %v4398, %v5331
          %v5333 = vpop.f32.mrb[0].mxu0
          %v5334 = vpop.f32.mrb[0].mxu0
          %v5335 = vadd.f32 %v4398, %v5334
          %v5336 = vpop.f32.mrb[0].mxu0
          %5337 = vdwg.mxu0
          %v5338 = vadd.f32 %v5247, %v5289
          %v5339 = vadd.f32 %v5250, %v5293
          %v5340 = vxor.u32 %v5338, 2147483648
          %v5341 = vxor.u32 %v5339, 2147483648
          %v5342 = vmul.f32 %v5340, 1.442695
          %v5343 = vpow.pop %v5342
          %v5344 = vmul.f32 %v5341, 1.442695
          %v5345 = vpow.pop %v5344
          %v5346 = vadd.f32 %v5343, 1.0
          %v5347 = vadd.f32 %v5345, 1.0
          %v5348 = vrcp.pop %v5346
          %v5349 = vmul.f32 1.0, %v5348
          %v5350 = vrcp.pop %v5347
          %v5351 = vmul.f32 1.0, %v5350
          %v5352 = vadd.f32 %v5248, %v5291
          %v5353 = vadd.f32 %v5251, %v5295
          %v5354 = vxor.u32 %v5352, 2147483648
          %v5355 = vxor.u32 %v5353, 2147483648
          %v5356 = vmul.f32 %v5354, 1.442695
          %v5357 = vpow.pop %v5356
          %v5358 = vmul.f32 %v5355, 1.442695
          %v5359 = vpow.pop %v5358
          %v5360 = vadd.f32 %v5357, 1.0
          %v5361 = vadd.f32 %v5359, 1.0
          %v5362 = vrcp.pop %v5360
          %v5363 = vmul.f32 1.0, %v5362
          %v5364 = vrcp.pop %v5361
          %v5365 = vmul.f32 1.0, %v5364
          %v5366 = vmul.f32 %v5349, %v5332
          %v5367 = vmul.f32 %v5351, %v5335
          %v5368 = vadd.f32 %v5249, %v5366
          %v5369 = vadd.f32 %v5252, %v5367
          %v5370 = vtanh.pop %v5368
          %v5371 = vtanh.pop %v5369
          %v5372 = vsub.f32 1.0, %v5363
          %v5373 = vsub.f32 1.0, %v5365
          %v5374 = vmul.f32 %v5372, %v5370
          %v5375 = vmul.f32 %v5373, %v5371
          %v5376 = vmul.f32 %v5363, %v5233
          %v5377 = vmul.f32 %v5365, %v5234
          %v5378 = vadd.f32 %v5374, %v5376
          %v5379 = vadd.f32 %v5375, %v5377
          %s5380 = sadd.s32 %s3107, 5
          %p5381 = scmp.lt.s32.totalorder %s5380, 20
          %s5382 = scalar_select %p5381, 1, 0
          %s5383 = scvt.s32.f32 %s5382
          %v5384 = vstv %s5383
          %v5385 = vmul.f32 %v5378, %v5384
          %v5386 = vmul.f32 %v5379, %v5384
          %v5387 = vadd.f32 %v5242, %v5385
          %v5388 = vadd.f32 %v5243, %v5386
          %v5389 = vld [vmem:[%s2349] sm:$0xff]
          %v5390 = vld [vmem:[%s2349 + $0x8] sm:$0xff]
          %v5391 = vld [vmem:[%s2349 + $0x10] sm:$0xff]
          %v5392 = vunpack.c.l.bf16 %v5389
          %v5393 = vunpack.c.l.bf16 %v5390
          %v5394 = vunpack.c.l.bf16 %v5391
          %v5395 = vunpack.c.h.bf16 %v5389
          %v5396 = vunpack.c.h.bf16 %v5390
          %v5397 = vunpack.c.h.bf16 %v5391
          %v5398 = vpack.c.bf16 %v5379, %v5378
          %5399 = vmatprep.subr.bf16.mxu0 %v4483
          %5400 = vmatpush1.bf16.msra.mxu0 %v4482
          %5401 = vmatprep.subr.bf16.mxu0 %v4486
          %5402 = vmatpush1.bf16.msra.mxu0 %v4485
          %5403 = vmatprep.subr.bf16.mxu0 %v4489
          %5404 = vmatpush1.bf16.msra.mxu0 %v4488
          %5405 = vmatprep.subr.bf16.mxu0 %v4492
          %5406 = vmatpush1.bf16.msra.mxu0 %v4491
          %5407 = vmatprep.subr.bf16.mxu0 %v4495
          %5408 = vmatpush1.bf16.msra.mxu0 %v4494
          %5409 = vmatprep.subr.bf16.mxu0 %v4498
          %5410 = vmatpush1.bf16.msra.mxu0 %v4497
          %5411 = vmatprep.subr.bf16.mxu0 %v4501
          %5412 = vmatpush1.bf16.msra.mxu0 %v4500
          %5413 = vmatprep.subr.bf16.mxu0 %v4504
          %5414 = vmatpush1.bf16.msra.mxu0 %v4503
          %5415 = vmatprep.subr.bf16.mxu0 0
          %5416 = vmatpush1.bf16.msra.mxu0 0
          %5417 = vmatprep.subr.bf16.mxu0 0
          %5418 = vmatpush1.bf16.msra.mxu0 0
          %5419 = vmatprep.subr.bf16.mxu0 0
          %5420 = vmatpush1.bf16.msra.mxu0 0
          %5421 = vmatprep.subr.bf16.mxu0 0
          %5422 = vmatpush1.bf16.msra.mxu0 0
          %5423 = vmatprep.subr.bf16.mxu0 0
          %5424 = vmatpush1.bf16.msra.mxu0 0
          %5425 = vmatprep.subr.bf16.mxu0 0
          %5426 = vmatpush1.bf16.msra.mxu0 0
          %5427 = vmatprep.subr.bf16.mxu0 0
          %5428 = vmatpush1.bf16.msra.mxu0 0
          %5429 = vmatprep.subr.bf16.mxu0 0
          %5430 = vmatpush1.bf16.msra.mxu0 0
          %5431 = vmatprep.mubr.bf16.mxu0 0
          %5432 = vmatmul.mubr.bf16.gmra.mrb[0].mxu0 %v5398
          %v5433 = vpop.f32.mrb[0].mxu0
          %v5434 = vadd.f32 %v4390, %v5433
          %v5435 = vpop.f32.mrb[0].mxu0
          %v5436 = vadd.f32 %v4394, %v5435
          %v5437 = vpop.f32.mrb[0].mxu0
          %v5438 = vadd.f32 %v4390, %v5437
          %v5439 = vpop.f32.mrb[0].mxu0
          %v5440 = vadd.f32 %v4394, %v5439
          %5441 = vdwg.mxu0
          %5442 = vmatprep.subr.bf16.mxu0 0
          %5443 = vmatpush1.bf16.msra.mxu0 %v4484
          %5444 = vmatprep.subr.bf16.mxu0 0
          %5445 = vmatpush1.bf16.msra.mxu0 %v4487
          %5446 = vmatprep.subr.bf16.mxu0 0
          %5447 = vmatpush1.bf16.msra.mxu0 %v4490
          %5448 = vmatprep.subr.bf16.mxu0 0
          %5449 = vmatpush1.bf16.msra.mxu0 %v4493
          %5450 = vmatprep.subr.bf16.mxu0 0
          %5451 = vmatpush1.bf16.msra.mxu0 %v4496
          %5452 = vmatprep.subr.bf16.mxu0 0
          %5453 = vmatpush1.bf16.msra.mxu0 %v4499
          %5454 = vmatprep.subr.bf16.mxu0 0
          %5455 = vmatpush1.bf16.msra.mxu0 %v4502
          %5456 = vmatprep.subr.bf16.mxu0 0
          %5457 = vmatpush1.bf16.msra.mxu0 %v4505
          %5458 = vmatprep.subr.bf16.mxu0 0
          %5459 = vmatpush1.bf16.msra.mxu0 0
          %5460 = vmatprep.subr.bf16.mxu0 0
          %5461 = vmatpush1.bf16.msra.mxu0 0
          %5462 = vmatprep.subr.bf16.mxu0 0
          %5463 = vmatpush1.bf16.msra.mxu0 0
          %5464 = vmatprep.subr.bf16.mxu0 0
          %5465 = vmatpush1.bf16.msra.mxu0 0
          %5466 = vmatprep.subr.bf16.mxu0 0
          %5467 = vmatpush1.bf16.msra.mxu0 0
          %5468 = vmatprep.subr.bf16.mxu0 0
          %5469 = vmatpush1.bf16.msra.mxu0 0
          %5470 = vmatprep.subr.bf16.mxu0 0
          %5471 = vmatpush1.bf16.msra.mxu0 0
          %5472 = vmatprep.subr.bf16.mxu0 0
          %5473 = vmatpush1.bf16.msra.mxu0 0
          %5474 = vmatprep.mubr.bf16.mxu0 0
          %5475 = vmatmul.mubr.bf16.gmra.mrb[0].mxu0 %v5398
          %v5476 = vpop.f32.mrb[0].mxu0
          %v5477 = vadd.f32 %v4398, %v5476
          %v5478 = vpop.f32.mrb[0].mxu0
          %v5479 = vpop.f32.mrb[0].mxu0
          %v5480 = vadd.f32 %v4398, %v5479
          %v5481 = vpop.f32.mrb[0].mxu0
          %5482 = vdwg.mxu0
          %v5483 = vadd.f32 %v5392, %v5434
          %v5484 = vadd.f32 %v5395, %v5438
          %v5485 = vxor.u32 %v5483, 2147483648
          %v5486 = vxor.u32 %v5484, 2147483648
          %v5487 = vmul.f32 %v5485, 1.442695
          %v5488 = vpow.pop %v5487
          %v5489 = vmul.f32 %v5486, 1.442695
          %v5490 = vpow.pop %v5489
          %v5491 = vadd.f32 %v5488, 1.0
          %v5492 = vadd.f32 %v5490, 1.0
          %v5493 = vrcp.pop %v5491
          %v5494 = vmul.f32 1.0, %v5493
          %v5495 = vrcp.pop %v5492
          %v5496 = vmul.f32 1.0, %v5495
          %v5497 = vadd.f32 %v5393, %v5436
          %v5498 = vadd.f32 %v5396, %v5440
          %v5499 = vxor.u32 %v5497, 2147483648
          %v5500 = vxor.u32 %v5498, 2147483648
          %v5501 = vmul.f32 %v5499, 1.442695
          %v5502 = vpow.pop %v5501
          %v5503 = vmul.f32 %v5500, 1.442695
          %v5504 = vpow.pop %v5503
          %v5505 = vadd.f32 %v5502, 1.0
          %v5506 = vadd.f32 %v5504, 1.0
          %v5507 = vrcp.pop %v5505
          %v5508 = vmul.f32 1.0, %v5507
          %v5509 = vrcp.pop %v5506
          %v5510 = vmul.f32 1.0, %v5509
          %v5511 = vmul.f32 %v5494, %v5477
          %v5512 = vmul.f32 %v5496, %v5480
          %v5513 = vadd.f32 %v5394, %v5511
          %v5514 = vadd.f32 %v5397, %v5512
          %v5515 = vtanh.pop %v5513
          %v5516 = vtanh.pop %v5514
          %v5517 = vsub.f32 1.0, %v5508
          %v5518 = vsub.f32 1.0, %v5510
          %v5519 = vmul.f32 %v5517, %v5515
          %v5520 = vmul.f32 %v5518, %v5516
          %v5521 = vmul.f32 %v5508, %v5378
          %v5522 = vmul.f32 %v5510, %v5379
          %v5523 = vadd.f32 %v5519, %v5521
          %v5524 = vadd.f32 %v5520, %v5522
          %s5525 = sadd.s32 %s3107, 6
          %p5526 = scmp.lt.s32.totalorder %s5525, 20
          %s5527 = scalar_select %p5526, 1, 0
          %s5528 = scvt.s32.f32 %s5527
          %v5529 = vstv %s5528
          %v5530 = vmul.f32 %v5523, %v5529
          %v5531 = vmul.f32 %v5524, %v5529
          %v5532 = vadd.f32 %v5387, %v5530
          %v5533 = vadd.f32 %v5388, %v5531
          %v5534 = vld [vmem:[%s2490] sm:$0xff]
          %v5535 = vld [vmem:[%s2490 + $0x8] sm:$0xff]
          %v5536 = vld [vmem:[%s2490 + $0x10] sm:$0xff]
          %v5537 = vunpack.c.l.bf16 %v5534
          %v5538 = vunpack.c.l.bf16 %v5535
          %v5539 = vunpack.c.l.bf16 %v5536
          %v5540 = vunpack.c.h.bf16 %v5534
          %v5541 = vunpack.c.h.bf16 %v5535
          %v5542 = vunpack.c.h.bf16 %v5536
          %v5543 = vpack.c.bf16 %v5524, %v5523
          %5544 = vmatprep.subr.bf16.mxu0 %v4483
          %5545 = vmatpush1.bf16.msra.mxu0 %v4482
          %5546 = vmatprep.subr.bf16.mxu0 %v4486
          %5547 = vmatpush1.bf16.msra.mxu0 %v4485
          %5548 = vmatprep.subr.bf16.mxu0 %v4489
          %5549 = vmatpush1.bf16.msra.mxu0 %v4488
          %5550 = vmatprep.subr.bf16.mxu0 %v4492
          %5551 = vmatpush1.bf16.msra.mxu0 %v4491
          %5552 = vmatprep.subr.bf16.mxu0 %v4495
          %5553 = vmatpush1.bf16.msra.mxu0 %v4494
          %5554 = vmatprep.subr.bf16.mxu0 %v4498
          %5555 = vmatpush1.bf16.msra.mxu0 %v4497
          %5556 = vmatprep.subr.bf16.mxu0 %v4501
          %5557 = vmatpush1.bf16.msra.mxu0 %v4500
          %5558 = vmatprep.subr.bf16.mxu0 %v4504
          %5559 = vmatpush1.bf16.msra.mxu0 %v4503
          %5560 = vmatprep.subr.bf16.mxu0 0
          %5561 = vmatpush1.bf16.msra.mxu0 0
          %5562 = vmatprep.subr.bf16.mxu0 0
          %5563 = vmatpush1.bf16.msra.mxu0 0
          %5564 = vmatprep.subr.bf16.mxu0 0
          %5565 = vmatpush1.bf16.msra.mxu0 0
          %5566 = vmatprep.subr.bf16.mxu0 0
          %5567 = vmatpush1.bf16.msra.mxu0 0
          %5568 = vmatprep.subr.bf16.mxu0 0
          %5569 = vmatpush1.bf16.msra.mxu0 0
          %5570 = vmatprep.subr.bf16.mxu0 0
          %5571 = vmatpush1.bf16.msra.mxu0 0
          %5572 = vmatprep.subr.bf16.mxu0 0
          %5573 = vmatpush1.bf16.msra.mxu0 0
          %5574 = vmatprep.subr.bf16.mxu0 0
          %5575 = vmatpush1.bf16.msra.mxu0 0
          %5576 = vmatprep.mubr.bf16.mxu0 0
          %5577 = vmatmul.mubr.bf16.gmra.mrb[0].mxu0 %v5543
          %v5578 = vpop.f32.mrb[0].mxu0
          %v5579 = vadd.f32 %v4390, %v5578
          %v5580 = vpop.f32.mrb[0].mxu0
          %v5581 = vadd.f32 %v4394, %v5580
          %v5582 = vpop.f32.mrb[0].mxu0
          %v5583 = vadd.f32 %v4390, %v5582
          %v5584 = vpop.f32.mrb[0].mxu0
          %v5585 = vadd.f32 %v4394, %v5584
          %5586 = vdwg.mxu0
          %5587 = vmatprep.subr.bf16.mxu0 0
          %5588 = vmatpush1.bf16.msra.mxu0 %v4484
          %5589 = vmatprep.subr.bf16.mxu0 0
          %5590 = vmatpush1.bf16.msra.mxu0 %v4487
          %5591 = vmatprep.subr.bf16.mxu0 0
          %5592 = vmatpush1.bf16.msra.mxu0 %v4490
          %5593 = vmatprep.subr.bf16.mxu0 0
          %5594 = vmatpush1.bf16.msra.mxu0 %v4493
          %5595 = vmatprep.subr.bf16.mxu0 0
          %5596 = vmatpush1.bf16.msra.mxu0 %v4496
          %5597 = vmatprep.subr.bf16.mxu0 0
          %5598 = vmatpush1.bf16.msra.mxu0 %v4499
          %5599 = vmatprep.subr.bf16.mxu0 0
          %5600 = vmatpush1.bf16.msra.mxu0 %v4502
          %5601 = vmatprep.subr.bf16.mxu0 0
          %5602 = vmatpush1.bf16.msra.mxu0 %v4505
          %5603 = vmatprep.subr.bf16.mxu0 0
          %5604 = vmatpush1.bf16.msra.mxu0 0
          %5605 = vmatprep.subr.bf16.mxu0 0
          %5606 = vmatpush1.bf16.msra.mxu0 0
          %5607 = vmatprep.subr.bf16.mxu0 0
          %5608 = vmatpush1.bf16.msra.mxu0 0
          %5609 = vmatprep.subr.bf16.mxu0 0
          %5610 = vmatpush1.bf16.msra.mxu0 0
          %5611 = vmatprep.subr.bf16.mxu0 0
          %5612 = vmatpush1.bf16.msra.mxu0 0
          %5613 = vmatprep.subr.bf16.mxu0 0
          %5614 = vmatpush1.bf16.msra.mxu0 0
          %5615 = vmatprep.subr.bf16.mxu0 0
          %5616 = vmatpush1.bf16.msra.mxu0 0
          %5617 = vmatprep.subr.bf16.mxu0 0
          %5618 = vmatpush1.bf16.msra.mxu0 0
          %5619 = vmatprep.mubr.bf16.mxu0 0
          %5620 = vmatmul.mubr.bf16.gmra.mrb[0].mxu0 %v5543
          %v5621 = vpop.f32.mrb[0].mxu0
          %v5622 = vadd.f32 %v4398, %v5621
          %v5623 = vpop.f32.mrb[0].mxu0
          %v5624 = vpop.f32.mrb[0].mxu0
          %v5625 = vadd.f32 %v4398, %v5624
          %v5626 = vpop.f32.mrb[0].mxu0
          %5627 = vdwg.mxu0
          %v5628 = vadd.f32 %v5537, %v5579
          %v5629 = vadd.f32 %v5540, %v5583
          %v5630 = vxor.u32 %v5628, 2147483648
          %v5631 = vxor.u32 %v5629, 2147483648
          %v5632 = vmul.f32 %v5630, 1.442695
          %v5633 = vpow.pop %v5632
          %v5634 = vmul.f32 %v5631, 1.442695
          %v5635 = vpow.pop %v5634
          %v5636 = vadd.f32 %v5633, 1.0
          %v5637 = vadd.f32 %v5635, 1.0
          %v5638 = vrcp.pop %v5636
          %v5639 = vmul.f32 1.0, %v5638
          %v5640 = vrcp.pop %v5637
          %v5641 = vmul.f32 1.0, %v5640
          %v5642 = vadd.f32 %v5538, %v5581
          %v5643 = vadd.f32 %v5541, %v5585
          %v5644 = vxor.u32 %v5642, 2147483648
          %v5645 = vxor.u32 %v5643, 2147483648
          %v5646 = vmul.f32 %v5644, 1.442695
          %v5647 = vpow.pop %v5646
          %v5648 = vmul.f32 %v5645, 1.442695
          %v5649 = vpow.pop %v5648
          %v5650 = vadd.f32 %v5647, 1.0
          %v5651 = vadd.f32 %v5649, 1.0
          %v5652 = vrcp.pop %v5650
          %v5653 = vmul.f32 1.0, %v5652
          %v5654 = vrcp.pop %v5651
          %v5655 = vmul.f32 1.0, %v5654
          %v5656 = vmul.f32 %v5639, %v5622
          %v5657 = vmul.f32 %v5641, %v5625
          %v5658 = vadd.f32 %v5539, %v5656
          %v5659 = vadd.f32 %v5542, %v5657
          %v5660 = vtanh.pop %v5658
          %v5661 = vtanh.pop %v5659
          %v5662 = vsub.f32 1.0, %v5653
          %v5663 = vsub.f32 1.0, %v5655
          %v5664 = vmul.f32 %v5662, %v5660
          %v5665 = vmul.f32 %v5663, %v5661
          %v5666 = vmul.f32 %v5653, %v5523
          %v5667 = vmul.f32 %v5655, %v5524
          %v5668 = vadd.f32 %v5664, %v5666
          %v5669 = vadd.f32 %v5665, %v5667
          %s5670 = sadd.s32 %s3107, 7
          %p5671 = scmp.lt.s32.totalorder %s5670, 20
          %s5672 = scalar_select %p5671, 1, 0
          %s5673 = scvt.s32.f32 %s5672
          %v5674 = vstv %s5673
          %v5675 = vmul.f32 %v5668, %v5674
          %v5676 = vmul.f32 %v5669, %v5674
          %v5677 = vadd.f32 %v5532, %v5675
          %v5678 = vadd.f32 %v5533, %v5676
          %5679 = vst [vmem:[#allocation3] sm:$0xff] %v5668
          %5680 = vst [vmem:[#allocation3 + $0x8] sm:$0xff] %v5669
          %5681 = vst [vmem:[#allocation4] sm:$0xff] %v5677
          %5682 = vst [vmem:[#allocation4 + $0x8] sm:$0xff] %v5678
          %v5683 = vld [vmem:[#allocation4] sm:$0xff]
          %v5684 = vld [vmem:[#allocation4 + $0x8] sm:$0xff]
          %v5685 = vmul.f32 %v5683, 0.05
          %v5686 = vmul.f32 %v5684, 0.05
          %v5687 = vld [vmem:[%s11] sm:$0xff]
          %v5688 = vld [vmem:[%s11 + $0x8] sm:$0xff]
          %v5689 = vld [vmem:[%s11 + $0x10] sm:$0xff]
          %v5690 = vld [vmem:[%s11 + $0x18] sm:$0xff]
          %v5691 = vld [vmem:[%s11 + $0x20] sm:$0xff]
          %v5692 = vld [vmem:[%s11 + $0x28] sm:$0xff]
          %v5693 = vld [vmem:[%s11 + $0x30] sm:$0xff]
          %v5694 = vld [vmem:[%s11 + $0x38] sm:$0xff]
          %v5695 = vld [vmem:[%s11 + $0x40] sm:$0xff]
          %v5696 = vld [vmem:[%s11 + $0x48] sm:$0xff]
          %v5697 = vld [vmem:[%s11 + $0x50] sm:$0xff]
          %v5698 = vld [vmem:[%s11 + $0x58] sm:$0xff]
          %v5699 = vld [vmem:[%s11 + $0x60] sm:$0xff]
          %v5700 = vld [vmem:[%s11 + $0x68] sm:$0xff]
          %v5701 = vld [vmem:[%s11 + $0x70] sm:$0xff]
          %v5702 = vld [vmem:[%s11 + $0x78] sm:$0xff]
          %v5703 = vld [vmem:[%s12] sm:$0x1]
          %v5705 = vlaneseq
          %v5706 = vshrl.u32 %v5705, 7
          %v5707 = vsub.s32 0, %v5706
          %v5708 = vrot.slane %v5703, %v5707
          %5710 = vmatprep.subr.mxu0 0.0
          %5711 = vmatpush1.msra.mxu0 %v5687
          %5712 = vmatprep.subr.mxu0 0.0
          %5713 = vmatpush1.msra.mxu0 %v5688
          %5714 = vmatprep.subr.mxu0 0.0
          %5715 = vmatpush1.msra.mxu0 %v5689
          %5716 = vmatprep.subr.mxu0 0.0
          %5717 = vmatpush1.msra.mxu0 %v5690
          %5718 = vmatprep.subr.mxu0 0.0
          %5719 = vmatpush1.msra.mxu0 %v5691
          %5720 = vmatprep.subr.mxu0 0.0
          %5721 = vmatpush1.msra.mxu0 %v5692
          %5722 = vmatprep.subr.mxu0 0.0
          %5723 = vmatpush1.msra.mxu0 %v5693
          %5724 = vmatprep.subr.mxu0 0.0
          %5725 = vmatpush1.msra.mxu0 %v5694
          %5726 = vmatprep.subr.mxu0 0.0
          %5727 = vmatpush1.msra.mxu0 %v5695
          %5728 = vmatprep.subr.mxu0 0.0
          %5729 = vmatpush1.msra.mxu0 %v5696
          %5730 = vmatprep.subr.mxu0 0.0
          %5731 = vmatpush1.msra.mxu0 %v5697
          %5732 = vmatprep.subr.mxu0 0.0
          %5733 = vmatpush1.msra.mxu0 %v5698
          %5734 = vmatprep.subr.mxu0 0.0
          %5735 = vmatpush1.msra.mxu0 %v5699
          %5736 = vmatprep.subr.mxu0 0.0
          %5737 = vmatpush1.msra.mxu0 %v5700
          %5738 = vmatprep.subr.mxu0 0.0
          %5739 = vmatpush1.msra.mxu0 %v5701
          %5740 = vmatprep.subr.mxu0 0.0
          %5741 = vmatpush1.msra.mxu0 %v5702
          %5742 = vmatprep.subr.mxu0 0.0
          %5743 = vmatpush1.msra.mxu0 0.0
          %5744 = vmatprep.subr.mxu0 0.0
          %5745 = vmatpush1.msra.mxu0 0.0
          %5746 = vmatprep.subr.mxu0 0.0
          %5747 = vmatpush1.msra.mxu0 0.0
          %5748 = vmatprep.subr.mxu0 0.0
          %5749 = vmatpush1.msra.mxu0 0.0
          %5750 = vmatprep.subr.mxu0 0.0
          %5751 = vmatpush1.msra.mxu0 0.0
          %5752 = vmatprep.subr.mxu0 0.0
          %5753 = vmatpush1.msra.mxu0 0.0
          %5754 = vmatprep.subr.mxu0 0.0
          %5755 = vmatpush1.msra.mxu0 0.0
          %5756 = vmatprep.subr.mxu0 0.0
          %5757 = vmatpush1.msra.mxu0 0.0
          %5758 = vmatprep.subr.mxu0 0.0
          %5759 = vmatpush1.msra.mxu0 0.0
          %5760 = vmatprep.subr.mxu0 0.0
          %5761 = vmatpush1.msra.mxu0 0.0
          %5762 = vmatprep.subr.mxu0 0.0
          %5763 = vmatpush1.msra.mxu0 0.0
          %5764 = vmatprep.subr.mxu0 0.0
          %5765 = vmatpush1.msra.mxu0 0.0
          %5766 = vmatprep.subr.mxu0 0.0
          %5767 = vmatpush1.msra.mxu0 0.0
          %5768 = vmatprep.subr.mxu0 0.0
          %5769 = vmatpush1.msra.mxu0 0.0
          %5770 = vmatprep.subr.mxu0 0.0
          %5771 = vmatpush1.msra.mxu0 0.0
          %5772 = vmatprep.subr.mxu0 0.0
          %5773 = vmatpush1.msra.mxu0 0.0
          %5774 = vmatprep.mubr.f32.mxu0 0.0
          %5775 = vmatmul.mubr.f32.gmra.mrb[0].mxu0 %v5685
          %v5776 = vpop.f32.mrb[0].mxu0
          %v5777 = vadd.f32 %v5708, %v5776
          %v5778 = vpop.f32.mrb[0].mxu0
          %5779 = vmatprep.mubr.f32.mxu0 0.0
          %5780 = vmatmul.mubr.f32.gmra.mrb[0].mxu0 %v5686
          %v5781 = vpop.f32.mrb[0].mxu0
          %v5782 = vadd.f32 %v5708, %v5781
          %v5783 = vpop.f32.mrb[0].mxu0
          %5784 = vdwg.mxu0
          %v5785 = vmax.f32 %v5777, 0.0
          %v5786 = vmax.f32 %v5782, 0.0
          %v5787 = vld [vmem:[%s13] sm:$0xff]
          %v5788 = vld [vmem:[%s13 + $0x8] sm:$0xff]
          %v5789 = vld [vmem:[%s13 + $0x10] sm:$0xff]
          %v5790 = vld [vmem:[%s13 + $0x18] sm:$0xff]
          %v5791 = vld [vmem:[%s13 + $0x20] sm:$0xff]
          %v5792 = vld [vmem:[%s13 + $0x28] sm:$0xff]
          %v5793 = vld [vmem:[%s13 + $0x30] sm:$0xff]
          %v5794 = vld [vmem:[%s13 + $0x38] sm:$0xff]
          %v5795 = vld [vmem:[%s13 + $0x40] sm:$0xff]
          %v5796 = vld [vmem:[%s13 + $0x48] sm:$0xff]
          %v5797 = vld [vmem:[%s13 + $0x50] sm:$0xff]
          %v5798 = vld [vmem:[%s13 + $0x58] sm:$0xff]
          %v5799 = vld [vmem:[%s13 + $0x60] sm:$0xff]
          %v5800 = vld [vmem:[%s13 + $0x68] sm:$0xff]
          %v5801 = vld [vmem:[%s13 + $0x70] sm:$0xff]
          %v5802 = vld [vmem:[%s13 + $0x78] sm:$0xff]
          %v5803 = vld [vmem:[%s14] sm:$0x1]
          %v5805 = vlaneseq
          %v5806 = vshrl.u32 %v5805, 7
          %v5807 = vsub.s32 0, %v5806
          %v5808 = vrot.slane %v5803, %v5807
          %5810 = vmatprep.subr.mxu0 0.0
          %5811 = vmatpush1.msra.mxu0 %v5787
          %5812 = vmatprep.subr.mxu0 0.0
          %5813 = vmatpush1.msra.mxu0 %v5788
          %5814 = vmatprep.subr.mxu0 0.0
          %5815 = vmatpush1.msra.mxu0 %v5789
          %5816 = vmatprep.subr.mxu0 0.0
          %5817 = vmatpush1.msra.mxu0 %v5790
          %5818 = vmatprep.subr.mxu0 0.0
          %5819 = vmatpush1.msra.mxu0 %v5791
          %5820 = vmatprep.subr.mxu0 0.0
          %5821 = vmatpush1.msra.mxu0 %v5792
          %5822 = vmatprep.subr.mxu0 0.0
          %5823 = vmatpush1.msra.mxu0 %v5793
          %5824 = vmatprep.subr.mxu0 0.0
          %5825 = vmatpush1.msra.mxu0 %v5794
          %5826 = vmatprep.subr.mxu0 0.0
          %5827 = vmatpush1.msra.mxu0 %v5795
          %5828 = vmatprep.subr.mxu0 0.0
          %5829 = vmatpush1.msra.mxu0 %v5796
          %5830 = vmatprep.subr.mxu0 0.0
          %5831 = vmatpush1.msra.mxu0 %v5797
          %5832 = vmatprep.subr.mxu0 0.0
          %5833 = vmatpush1.msra.mxu0 %v5798
          %5834 = vmatprep.subr.mxu0 0.0
          %5835 = vmatpush1.msra.mxu0 %v5799
          %5836 = vmatprep.subr.mxu0 0.0
          %5837 = vmatpush1.msra.mxu0 %v5800
          %5838 = vmatprep.subr.mxu0 0.0
          %5839 = vmatpush1.msra.mxu0 %v5801
          %5840 = vmatprep.subr.mxu0 0.0
          %5841 = vmatpush1.msra.mxu0 %v5802
          %5842 = vmatprep.subr.mxu0 0.0
          %5843 = vmatpush1.msra.mxu0 0.0
          %5844 = vmatprep.subr.mxu0 0.0
          %5845 = vmatpush1.msra.mxu0 0.0
          %5846 = vmatprep.subr.mxu0 0.0
          %5847 = vmatpush1.msra.mxu0 0.0
          %5848 = vmatprep.subr.mxu0 0.0
          %5849 = vmatpush1.msra.mxu0 0.0
          %5850 = vmatprep.subr.mxu0 0.0
          %5851 = vmatpush1.msra.mxu0 0.0
          %5852 = vmatprep.subr.mxu0 0.0
          %5853 = vmatpush1.msra.mxu0 0.0
          %5854 = vmatprep.subr.mxu0 0.0
          %5855 = vmatpush1.msra.mxu0 0.0
          %5856 = vmatprep.subr.mxu0 0.0
          %5857 = vmatpush1.msra.mxu0 0.0
          %5858 = vmatprep.subr.mxu0 0.0
          %5859 = vmatpush1.msra.mxu0 0.0
          %5860 = vmatprep.subr.mxu0 0.0
          %5861 = vmatpush1.msra.mxu0 0.0
          %5862 = vmatprep.subr.mxu0 0.0
          %5863 = vmatpush1.msra.mxu0 0.0
          %5864 = vmatprep.subr.mxu0 0.0
          %5865 = vmatpush1.msra.mxu0 0.0
          %5866 = vmatprep.subr.mxu0 0.0
          %5867 = vmatpush1.msra.mxu0 0.0
          %5868 = vmatprep.subr.mxu0 0.0
          %5869 = vmatpush1.msra.mxu0 0.0
          %5870 = vmatprep.subr.mxu0 0.0
          %5871 = vmatpush1.msra.mxu0 0.0
          %5872 = vmatprep.subr.mxu0 0.0
          %5873 = vmatpush1.msra.mxu0 0.0
          %5874 = vmatprep.mubr.f32.mxu0 0.0
          %5875 = vmatmul.mubr.f32.gmra.mrb[0].mxu0 %v5785
          %v5876 = vpop.f32.mrb[0].mxu0
          %v5877 = vadd.f32 %v5808, %v5876
          %v5878 = vpop.f32.mrb[0].mxu0
          %5879 = vmatprep.mubr.f32.mxu0 0.0
          %5880 = vmatmul.mubr.f32.gmra.mrb[0].mxu0 %v5786
          %v5881 = vpop.f32.mrb[0].mxu0
          %v5882 = vadd.f32 %v5808, %v5881
          %v5883 = vpop.f32.mrb[0].mxu0
          %5884 = vdwg.mxu0
          %vm5885 = vcmask 15360
          %v5886 = vsel %vm5885, %v5877, -inf
          %5887 = vmax.xlane.f32.xlu0 %v5886
          %v5888 = vpop.xlane.xlu0 %5887
          %v5889 = vsel %vm5885, %v5882, -inf
          %5890 = vmax.xlane.f32.xlu0 %v5889
          %v5891 = vpop.xlane.xlu0 %5890
          %v5892 = vsub.f32 %v5877, %v5888
          %v5893 = vsub.f32 %v5882, %v5891
          %v5894 = vmul.f32 %v5892, 1.442695
          %v5895 = vpow.pop %v5894
          %v5896 = vmul.f32 %v5893, 1.442695
          %v5897 = vpow.pop %v5896
          %v5898 = vsel %vm5885, %v5895, 0.0
          %5899 = vadd.xlane.f32.xlu0 %v5898
          %v5900 = vpop.xlane.xlu0 %5899
          %v5901 = vsel %vm5885, %v5897, 0.0
          %5902 = vadd.xlane.f32.xlu0 %v5901
          %v5903 = vpop.xlane.xlu0 %5902
          %v5904 = vrcp.pop %v5900
          %v5905 = vmul.f32 %v5895, %v5904
          %v5906 = vrcp.pop %v5903
          %v5907 = vmul.f32 %v5897, %v5906
          %5908 = vst.msk [vmem:[%s591] sm:$0xff] %vm5885, %v5905
          %5909 = vst.msk [vmem:[%s591 + $0x8] sm:$0xff] %vm5885, %v5907
        $region112: #{tpu_custom_call.1} parent=79 // pred_fallthru
          _
        %s5910 = smul.u32 2, %s35
        %p5911 = scmp.lt.s32.totalorder %s5910, 1
        %s5912 = scalar_select %p5911, %s5910, 1
        %s5913 = smul.addr %s5912, 8
        %s5914 = scalar_lea.vmem %s15, %s5913
        // Predicated region
        $region113: #{tpu_custom_call.1} parent=79 // pred_check
          %p5915 = pneg %p383
        $region114: #{tpu_custom_call.1} parent=79 // pred_check_branch
          %5917 = sbr.rel (%p5915) target = $region116
        $region115: #{tpu_custom_call.1} parent=79 // pred_region
          %s5918 = smul.u32 2, %s35
        $region116: #{tpu_custom_call.1} parent=79 // pred_fallthru
          _
        // Predicated region
        $region117: #{tpu_custom_call.1} parent=79 // pred_check
          %p5919 = pneg %p383
        $region118: #{tpu_custom_call.1} parent=79 // pred_check_branch
          %5921 = sbr.rel (%p5919) target = $region120
        $region119: #{tpu_custom_call.1} parent=79 // pred_region
          %s5922 = smul.u32 2, %s35
          %p5923 = scmp.lt.s32.totalorder %s5922, 1
          %s5924 = scalar_select %p5923, %s5922, 1
          %s5925 = smul.addr %s5924, 8
          %s5926 = scalar_lea.vmem %s15, %s5925
        $region120: #{tpu_custom_call.1} parent=79 // pred_fallthru
          _
      $region80: #{tpu_custom_call.1} parent=5 // pred_fallthru
        _
      %p5927 = scmp.le.s32.totalorder 2, %s26
      // Predicated region
      $region121: #{tpu_custom_call.1} parent=5 // pred_check
        %p5928 = pneg %p5927
      $region122: #{tpu_custom_call.1} parent=5 // pred_check_branch
        %5930 = sbr.rel (%p5928) target = $region124
      $region123: #{tpu_custom_call.1} parent=5 // pred_region
        %s5931 = ssub.s32 %s26, 2
      $region124: #{tpu_custom_call.1} parent=5 // pred_fallthru
        _
    $region6: #{tpu_custom_call.1} parent=1 // loop_footer
      %s30 = sadd.s32 1, %s26
    $region7: #{tpu_custom_call.1} parent=1 // loop_footer_branch
      %25 = sbr.rel target = $region3
    $region8: #{tpu_custom_call.1} parent=1 // loop_exit
      _
    %5932 = vsyncpa [#allocation8], 1
    %s5933 = scalar_lea.sflag [#allocation8], 1
    %5934 = vsyncpa %s5933, 1
    %5935 = vsyncpa [#allocation10], 1
    %5936 = vsyncpa [#allocation13], 1

</llo_original>
